<compile_context>
chip_gen: v6e
topology: v6e:2x2x1
jax: 0.10.0
libtpu: 0.0.40
codegen_flags: <defaults>
</compile_context>

<pallas_src>
import jax
import jax.numpy as jnp
from jax import lax
from jax.experimental import pallas as pl
from jax.experimental.pallas import tpu as pltpu

# ----------------------------- model dimensions -----------------------------
B     = 4            # batch size
S_SRC = 8            # source sequence length
S_TRG = 8            # target sequence length (incl. <bos>)
S_IMG = 8            # number of image regions (conv spatial locations)
EMB   = 32           # emb_dim
ENC   = 32           # enc_dim  -> txt_ctx_dim = 2 * enc_dim
DEC   = 64           # dec_dim
CTXT  = 2 * ENC      # textual context dim
CIMG  = 64           # img_ctx_dim
NSRC  = 64           # n_src_vocab
NTRG  = 64           # n_trg_vocab

F32 = jnp.float32


# --------------------- fused-gate GRU cell (precomputed gx) ------------------
def _gru_from_gates(gx, h, wh_ref, bh_ref, H):
    """PyTorch GRUCell with gates (r, z, n) concatenated along the last axis.
    gx = x @ Wi + bi  (precomputed, (B, 3H));  wh: (H, 3H), bh: (1, 3H)."""
    gh = jnp.dot(h, wh_ref[...], preferred_element_type=F32) + bh_ref[...]
    r = jax.nn.sigmoid(gx[:, 0:H] + gh[:, 0:H])
    z = jax.nn.sigmoid(gx[:, H:2 * H] + gh[:, H:2 * H])
    n = jnp.tanh(gx[:, 2 * H:3 * H] + r * gh[:, 2 * H:3 * H])
    return (1.0 - z) * n + z * h


# --------------------------- single fused forward kernel ---------------------
def amnmt_fused_kernel(
    # data
    src_emb_ref, src_mask_ref, img_ctx_ref, trg_emb_ref, tgt_oh_ref,
    # bidirectional encoder GRU (fused gates)
    enc_wi_f, enc_wh_f, enc_bi_f, enc_bh_f,
    enc_wi_b, enc_wh_b, enc_bi_b, enc_bh_b,
    # ff_dec_init
    w_init, b_init,
    # decoder GRU cells (fused gates)
    d0_wi, d0_wh, d0_bi, d0_bh,
    d1_wi, d1_wh, d1_bi, d1_bh,
    # MLP attention (txt / img): ctx2ctx, hid2ctx, mlp, ctx2hid
    at_c2c, at_h2c, at_mlp, at_c2h,
    ai_c2c, ai_h2c, ai_mlp, ai_c2h,
    # output head
    w_ho, b_ho, w_op, b_op,
    # output
    loss_ref,
    # scratch (VMEM)
    gxf_ref, gxb_ref, ctxf_ref, ctxb_ref, txtp_ref, imgp_ref, gy_ref, h2_ref,
):
    S      = src_emb_ref.shape[0]
    Bk     = src_emb_ref.shape[1]
    S_img  = img_ctx_ref.shape[0]
    H_enc  = enc_wh_f.shape[0]
    H_dec  = d0_wh.shape[0]
    T      = gy_ref.shape[0]

    # ---- (a) hoisted encoder input projections (off the recurrent chain) ----
    for t in range(S):
        x_t = src_emb_ref[t]                                          # (B, EMB)
        gxf_ref[t] = jnp.dot(x_t, enc_wi_f[...], preferred_element_type=F32) + enc_bi_f[...]
        gxb_ref[t] = jnp.dot(x_t, enc_wi_b[...], preferred_element_type=F32) + enc_bi_b[...]

    # ---- (b) bidirectional GRU recurrences (only h @ Wh on the serial chain) ----
    h0e = jnp.zeros((Bk, H_enc), F32)

    def fwd(t, h):
        h = _gru_from_gates(gxf_ref[t], h, enc_wh_f, enc_bh_f, H_enc)
        ctxf_ref[t] = h
        return h
    lax.fori_loop(0, S, fwd, h0e)

    def bwd(i, h):
        t = S - 1 - i
        h = _gru_from_gates(gxb_ref[t], h, enc_wh_b, enc_bh_b, H_enc)
        ctxb_ref[t] = h
        return h
    lax.fori_loop(0, S, bwd, h0e)

    txt_ctx = jnp.concatenate([ctxf_ref[...], ctxb_ref[...]], axis=-1)  # (S, B, CTXT)
    img_ctx = img_ctx_ref[...]                                          # (S_img, B, CIMG)
    mask    = src_mask_ref[...]                                         # (S, B, 1)

    # ---- (c) time-invariant projections: ctx2ctx (both branches) + dec0 x@Wi ----
    for t in range(S):
        txtp_ref[t] = jnp.dot(txt_ctx[t], at_c2c[...], preferred_element_type=F32)
    for t in range(S_img):
        imgp_ref[t] = jnp.dot(img_ctx_ref[t], ai_c2c[...], preferred_element_type=F32)
    for t in range(T):
        gy_ref[t] = jnp.dot(trg_emb_ref[t], d0_wi[...], preferred_element_type=F32) + d0_bi[...]

    txt_ctx_p = txtp_ref[...]
    img_ctx_p = imgp_ref[...]

    # ---- (d) dec_init = 'mean_ctx' ----
    # Mask padded timesteps in the numerator (packed-seq outputs are zero there);
    # clamp the denominator so an all-pad column cannot divide by zero.
    denom    = jnp.maximum(jnp.sum(mask, axis=0), 1.0)                  # (B, 1)
    mean_ctx = jnp.sum(txt_ctx * mask, axis=0) / denom                  # (B, CTXT)
    h0 = jnp.tanh(jnp.dot(mean_ctx, w_init[...], preferred_element_type=F32) + b_init[...])

    # ---- (e) MLP attention (att_bottleneck='ctx', att_activ='tanh') ----
    def mlp_attention(ctx, ctx_p, h2c_ref, mlp_ref, c2h_ref, msk, h1):
        hp = jnp.dot(h1, h2c_ref[...], preferred_element_type=F32)      # (B, C)
        scores = jnp.sum(jnp.tanh(ctx_p + hp[None, :, :]) * mlp_ref[...],
                         axis=-1, keepdims=True)                        # (S, B, 1)
        if msk is not None:
            scores = jnp.where(msk > 0.0, scores, -1e8)                 # masked_fill
        m = jnp.max(scores, axis=0, keepdims=True)
        e = jnp.exp(scores - m)
        alpha = e / jnp.sum(e, axis=0, keepdims=True)                   # softmax over time
        z = jnp.sum(alpha * ctx, axis=0)                                # (B, C)
        return jnp.dot(z, c2h_ref[...], preferred_element_type=F32)     # (B, DEC)

    # ---- (f) conditional multimodal decoder recurrence ----
    def dec_step(t, h):
        h1 = _gru_from_gates(gy_ref[t], h, d0_wh, d0_bh, H_dec)         # dec0
        z_t = (mlp_attention(txt_ctx, txt_ctx_p, at_h2c, at_mlp, at_c2h, mask, h1)
               + mlp_attention(img_ctx, img_ctx_p, ai_h2c, ai_mlp, ai_c2h, None, h1))
        gz = jnp.dot(z_t, d1_wi[...], preferred_element_type=F32) + d1_bi[...]
        h2 = _gru_from_gates(gz, h1, d1_wh, d1_bh, H_dec)               # dec1
        h2_ref[t] = h2
        return h2
    lax.fori_loop(0, T, dec_step, h0)

    # ---- (g) output head + NLL(sum, ignore_index=0), off the serial chain ----
    total = jnp.zeros((1, 1), F32)
    for t in range(T):
        logit = jnp.tanh(jnp.dot(h2_ref[t], w_ho[...], preferred_element_type=F32) + b_ho[...])
        out = jnp.dot(logit, w_op[...], preferred_element_type=F32) + b_op[...]
        m = jnp.max(out, axis=-1, keepdims=True)
        lse = m + jnp.log(jnp.sum(jnp.exp(out - m), axis=-1, keepdims=True))
        log_p = out - lse                                               # (B, NTRG)
        # one-hot targets for y_{t+1} already carry the ignore_index=0 mask
        total = total - jnp.sum(log_p * tgt_oh_ref[t], keepdims=True)
    loss_ref[...] = total


# ------------------------------- full forward --------------------------------
def amnmt_forward(params, src_tokens, trg_tokens, img_feats):
    """src_tokens: (S_SRC, B) int32, trg_tokens: (S_TRG, B) int32,
    img_feats: (B, S_IMG, CIMG) float32 (pre-extracted conv features)."""
    p = params
    T = trg_tokens.shape[0] - 1

    # embedding lookups / one-hot targets are gather-style glue outside the kernel
    src_emb  = jnp.take(p['src_emb'], src_tokens, axis=0)               # (S_SRC, B, EMB)
    trg_emb  = jnp.take(p['trg_emb'], trg_tokens, axis=0)               # (S_TRG, B, EMB)
    src_mask = (src_tokens != 0).astype(F32)[:, :, None]                # (S_SRC, B, 1)
    img_ctx  = jnp.transpose(img_feats, (1, 0, 2))                      # (S_IMG, B, CIMG)
    tgt_oh   = jax.nn.one_hot(trg_tokens[1:], NTRG, dtype=F32)          # (T, B, NTRG)
    tgt_oh   = tgt_oh * (trg_tokens[1:] != 0).astype(F32)[..., None]    # ignore_index=0

    loss_sum = pl.pallas_call(
        amnmt_fused_kernel,
        out_shape=jax.ShapeDtypeStruct((1, 1), F32),
        scratch_shapes=[
            pltpu.VMEM((S_SRC, B, 3 * ENC), F32),   # gx fwd (hoisted x@Wi)
            pltpu.VMEM((S_SRC, B, 3 * ENC), F32),   # gx bwd
            pltpu.VMEM((S_SRC, B, ENC), F32),       # ctx fwd
            pltpu.VMEM((S_SRC, B, ENC), F32),       # ctx bwd
            pltpu.VMEM((S_SRC, B, CTXT), F32),      # txt ctx2ctx(ctx)
            pltpu.VMEM((S_IMG, B, CIMG), F32),      # img ctx2ctx(ctx)
            pltpu.VMEM((T, B, 3 * DEC), F32),       # dec0 hoisted y@Wi
            pltpu.VMEM((T, B, DEC), F32),           # per-step h2 for batched head
        ],
    )(src_emb, src_mask, img_ctx, trg_emb, tgt_oh,
      p['enc_wi_f'], p['enc_wh_f'], p['enc_bi_f'], p['enc_bh_f'],
      p['enc_wi_b'], p['enc_wh_b'], p['enc_bi_b'], p['enc_bh_b'],
      p['w_init'], p['b_init'],
      p['dec0_wi'], p['dec0_wh'], p['dec0_bi'], p['dec0_bh'],
      p['dec1_wi'], p['dec1_wh'], p['dec1_bi'], p['dec1_bh'],
      p['att_t_ctx2ctx'], p['att_t_hid2ctx'], p['att_t_mlp'], p['att_t_ctx2hid'],
      p['att_i_ctx2ctx'], p['att_i_hid2ctx'], p['att_i_mlp'], p['att_i_ctx2hid'],
      p['w_ho'], p['b_ho'], p['w_op'], p['b_op'])

    n_tokens = T * trg_tokens.shape[1]   # data[tl][1:].numel() (includes pads, as in PyTorch)
    return loss_sum[0, 0] / n_tokens


# ------------------------------ parameter init --------------------------------
def init_params(key):
    keys = iter(jax.random.split(key, 64))

    def nrm(shape, scale=0.1):
        return (scale * jax.random.normal(next(keys), shape)).astype(F32)

    p = {}
    p['src_emb'] = nrm((NSRC, EMB)).at[0].set(0.0)     # padding_idx=0
    p['trg_emb'] = nrm((NTRG, EMB)).at[0].set(0.0)
    for d in ('f', 'b'):                                # bidirectional encoder GRU, fused gates
        p[f'enc_wi_{d}'] = nrm((EMB, 3 * ENC))
        p[f'enc_wh_{d}'] = nrm((ENC, 3 * ENC))
        p[f'enc_bi_{d}'] = nrm((1, 3 * ENC))
        p[f'enc_bh_{d}'] = nrm((1, 3 * ENC))
    p['w_init'] = nrm((CTXT, DEC)); p['b_init'] = nrm((1, DEC))
    p['dec0_wi'] = nrm((EMB, 3 * DEC)); p['dec0_wh'] = nrm((DEC, 3 * DEC))
    p['dec0_bi'] = nrm((1, 3 * DEC));   p['dec0_bh'] = nrm((1, 3 * DEC))
    p['dec1_wi'] = nrm((DEC, 3 * DEC)); p['dec1_wh'] = nrm((DEC, 3 * DEC))
    p['dec1_bi'] = nrm((1, 3 * DEC));   p['dec1_bh'] = nrm((1, 3 * DEC))
    # MLP attention (att_bottleneck='ctx' -> mid dim == ctx dim; mlp_bias=False)
    p['att_t_ctx2ctx'] = nrm((CTXT, CTXT)); p['att_t_hid2ctx'] = nrm((DEC, CTXT))
    p['att_t_mlp'] = nrm((1, 1, CTXT));     p['att_t_ctx2hid'] = nrm((CTXT, DEC))
    p['att_i_ctx2ctx'] = nrm((CIMG, CIMG)); p['att_i_hid2ctx'] = nrm((DEC, CIMG))
    p['att_i_mlp'] = nrm((1, 1, CIMG));     p['att_i_ctx2hid'] = nrm((CIMG, DEC))
    p['w_ho'] = nrm((DEC, EMB)); p['b_ho'] = jnp.zeros((1, EMB), F32)   # bias_zero=True
    p['w_op'] = nrm((EMB, NTRG)); p['b_op'] = nrm((1, NTRG))
    return p


# ------------------------------------ main ------------------------------------
if __name__ == "__main__":
    key = jax.random.PRNGKey(0)
    k_par, k_src, k_trg, k_img = jax.random.split(key, 4)
    params = init_params(k_par)

    src = jax.random.randint(k_src, (S_SRC, B), 1, NSRC).astype(jnp.int32)
    src = src.at[6:, 1].set(0).at[5:, 3].set(0)        # some source padding -> mask
    trg = jax.random.randint(k_trg, (S_TRG, B), 1, NTRG).astype(jnp.int32)
    trg = trg.at[0].set(1).at[S_TRG - 1, 2].set(0)     # <bos> row + one padded target
    img = jax.random.normal(k_img, (B, S_IMG, CIMG), F32)

    loss = jax.jit(amnmt_forward)(params, src, trg, img)
    loss = jax.block_until_ready(loss)
    assert bool(jnp.isfinite(loss))
    print("KERNEL_OK")
</pallas_src>

<mosaic_0001>
module attributes {stable_mosaic.version = 11 : i64} {
  func.func @amnmt_fused_kernel(%arg0: memref<8x4x32xf32, #tpu.memory_space<vmem>>, %arg1: memref<8x4x1xf32, #tpu.memory_space<vmem>>, %arg2: memref<8x4x64xf32, #tpu.memory_space<vmem>>, %arg3: memref<8x4x32xf32, #tpu.memory_space<vmem>>, %arg4: memref<7x4x64xf32, #tpu.memory_space<vmem>>, %arg5: memref<32x96xf32, #tpu.memory_space<vmem>>, %arg6: memref<32x96xf32, #tpu.memory_space<vmem>>, %arg7: memref<1x96xf32, #tpu.memory_space<vmem>>, %arg8: memref<1x96xf32, #tpu.memory_space<vmem>>, %arg9: memref<32x96xf32, #tpu.memory_space<vmem>>, %arg10: memref<32x96xf32, #tpu.memory_space<vmem>>, %arg11: memref<1x96xf32, #tpu.memory_space<vmem>>, %arg12: memref<1x96xf32, #tpu.memory_space<vmem>>, %arg13: memref<64x64xf32, #tpu.memory_space<vmem>>, %arg14: memref<1x64xf32, #tpu.memory_space<vmem>>, %arg15: memref<32x192xf32, #tpu.memory_space<vmem>>, %arg16: memref<64x192xf32, #tpu.memory_space<vmem>>, %arg17: memref<1x192xf32, #tpu.memory_space<vmem>>, %arg18: memref<1x192xf32, #tpu.memory_space<vmem>>, %arg19: memref<64x192xf32, #tpu.memory_space<vmem>>, %arg20: memref<64x192xf32, #tpu.memory_space<vmem>>, %arg21: memref<1x192xf32, #tpu.memory_space<vmem>>, %arg22: memref<1x192xf32, #tpu.memory_space<vmem>>, %arg23: memref<64x64xf32, #tpu.memory_space<vmem>>, %arg24: memref<64x64xf32, #tpu.memory_space<vmem>>, %arg25: memref<1x1x64xf32, #tpu.memory_space<vmem>>, %arg26: memref<64x64xf32, #tpu.memory_space<vmem>>, %arg27: memref<64x64xf32, #tpu.memory_space<vmem>>, %arg28: memref<64x64xf32, #tpu.memory_space<vmem>>, %arg29: memref<1x1x64xf32, #tpu.memory_space<vmem>>, %arg30: memref<64x64xf32, #tpu.memory_space<vmem>>, %arg31: memref<64x32xf32, #tpu.memory_space<vmem>>, %arg32: memref<1x32xf32, #tpu.memory_space<vmem>>, %arg33: memref<32x64xf32, #tpu.memory_space<vmem>>, %arg34: memref<1x64xf32, #tpu.memory_space<vmem>>, %arg35: memref<1x1xf32, #tpu.memory_space<vmem>>, %arg36: memref<8x4x96xf32, #tpu.memory_space<vmem>>, %arg37: memref<8x4x96xf32, #tpu.memory_space<vmem>>, %arg38: memref<8x4x32xf32, #tpu.memory_space<vmem>>, %arg39: memref<8x4x32xf32, #tpu.memory_space<vmem>>, %arg40: memref<8x4x64xf32, #tpu.memory_space<vmem>>, %arg41: memref<8x4x64xf32, #tpu.memory_space<vmem>>, %arg42: memref<7x4x192xf32, #tpu.memory_space<vmem>>, %arg43: memref<7x4x64xf32, #tpu.memory_space<vmem>>) attributes {dimension_semantics = [], scalar_prefetch = 0 : i64, scratch_operands = 8 : i64, tpu.core_type = #tpu.core_type<tc>} {
    %c0 = arith.constant 0 : index
    %c0_0 = arith.constant 0 : index
    %c0_1 = arith.constant 0 : index
    %0 = vector.load %arg0[%c0, %c0_0, %c0_1] : memref<8x4x32xf32, #tpu.memory_space<vmem>>, vector<1x4x32xf32>
    %1 = vector.shape_cast %0 : vector<1x4x32xf32> to vector<4x32xf32>
    %c0_2 = arith.constant 0 : index
    %c0_3 = arith.constant 0 : index
    %2 = vector.load %arg5[%c0_2, %c0_3] : memref<32x96xf32, #tpu.memory_space<vmem>>, vector<32x96xf32>
    %cst = arith.constant dense<0.000000e+00> : vector<4x96xf32>
    %3 = tpu.matmul %1, %2, %cst {dimension_numbers = #tpu.dot_dimension_numbers<[1], [0], [0], [1], [0, 0, 1, 1], [], []>} : vector<4x32xf32>, vector<32x96xf32>, vector<4x96xf32> -> vector<4x96xf32>
    %c0_4 = arith.constant 0 : index
    %c0_5 = arith.constant 0 : index
    %4 = vector.load %arg7[%c0_4, %c0_5] : memref<1x96xf32, #tpu.memory_space<vmem>>, vector<1x96xf32>
    %5 = vector.broadcast %4 : vector<1x96xf32> to vector<4x96xf32>
    %6 = arith.addf %3, %5 : vector<4x96xf32>
    %c0_6 = arith.constant 0 : index
    %c0_7 = arith.constant 0 : index
    %c0_8 = arith.constant 0 : index
    %7 = vector.load %arg36[%c0_6, %c0_7, %c0_8] : memref<8x4x96xf32, #tpu.memory_space<vmem>>, vector<1x4x96xf32>
    %8 = vector.shape_cast %7 : vector<1x4x96xf32> to vector<4x96xf32>
    %9 = vector.shape_cast %6 : vector<4x96xf32> to vector<1x4x96xf32>
    tpu.vector_store %arg36[%c0_6, %c0_7, %c0_8], %9 {strides = array<i32>} : memref<8x4x96xf32, #tpu.memory_space<vmem>>, vector<1x4x96xf32>,
    %c0_9 = arith.constant 0 : index
    %c0_10 = arith.constant 0 : index
    %10 = vector.load %arg9[%c0_9, %c0_10] : memref<32x96xf32, #tpu.memory_space<vmem>>, vector<32x96xf32>
    %cst_11 = arith.constant dense<0.000000e+00> : vector<4x96xf32>
    %11 = tpu.matmul %1, %10, %cst_11 {dimension_numbers = #tpu.dot_dimension_numbers<[1], [0], [0], [1], [0, 0, 1, 1], [], []>} : vector<4x32xf32>, vector<32x96xf32>, vector<4x96xf32> -> vector<4x96xf32>
    %c0_12 = arith.constant 0 : index
    %c0_13 = arith.constant 0 : index
    %12 = vector.load %arg11[%c0_12, %c0_13] : memref<1x96xf32, #tpu.memory_space<vmem>>, vector<1x96xf32>
    %13 = vector.broadcast %12 : vector<1x96xf32> to vector<4x96xf32>
    %14 = arith.addf %11, %13 : vector<4x96xf32>
    %c0_14 = arith.constant 0 : index
    %c0_15 = arith.constant 0 : index
    %c0_16 = arith.constant 0 : index
    %15 = vector.load %arg37[%c0_14, %c0_15, %c0_16] : memref<8x4x96xf32, #tpu.memory_space<vmem>>, vector<1x4x96xf32>
    %16 = vector.shape_cast %15 : vector<1x4x96xf32> to vector<4x96xf32>
    %17 = vector.shape_cast %14 : vector<4x96xf32> to vector<1x4x96xf32>
    tpu.vector_store %arg37[%c0_14, %c0_15, %c0_16], %17 {strides = array<i32>} : memref<8x4x96xf32, #tpu.memory_space<vmem>>, vector<1x4x96xf32>,
    %c1 = arith.constant 1 : index
    %c0_17 = arith.constant 0 : index
    %c0_18 = arith.constant 0 : index
    %18 = vector.load %arg0[%c1, %c0_17, %c0_18] : memref<8x4x32xf32, #tpu.memory_space<vmem>>, vector<1x4x32xf32>
    %19 = vector.shape_cast %18 : vector<1x4x32xf32> to vector<4x32xf32>
    %c0_19 = arith.constant 0 : index
    %c0_20 = arith.constant 0 : index
    %20 = vector.load %arg5[%c0_19, %c0_20] : memref<32x96xf32, #tpu.memory_space<vmem>>, vector<32x96xf32>
    %cst_21 = arith.constant dense<0.000000e+00> : vector<4x96xf32>
    %21 = tpu.matmul %19, %20, %cst_21 {dimension_numbers = #tpu.dot_dimension_numbers<[1], [0], [0], [1], [0, 0, 1, 1], [], []>} : vector<4x32xf32>, vector<32x96xf32>, vector<4x96xf32> -> vector<4x96xf32>
    %c0_22 = arith.constant 0 : index
    %c0_23 = arith.constant 0 : index
    %22 = vector.load %arg7[%c0_22, %c0_23] : memref<1x96xf32, #tpu.memory_space<vmem>>, vector<1x96xf32>
    %23 = vector.broadcast %22 : vector<1x96xf32> to vector<4x96xf32>
    %24 = arith.addf %21, %23 : vector<4x96xf32>
    %c1_24 = arith.constant 1 : index
    %c0_25 = arith.constant 0 : index
    %c0_26 = arith.constant 0 : index
    %25 = vector.load %arg36[%c1_24, %c0_25, %c0_26] : memref<8x4x96xf32, #tpu.memory_space<vmem>>, vector<1x4x96xf32>
    %26 = vector.shape_cast %25 : vector<1x4x96xf32> to vector<4x96xf32>
    %27 = vector.shape_cast %24 : vector<4x96xf32> to vector<1x4x96xf32>
    tpu.vector_store %arg36[%c1_24, %c0_25, %c0_26], %27 {strides = array<i32>} : memref<8x4x96xf32, #tpu.memory_space<vmem>>, vector<1x4x96xf32>,
    %c0_27 = arith.constant 0 : index
    %c0_28 = arith.constant 0 : index
    %28 = vector.load %arg9[%c0_27, %c0_28] : memref<32x96xf32, #tpu.memory_space<vmem>>, vector<32x96xf32>
    %cst_29 = arith.constant dense<0.000000e+00> : vector<4x96xf32>
    %29 = tpu.matmul %19, %28, %cst_29 {dimension_numbers = #tpu.dot_dimension_numbers<[1], [0], [0], [1], [0, 0, 1, 1], [], []>} : vector<4x32xf32>, vector<32x96xf32>, vector<4x96xf32> -> vector<4x96xf32>
    %c0_30 = arith.constant 0 : index
    %c0_31 = arith.constant 0 : index
    %30 = vector.load %arg11[%c0_30, %c0_31] : memref<1x96xf32, #tpu.memory_space<vmem>>, vector<1x96xf32>
    %31 = vector.broadcast %30 : vector<1x96xf32> to vector<4x96xf32>
    %32 = arith.addf %29, %31 : vector<4x96xf32>
    %c1_32 = arith.constant 1 : index
    %c0_33 = arith.constant 0 : index
    %c0_34 = arith.constant 0 : index
    %33 = vector.load %arg37[%c1_32, %c0_33, %c0_34] : memref<8x4x96xf32, #tpu.memory_space<vmem>>, vector<1x4x96xf32>
    %34 = vector.shape_cast %33 : vector<1x4x96xf32> to vector<4x96xf32>
    %35 = vector.shape_cast %32 : vector<4x96xf32> to vector<1x4x96xf32>
    tpu.vector_store %arg37[%c1_32, %c0_33, %c0_34], %35 {strides = array<i32>} : memref<8x4x96xf32, #tpu.memory_space<vmem>>, vector<1x4x96xf32>,
    %c2 = arith.constant 2 : index
    %c0_35 = arith.constant 0 : index
    %c0_36 = arith.constant 0 : index
    %36 = vector.load %arg0[%c2, %c0_35, %c0_36] : memref<8x4x32xf32, #tpu.memory_space<vmem>>, vector<1x4x32xf32>
    %37 = vector.shape_cast %36 : vector<1x4x32xf32> to vector<4x32xf32>
    %c0_37 = arith.constant 0 : index
    %c0_38 = arith.constant 0 : index
    %38 = vector.load %arg5[%c0_37, %c0_38] : memref<32x96xf32, #tpu.memory_space<vmem>>, vector<32x96xf32>
    %cst_39 = arith.constant dense<0.000000e+00> : vector<4x96xf32>
    %39 = tpu.matmul %37, %38, %cst_39 {dimension_numbers = #tpu.dot_dimension_numbers<[1], [0], [0], [1], [0, 0, 1, 1], [], []>} : vector<4x32xf32>, vector<32x96xf32>, vector<4x96xf32> -> vector<4x96xf32>
    %c0_40 = arith.constant 0 : index
    %c0_41 = arith.constant 0 : index
    %40 = vector.load %arg7[%c0_40, %c0_41] : memref<1x96xf32, #tpu.memory_space<vmem>>, vector<1x96xf32>
    %41 = vector.broadcast %40 : vector<1x96xf32> to vector<4x96xf32>
    %42 = arith.addf %39, %41 : vector<4x96xf32>
    %c2_42 = arith.constant 2 : index
    %c0_43 = arith.constant 0 : index
    %c0_44 = arith.constant 0 : index
    %43 = vector.load %arg36[%c2_42, %c0_43, %c0_44] : memref<8x4x96xf32, #tpu.memory_space<vmem>>, vector<1x4x96xf32>
    %44 = vector.shape_cast %43 : vector<1x4x96xf32> to vector<4x96xf32>
    %45 = vector.shape_cast %42 : vector<4x96xf32> to vector<1x4x96xf32>
    tpu.vector_store %arg36[%c2_42, %c0_43, %c0_44], %45 {strides = array<i32>} : memref<8x4x96xf32, #tpu.memory_space<vmem>>, vector<1x4x96xf32>,
    %c0_45 = arith.constant 0 : index
    %c0_46 = arith.constant 0 : index
    %46 = vector.load %arg9[%c0_45, %c0_46] : memref<32x96xf32, #tpu.memory_space<vmem>>, vector<32x96xf32>
    %cst_47 = arith.constant dense<0.000000e+00> : vector<4x96xf32>
    %47 = tpu.matmul %37, %46, %cst_47 {dimension_numbers = #tpu.dot_dimension_numbers<[1], [0], [0], [1], [0, 0, 1, 1], [], []>} : vector<4x32xf32>, vector<32x96xf32>, vector<4x96xf32> -> vector<4x96xf32>
    %c0_48 = arith.constant 0 : index
    %c0_49 = arith.constant 0 : index
    %48 = vector.load %arg11[%c0_48, %c0_49] : memref<1x96xf32, #tpu.memory_space<vmem>>, vector<1x96xf32>
    %49 = vector.broadcast %48 : vector<1x96xf32> to vector<4x96xf32>
    %50 = arith.addf %47, %49 : vector<4x96xf32>
    %c2_50 = arith.constant 2 : index
    %c0_51 = arith.constant 0 : index
    %c0_52 = arith.constant 0 : index
    %51 = vector.load %arg37[%c2_50, %c0_51, %c0_52] : memref<8x4x96xf32, #tpu.memory_space<vmem>>, vector<1x4x96xf32>
    %52 = vector.shape_cast %51 : vector<1x4x96xf32> to vector<4x96xf32>
    %53 = vector.shape_cast %50 : vector<4x96xf32> to vector<1x4x96xf32>
    tpu.vector_store %arg37[%c2_50, %c0_51, %c0_52], %53 {strides = array<i32>} : memref<8x4x96xf32, #tpu.memory_space<vmem>>, vector<1x4x96xf32>,
    %c3 = arith.constant 3 : index
    %c0_53 = arith.constant 0 : index
    %c0_54 = arith.constant 0 : index
    %54 = vector.load %arg0[%c3, %c0_53, %c0_54] : memref<8x4x32xf32, #tpu.memory_space<vmem>>, vector<1x4x32xf32>
    %55 = vector.shape_cast %54 : vector<1x4x32xf32> to vector<4x32xf32>
    %c0_55 = arith.constant 0 : index
    %c0_56 = arith.constant 0 : index
    %56 = vector.load %arg5[%c0_55, %c0_56] : memref<32x96xf32, #tpu.memory_space<vmem>>, vector<32x96xf32>
    %cst_57 = arith.constant dense<0.000000e+00> : vector<4x96xf32>
    %57 = tpu.matmul %55, %56, %cst_57 {dimension_numbers = #tpu.dot_dimension_numbers<[1], [0], [0], [1], [0, 0, 1, 1], [], []>} : vector<4x32xf32>, vector<32x96xf32>, vector<4x96xf32> -> vector<4x96xf32>
    %c0_58 = arith.constant 0 : index
    %c0_59 = arith.constant 0 : index
    %58 = vector.load %arg7[%c0_58, %c0_59] : memref<1x96xf32, #tpu.memory_space<vmem>>, vector<1x96xf32>
    %59 = vector.broadcast %58 : vector<1x96xf32> to vector<4x96xf32>
    %60 = arith.addf %57, %59 : vector<4x96xf32>
    %c3_60 = arith.constant 3 : index
    %c0_61 = arith.constant 0 : index
    %c0_62 = arith.constant 0 : index
    %61 = vector.load %arg36[%c3_60, %c0_61, %c0_62] : memref<8x4x96xf32, #tpu.memory_space<vmem>>, vector<1x4x96xf32>
    %62 = vector.shape_cast %61 : vector<1x4x96xf32> to vector<4x96xf32>
    %63 = vector.shape_cast %60 : vector<4x96xf32> to vector<1x4x96xf32>
    tpu.vector_store %arg36[%c3_60, %c0_61, %c0_62], %63 {strides = array<i32>} : memref<8x4x96xf32, #tpu.memory_space<vmem>>, vector<1x4x96xf32>,
    %c0_63 = arith.constant 0 : index
    %c0_64 = arith.constant 0 : index
    %64 = vector.load %arg9[%c0_63, %c0_64] : memref<32x96xf32, #tpu.memory_space<vmem>>, vector<32x96xf32>
    %cst_65 = arith.constant dense<0.000000e+00> : vector<4x96xf32>
    %65 = tpu.matmul %55, %64, %cst_65 {dimension_numbers = #tpu.dot_dimension_numbers<[1], [0], [0], [1], [0, 0, 1, 1], [], []>} : vector<4x32xf32>, vector<32x96xf32>, vector<4x96xf32> -> vector<4x96xf32>
    %c0_66 = arith.constant 0 : index
    %c0_67 = arith.constant 0 : index
    %66 = vector.load %arg11[%c0_66, %c0_67] : memref<1x96xf32, #tpu.memory_space<vmem>>, vector<1x96xf32>
    %67 = vector.broadcast %66 : vector<1x96xf32> to vector<4x96xf32>
    %68 = arith.addf %65, %67 : vector<4x96xf32>
    %c3_68 = arith.constant 3 : index
    %c0_69 = arith.constant 0 : index
    %c0_70 = arith.constant 0 : index
    %69 = vector.load %arg37[%c3_68, %c0_69, %c0_70] : memref<8x4x96xf32, #tpu.memory_space<vmem>>, vector<1x4x96xf32>
    %70 = vector.shape_cast %69 : vector<1x4x96xf32> to vector<4x96xf32>
    %71 = vector.shape_cast %68 : vector<4x96xf32> to vector<1x4x96xf32>
    tpu.vector_store %arg37[%c3_68, %c0_69, %c0_70], %71 {strides = array<i32>} : memref<8x4x96xf32, #tpu.memory_space<vmem>>, vector<1x4x96xf32>,
    %c4 = arith.constant 4 : index
    %c0_71 = arith.constant 0 : index
    %c0_72 = arith.constant 0 : index
    %72 = vector.load %arg0[%c4, %c0_71, %c0_72] : memref<8x4x32xf32, #tpu.memory_space<vmem>>, vector<1x4x32xf32>
    %73 = vector.shape_cast %72 : vector<1x4x32xf32> to vector<4x32xf32>
    %c0_73 = arith.constant 0 : index
    %c0_74 = arith.constant 0 : index
    %74 = vector.load %arg5[%c0_73, %c0_74] : memref<32x96xf32, #tpu.memory_space<vmem>>, vector<32x96xf32>
    %cst_75 = arith.constant dense<0.000000e+00> : vector<4x96xf32>
    %75 = tpu.matmul %73, %74, %cst_75 {dimension_numbers = #tpu.dot_dimension_numbers<[1], [0], [0], [1], [0, 0, 1, 1], [], []>} : vector<4x32xf32>, vector<32x96xf32>, vector<4x96xf32> -> vector<4x96xf32>
    %c0_76 = arith.constant 0 : index
    %c0_77 = arith.constant 0 : index
    %76 = vector.load %arg7[%c0_76, %c0_77] : memref<1x96xf32, #tpu.memory_space<vmem>>, vector<1x96xf32>
    %77 = vector.broadcast %76 : vector<1x96xf32> to vector<4x96xf32>
    %78 = arith.addf %75, %77 : vector<4x96xf32>
    %c4_78 = arith.constant 4 : index
    %c0_79 = arith.constant 0 : index
    %c0_80 = arith.constant 0 : index
    %79 = vector.load %arg36[%c4_78, %c0_79, %c0_80] : memref<8x4x96xf32, #tpu.memory_space<vmem>>, vector<1x4x96xf32>
    %80 = vector.shape_cast %79 : vector<1x4x96xf32> to vector<4x96xf32>
    %81 = vector.shape_cast %78 : vector<4x96xf32> to vector<1x4x96xf32>
    tpu.vector_store %arg36[%c4_78, %c0_79, %c0_80], %81 {strides = array<i32>} : memref<8x4x96xf32, #tpu.memory_space<vmem>>, vector<1x4x96xf32>,
    %c0_81 = arith.constant 0 : index
    %c0_82 = arith.constant 0 : index
    %82 = vector.load %arg9[%c0_81, %c0_82] : memref<32x96xf32, #tpu.memory_space<vmem>>, vector<32x96xf32>
    %cst_83 = arith.constant dense<0.000000e+00> : vector<4x96xf32>
    %83 = tpu.matmul %73, %82, %cst_83 {dimension_numbers = #tpu.dot_dimension_numbers<[1], [0], [0], [1], [0, 0, 1, 1], [], []>} : vector<4x32xf32>, vector<32x96xf32>, vector<4x96xf32> -> vector<4x96xf32>
    %c0_84 = arith.constant 0 : index
    %c0_85 = arith.constant 0 : index
    %84 = vector.load %arg11[%c0_84, %c0_85] : memref<1x96xf32, #tpu.memory_space<vmem>>, vector<1x96xf32>
    %85 = vector.broadcast %84 : vector<1x96xf32> to vector<4x96xf32>
    %86 = arith.addf %83, %85 : vector<4x96xf32>
    %c4_86 = arith.constant 4 : index
    %c0_87 = arith.constant 0 : index
    %c0_88 = arith.constant 0 : index
    %87 = vector.load %arg37[%c4_86, %c0_87, %c0_88] : memref<8x4x96xf32, #tpu.memory_space<vmem>>, vector<1x4x96xf32>
    %88 = vector.shape_cast %87 : vector<1x4x96xf32> to vector<4x96xf32>
    %89 = vector.shape_cast %86 : vector<4x96xf32> to vector<1x4x96xf32>
    tpu.vector_store %arg37[%c4_86, %c0_87, %c0_88], %89 {strides = array<i32>} : memref<8x4x96xf32, #tpu.memory_space<vmem>>, vector<1x4x96xf32>,
    %c5 = arith.constant 5 : index
    %c0_89 = arith.constant 0 : index
    %c0_90 = arith.constant 0 : index
    %90 = vector.load %arg0[%c5, %c0_89, %c0_90] : memref<8x4x32xf32, #tpu.memory_space<vmem>>, vector<1x4x32xf32>
    %91 = vector.shape_cast %90 : vector<1x4x32xf32> to vector<4x32xf32>
    %c0_91 = arith.constant 0 : index
    %c0_92 = arith.constant 0 : index
    %92 = vector.load %arg5[%c0_91, %c0_92] : memref<32x96xf32, #tpu.memory_space<vmem>>, vector<32x96xf32>
    %cst_93 = arith.constant dense<0.000000e+00> : vector<4x96xf32>
    %93 = tpu.matmul %91, %92, %cst_93 {dimension_numbers = #tpu.dot_dimension_numbers<[1], [0], [0], [1], [0, 0, 1, 1], [], []>} : vector<4x32xf32>, vector<32x96xf32>, vector<4x96xf32> -> vector<4x96xf32>
    %c0_94 = arith.constant 0 : index
    %c0_95 = arith.constant 0 : index
    %94 = vector.load %arg7[%c0_94, %c0_95] : memref<1x96xf32, #tpu.memory_space<vmem>>, vector<1x96xf32>
    %95 = vector.broadcast %94 : vector<1x96xf32> to vector<4x96xf32>
    %96 = arith.addf %93, %95 : vector<4x96xf32>
    %c5_96 = arith.constant 5 : index
    %c0_97 = arith.constant 0 : index
    %c0_98 = arith.constant 0 : index
    %97 = vector.load %arg36[%c5_96, %c0_97, %c0_98] : memref<8x4x96xf32, #tpu.memory_space<vmem>>, vector<1x4x96xf32>
    %98 = vector.shape_cast %97 : vector<1x4x96xf32> to vector<4x96xf32>
    %99 = vector.shape_cast %96 : vector<4x96xf32> to vector<1x4x96xf32>
    tpu.vector_store %arg36[%c5_96, %c0_97, %c0_98], %99 {strides = array<i32>} : memref<8x4x96xf32, #tpu.memory_space<vmem>>, vector<1x4x96xf32>,
    %c0_99 = arith.constant 0 : index
    %c0_100 = arith.constant 0 : index
    %100 = vector.load %arg9[%c0_99, %c0_100] : memref<32x96xf32, #tpu.memory_space<vmem>>, vector<32x96xf32>
    %cst_101 = arith.constant dense<0.000000e+00> : vector<4x96xf32>
    %101 = tpu.matmul %91, %100, %cst_101 {dimension_numbers = #tpu.dot_dimension_numbers<[1], [0], [0], [1], [0, 0, 1, 1], [], []>} : vector<4x32xf32>, vector<32x96xf32>, vector<4x96xf32> -> vector<4x96xf32>
    %c0_102 = arith.constant 0 : index
    %c0_103 = arith.constant 0 : index
    %102 = vector.load %arg11[%c0_102, %c0_103] : memref<1x96xf32, #tpu.memory_space<vmem>>, vector<1x96xf32>
    %103 = vector.broadcast %102 : vector<1x96xf32> to vector<4x96xf32>
    %104 = arith.addf %101, %103 : vector<4x96xf32>
    %c5_104 = arith.constant 5 : index
    %c0_105 = arith.constant 0 : index
    %c0_106 = arith.constant 0 : index
    %105 = vector.load %arg37[%c5_104, %c0_105, %c0_106] : memref<8x4x96xf32, #tpu.memory_space<vmem>>, vector<1x4x96xf32>
    %106 = vector.shape_cast %105 : vector<1x4x96xf32> to vector<4x96xf32>
    %107 = vector.shape_cast %104 : vector<4x96xf32> to vector<1x4x96xf32>
    tpu.vector_store %arg37[%c5_104, %c0_105, %c0_106], %107 {strides = array<i32>} : memref<8x4x96xf32, #tpu.memory_space<vmem>>, vector<1x4x96xf32>,
    %c6 = arith.constant 6 : index
    %c0_107 = arith.constant 0 : index
    %c0_108 = arith.constant 0 : index
    %108 = vector.load %arg0[%c6, %c0_107, %c0_108] : memref<8x4x32xf32, #tpu.memory_space<vmem>>, vector<1x4x32xf32>
    %109 = vector.shape_cast %108 : vector<1x4x32xf32> to vector<4x32xf32>
    %c0_109 = arith.constant 0 : index
    %c0_110 = arith.constant 0 : index
    %110 = vector.load %arg5[%c0_109, %c0_110] : memref<32x96xf32, #tpu.memory_space<vmem>>, vector<32x96xf32>
    %cst_111 = arith.constant dense<0.000000e+00> : vector<4x96xf32>
    %111 = tpu.matmul %109, %110, %cst_111 {dimension_numbers = #tpu.dot_dimension_numbers<[1], [0], [0], [1], [0, 0, 1, 1], [], []>} : vector<4x32xf32>, vector<32x96xf32>, vector<4x96xf32> -> vector<4x96xf32>
    %c0_112 = arith.constant 0 : index
    %c0_113 = arith.constant 0 : index
    %112 = vector.load %arg7[%c0_112, %c0_113] : memref<1x96xf32, #tpu.memory_space<vmem>>, vector<1x96xf32>
    %113 = vector.broadcast %112 : vector<1x96xf32> to vector<4x96xf32>
    %114 = arith.addf %111, %113 : vector<4x96xf32>
    %c6_114 = arith.constant 6 : index
    %c0_115 = arith.constant 0 : index
    %c0_116 = arith.constant 0 : index
    %115 = vector.load %arg36[%c6_114, %c0_115, %c0_116] : memref<8x4x96xf32, #tpu.memory_space<vmem>>, vector<1x4x96xf32>
    %116 = vector.shape_cast %115 : vector<1x4x96xf32> to vector<4x96xf32>
    %117 = vector.shape_cast %114 : vector<4x96xf32> to vector<1x4x96xf32>
    tpu.vector_store %arg36[%c6_114, %c0_115, %c0_116], %117 {strides = array<i32>} : memref<8x4x96xf32, #tpu.memory_space<vmem>>, vector<1x4x96xf32>,
    %c0_117 = arith.constant 0 : index
    %c0_118 = arith.constant 0 : index
    %118 = vector.load %arg9[%c0_117, %c0_118] : memref<32x96xf32, #tpu.memory_space<vmem>>, vector<32x96xf32>
    %cst_119 = arith.constant dense<0.000000e+00> : vector<4x96xf32>
    %119 = tpu.matmul %109, %118, %cst_119 {dimension_numbers = #tpu.dot_dimension_numbers<[1], [0], [0], [1], [0, 0, 1, 1], [], []>} : vector<4x32xf32>, vector<32x96xf32>, vector<4x96xf32> -> vector<4x96xf32>
    %c0_120 = arith.constant 0 : index
    %c0_121 = arith.constant 0 : index
    %120 = vector.load %arg11[%c0_120, %c0_121] : memref<1x96xf32, #tpu.memory_space<vmem>>, vector<1x96xf32>
    %121 = vector.broadcast %120 : vector<1x96xf32> to vector<4x96xf32>
    %122 = arith.addf %119, %121 : vector<4x96xf32>
    %c6_122 = arith.constant 6 : index
    %c0_123 = arith.constant 0 : index
    %c0_124 = arith.constant 0 : index
    %123 = vector.load %arg37[%c6_122, %c0_123, %c0_124] : memref<8x4x96xf32, #tpu.memory_space<vmem>>, vector<1x4x96xf32>
    %124 = vector.shape_cast %123 : vector<1x4x96xf32> to vector<4x96xf32>
    %125 = vector.shape_cast %122 : vector<4x96xf32> to vector<1x4x96xf32>
    tpu.vector_store %arg37[%c6_122, %c0_123, %c0_124], %125 {strides = array<i32>} : memref<8x4x96xf32, #tpu.memory_space<vmem>>, vector<1x4x96xf32>,
    %c7 = arith.constant 7 : index
    %c0_125 = arith.constant 0 : index
    %c0_126 = arith.constant 0 : index
    %126 = vector.load %arg0[%c7, %c0_125, %c0_126] : memref<8x4x32xf32, #tpu.memory_space<vmem>>, vector<1x4x32xf32>
    %127 = vector.shape_cast %126 : vector<1x4x32xf32> to vector<4x32xf32>
    %c0_127 = arith.constant 0 : index
    %c0_128 = arith.constant 0 : index
    %128 = vector.load %arg5[%c0_127, %c0_128] : memref<32x96xf32, #tpu.memory_space<vmem>>, vector<32x96xf32>
    %cst_129 = arith.constant dense<0.000000e+00> : vector<4x96xf32>
    %129 = tpu.matmul %127, %128, %cst_129 {dimension_numbers = #tpu.dot_dimension_numbers<[1], [0], [0], [1], [0, 0, 1, 1], [], []>} : vector<4x32xf32>, vector<32x96xf32>, vector<4x96xf32> -> vector<4x96xf32>
    %c0_130 = arith.constant 0 : index
    %c0_131 = arith.constant 0 : index
    %130 = vector.load %arg7[%c0_130, %c0_131] : memref<1x96xf32, #tpu.memory_space<vmem>>, vector<1x96xf32>
    %131 = vector.broadcast %130 : vector<1x96xf32> to vector<4x96xf32>
    %132 = arith.addf %129, %131 : vector<4x96xf32>
    %c7_132 = arith.constant 7 : index
    %c0_133 = arith.constant 0 : index
    %c0_134 = arith.constant 0 : index
    %133 = vector.load %arg36[%c7_132, %c0_133, %c0_134] : memref<8x4x96xf32, #tpu.memory_space<vmem>>, vector<1x4x96xf32>
    %134 = vector.shape_cast %133 : vector<1x4x96xf32> to vector<4x96xf32>
    %135 = vector.shape_cast %132 : vector<4x96xf32> to vector<1x4x96xf32>
    tpu.vector_store %arg36[%c7_132, %c0_133, %c0_134], %135 {strides = array<i32>} : memref<8x4x96xf32, #tpu.memory_space<vmem>>, vector<1x4x96xf32>,
    %c0_135 = arith.constant 0 : index
    %c0_136 = arith.constant 0 : index
    %136 = vector.load %arg9[%c0_135, %c0_136] : memref<32x96xf32, #tpu.memory_space<vmem>>, vector<32x96xf32>
    %cst_137 = arith.constant dense<0.000000e+00> : vector<4x96xf32>
    %137 = tpu.matmul %127, %136, %cst_137 {dimension_numbers = #tpu.dot_dimension_numbers<[1], [0], [0], [1], [0, 0, 1, 1], [], []>} : vector<4x32xf32>, vector<32x96xf32>, vector<4x96xf32> -> vector<4x96xf32>
    %c0_138 = arith.constant 0 : index
    %c0_139 = arith.constant 0 : index
    %138 = vector.load %arg11[%c0_138, %c0_139] : memref<1x96xf32, #tpu.memory_space<vmem>>, vector<1x96xf32>
    %139 = vector.broadcast %138 : vector<1x96xf32> to vector<4x96xf32>
    %140 = arith.addf %137, %139 : vector<4x96xf32>
    %c7_140 = arith.constant 7 : index
    %c0_141 = arith.constant 0 : index
    %c0_142 = arith.constant 0 : index
    %141 = vector.load %arg37[%c7_140, %c0_141, %c0_142] : memref<8x4x96xf32, #tpu.memory_space<vmem>>, vector<1x4x96xf32>
    %142 = vector.shape_cast %141 : vector<1x4x96xf32> to vector<4x96xf32>
    %143 = vector.shape_cast %140 : vector<4x96xf32> to vector<1x4x96xf32>
    tpu.vector_store %arg37[%c7_140, %c0_141, %c0_142], %143 {strides = array<i32>} : memref<8x4x96xf32, #tpu.memory_space<vmem>>, vector<1x4x96xf32>,
    %cst_143 = arith.constant 0.000000e+00 : f32
    %144 = vector.broadcast %cst_143 : f32 to vector<4x32xf32>
    %c0_i32 = arith.constant 0 : i32
    %c8_i32 = arith.constant 8 : i32
    %145 = arith.addi %c0_i32, %c8_i32 : i32
    %c1_i32 = arith.constant 1 : i32
    %146 = scf.for %arg44 = %c0_i32 to %145 step %c1_i32 iter_args(%arg45 = %144) -> (vector<4x32xf32>)  : i32 {
      %587 = arith.index_cast %arg44 : i32 to index
      %c0_511 = arith.constant 0 : index
      %c0_512 = arith.constant 0 : index
      %588 = vector.load %arg36[%587, %c0_511, %c0_512] : memref<8x4x96xf32, #tpu.memory_space<vmem>>, vector<1x4x96xf32>
      %589 = vector.shape_cast %588 : vector<1x4x96xf32> to vector<4x96xf32>
      %c0_513 = arith.constant 0 : index
      %c0_514 = arith.constant 0 : index
      %590 = vector.load %arg6[%c0_513, %c0_514] : memref<32x96xf32, #tpu.memory_space<vmem>>, vector<32x96xf32>
      %cst_515 = arith.constant dense<0.000000e+00> : vector<4x96xf32>
      %591 = tpu.matmul %arg45, %590, %cst_515 {dimension_numbers = #tpu.dot_dimension_numbers<[1], [0], [0], [1], [0, 0, 1, 1], [], []>} : vector<4x32xf32>, vector<32x96xf32>, vector<4x96xf32> -> vector<4x96xf32>
      %c0_516 = arith.constant 0 : index
      %c0_517 = arith.constant 0 : index
      %592 = vector.load %arg8[%c0_516, %c0_517] : memref<1x96xf32, #tpu.memory_space<vmem>>, vector<1x96xf32>
      %593 = vector.broadcast %592 : vector<1x96xf32> to vector<4x96xf32>
      %594 = arith.addf %591, %593 : vector<4x96xf32>
      %595 = vector.extract_strided_slice %589 {offsets = [0, 0], sizes = [4, 32], strides = [1, 1]} : vector<4x96xf32> to vector<4x32xf32>
      %596 = vector.extract_strided_slice %594 {offsets = [0, 0], sizes = [4, 32], strides = [1, 1]} : vector<4x96xf32> to vector<4x32xf32>
      %597 = arith.addf %595, %596 : vector<4x32xf32>
      %598 = arith.negf %597 : vector<4x32xf32>
      %599 = math.exp %598 : vector<4x32xf32>
      %cst_518 = arith.constant 1.000000e+00 : f32
      %600 = vector.broadcast %cst_518 : f32 to vector<4x32xf32>
      %601 = arith.addf %600, %599 : vector<4x32xf32>
      %602 = arith.divf %600, %601 : vector<4x32xf32>
      %603 = vector.extract_strided_slice %589 {offsets = [0, 32], sizes = [4, 32], strides = [1, 1]} : vector<4x96xf32> to vector<4x32xf32>
      %604 = vector.extract_strided_slice %594 {offsets = [0, 32], sizes = [4, 32], strides = [1, 1]} : vector<4x96xf32> to vector<4x32xf32>
      %605 = arith.addf %603, %604 : vector<4x32xf32>
      %606 = arith.negf %605 : vector<4x32xf32>
      %607 = math.exp %606 : vector<4x32xf32>
      %cst_519 = arith.constant 1.000000e+00 : f32
      %608 = vector.broadcast %cst_519 : f32 to vector<4x32xf32>
      %609 = arith.addf %608, %607 : vector<4x32xf32>
      %610 = arith.divf %608, %609 : vector<4x32xf32>
      %611 = vector.extract_strided_slice %589 {offsets = [0, 64], sizes = [4, 32], strides = [1, 1]} : vector<4x96xf32> to vector<4x32xf32>
      %612 = vector.extract_strided_slice %594 {offsets = [0, 64], sizes = [4, 32], strides = [1, 1]} : vector<4x96xf32> to vector<4x32xf32>
      %613 = arith.mulf %602, %612 : vector<4x32xf32>
      %614 = arith.addf %611, %613 : vector<4x32xf32>
      %615 = math.tanh %614 : vector<4x32xf32>
      %cst_520 = arith.constant 1.000000e+00 : f32
      %616 = vector.broadcast %cst_520 : f32 to vector<4x32xf32>
      %617 = arith.subf %616, %610 : vector<4x32xf32>
      %618 = arith.mulf %617, %615 : vector<4x32xf32>
      %619 = arith.mulf %610, %arg45 : vector<4x32xf32>
      %620 = arith.addf %618, %619 : vector<4x32xf32>
      %621 = arith.index_cast %arg44 : i32 to index
      %c0_521 = arith.constant 0 : index
      %c0_522 = arith.constant 0 : index
      %622 = vector.load %arg38[%621, %c0_521, %c0_522] : memref<8x4x32xf32, #tpu.memory_space<vmem>>, vector<1x4x32xf32>
      %623 = vector.shape_cast %622 : vector<1x4x32xf32> to vector<4x32xf32>
      %624 = vector.shape_cast %620 : vector<4x32xf32> to vector<1x4x32xf32>
      tpu.vector_store %arg38[%621, %c0_521, %c0_522], %624 {strides = array<i32>} : memref<8x4x32xf32, #tpu.memory_space<vmem>>, vector<1x4x32xf32>,
      scf.yield %620 : vector<4x32xf32>
    }
    %c8_i32_144 = arith.constant 8 : i32
    %c0_i32_145 = arith.constant 0 : i32
    %c8_i32_146 = arith.constant 8 : i32
    %147 = arith.addi %c0_i32_145, %c8_i32_146 : i32
    %c1_i32_147 = arith.constant 1 : i32
    %148 = scf.for %arg44 = %c0_i32_145 to %147 step %c1_i32_147 iter_args(%arg45 = %144) -> (vector<4x32xf32>)  : i32 {
      %c7_i32_511 = arith.constant 7 : i32
      %587 = arith.subi %c7_i32_511, %arg44 : i32
      %588 = arith.index_cast %587 : i32 to index
      %c0_512 = arith.constant 0 : index
      %c0_513 = arith.constant 0 : index
      %589 = vector.load %arg37[%588, %c0_512, %c0_513] : memref<8x4x96xf32, #tpu.memory_space<vmem>>, vector<1x4x96xf32>
      %590 = vector.shape_cast %589 : vector<1x4x96xf32> to vector<4x96xf32>
      %c0_514 = arith.constant 0 : index
      %c0_515 = arith.constant 0 : index
      %591 = vector.load %arg10[%c0_514, %c0_515] : memref<32x96xf32, #tpu.memory_space<vmem>>, vector<32x96xf32>
      %cst_516 = arith.constant dense<0.000000e+00> : vector<4x96xf32>
      %592 = tpu.matmul %arg45, %591, %cst_516 {dimension_numbers = #tpu.dot_dimension_numbers<[1], [0], [0], [1], [0, 0, 1, 1], [], []>} : vector<4x32xf32>, vector<32x96xf32>, vector<4x96xf32> -> vector<4x96xf32>
      %c0_517 = arith.constant 0 : index
      %c0_518 = arith.constant 0 : index
      %593 = vector.load %arg12[%c0_517, %c0_518] : memref<1x96xf32, #tpu.memory_space<vmem>>, vector<1x96xf32>
      %594 = vector.broadcast %593 : vector<1x96xf32> to vector<4x96xf32>
      %595 = arith.addf %592, %594 : vector<4x96xf32>
      %596 = vector.extract_strided_slice %590 {offsets = [0, 0], sizes = [4, 32], strides = [1, 1]} : vector<4x96xf32> to vector<4x32xf32>
      %597 = vector.extract_strided_slice %595 {offsets = [0, 0], sizes = [4, 32], strides = [1, 1]} : vector<4x96xf32> to vector<4x32xf32>
      %598 = arith.addf %596, %597 : vector<4x32xf32>
      %599 = arith.negf %598 : vector<4x32xf32>
      %600 = math.exp %599 : vector<4x32xf32>
      %cst_519 = arith.constant 1.000000e+00 : f32
      %601 = vector.broadcast %cst_519 : f32 to vector<4x32xf32>
      %602 = arith.addf %601, %600 : vector<4x32xf32>
      %603 = arith.divf %601, %602 : vector<4x32xf32>
      %604 = vector.extract_strided_slice %590 {offsets = [0, 32], sizes = [4, 32], strides = [1, 1]} : vector<4x96xf32> to vector<4x32xf32>
      %605 = vector.extract_strided_slice %595 {offsets = [0, 32], sizes = [4, 32], strides = [1, 1]} : vector<4x96xf32> to vector<4x32xf32>
      %606 = arith.addf %604, %605 : vector<4x32xf32>
      %607 = arith.negf %606 : vector<4x32xf32>
      %608 = math.exp %607 : vector<4x32xf32>
      %cst_520 = arith.constant 1.000000e+00 : f32
      %609 = vector.broadcast %cst_520 : f32 to vector<4x32xf32>
      %610 = arith.addf %609, %608 : vector<4x32xf32>
      %611 = arith.divf %609, %610 : vector<4x32xf32>
      %612 = vector.extract_strided_slice %590 {offsets = [0, 64], sizes = [4, 32], strides = [1, 1]} : vector<4x96xf32> to vector<4x32xf32>
      %613 = vector.extract_strided_slice %595 {offsets = [0, 64], sizes = [4, 32], strides = [1, 1]} : vector<4x96xf32> to vector<4x32xf32>
      %614 = arith.mulf %603, %613 : vector<4x32xf32>
      %615 = arith.addf %612, %614 : vector<4x32xf32>
      %616 = math.tanh %615 : vector<4x32xf32>
      %cst_521 = arith.constant 1.000000e+00 : f32
      %617 = vector.broadcast %cst_521 : f32 to vector<4x32xf32>
      %618 = arith.subf %617, %611 : vector<4x32xf32>
      %619 = arith.mulf %618, %616 : vector<4x32xf32>
      %620 = arith.mulf %611, %arg45 : vector<4x32xf32>
      %621 = arith.addf %619, %620 : vector<4x32xf32>
      %622 = arith.index_cast %587 : i32 to index
      %c0_522 = arith.constant 0 : index
      %c0_523 = arith.constant 0 : index
      %623 = vector.load %arg39[%622, %c0_522, %c0_523] : memref<8x4x32xf32, #tpu.memory_space<vmem>>, vector<1x4x32xf32>
      %624 = vector.shape_cast %623 : vector<1x4x32xf32> to vector<4x32xf32>
      %625 = vector.shape_cast %621 : vector<4x32xf32> to vector<1x4x32xf32>
      tpu.vector_store %arg39[%622, %c0_522, %c0_523], %625 {strides = array<i32>} : memref<8x4x32xf32, #tpu.memory_space<vmem>>, vector<1x4x32xf32>,
      scf.yield %621 : vector<4x32xf32>
    }
    %c8_i32_148 = arith.constant 8 : i32
    %c0_149 = arith.constant 0 : index
    %c0_150 = arith.constant 0 : index
    %c0_151 = arith.constant 0 : index
    %149 = vector.load %arg38[%c0_149, %c0_150, %c0_151] : memref<8x4x32xf32, #tpu.memory_space<vmem>>, vector<8x4x32xf32>
    %c0_152 = arith.constant 0 : index
    %c0_153 = arith.constant 0 : index
    %c0_154 = arith.constant 0 : index
    %150 = vector.load %arg39[%c0_152, %c0_153, %c0_154] : memref<8x4x32xf32, #tpu.memory_space<vmem>>, vector<8x4x32xf32>
    %151 = tpu.concatenate %149, %150 in 2 : vector<8x4x32xf32>, vector<8x4x32xf32> -> vector<8x4x64xf32>
    %c0_155 = arith.constant 0 : index
    %c0_156 = arith.constant 0 : index
    %c0_157 = arith.constant 0 : index
    %152 = vector.load %arg2[%c0_155, %c0_156, %c0_157] : memref<8x4x64xf32, #tpu.memory_space<vmem>>, vector<8x4x64xf32>
    %c0_158 = arith.constant 0 : index
    %c0_159 = arith.constant 0 : index
    %c0_160 = arith.constant 0 : index
    %153 = vector.load %arg1[%c0_158, %c0_159, %c0_160] : memref<8x4x1xf32, #tpu.memory_space<vmem>>, vector<8x4x1xf32>
    %154 = vector.extract_strided_slice %151 {offsets = [0, 0, 0], sizes = [1, 4, 64], strides = [1, 1, 1]} : vector<8x4x64xf32> to vector<1x4x64xf32>
    %155 = vector.shape_cast %154 : vector<1x4x64xf32> to vector<4x64xf32>
    %c0_161 = arith.constant 0 : index
    %c0_162 = arith.constant 0 : index
    %156 = vector.load %arg23[%c0_161, %c0_162] : memref<64x64xf32, #tpu.memory_space<vmem>>, vector<64x64xf32>
    %cst_163 = arith.constant dense<0.000000e+00> : vector<4x64xf32>
    %157 = tpu.matmul %155, %156, %cst_163 {dimension_numbers = #tpu.dot_dimension_numbers<[1], [0], [0], [1], [0, 0, 1, 1], [], []>} : vector<4x64xf32>, vector<64x64xf32>, vector<4x64xf32> -> vector<4x64xf32>
    %c0_164 = arith.constant 0 : index
    %c0_165 = arith.constant 0 : index
    %c0_166 = arith.constant 0 : index
    %158 = vector.load %arg40[%c0_164, %c0_165, %c0_166] : memref<8x4x64xf32, #tpu.memory_space<vmem>>, vector<1x4x64xf32>
    %159 = vector.shape_cast %158 : vector<1x4x64xf32> to vector<4x64xf32>
    %160 = vector.shape_cast %157 : vector<4x64xf32> to vector<1x4x64xf32>
    tpu.vector_store %arg40[%c0_164, %c0_165, %c0_166], %160 {strides = array<i32>} : memref<8x4x64xf32, #tpu.memory_space<vmem>>, vector<1x4x64xf32>,
    %161 = vector.extract_strided_slice %151 {offsets = [1, 0, 0], sizes = [1, 4, 64], strides = [1, 1, 1]} : vector<8x4x64xf32> to vector<1x4x64xf32>
    %162 = vector.shape_cast %161 : vector<1x4x64xf32> to vector<4x64xf32>
    %c0_167 = arith.constant 0 : index
    %c0_168 = arith.constant 0 : index
    %163 = vector.load %arg23[%c0_167, %c0_168] : memref<64x64xf32, #tpu.memory_space<vmem>>, vector<64x64xf32>
    %cst_169 = arith.constant dense<0.000000e+00> : vector<4x64xf32>
    %164 = tpu.matmul %162, %163, %cst_169 {dimension_numbers = #tpu.dot_dimension_numbers<[1], [0], [0], [1], [0, 0, 1, 1], [], []>} : vector<4x64xf32>, vector<64x64xf32>, vector<4x64xf32> -> vector<4x64xf32>
    %c1_170 = arith.constant 1 : index
    %c0_171 = arith.constant 0 : index
    %c0_172 = arith.constant 0 : index
    %165 = vector.load %arg40[%c1_170, %c0_171, %c0_172] : memref<8x4x64xf32, #tpu.memory_space<vmem>>, vector<1x4x64xf32>
    %166 = vector.shape_cast %165 : vector<1x4x64xf32> to vector<4x64xf32>
    %167 = vector.shape_cast %164 : vector<4x64xf32> to vector<1x4x64xf32>
    tpu.vector_store %arg40[%c1_170, %c0_171, %c0_172], %167 {strides = array<i32>} : memref<8x4x64xf32, #tpu.memory_space<vmem>>, vector<1x4x64xf32>,
    %168 = vector.extract_strided_slice %151 {offsets = [2, 0, 0], sizes = [1, 4, 64], strides = [1, 1, 1]} : vector<8x4x64xf32> to vector<1x4x64xf32>
    %169 = vector.shape_cast %168 : vector<1x4x64xf32> to vector<4x64xf32>
    %c0_173 = arith.constant 0 : index
    %c0_174 = arith.constant 0 : index
    %170 = vector.load %arg23[%c0_173, %c0_174] : memref<64x64xf32, #tpu.memory_space<vmem>>, vector<64x64xf32>
    %cst_175 = arith.constant dense<0.000000e+00> : vector<4x64xf32>
    %171 = tpu.matmul %169, %170, %cst_175 {dimension_numbers = #tpu.dot_dimension_numbers<[1], [0], [0], [1], [0, 0, 1, 1], [], []>} : vector<4x64xf32>, vector<64x64xf32>, vector<4x64xf32> -> vector<4x64xf32>
    %c2_176 = arith.constant 2 : index
    %c0_177 = arith.constant 0 : index
    %c0_178 = arith.constant 0 : index
    %172 = vector.load %arg40[%c2_176, %c0_177, %c0_178] : memref<8x4x64xf32, #tpu.memory_space<vmem>>, vector<1x4x64xf32>
    %173 = vector.shape_cast %172 : vector<1x4x64xf32> to vector<4x64xf32>
    %174 = vector.shape_cast %171 : vector<4x64xf32> to vector<1x4x64xf32>
    tpu.vector_store %arg40[%c2_176, %c0_177, %c0_178], %174 {strides = array<i32>} : memref<8x4x64xf32, #tpu.memory_space<vmem>>, vector<1x4x64xf32>,
    %175 = vector.extract_strided_slice %151 {offsets = [3, 0, 0], sizes = [1, 4, 64], strides = [1, 1, 1]} : vector<8x4x64xf32> to vector<1x4x64xf32>
    %176 = vector.shape_cast %175 : vector<1x4x64xf32> to vector<4x64xf32>
    %c0_179 = arith.constant 0 : index
    %c0_180 = arith.constant 0 : index
    %177 = vector.load %arg23[%c0_179, %c0_180] : memref<64x64xf32, #tpu.memory_space<vmem>>, vector<64x64xf32>
    %cst_181 = arith.constant dense<0.000000e+00> : vector<4x64xf32>
    %178 = tpu.matmul %176, %177, %cst_181 {dimension_numbers = #tpu.dot_dimension_numbers<[1], [0], [0], [1], [0, 0, 1, 1], [], []>} : vector<4x64xf32>, vector<64x64xf32>, vector<4x64xf32> -> vector<4x64xf32>
    %c3_182 = arith.constant 3 : index
    %c0_183 = arith.constant 0 : index
    %c0_184 = arith.constant 0 : index
    %179 = vector.load %arg40[%c3_182, %c0_183, %c0_184] : memref<8x4x64xf32, #tpu.memory_space<vmem>>, vector<1x4x64xf32>
    %180 = vector.shape_cast %179 : vector<1x4x64xf32> to vector<4x64xf32>
    %181 = vector.shape_cast %178 : vector<4x64xf32> to vector<1x4x64xf32>
    tpu.vector_store %arg40[%c3_182, %c0_183, %c0_184], %181 {strides = array<i32>} : memref<8x4x64xf32, #tpu.memory_space<vmem>>, vector<1x4x64xf32>,
    %182 = vector.extract_strided_slice %151 {offsets = [4, 0, 0], sizes = [1, 4, 64], strides = [1, 1, 1]} : vector<8x4x64xf32> to vector<1x4x64xf32>
    %183 = vector.shape_cast %182 : vector<1x4x64xf32> to vector<4x64xf32>
    %c0_185 = arith.constant 0 : index
    %c0_186 = arith.constant 0 : index
    %184 = vector.load %arg23[%c0_185, %c0_186] : memref<64x64xf32, #tpu.memory_space<vmem>>, vector<64x64xf32>
    %cst_187 = arith.constant dense<0.000000e+00> : vector<4x64xf32>
    %185 = tpu.matmul %183, %184, %cst_187 {dimension_numbers = #tpu.dot_dimension_numbers<[1], [0], [0], [1], [0, 0, 1, 1], [], []>} : vector<4x64xf32>, vector<64x64xf32>, vector<4x64xf32> -> vector<4x64xf32>
    %c4_188 = arith.constant 4 : index
    %c0_189 = arith.constant 0 : index
    %c0_190 = arith.constant 0 : index
    %186 = vector.load %arg40[%c4_188, %c0_189, %c0_190] : memref<8x4x64xf32, #tpu.memory_space<vmem>>, vector<1x4x64xf32>
    %187 = vector.shape_cast %186 : vector<1x4x64xf32> to vector<4x64xf32>
    %188 = vector.shape_cast %185 : vector<4x64xf32> to vector<1x4x64xf32>
    tpu.vector_store %arg40[%c4_188, %c0_189, %c0_190], %188 {strides = array<i32>} : memref<8x4x64xf32, #tpu.memory_space<vmem>>, vector<1x4x64xf32>,
    %189 = vector.extract_strided_slice %151 {offsets = [5, 0, 0], sizes = [1, 4, 64], strides = [1, 1, 1]} : vector<8x4x64xf32> to vector<1x4x64xf32>
    %190 = vector.shape_cast %189 : vector<1x4x64xf32> to vector<4x64xf32>
    %c0_191 = arith.constant 0 : index
    %c0_192 = arith.constant 0 : index
    %191 = vector.load %arg23[%c0_191, %c0_192] : memref<64x64xf32, #tpu.memory_space<vmem>>, vector<64x64xf32>
    %cst_193 = arith.constant dense<0.000000e+00> : vector<4x64xf32>
    %192 = tpu.matmul %190, %191, %cst_193 {dimension_numbers = #tpu.dot_dimension_numbers<[1], [0], [0], [1], [0, 0, 1, 1], [], []>} : vector<4x64xf32>, vector<64x64xf32>, vector<4x64xf32> -> vector<4x64xf32>
    %c5_194 = arith.constant 5 : index
    %c0_195 = arith.constant 0 : index
    %c0_196 = arith.constant 0 : index
    %193 = vector.load %arg40[%c5_194, %c0_195, %c0_196] : memref<8x4x64xf32, #tpu.memory_space<vmem>>, vector<1x4x64xf32>
    %194 = vector.shape_cast %193 : vector<1x4x64xf32> to vector<4x64xf32>
    %195 = vector.shape_cast %192 : vector<4x64xf32> to vector<1x4x64xf32>
    tpu.vector_store %arg40[%c5_194, %c0_195, %c0_196], %195 {strides = array<i32>} : memref<8x4x64xf32, #tpu.memory_space<vmem>>, vector<1x4x64xf32>,
    %196 = vector.extract_strided_slice %151 {offsets = [6, 0, 0], sizes = [1, 4, 64], strides = [1, 1, 1]} : vector<8x4x64xf32> to vector<1x4x64xf32>
    %197 = vector.shape_cast %196 : vector<1x4x64xf32> to vector<4x64xf32>
    %c0_197 = arith.constant 0 : index
    %c0_198 = arith.constant 0 : index
    %198 = vector.load %arg23[%c0_197, %c0_198] : memref<64x64xf32, #tpu.memory_space<vmem>>, vector<64x64xf32>
    %cst_199 = arith.constant dense<0.000000e+00> : vector<4x64xf32>
    %199 = tpu.matmul %197, %198, %cst_199 {dimension_numbers = #tpu.dot_dimension_numbers<[1], [0], [0], [1], [0, 0, 1, 1], [], []>} : vector<4x64xf32>, vector<64x64xf32>, vector<4x64xf32> -> vector<4x64xf32>
    %c6_200 = arith.constant 6 : index
    %c0_201 = arith.constant 0 : index
    %c0_202 = arith.constant 0 : index
    %200 = vector.load %arg40[%c6_200, %c0_201, %c0_202] : memref<8x4x64xf32, #tpu.memory_space<vmem>>, vector<1x4x64xf32>
    %201 = vector.shape_cast %200 : vector<1x4x64xf32> to vector<4x64xf32>
    %202 = vector.shape_cast %199 : vector<4x64xf32> to vector<1x4x64xf32>
    tpu.vector_store %arg40[%c6_200, %c0_201, %c0_202], %202 {strides = array<i32>} : memref<8x4x64xf32, #tpu.memory_space<vmem>>, vector<1x4x64xf32>,
    %203 = vector.extract_strided_slice %151 {offsets = [7, 0, 0], sizes = [1, 4, 64], strides = [1, 1, 1]} : vector<8x4x64xf32> to vector<1x4x64xf32>
    %204 = vector.shape_cast %203 : vector<1x4x64xf32> to vector<4x64xf32>
    %c0_203 = arith.constant 0 : index
    %c0_204 = arith.constant 0 : index
    %205 = vector.load %arg23[%c0_203, %c0_204] : memref<64x64xf32, #tpu.memory_space<vmem>>, vector<64x64xf32>
    %cst_205 = arith.constant dense<0.000000e+00> : vector<4x64xf32>
    %206 = tpu.matmul %204, %205, %cst_205 {dimension_numbers = #tpu.dot_dimension_numbers<[1], [0], [0], [1], [0, 0, 1, 1], [], []>} : vector<4x64xf32>, vector<64x64xf32>, vector<4x64xf32> -> vector<4x64xf32>
    %c7_206 = arith.constant 7 : index
    %c0_207 = arith.constant 0 : index
    %c0_208 = arith.constant 0 : index
    %207 = vector.load %arg40[%c7_206, %c0_207, %c0_208] : memref<8x4x64xf32, #tpu.memory_space<vmem>>, vector<1x4x64xf32>
    %208 = vector.shape_cast %207 : vector<1x4x64xf32> to vector<4x64xf32>
    %209 = vector.shape_cast %206 : vector<4x64xf32> to vector<1x4x64xf32>
    tpu.vector_store %arg40[%c7_206, %c0_207, %c0_208], %209 {strides = array<i32>} : memref<8x4x64xf32, #tpu.memory_space<vmem>>, vector<1x4x64xf32>,
    %c0_209 = arith.constant 0 : index
    %c0_210 = arith.constant 0 : index
    %c0_211 = arith.constant 0 : index
    %210 = vector.load %arg2[%c0_209, %c0_210, %c0_211] : memref<8x4x64xf32, #tpu.memory_space<vmem>>, vector<1x4x64xf32>
    %211 = vector.shape_cast %210 : vector<1x4x64xf32> to vector<4x64xf32>
    %c0_212 = arith.constant 0 : index
    %c0_213 = arith.constant 0 : index
    %212 = vector.load %arg27[%c0_212, %c0_213] : memref<64x64xf32, #tpu.memory_space<vmem>>, vector<64x64xf32>
    %cst_214 = arith.constant dense<0.000000e+00> : vector<4x64xf32>
    %213 = tpu.matmul %211, %212, %cst_214 {dimension_numbers = #tpu.dot_dimension_numbers<[1], [0], [0], [1], [0, 0, 1, 1], [], []>} : vector<4x64xf32>, vector<64x64xf32>, vector<4x64xf32> -> vector<4x64xf32>
    %c0_215 = arith.constant 0 : index
    %c0_216 = arith.constant 0 : index
    %c0_217 = arith.constant 0 : index
    %214 = vector.load %arg41[%c0_215, %c0_216, %c0_217] : memref<8x4x64xf32, #tpu.memory_space<vmem>>, vector<1x4x64xf32>
    %215 = vector.shape_cast %214 : vector<1x4x64xf32> to vector<4x64xf32>
    %216 = vector.shape_cast %213 : vector<4x64xf32> to vector<1x4x64xf32>
    tpu.vector_store %arg41[%c0_215, %c0_216, %c0_217], %216 {strides = array<i32>} : memref<8x4x64xf32, #tpu.memory_space<vmem>>, vector<1x4x64xf32>,
    %c1_218 = arith.constant 1 : index
    %c0_219 = arith.constant 0 : index
    %c0_220 = arith.constant 0 : index
    %217 = vector.load %arg2[%c1_218, %c0_219, %c0_220] : memref<8x4x64xf32, #tpu.memory_space<vmem>>, vector<1x4x64xf32>
    %218 = vector.shape_cast %217 : vector<1x4x64xf32> to vector<4x64xf32>
    %c0_221 = arith.constant 0 : index
    %c0_222 = arith.constant 0 : index
    %219 = vector.load %arg27[%c0_221, %c0_222] : memref<64x64xf32, #tpu.memory_space<vmem>>, vector<64x64xf32>
    %cst_223 = arith.constant dense<0.000000e+00> : vector<4x64xf32>
    %220 = tpu.matmul %218, %219, %cst_223 {dimension_numbers = #tpu.dot_dimension_numbers<[1], [0], [0], [1], [0, 0, 1, 1], [], []>} : vector<4x64xf32>, vector<64x64xf32>, vector<4x64xf32> -> vector<4x64xf32>
    %c1_224 = arith.constant 1 : index
    %c0_225 = arith.constant 0 : index
    %c0_226 = arith.constant 0 : index
    %221 = vector.load %arg41[%c1_224, %c0_225, %c0_226] : memref<8x4x64xf32, #tpu.memory_space<vmem>>, vector<1x4x64xf32>
    %222 = vector.shape_cast %221 : vector<1x4x64xf32> to vector<4x64xf32>
    %223 = vector.shape_cast %220 : vector<4x64xf32> to vector<1x4x64xf32>
    tpu.vector_store %arg41[%c1_224, %c0_225, %c0_226], %223 {strides = array<i32>} : memref<8x4x64xf32, #tpu.memory_space<vmem>>, vector<1x4x64xf32>,
    %c2_227 = arith.constant 2 : index
    %c0_228 = arith.constant 0 : index
    %c0_229 = arith.constant 0 : index
    %224 = vector.load %arg2[%c2_227, %c0_228, %c0_229] : memref<8x4x64xf32, #tpu.memory_space<vmem>>, vector<1x4x64xf32>
    %225 = vector.shape_cast %224 : vector<1x4x64xf32> to vector<4x64xf32>
    %c0_230 = arith.constant 0 : index
    %c0_231 = arith.constant 0 : index
    %226 = vector.load %arg27[%c0_230, %c0_231] : memref<64x64xf32, #tpu.memory_space<vmem>>, vector<64x64xf32>
    %cst_232 = arith.constant dense<0.000000e+00> : vector<4x64xf32>
    %227 = tpu.matmul %225, %226, %cst_232 {dimension_numbers = #tpu.dot_dimension_numbers<[1], [0], [0], [1], [0, 0, 1, 1], [], []>} : vector<4x64xf32>, vector<64x64xf32>, vector<4x64xf32> -> vector<4x64xf32>
    %c2_233 = arith.constant 2 : index
    %c0_234 = arith.constant 0 : index
    %c0_235 = arith.constant 0 : index
    %228 = vector.load %arg41[%c2_233, %c0_234, %c0_235] : memref<8x4x64xf32, #tpu.memory_space<vmem>>, vector<1x4x64xf32>
    %229 = vector.shape_cast %228 : vector<1x4x64xf32> to vector<4x64xf32>
    %230 = vector.shape_cast %227 : vector<4x64xf32> to vector<1x4x64xf32>
    tpu.vector_store %arg41[%c2_233, %c0_234, %c0_235], %230 {strides = array<i32>} : memref<8x4x64xf32, #tpu.memory_space<vmem>>, vector<1x4x64xf32>,
    %c3_236 = arith.constant 3 : index
    %c0_237 = arith.constant 0 : index
    %c0_238 = arith.constant 0 : index
    %231 = vector.load %arg2[%c3_236, %c0_237, %c0_238] : memref<8x4x64xf32, #tpu.memory_space<vmem>>, vector<1x4x64xf32>
    %232 = vector.shape_cast %231 : vector<1x4x64xf32> to vector<4x64xf32>
    %c0_239 = arith.constant 0 : index
    %c0_240 = arith.constant 0 : index
    %233 = vector.load %arg27[%c0_239, %c0_240] : memref<64x64xf32, #tpu.memory_space<vmem>>, vector<64x64xf32>
    %cst_241 = arith.constant dense<0.000000e+00> : vector<4x64xf32>
    %234 = tpu.matmul %232, %233, %cst_241 {dimension_numbers = #tpu.dot_dimension_numbers<[1], [0], [0], [1], [0, 0, 1, 1], [], []>} : vector<4x64xf32>, vector<64x64xf32>, vector<4x64xf32> -> vector<4x64xf32>
    %c3_242 = arith.constant 3 : index
    %c0_243 = arith.constant 0 : index
    %c0_244 = arith.constant 0 : index
    %235 = vector.load %arg41[%c3_242, %c0_243, %c0_244] : memref<8x4x64xf32, #tpu.memory_space<vmem>>, vector<1x4x64xf32>
    %236 = vector.shape_cast %235 : vector<1x4x64xf32> to vector<4x64xf32>
    %237 = vector.shape_cast %234 : vector<4x64xf32> to vector<1x4x64xf32>
    tpu.vector_store %arg41[%c3_242, %c0_243, %c0_244], %237 {strides = array<i32>} : memref<8x4x64xf32, #tpu.memory_space<vmem>>, vector<1x4x64xf32>,
    %c4_245 = arith.constant 4 : index
    %c0_246 = arith.constant 0 : index
    %c0_247 = arith.constant 0 : index
    %238 = vector.load %arg2[%c4_245, %c0_246, %c0_247] : memref<8x4x64xf32, #tpu.memory_space<vmem>>, vector<1x4x64xf32>
    %239 = vector.shape_cast %238 : vector<1x4x64xf32> to vector<4x64xf32>
    %c0_248 = arith.constant 0 : index
    %c0_249 = arith.constant 0 : index
    %240 = vector.load %arg27[%c0_248, %c0_249] : memref<64x64xf32, #tpu.memory_space<vmem>>, vector<64x64xf32>
    %cst_250 = arith.constant dense<0.000000e+00> : vector<4x64xf32>
    %241 = tpu.matmul %239, %240, %cst_250 {dimension_numbers = #tpu.dot_dimension_numbers<[1], [0], [0], [1], [0, 0, 1, 1], [], []>} : vector<4x64xf32>, vector<64x64xf32>, vector<4x64xf32> -> vector<4x64xf32>
    %c4_251 = arith.constant 4 : index
    %c0_252 = arith.constant 0 : index
    %c0_253 = arith.constant 0 : index
    %242 = vector.load %arg41[%c4_251, %c0_252, %c0_253] : memref<8x4x64xf32, #tpu.memory_space<vmem>>, vector<1x4x64xf32>
    %243 = vector.shape_cast %242 : vector<1x4x64xf32> to vector<4x64xf32>
    %244 = vector.shape_cast %241 : vector<4x64xf32> to vector<1x4x64xf32>
    tpu.vector_store %arg41[%c4_251, %c0_252, %c0_253], %244 {strides = array<i32>} : memref<8x4x64xf32, #tpu.memory_space<vmem>>, vector<1x4x64xf32>,
    %c5_254 = arith.constant 5 : index
    %c0_255 = arith.constant 0 : index
    %c0_256 = arith.constant 0 : index
    %245 = vector.load %arg2[%c5_254, %c0_255, %c0_256] : memref<8x4x64xf32, #tpu.memory_space<vmem>>, vector<1x4x64xf32>
    %246 = vector.shape_cast %245 : vector<1x4x64xf32> to vector<4x64xf32>
    %c0_257 = arith.constant 0 : index
    %c0_258 = arith.constant 0 : index
    %247 = vector.load %arg27[%c0_257, %c0_258] : memref<64x64xf32, #tpu.memory_space<vmem>>, vector<64x64xf32>
    %cst_259 = arith.constant dense<0.000000e+00> : vector<4x64xf32>
    %248 = tpu.matmul %246, %247, %cst_259 {dimension_numbers = #tpu.dot_dimension_numbers<[1], [0], [0], [1], [0, 0, 1, 1], [], []>} : vector<4x64xf32>, vector<64x64xf32>, vector<4x64xf32> -> vector<4x64xf32>
    %c5_260 = arith.constant 5 : index
    %c0_261 = arith.constant 0 : index
    %c0_262 = arith.constant 0 : index
    %249 = vector.load %arg41[%c5_260, %c0_261, %c0_262] : memref<8x4x64xf32, #tpu.memory_space<vmem>>, vector<1x4x64xf32>
    %250 = vector.shape_cast %249 : vector<1x4x64xf32> to vector<4x64xf32>
    %251 = vector.shape_cast %248 : vector<4x64xf32> to vector<1x4x64xf32>
    tpu.vector_store %arg41[%c5_260, %c0_261, %c0_262], %251 {strides = array<i32>} : memref<8x4x64xf32, #tpu.memory_space<vmem>>, vector<1x4x64xf32>,
    %c6_263 = arith.constant 6 : index
    %c0_264 = arith.constant 0 : index
    %c0_265 = arith.constant 0 : index
    %252 = vector.load %arg2[%c6_263, %c0_264, %c0_265] : memref<8x4x64xf32, #tpu.memory_space<vmem>>, vector<1x4x64xf32>
    %253 = vector.shape_cast %252 : vector<1x4x64xf32> to vector<4x64xf32>
    %c0_266 = arith.constant 0 : index
    %c0_267 = arith.constant 0 : index
    %254 = vector.load %arg27[%c0_266, %c0_267] : memref<64x64xf32, #tpu.memory_space<vmem>>, vector<64x64xf32>
    %cst_268 = arith.constant dense<0.000000e+00> : vector<4x64xf32>
    %255 = tpu.matmul %253, %254, %cst_268 {dimension_numbers = #tpu.dot_dimension_numbers<[1], [0], [0], [1], [0, 0, 1, 1], [], []>} : vector<4x64xf32>, vector<64x64xf32>, vector<4x64xf32> -> vector<4x64xf32>
    %c6_269 = arith.constant 6 : index
    %c0_270 = arith.constant 0 : index
    %c0_271 = arith.constant 0 : index
    %256 = vector.load %arg41[%c6_269, %c0_270, %c0_271] : memref<8x4x64xf32, #tpu.memory_space<vmem>>, vector<1x4x64xf32>
    %257 = vector.shape_cast %256 : vector<1x4x64xf32> to vector<4x64xf32>
    %258 = vector.shape_cast %255 : vector<4x64xf32> to vector<1x4x64xf32>
    tpu.vector_store %arg41[%c6_269, %c0_270, %c0_271], %258 {strides = array<i32>} : memref<8x4x64xf32, #tpu.memory_space<vmem>>, vector<1x4x64xf32>,
    %c7_272 = arith.constant 7 : index
    %c0_273 = arith.constant 0 : index
    %c0_274 = arith.constant 0 : index
    %259 = vector.load %arg2[%c7_272, %c0_273, %c0_274] : memref<8x4x64xf32, #tpu.memory_space<vmem>>, vector<1x4x64xf32>
    %260 = vector.shape_cast %259 : vector<1x4x64xf32> to vector<4x64xf32>
    %c0_275 = arith.constant 0 : index
    %c0_276 = arith.constant 0 : index
    %261 = vector.load %arg27[%c0_275, %c0_276] : memref<64x64xf32, #tpu.memory_space<vmem>>, vector<64x64xf32>
    %cst_277 = arith.constant dense<0.000000e+00> : vector<4x64xf32>
    %262 = tpu.matmul %260, %261, %cst_277 {dimension_numbers = #tpu.dot_dimension_numbers<[1], [0], [0], [1], [0, 0, 1, 1], [], []>} : vector<4x64xf32>, vector<64x64xf32>, vector<4x64xf32> -> vector<4x64xf32>
    %c7_278 = arith.constant 7 : index
    %c0_279 = arith.constant 0 : index
    %c0_280 = arith.constant 0 : index
    %263 = vector.load %arg41[%c7_278, %c0_279, %c0_280] : memref<8x4x64xf32, #tpu.memory_space<vmem>>, vector<1x4x64xf32>
    %264 = vector.shape_cast %263 : vector<1x4x64xf32> to vector<4x64xf32>
    %265 = vector.shape_cast %262 : vector<4x64xf32> to vector<1x4x64xf32>
    tpu.vector_store %arg41[%c7_278, %c0_279, %c0_280], %265 {strides = array<i32>} : memref<8x4x64xf32, #tpu.memory_space<vmem>>, vector<1x4x64xf32>,
    %c0_281 = arith.constant 0 : index
    %c0_282 = arith.constant 0 : index
    %c0_283 = arith.constant 0 : index
    %266 = vector.load %arg3[%c0_281, %c0_282, %c0_283] : memref<8x4x32xf32, #tpu.memory_space<vmem>>, vector<1x4x32xf32>
    %267 = vector.shape_cast %266 : vector<1x4x32xf32> to vector<4x32xf32>
    %c0_284 = arith.constant 0 : index
    %c0_285 = arith.constant 0 : index
    %268 = vector.load %arg15[%c0_284, %c0_285] : memref<32x192xf32, #tpu.memory_space<vmem>>, vector<32x192xf32>
    %cst_286 = arith.constant dense<0.000000e+00> : vector<4x192xf32>
    %269 = tpu.matmul %267, %268, %cst_286 {dimension_numbers = #tpu.dot_dimension_numbers<[1], [0], [0], [1], [0, 0, 1, 1], [], []>} : vector<4x32xf32>, vector<32x192xf32>, vector<4x192xf32> -> vector<4x192xf32>
    %c0_287 = arith.constant 0 : index
    %c0_288 = arith.constant 0 : index
    %270 = vector.load %arg17[%c0_287, %c0_288] : memref<1x192xf32, #tpu.memory_space<vmem>>, vector<1x192xf32>
    %271 = vector.broadcast %270 : vector<1x192xf32> to vector<4x192xf32>
    %272 = arith.addf %269, %271 : vector<4x192xf32>
    %c0_289 = arith.constant 0 : index
    %c0_290 = arith.constant 0 : index
    %c0_291 = arith.constant 0 : index
    %273 = vector.load %arg42[%c0_289, %c0_290, %c0_291] : memref<7x4x192xf32, #tpu.memory_space<vmem>>, vector<1x4x192xf32>
    %274 = vector.shape_cast %273 : vector<1x4x192xf32> to vector<4x192xf32>
    %275 = vector.shape_cast %272 : vector<4x192xf32> to vector<1x4x192xf32>
    tpu.vector_store %arg42[%c0_289, %c0_290, %c0_291], %275 {strides = array<i32>} : memref<7x4x192xf32, #tpu.memory_space<vmem>>, vector<1x4x192xf32>,
    %c1_292 = arith.constant 1 : index
    %c0_293 = arith.constant 0 : index
    %c0_294 = arith.constant 0 : index
    %276 = vector.load %arg3[%c1_292, %c0_293, %c0_294] : memref<8x4x32xf32, #tpu.memory_space<vmem>>, vector<1x4x32xf32>
    %277 = vector.shape_cast %276 : vector<1x4x32xf32> to vector<4x32xf32>
    %c0_295 = arith.constant 0 : index
    %c0_296 = arith.constant 0 : index
    %278 = vector.load %arg15[%c0_295, %c0_296] : memref<32x192xf32, #tpu.memory_space<vmem>>, vector<32x192xf32>
    %cst_297 = arith.constant dense<0.000000e+00> : vector<4x192xf32>
    %279 = tpu.matmul %277, %278, %cst_297 {dimension_numbers = #tpu.dot_dimension_numbers<[1], [0], [0], [1], [0, 0, 1, 1], [], []>} : vector<4x32xf32>, vector<32x192xf32>, vector<4x192xf32> -> vector<4x192xf32>
    %c0_298 = arith.constant 0 : index
    %c0_299 = arith.constant 0 : index
    %280 = vector.load %arg17[%c0_298, %c0_299] : memref<1x192xf32, #tpu.memory_space<vmem>>, vector<1x192xf32>
    %281 = vector.broadcast %280 : vector<1x192xf32> to vector<4x192xf32>
    %282 = arith.addf %279, %281 : vector<4x192xf32>
    %c1_300 = arith.constant 1 : index
    %c0_301 = arith.constant 0 : index
    %c0_302 = arith.constant 0 : index
    %283 = vector.load %arg42[%c1_300, %c0_301, %c0_302] : memref<7x4x192xf32, #tpu.memory_space<vmem>>, vector<1x4x192xf32>
    %284 = vector.shape_cast %283 : vector<1x4x192xf32> to vector<4x192xf32>
    %285 = vector.shape_cast %282 : vector<4x192xf32> to vector<1x4x192xf32>
    tpu.vector_store %arg42[%c1_300, %c0_301, %c0_302], %285 {strides = array<i32>} : memref<7x4x192xf32, #tpu.memory_space<vmem>>, vector<1x4x192xf32>,
    %c2_303 = arith.constant 2 : index
    %c0_304 = arith.constant 0 : index
    %c0_305 = arith.constant 0 : index
    %286 = vector.load %arg3[%c2_303, %c0_304, %c0_305] : memref<8x4x32xf32, #tpu.memory_space<vmem>>, vector<1x4x32xf32>
    %287 = vector.shape_cast %286 : vector<1x4x32xf32> to vector<4x32xf32>
    %c0_306 = arith.constant 0 : index
    %c0_307 = arith.constant 0 : index
    %288 = vector.load %arg15[%c0_306, %c0_307] : memref<32x192xf32, #tpu.memory_space<vmem>>, vector<32x192xf32>
    %cst_308 = arith.constant dense<0.000000e+00> : vector<4x192xf32>
    %289 = tpu.matmul %287, %288, %cst_308 {dimension_numbers = #tpu.dot_dimension_numbers<[1], [0], [0], [1], [0, 0, 1, 1], [], []>} : vector<4x32xf32>, vector<32x192xf32>, vector<4x192xf32> -> vector<4x192xf32>
    %c0_309 = arith.constant 0 : index
    %c0_310 = arith.constant 0 : index
    %290 = vector.load %arg17[%c0_309, %c0_310] : memref<1x192xf32, #tpu.memory_space<vmem>>, vector<1x192xf32>
    %291 = vector.broadcast %290 : vector<1x192xf32> to vector<4x192xf32>
    %292 = arith.addf %289, %291 : vector<4x192xf32>
    %c2_311 = arith.constant 2 : index
    %c0_312 = arith.constant 0 : index
    %c0_313 = arith.constant 0 : index
    %293 = vector.load %arg42[%c2_311, %c0_312, %c0_313] : memref<7x4x192xf32, #tpu.memory_space<vmem>>, vector<1x4x192xf32>
    %294 = vector.shape_cast %293 : vector<1x4x192xf32> to vector<4x192xf32>
    %295 = vector.shape_cast %292 : vector<4x192xf32> to vector<1x4x192xf32>
    tpu.vector_store %arg42[%c2_311, %c0_312, %c0_313], %295 {strides = array<i32>} : memref<7x4x192xf32, #tpu.memory_space<vmem>>, vector<1x4x192xf32>,
    %c3_314 = arith.constant 3 : index
    %c0_315 = arith.constant 0 : index
    %c0_316 = arith.constant 0 : index
    %296 = vector.load %arg3[%c3_314, %c0_315, %c0_316] : memref<8x4x32xf32, #tpu.memory_space<vmem>>, vector<1x4x32xf32>
    %297 = vector.shape_cast %296 : vector<1x4x32xf32> to vector<4x32xf32>
    %c0_317 = arith.constant 0 : index
    %c0_318 = arith.constant 0 : index
    %298 = vector.load %arg15[%c0_317, %c0_318] : memref<32x192xf32, #tpu.memory_space<vmem>>, vector<32x192xf32>
    %cst_319 = arith.constant dense<0.000000e+00> : vector<4x192xf32>
    %299 = tpu.matmul %297, %298, %cst_319 {dimension_numbers = #tpu.dot_dimension_numbers<[1], [0], [0], [1], [0, 0, 1, 1], [], []>} : vector<4x32xf32>, vector<32x192xf32>, vector<4x192xf32> -> vector<4x192xf32>
    %c0_320 = arith.constant 0 : index
    %c0_321 = arith.constant 0 : index
    %300 = vector.load %arg17[%c0_320, %c0_321] : memref<1x192xf32, #tpu.memory_space<vmem>>, vector<1x192xf32>
    %301 = vector.broadcast %300 : vector<1x192xf32> to vector<4x192xf32>
    %302 = arith.addf %299, %301 : vector<4x192xf32>
    %c3_322 = arith.constant 3 : index
    %c0_323 = arith.constant 0 : index
    %c0_324 = arith.constant 0 : index
    %303 = vector.load %arg42[%c3_322, %c0_323, %c0_324] : memref<7x4x192xf32, #tpu.memory_space<vmem>>, vector<1x4x192xf32>
    %304 = vector.shape_cast %303 : vector<1x4x192xf32> to vector<4x192xf32>
    %305 = vector.shape_cast %302 : vector<4x192xf32> to vector<1x4x192xf32>
    tpu.vector_store %arg42[%c3_322, %c0_323, %c0_324], %305 {strides = array<i32>} : memref<7x4x192xf32, #tpu.memory_space<vmem>>, vector<1x4x192xf32>,
    %c4_325 = arith.constant 4 : index
    %c0_326 = arith.constant 0 : index
    %c0_327 = arith.constant 0 : index
    %306 = vector.load %arg3[%c4_325, %c0_326, %c0_327] : memref<8x4x32xf32, #tpu.memory_space<vmem>>, vector<1x4x32xf32>
    %307 = vector.shape_cast %306 : vector<1x4x32xf32> to vector<4x32xf32>
    %c0_328 = arith.constant 0 : index
    %c0_329 = arith.constant 0 : index
    %308 = vector.load %arg15[%c0_328, %c0_329] : memref<32x192xf32, #tpu.memory_space<vmem>>, vector<32x192xf32>
    %cst_330 = arith.constant dense<0.000000e+00> : vector<4x192xf32>
    %309 = tpu.matmul %307, %308, %cst_330 {dimension_numbers = #tpu.dot_dimension_numbers<[1], [0], [0], [1], [0, 0, 1, 1], [], []>} : vector<4x32xf32>, vector<32x192xf32>, vector<4x192xf32> -> vector<4x192xf32>
    %c0_331 = arith.constant 0 : index
    %c0_332 = arith.constant 0 : index
    %310 = vector.load %arg17[%c0_331, %c0_332] : memref<1x192xf32, #tpu.memory_space<vmem>>, vector<1x192xf32>
    %311 = vector.broadcast %310 : vector<1x192xf32> to vector<4x192xf32>
    %312 = arith.addf %309, %311 : vector<4x192xf32>
    %c4_333 = arith.constant 4 : index
    %c0_334 = arith.constant 0 : index
    %c0_335 = arith.constant 0 : index
    %313 = vector.load %arg42[%c4_333, %c0_334, %c0_335] : memref<7x4x192xf32, #tpu.memory_space<vmem>>, vector<1x4x192xf32>
    %314 = vector.shape_cast %313 : vector<1x4x192xf32> to vector<4x192xf32>
    %315 = vector.shape_cast %312 : vector<4x192xf32> to vector<1x4x192xf32>
    tpu.vector_store %arg42[%c4_333, %c0_334, %c0_335], %315 {strides = array<i32>} : memref<7x4x192xf32, #tpu.memory_space<vmem>>, vector<1x4x192xf32>,
    %c5_336 = arith.constant 5 : index
    %c0_337 = arith.constant 0 : index
    %c0_338 = arith.constant 0 : index
    %316 = vector.load %arg3[%c5_336, %c0_337, %c0_338] : memref<8x4x32xf32, #tpu.memory_space<vmem>>, vector<1x4x32xf32>
    %317 = vector.shape_cast %316 : vector<1x4x32xf32> to vector<4x32xf32>
    %c0_339 = arith.constant 0 : index
    %c0_340 = arith.constant 0 : index
    %318 = vector.load %arg15[%c0_339, %c0_340] : memref<32x192xf32, #tpu.memory_space<vmem>>, vector<32x192xf32>
    %cst_341 = arith.constant dense<0.000000e+00> : vector<4x192xf32>
    %319 = tpu.matmul %317, %318, %cst_341 {dimension_numbers = #tpu.dot_dimension_numbers<[1], [0], [0], [1], [0, 0, 1, 1], [], []>} : vector<4x32xf32>, vector<32x192xf32>, vector<4x192xf32> -> vector<4x192xf32>
    %c0_342 = arith.constant 0 : index
    %c0_343 = arith.constant 0 : index
    %320 = vector.load %arg17[%c0_342, %c0_343] : memref<1x192xf32, #tpu.memory_space<vmem>>, vector<1x192xf32>
    %321 = vector.broadcast %320 : vector<1x192xf32> to vector<4x192xf32>
    %322 = arith.addf %319, %321 : vector<4x192xf32>
    %c5_344 = arith.constant 5 : index
    %c0_345 = arith.constant 0 : index
    %c0_346 = arith.constant 0 : index
    %323 = vector.load %arg42[%c5_344, %c0_345, %c0_346] : memref<7x4x192xf32, #tpu.memory_space<vmem>>, vector<1x4x192xf32>
    %324 = vector.shape_cast %323 : vector<1x4x192xf32> to vector<4x192xf32>
    %325 = vector.shape_cast %322 : vector<4x192xf32> to vector<1x4x192xf32>
    tpu.vector_store %arg42[%c5_344, %c0_345, %c0_346], %325 {strides = array<i32>} : memref<7x4x192xf32, #tpu.memory_space<vmem>>, vector<1x4x192xf32>,
    %c6_347 = arith.constant 6 : index
    %c0_348 = arith.constant 0 : index
    %c0_349 = arith.constant 0 : index
    %326 = vector.load %arg3[%c6_347, %c0_348, %c0_349] : memref<8x4x32xf32, #tpu.memory_space<vmem>>, vector<1x4x32xf32>
    %327 = vector.shape_cast %326 : vector<1x4x32xf32> to vector<4x32xf32>
    %c0_350 = arith.constant 0 : index
    %c0_351 = arith.constant 0 : index
    %328 = vector.load %arg15[%c0_350, %c0_351] : memref<32x192xf32, #tpu.memory_space<vmem>>, vector<32x192xf32>
    %cst_352 = arith.constant dense<0.000000e+00> : vector<4x192xf32>
    %329 = tpu.matmul %327, %328, %cst_352 {dimension_numbers = #tpu.dot_dimension_numbers<[1], [0], [0], [1], [0, 0, 1, 1], [], []>} : vector<4x32xf32>, vector<32x192xf32>, vector<4x192xf32> -> vector<4x192xf32>
    %c0_353 = arith.constant 0 : index
    %c0_354 = arith.constant 0 : index
    %330 = vector.load %arg17[%c0_353, %c0_354] : memref<1x192xf32, #tpu.memory_space<vmem>>, vector<1x192xf32>
    %331 = vector.broadcast %330 : vector<1x192xf32> to vector<4x192xf32>
    %332 = arith.addf %329, %331 : vector<4x192xf32>
    %c6_355 = arith.constant 6 : index
    %c0_356 = arith.constant 0 : index
    %c0_357 = arith.constant 0 : index
    %333 = vector.load %arg42[%c6_355, %c0_356, %c0_357] : memref<7x4x192xf32, #tpu.memory_space<vmem>>, vector<1x4x192xf32>
    %334 = vector.shape_cast %333 : vector<1x4x192xf32> to vector<4x192xf32>
    %335 = vector.shape_cast %332 : vector<4x192xf32> to vector<1x4x192xf32>
    tpu.vector_store %arg42[%c6_355, %c0_356, %c0_357], %335 {strides = array<i32>} : memref<7x4x192xf32, #tpu.memory_space<vmem>>, vector<1x4x192xf32>,
    %c0_358 = arith.constant 0 : index
    %c0_359 = arith.constant 0 : index
    %c0_360 = arith.constant 0 : index
    %336 = vector.load %arg40[%c0_358, %c0_359, %c0_360] : memref<8x4x64xf32, #tpu.memory_space<vmem>>, vector<8x4x64xf32>
    %c0_361 = arith.constant 0 : index
    %c0_362 = arith.constant 0 : index
    %c0_363 = arith.constant 0 : index
    %337 = vector.load %arg41[%c0_361, %c0_362, %c0_363] : memref<8x4x64xf32, #tpu.memory_space<vmem>>, vector<8x4x64xf32>
    %cst_364 = arith.constant dense<0.000000e+00> : vector<4x1xf32>
    %338 = vector.multi_reduction <add>, %153, %cst_364 [0] : vector<8x4x1xf32> to vector<4x1xf32>
    %cst_365 = arith.constant 1.000000e+00 : f32
    %339 = vector.broadcast %cst_365 : f32 to vector<4x1xf32>
    %340 = arith.maximumf %338, %339 : vector<4x1xf32>
    %341 = vector.broadcast %153 : vector<8x4x1xf32> to vector<8x4x64xf32>
    %342 = arith.mulf %151, %341 : vector<8x4x64xf32>
    %cst_366 = arith.constant dense<0.000000e+00> : vector<4x64xf32>
    %343 = vector.multi_reduction <add>, %342, %cst_366 [0] : vector<8x4x64xf32> to vector<4x64xf32>
    %344 = vector.broadcast %340 : vector<4x1xf32> to vector<4x64xf32>
    %345 = arith.divf %343, %344 : vector<4x64xf32>
    %c0_367 = arith.constant 0 : index
    %c0_368 = arith.constant 0 : index
    %346 = vector.load %arg13[%c0_367, %c0_368] : memref<64x64xf32, #tpu.memory_space<vmem>>, vector<64x64xf32>
    %cst_369 = arith.constant dense<0.000000e+00> : vector<4x64xf32>
    %347 = tpu.matmul %345, %346, %cst_369 {dimension_numbers = #tpu.dot_dimension_numbers<[1], [0], [0], [1], [0, 0, 1, 1], [], []>} : vector<4x64xf32>, vector<64x64xf32>, vector<4x64xf32> -> vector<4x64xf32>
    %c0_370 = arith.constant 0 : index
    %c0_371 = arith.constant 0 : index
    %348 = vector.load %arg14[%c0_370, %c0_371] : memref<1x64xf32, #tpu.memory_space<vmem>>, vector<1x64xf32>
    %349 = vector.broadcast %348 : vector<1x64xf32> to vector<4x64xf32>
    %350 = arith.addf %347, %349 : vector<4x64xf32>
    %351 = math.tanh %350 : vector<4x64xf32>
    %c0_i32_372 = arith.constant 0 : i32
    %c7_i32 = arith.constant 7 : i32
    %352 = arith.addi %c0_i32_372, %c7_i32 : i32
    %c1_i32_373 = arith.constant 1 : i32
    %353 = scf.for %arg44 = %c0_i32_372 to %352 step %c1_i32_373 iter_args(%arg45 = %351) -> (vector<4x64xf32>)  : i32 {
      %587 = arith.index_cast %arg44 : i32 to index
      %c0_511 = arith.constant 0 : index
      %c0_512 = arith.constant 0 : index
      %588 = vector.load %arg42[%587, %c0_511, %c0_512] : memref<7x4x192xf32, #tpu.memory_space<vmem>>, vector<1x4x192xf32>
      %589 = vector.shape_cast %588 : vector<1x4x192xf32> to vector<4x192xf32>
      %c0_513 = arith.constant 0 : index
      %c0_514 = arith.constant 0 : index
      %590 = vector.load %arg16[%c0_513, %c0_514] : memref<64x192xf32, #tpu.memory_space<vmem>>, vector<64x192xf32>
      %cst_515 = arith.constant dense<0.000000e+00> : vector<4x192xf32>
      %591 = tpu.matmul %arg45, %590, %cst_515 {dimension_numbers = #tpu.dot_dimension_numbers<[1], [0], [0], [1], [0, 0, 1, 1], [], []>} : vector<4x64xf32>, vector<64x192xf32>, vector<4x192xf32> -> vector<4x192xf32>
      %c0_516 = arith.constant 0 : index
      %c0_517 = arith.constant 0 : index
      %592 = vector.load %arg18[%c0_516, %c0_517] : memref<1x192xf32, #tpu.memory_space<vmem>>, vector<1x192xf32>
      %593 = vector.broadcast %592 : vector<1x192xf32> to vector<4x192xf32>
      %594 = arith.addf %591, %593 : vector<4x192xf32>
      %595 = vector.extract_strided_slice %589 {offsets = [0, 0], sizes = [4, 64], strides = [1, 1]} : vector<4x192xf32> to vector<4x64xf32>
      %596 = vector.extract_strided_slice %594 {offsets = [0, 0], sizes = [4, 64], strides = [1, 1]} : vector<4x192xf32> to vector<4x64xf32>
      %597 = arith.addf %595, %596 : vector<4x64xf32>
      %598 = arith.negf %597 : vector<4x64xf32>
      %599 = math.exp %598 : vector<4x64xf32>
      %cst_518 = arith.constant 1.000000e+00 : f32
      %600 = vector.broadcast %cst_518 : f32 to vector<4x64xf32>
      %601 = arith.addf %600, %599 : vector<4x64xf32>
      %602 = arith.divf %600, %601 : vector<4x64xf32>
      %603 = vector.extract_strided_slice %589 {offsets = [0, 64], sizes = [4, 64], strides = [1, 1]} : vector<4x192xf32> to vector<4x64xf32>
      %604 = vector.extract_strided_slice %594 {offsets = [0, 64], sizes = [4, 64], strides = [1, 1]} : vector<4x192xf32> to vector<4x64xf32>
      %605 = arith.addf %603, %604 : vector<4x64xf32>
      %606 = arith.negf %605 : vector<4x64xf32>
      %607 = math.exp %606 : vector<4x64xf32>
      %cst_519 = arith.constant 1.000000e+00 : f32
      %608 = vector.broadcast %cst_519 : f32 to vector<4x64xf32>
      %609 = arith.addf %608, %607 : vector<4x64xf32>
      %610 = arith.divf %608, %609 : vector<4x64xf32>
      %611 = vector.extract_strided_slice %589 {offsets = [0, 128], sizes = [4, 64], strides = [1, 1]} : vector<4x192xf32> to vector<4x64xf32>
      %612 = vector.extract_strided_slice %594 {offsets = [0, 128], sizes = [4, 64], strides = [1, 1]} : vector<4x192xf32> to vector<4x64xf32>
      %613 = arith.mulf %602, %612 : vector<4x64xf32>
      %614 = arith.addf %611, %613 : vector<4x64xf32>
      %615 = math.tanh %614 : vector<4x64xf32>
      %cst_520 = arith.constant 1.000000e+00 : f32
      %616 = vector.broadcast %cst_520 : f32 to vector<4x64xf32>
      %617 = arith.subf %616, %610 : vector<4x64xf32>
      %618 = arith.mulf %617, %615 : vector<4x64xf32>
      %619 = arith.mulf %610, %arg45 : vector<4x64xf32>
      %620 = arith.addf %618, %619 : vector<4x64xf32>
      %c0_521 = arith.constant 0 : index
      %c0_522 = arith.constant 0 : index
      %621 = vector.load %arg24[%c0_521, %c0_522] : memref<64x64xf32, #tpu.memory_space<vmem>>, vector<64x64xf32>
      %cst_523 = arith.constant dense<0.000000e+00> : vector<4x64xf32>
      %622 = tpu.matmul %620, %621, %cst_523 {dimension_numbers = #tpu.dot_dimension_numbers<[1], [0], [0], [1], [0, 0, 1, 1], [], []>} : vector<4x64xf32>, vector<64x64xf32>, vector<4x64xf32> -> vector<4x64xf32>
      %623 = vector.shape_cast %622 : vector<4x64xf32> to vector<1x4x64xf32>
      %624 = vector.broadcast %623 : vector<1x4x64xf32> to vector<8x4x64xf32>
      %625 = arith.addf %336, %624 : vector<8x4x64xf32>
      %626 = math.tanh %625 : vector<8x4x64xf32>
      %c0_524 = arith.constant 0 : index
      %c0_525 = arith.constant 0 : index
      %c0_526 = arith.constant 0 : index
      %627 = vector.load %arg25[%c0_524, %c0_525, %c0_526] : memref<1x1x64xf32, #tpu.memory_space<vmem>>, vector<1x1x64xf32>
      %628 = vector.broadcast %627 : vector<1x1x64xf32> to vector<8x4x64xf32>
      %629 = arith.mulf %626, %628 : vector<8x4x64xf32>
      %cst_527 = arith.constant dense<0.000000e+00> : vector<8x4xf32>
      %630 = vector.multi_reduction <add>, %629, %cst_527 [2] : vector<8x4x64xf32> to vector<8x4xf32>
      %631 = vector.shape_cast %630 : vector<8x4xf32> to vector<8x4x1xf32>
      %cst_528 = arith.constant 0.000000e+00 : f32
      %632 = vector.broadcast %cst_528 : f32 to vector<8x4x1xf32>
      %633 = arith.cmpf ogt, %153, %632 : vector<8x4x1xf32>
      %cst_529 = arith.constant -1.000000e+08 : f32
      %634 = vector.broadcast %cst_529 : f32 to vector<8x4x1xf32>
      %635 = arith.select %633, %631, %634 : vector<8x4x1xi1>, vector<8x4x1xf32>
      %cst_530 = arith.constant dense<0xFF800000> : vector<4x1xf32>
      %636 = vector.multi_reduction <maximumf>, %635, %cst_530 [0] : vector<8x4x1xf32> to vector<4x1xf32>
      %637 = vector.shape_cast %636 : vector<4x1xf32> to vector<1x4x1xf32>
      %638 = vector.broadcast %637 : vector<1x4x1xf32> to vector<8x4x1xf32>
      %639 = arith.subf %635, %638 : vector<8x4x1xf32>
      %640 = math.exp %639 : vector<8x4x1xf32>
      %cst_531 = arith.constant dense<0.000000e+00> : vector<4x1xf32>
      %641 = vector.multi_reduction <add>, %640, %cst_531 [0] : vector<8x4x1xf32> to vector<4x1xf32>
      %642 = vector.shape_cast %641 : vector<4x1xf32> to vector<1x4x1xf32>
      %643 = vector.broadcast %642 : vector<1x4x1xf32> to vector<8x4x1xf32>
      %644 = arith.divf %640, %643 : vector<8x4x1xf32>
      %645 = vector.broadcast %644 : vector<8x4x1xf32> to vector<8x4x64xf32>
      %646 = arith.mulf %645, %151 : vector<8x4x64xf32>
      %cst_532 = arith.constant dense<0.000000e+00> : vector<4x64xf32>
      %647 = vector.multi_reduction <add>, %646, %cst_532 [0] : vector<8x4x64xf32> to vector<4x64xf32>
      %c0_533 = arith.constant 0 : index
      %c0_534 = arith.constant 0 : index
      %648 = vector.load %arg26[%c0_533, %c0_534] : memref<64x64xf32, #tpu.memory_space<vmem>>, vector<64x64xf32>
      %cst_535 = arith.constant dense<0.000000e+00> : vector<4x64xf32>
      %649 = tpu.matmul %647, %648, %cst_535 {dimension_numbers = #tpu.dot_dimension_numbers<[1], [0], [0], [1], [0, 0, 1, 1], [], []>} : vector<4x64xf32>, vector<64x64xf32>, vector<4x64xf32> -> vector<4x64xf32>
      %c0_536 = arith.constant 0 : index
      %c0_537 = arith.constant 0 : index
      %650 = vector.load %arg28[%c0_536, %c0_537] : memref<64x64xf32, #tpu.memory_space<vmem>>, vector<64x64xf32>
      %cst_538 = arith.constant dense<0.000000e+00> : vector<4x64xf32>
      %651 = tpu.matmul %620, %650, %cst_538 {dimension_numbers = #tpu.dot_dimension_numbers<[1], [0], [0], [1], [0, 0, 1, 1], [], []>} : vector<4x64xf32>, vector<64x64xf32>, vector<4x64xf32> -> vector<4x64xf32>
      %652 = vector.shape_cast %651 : vector<4x64xf32> to vector<1x4x64xf32>
      %653 = vector.broadcast %652 : vector<1x4x64xf32> to vector<8x4x64xf32>
      %654 = arith.addf %337, %653 : vector<8x4x64xf32>
      %655 = math.tanh %654 : vector<8x4x64xf32>
      %c0_539 = arith.constant 0 : index
      %c0_540 = arith.constant 0 : index
      %c0_541 = arith.constant 0 : index
      %656 = vector.load %arg29[%c0_539, %c0_540, %c0_541] : memref<1x1x64xf32, #tpu.memory_space<vmem>>, vector<1x1x64xf32>
      %657 = vector.broadcast %656 : vector<1x1x64xf32> to vector<8x4x64xf32>
      %658 = arith.mulf %655, %657 : vector<8x4x64xf32>
      %cst_542 = arith.constant dense<0.000000e+00> : vector<8x4xf32>
      %659 = vector.multi_reduction <add>, %658, %cst_542 [2] : vector<8x4x64xf32> to vector<8x4xf32>
      %660 = vector.shape_cast %659 : vector<8x4xf32> to vector<8x4x1xf32>
      %cst_543 = arith.constant dense<0xFF800000> : vector<4x1xf32>
      %661 = vector.multi_reduction <maximumf>, %660, %cst_543 [0] : vector<8x4x1xf32> to vector<4x1xf32>
      %662 = vector.shape_cast %661 : vector<4x1xf32> to vector<1x4x1xf32>
      %663 = vector.broadcast %662 : vector<1x4x1xf32> to vector<8x4x1xf32>
      %664 = arith.subf %660, %663 : vector<8x4x1xf32>
      %665 = math.exp %664 : vector<8x4x1xf32>
      %cst_544 = arith.constant dense<0.000000e+00> : vector<4x1xf32>
      %666 = vector.multi_reduction <add>, %665, %cst_544 [0] : vector<8x4x1xf32> to vector<4x1xf32>
      %667 = vector.shape_cast %666 : vector<4x1xf32> to vector<1x4x1xf32>
      %668 = vector.broadcast %667 : vector<1x4x1xf32> to vector<8x4x1xf32>
      %669 = arith.divf %665, %668 : vector<8x4x1xf32>
      %670 = vector.broadcast %669 : vector<8x4x1xf32> to vector<8x4x64xf32>
      %671 = arith.mulf %670, %152 : vector<8x4x64xf32>
      %cst_545 = arith.constant dense<0.000000e+00> : vector<4x64xf32>
      %672 = vector.multi_reduction <add>, %671, %cst_545 [0] : vector<8x4x64xf32> to vector<4x64xf32>
      %c0_546 = arith.constant 0 : index
      %c0_547 = arith.constant 0 : index
      %673 = vector.load %arg30[%c0_546, %c0_547] : memref<64x64xf32, #tpu.memory_space<vmem>>, vector<64x64xf32>
      %cst_548 = arith.constant dense<0.000000e+00> : vector<4x64xf32>
      %674 = tpu.matmul %672, %673, %cst_548 {dimension_numbers = #tpu.dot_dimension_numbers<[1], [0], [0], [1], [0, 0, 1, 1], [], []>} : vector<4x64xf32>, vector<64x64xf32>, vector<4x64xf32> -> vector<4x64xf32>
      %675 = arith.addf %649, %674 : vector<4x64xf32>
      %c0_549 = arith.constant 0 : index
      %c0_550 = arith.constant 0 : index
      %676 = vector.load %arg19[%c0_549, %c0_550] : memref<64x192xf32, #tpu.memory_space<vmem>>, vector<64x192xf32>
      %cst_551 = arith.constant dense<0.000000e+00> : vector<4x192xf32>
      %677 = tpu.matmul %675, %676, %cst_551 {dimension_numbers = #tpu.dot_dimension_numbers<[1], [0], [0], [1], [0, 0, 1, 1], [], []>} : vector<4x64xf32>, vector<64x192xf32>, vector<4x192xf32> -> vector<4x192xf32>
      %c0_552 = arith.constant 0 : index
      %c0_553 = arith.constant 0 : index
      %678 = vector.load %arg21[%c0_552, %c0_553] : memref<1x192xf32, #tpu.memory_space<vmem>>, vector<1x192xf32>
      %679 = vector.broadcast %678 : vector<1x192xf32> to vector<4x192xf32>
      %680 = arith.addf %677, %679 : vector<4x192xf32>
      %c0_554 = arith.constant 0 : index
      %c0_555 = arith.constant 0 : index
      %681 = vector.load %arg20[%c0_554, %c0_555] : memref<64x192xf32, #tpu.memory_space<vmem>>, vector<64x192xf32>
      %cst_556 = arith.constant dense<0.000000e+00> : vector<4x192xf32>
      %682 = tpu.matmul %620, %681, %cst_556 {dimension_numbers = #tpu.dot_dimension_numbers<[1], [0], [0], [1], [0, 0, 1, 1], [], []>} : vector<4x64xf32>, vector<64x192xf32>, vector<4x192xf32> -> vector<4x192xf32>
      %c0_557 = arith.constant 0 : index
      %c0_558 = arith.constant 0 : index
      %683 = vector.load %arg22[%c0_557, %c0_558] : memref<1x192xf32, #tpu.memory_space<vmem>>, vector<1x192xf32>
      %684 = vector.broadcast %683 : vector<1x192xf32> to vector<4x192xf32>
      %685 = arith.addf %682, %684 : vector<4x192xf32>
      %686 = vector.extract_strided_slice %680 {offsets = [0, 0], sizes = [4, 64], strides = [1, 1]} : vector<4x192xf32> to vector<4x64xf32>
      %687 = vector.extract_strided_slice %685 {offsets = [0, 0], sizes = [4, 64], strides = [1, 1]} : vector<4x192xf32> to vector<4x64xf32>
      %688 = arith.addf %686, %687 : vector<4x64xf32>
      %689 = arith.negf %688 : vector<4x64xf32>
      %690 = math.exp %689 : vector<4x64xf32>
      %cst_559 = arith.constant 1.000000e+00 : f32
      %691 = vector.broadcast %cst_559 : f32 to vector<4x64xf32>
      %692 = arith.addf %691, %690 : vector<4x64xf32>
      %693 = arith.divf %691, %692 : vector<4x64xf32>
      %694 = vector.extract_strided_slice %680 {offsets = [0, 64], sizes = [4, 64], strides = [1, 1]} : vector<4x192xf32> to vector<4x64xf32>
      %695 = vector.extract_strided_slice %685 {offsets = [0, 64], sizes = [4, 64], strides = [1, 1]} : vector<4x192xf32> to vector<4x64xf32>
      %696 = arith.addf %694, %695 : vector<4x64xf32>
      %697 = arith.negf %696 : vector<4x64xf32>
      %698 = math.exp %697 : vector<4x64xf32>
      %cst_560 = arith.constant 1.000000e+00 : f32
      %699 = vector.broadcast %cst_560 : f32 to vector<4x64xf32>
      %700 = arith.addf %699, %698 : vector<4x64xf32>
      %701 = arith.divf %699, %700 : vector<4x64xf32>
      %702 = vector.extract_strided_slice %680 {offsets = [0, 128], sizes = [4, 64], strides = [1, 1]} : vector<4x192xf32> to vector<4x64xf32>
      %703 = vector.extract_strided_slice %685 {offsets = [0, 128], sizes = [4, 64], strides = [1, 1]} : vector<4x192xf32> to vector<4x64xf32>
      %704 = arith.mulf %693, %703 : vector<4x64xf32>
      %705 = arith.addf %702, %704 : vector<4x64xf32>
      %706 = math.tanh %705 : vector<4x64xf32>
      %cst_561 = arith.constant 1.000000e+00 : f32
      %707 = vector.broadcast %cst_561 : f32 to vector<4x64xf32>
      %708 = arith.subf %707, %701 : vector<4x64xf32>
      %709 = arith.mulf %708, %706 : vector<4x64xf32>
      %710 = arith.mulf %701, %620 : vector<4x64xf32>
      %711 = arith.addf %709, %710 : vector<4x64xf32>
      %712 = arith.index_cast %arg44 : i32 to index
      %c0_562 = arith.constant 0 : index
      %c0_563 = arith.constant 0 : index
      %713 = vector.load %arg43[%712, %c0_562, %c0_563] : memref<7x4x64xf32, #tpu.memory_space<vmem>>, vector<1x4x64xf32>
      %714 = vector.shape_cast %713 : vector<1x4x64xf32> to vector<4x64xf32>
      %715 = vector.shape_cast %711 : vector<4x64xf32> to vector<1x4x64xf32>
      tpu.vector_store %arg43[%712, %c0_562, %c0_563], %715 {strides = array<i32>} : memref<7x4x64xf32, #tpu.memory_space<vmem>>, vector<1x4x64xf32>,
      scf.yield %711 : vector<4x64xf32>
    }
    %c7_i32_374 = arith.constant 7 : i32
    %cst_375 = arith.constant 0.000000e+00 : f32
    %354 = vector.broadcast %cst_375 : f32 to vector<1x1xf32>
    %c0_376 = arith.constant 0 : index
    %c0_377 = arith.constant 0 : index
    %c0_378 = arith.constant 0 : index
    %355 = vector.load %arg43[%c0_376, %c0_377, %c0_378] : memref<7x4x64xf32, #tpu.memory_space<vmem>>, vector<1x4x64xf32>
    %356 = vector.shape_cast %355 : vector<1x4x64xf32> to vector<4x64xf32>
    %c0_379 = arith.constant 0 : index
    %c0_380 = arith.constant 0 : index
    %357 = vector.load %arg31[%c0_379, %c0_380] : memref<64x32xf32, #tpu.memory_space<vmem>>, vector<64x32xf32>
    %cst_381 = arith.constant dense<0.000000e+00> : vector<4x32xf32>
    %358 = tpu.matmul %356, %357, %cst_381 {dimension_numbers = #tpu.dot_dimension_numbers<[1], [0], [0], [1], [0, 0, 1, 1], [], []>} : vector<4x64xf32>, vector<64x32xf32>, vector<4x32xf32> -> vector<4x32xf32>
    %c0_382 = arith.constant 0 : index
    %c0_383 = arith.constant 0 : index
    %359 = vector.load %arg32[%c0_382, %c0_383] : memref<1x32xf32, #tpu.memory_space<vmem>>, vector<1x32xf32>
    %360 = vector.broadcast %359 : vector<1x32xf32> to vector<4x32xf32>
    %361 = arith.addf %358, %360 : vector<4x32xf32>
    %362 = math.tanh %361 : vector<4x32xf32>
    %c0_384 = arith.constant 0 : index
    %c0_385 = arith.constant 0 : index
    %363 = vector.load %arg33[%c0_384, %c0_385] : memref<32x64xf32, #tpu.memory_space<vmem>>, vector<32x64xf32>
    %cst_386 = arith.constant dense<0.000000e+00> : vector<4x64xf32>
    %364 = tpu.matmul %362, %363, %cst_386 {dimension_numbers = #tpu.dot_dimension_numbers<[1], [0], [0], [1], [0, 0, 1, 1], [], []>} : vector<4x32xf32>, vector<32x64xf32>, vector<4x64xf32> -> vector<4x64xf32>
    %c0_387 = arith.constant 0 : index
    %c0_388 = arith.constant 0 : index
    %365 = vector.load %arg34[%c0_387, %c0_388] : memref<1x64xf32, #tpu.memory_space<vmem>>, vector<1x64xf32>
    %366 = vector.broadcast %365 : vector<1x64xf32> to vector<4x64xf32>
    %367 = arith.addf %364, %366 : vector<4x64xf32>
    %cst_389 = arith.constant dense<0xFF800000> : vector<4xf32>
    %368 = vector.multi_reduction <maximumf>, %367, %cst_389 [1] : vector<4x64xf32> to vector<4xf32>
    %369 = vector.shape_cast %368 : vector<4xf32> to vector<4x1xf32>
    %370 = vector.broadcast %369 : vector<4x1xf32> to vector<4x64xf32>
    %371 = arith.subf %367, %370 : vector<4x64xf32>
    %372 = math.exp %371 : vector<4x64xf32>
    %cst_390 = arith.constant dense<0.000000e+00> : vector<4xf32>
    %373 = vector.multi_reduction <add>, %372, %cst_390 [1] : vector<4x64xf32> to vector<4xf32>
    %374 = vector.shape_cast %373 : vector<4xf32> to vector<4x1xf32>
    %375 = math.log %374 : vector<4x1xf32>
    %376 = arith.addf %369, %375 : vector<4x1xf32>
    %377 = vector.broadcast %376 : vector<4x1xf32> to vector<4x64xf32>
    %378 = arith.subf %367, %377 : vector<4x64xf32>
    %c0_391 = arith.constant 0 : index
    %c0_392 = arith.constant 0 : index
    %c0_393 = arith.constant 0 : index
    %379 = vector.load %arg4[%c0_391, %c0_392, %c0_393] : memref<7x4x64xf32, #tpu.memory_space<vmem>>, vector<1x4x64xf32>
    %380 = vector.shape_cast %379 : vector<1x4x64xf32> to vector<4x64xf32>
    %381 = arith.mulf %378, %380 : vector<4x64xf32>
    %382 = vector.shape_cast %381 : vector<4x64xf32> to vector<1x4x64xf32>
    %cst_394 = arith.constant dense<0.000000e+00> : vector<1xf32>
    %383 = vector.multi_reduction <add>, %382, %cst_394 [1, 2] : vector<1x4x64xf32> to vector<1xf32>
    %384 = vector.shape_cast %383 : vector<1xf32> to vector<1x1x1xf32>
    %385 = vector.extract %384[0, 0, 0] : f32 from vector<1x1x1xf32>
    %386 = vector.broadcast %385 : f32 to vector<1x1xf32>
    %387 = arith.subf %354, %386 : vector<1x1xf32>
    %c1_395 = arith.constant 1 : index
    %c0_396 = arith.constant 0 : index
    %c0_397 = arith.constant 0 : index
    %388 = vector.load %arg43[%c1_395, %c0_396, %c0_397] : memref<7x4x64xf32, #tpu.memory_space<vmem>>, vector<1x4x64xf32>
    %389 = vector.shape_cast %388 : vector<1x4x64xf32> to vector<4x64xf32>
    %c0_398 = arith.constant 0 : index
    %c0_399 = arith.constant 0 : index
    %390 = vector.load %arg31[%c0_398, %c0_399] : memref<64x32xf32, #tpu.memory_space<vmem>>, vector<64x32xf32>
    %cst_400 = arith.constant dense<0.000000e+00> : vector<4x32xf32>
    %391 = tpu.matmul %389, %390, %cst_400 {dimension_numbers = #tpu.dot_dimension_numbers<[1], [0], [0], [1], [0, 0, 1, 1], [], []>} : vector<4x64xf32>, vector<64x32xf32>, vector<4x32xf32> -> vector<4x32xf32>
    %c0_401 = arith.constant 0 : index
    %c0_402 = arith.constant 0 : index
    %392 = vector.load %arg32[%c0_401, %c0_402] : memref<1x32xf32, #tpu.memory_space<vmem>>, vector<1x32xf32>
    %393 = vector.broadcast %392 : vector<1x32xf32> to vector<4x32xf32>
    %394 = arith.addf %391, %393 : vector<4x32xf32>
    %395 = math.tanh %394 : vector<4x32xf32>
    %c0_403 = arith.constant 0 : index
    %c0_404 = arith.constant 0 : index
    %396 = vector.load %arg33[%c0_403, %c0_404] : memref<32x64xf32, #tpu.memory_space<vmem>>, vector<32x64xf32>
    %cst_405 = arith.constant dense<0.000000e+00> : vector<4x64xf32>
    %397 = tpu.matmul %395, %396, %cst_405 {dimension_numbers = #tpu.dot_dimension_numbers<[1], [0], [0], [1], [0, 0, 1, 1], [], []>} : vector<4x32xf32>, vector<32x64xf32>, vector<4x64xf32> -> vector<4x64xf32>
    %c0_406 = arith.constant 0 : index
    %c0_407 = arith.constant 0 : index
    %398 = vector.load %arg34[%c0_406, %c0_407] : memref<1x64xf32, #tpu.memory_space<vmem>>, vector<1x64xf32>
    %399 = vector.broadcast %398 : vector<1x64xf32> to vector<4x64xf32>
    %400 = arith.addf %397, %399 : vector<4x64xf32>
    %cst_408 = arith.constant dense<0xFF800000> : vector<4xf32>
    %401 = vector.multi_reduction <maximumf>, %400, %cst_408 [1] : vector<4x64xf32> to vector<4xf32>
    %402 = vector.shape_cast %401 : vector<4xf32> to vector<4x1xf32>
    %403 = vector.broadcast %402 : vector<4x1xf32> to vector<4x64xf32>
    %404 = arith.subf %400, %403 : vector<4x64xf32>
    %405 = math.exp %404 : vector<4x64xf32>
    %cst_409 = arith.constant dense<0.000000e+00> : vector<4xf32>
    %406 = vector.multi_reduction <add>, %405, %cst_409 [1] : vector<4x64xf32> to vector<4xf32>
    %407 = vector.shape_cast %406 : vector<4xf32> to vector<4x1xf32>
    %408 = math.log %407 : vector<4x1xf32>
    %409 = arith.addf %402, %408 : vector<4x1xf32>
    %410 = vector.broadcast %409 : vector<4x1xf32> to vector<4x64xf32>
    %411 = arith.subf %400, %410 : vector<4x64xf32>
    %c1_410 = arith.constant 1 : index
    %c0_411 = arith.constant 0 : index
    %c0_412 = arith.constant 0 : index
    %412 = vector.load %arg4[%c1_410, %c0_411, %c0_412] : memref<7x4x64xf32, #tpu.memory_space<vmem>>, vector<1x4x64xf32>
    %413 = vector.shape_cast %412 : vector<1x4x64xf32> to vector<4x64xf32>
    %414 = arith.mulf %411, %413 : vector<4x64xf32>
    %415 = vector.shape_cast %414 : vector<4x64xf32> to vector<1x4x64xf32>
    %cst_413 = arith.constant dense<0.000000e+00> : vector<1xf32>
    %416 = vector.multi_reduction <add>, %415, %cst_413 [1, 2] : vector<1x4x64xf32> to vector<1xf32>
    %417 = vector.shape_cast %416 : vector<1xf32> to vector<1x1x1xf32>
    %418 = vector.extract %417[0, 0, 0] : f32 from vector<1x1x1xf32>
    %419 = vector.broadcast %418 : f32 to vector<1x1xf32>
    %420 = arith.subf %387, %419 : vector<1x1xf32>
    %c2_414 = arith.constant 2 : index
    %c0_415 = arith.constant 0 : index
    %c0_416 = arith.constant 0 : index
    %421 = vector.load %arg43[%c2_414, %c0_415, %c0_416] : memref<7x4x64xf32, #tpu.memory_space<vmem>>, vector<1x4x64xf32>
    %422 = vector.shape_cast %421 : vector<1x4x64xf32> to vector<4x64xf32>
    %c0_417 = arith.constant 0 : index
    %c0_418 = arith.constant 0 : index
    %423 = vector.load %arg31[%c0_417, %c0_418] : memref<64x32xf32, #tpu.memory_space<vmem>>, vector<64x32xf32>
    %cst_419 = arith.constant dense<0.000000e+00> : vector<4x32xf32>
    %424 = tpu.matmul %422, %423, %cst_419 {dimension_numbers = #tpu.dot_dimension_numbers<[1], [0], [0], [1], [0, 0, 1, 1], [], []>} : vector<4x64xf32>, vector<64x32xf32>, vector<4x32xf32> -> vector<4x32xf32>
    %c0_420 = arith.constant 0 : index
    %c0_421 = arith.constant 0 : index
    %425 = vector.load %arg32[%c0_420, %c0_421] : memref<1x32xf32, #tpu.memory_space<vmem>>, vector<1x32xf32>
    %426 = vector.broadcast %425 : vector<1x32xf32> to vector<4x32xf32>
    %427 = arith.addf %424, %426 : vector<4x32xf32>
    %428 = math.tanh %427 : vector<4x32xf32>
    %c0_422 = arith.constant 0 : index
    %c0_423 = arith.constant 0 : index
    %429 = vector.load %arg33[%c0_422, %c0_423] : memref<32x64xf32, #tpu.memory_space<vmem>>, vector<32x64xf32>
    %cst_424 = arith.constant dense<0.000000e+00> : vector<4x64xf32>
    %430 = tpu.matmul %428, %429, %cst_424 {dimension_numbers = #tpu.dot_dimension_numbers<[1], [0], [0], [1], [0, 0, 1, 1], [], []>} : vector<4x32xf32>, vector<32x64xf32>, vector<4x64xf32> -> vector<4x64xf32>
    %c0_425 = arith.constant 0 : index
    %c0_426 = arith.constant 0 : index
    %431 = vector.load %arg34[%c0_425, %c0_426] : memref<1x64xf32, #tpu.memory_space<vmem>>, vector<1x64xf32>
    %432 = vector.broadcast %431 : vector<1x64xf32> to vector<4x64xf32>
    %433 = arith.addf %430, %432 : vector<4x64xf32>
    %cst_427 = arith.constant dense<0xFF800000> : vector<4xf32>
    %434 = vector.multi_reduction <maximumf>, %433, %cst_427 [1] : vector<4x64xf32> to vector<4xf32>
    %435 = vector.shape_cast %434 : vector<4xf32> to vector<4x1xf32>
    %436 = vector.broadcast %435 : vector<4x1xf32> to vector<4x64xf32>
    %437 = arith.subf %433, %436 : vector<4x64xf32>
    %438 = math.exp %437 : vector<4x64xf32>
    %cst_428 = arith.constant dense<0.000000e+00> : vector<4xf32>
    %439 = vector.multi_reduction <add>, %438, %cst_428 [1] : vector<4x64xf32> to vector<4xf32>
    %440 = vector.shape_cast %439 : vector<4xf32> to vector<4x1xf32>
    %441 = math.log %440 : vector<4x1xf32>
    %442 = arith.addf %435, %441 : vector<4x1xf32>
    %443 = vector.broadcast %442 : vector<4x1xf32> to vector<4x64xf32>
    %444 = arith.subf %433, %443 : vector<4x64xf32>
    %c2_429 = arith.constant 2 : index
    %c0_430 = arith.constant 0 : index
    %c0_431 = arith.constant 0 : index
    %445 = vector.load %arg4[%c2_429, %c0_430, %c0_431] : memref<7x4x64xf32, #tpu.memory_space<vmem>>, vector<1x4x64xf32>
    %446 = vector.shape_cast %445 : vector<1x4x64xf32> to vector<4x64xf32>
    %447 = arith.mulf %444, %446 : vector<4x64xf32>
    %448 = vector.shape_cast %447 : vector<4x64xf32> to vector<1x4x64xf32>
    %cst_432 = arith.constant dense<0.000000e+00> : vector<1xf32>
    %449 = vector.multi_reduction <add>, %448, %cst_432 [1, 2] : vector<1x4x64xf32> to vector<1xf32>
    %450 = vector.shape_cast %449 : vector<1xf32> to vector<1x1x1xf32>
    %451 = vector.extract %450[0, 0, 0] : f32 from vector<1x1x1xf32>
    %452 = vector.broadcast %451 : f32 to vector<1x1xf32>
    %453 = arith.subf %420, %452 : vector<1x1xf32>
    %c3_433 = arith.constant 3 : index
    %c0_434 = arith.constant 0 : index
    %c0_435 = arith.constant 0 : index
    %454 = vector.load %arg43[%c3_433, %c0_434, %c0_435] : memref<7x4x64xf32, #tpu.memory_space<vmem>>, vector<1x4x64xf32>
    %455 = vector.shape_cast %454 : vector<1x4x64xf32> to vector<4x64xf32>
    %c0_436 = arith.constant 0 : index
    %c0_437 = arith.constant 0 : index
    %456 = vector.load %arg31[%c0_436, %c0_437] : memref<64x32xf32, #tpu.memory_space<vmem>>, vector<64x32xf32>
    %cst_438 = arith.constant dense<0.000000e+00> : vector<4x32xf32>
    %457 = tpu.matmul %455, %456, %cst_438 {dimension_numbers = #tpu.dot_dimension_numbers<[1], [0], [0], [1], [0, 0, 1, 1], [], []>} : vector<4x64xf32>, vector<64x32xf32>, vector<4x32xf32> -> vector<4x32xf32>
    %c0_439 = arith.constant 0 : index
    %c0_440 = arith.constant 0 : index
    %458 = vector.load %arg32[%c0_439, %c0_440] : memref<1x32xf32, #tpu.memory_space<vmem>>, vector<1x32xf32>
    %459 = vector.broadcast %458 : vector<1x32xf32> to vector<4x32xf32>
    %460 = arith.addf %457, %459 : vector<4x32xf32>
    %461 = math.tanh %460 : vector<4x32xf32>
    %c0_441 = arith.constant 0 : index
    %c0_442 = arith.constant 0 : index
    %462 = vector.load %arg33[%c0_441, %c0_442] : memref<32x64xf32, #tpu.memory_space<vmem>>, vector<32x64xf32>
    %cst_443 = arith.constant dense<0.000000e+00> : vector<4x64xf32>
    %463 = tpu.matmul %461, %462, %cst_443 {dimension_numbers = #tpu.dot_dimension_numbers<[1], [0], [0], [1], [0, 0, 1, 1], [], []>} : vector<4x32xf32>, vector<32x64xf32>, vector<4x64xf32> -> vector<4x64xf32>
    %c0_444 = arith.constant 0 : index
    %c0_445 = arith.constant 0 : index
    %464 = vector.load %arg34[%c0_444, %c0_445] : memref<1x64xf32, #tpu.memory_space<vmem>>, vector<1x64xf32>
    %465 = vector.broadcast %464 : vector<1x64xf32> to vector<4x64xf32>
    %466 = arith.addf %463, %465 : vector<4x64xf32>
    %cst_446 = arith.constant dense<0xFF800000> : vector<4xf32>
    %467 = vector.multi_reduction <maximumf>, %466, %cst_446 [1] : vector<4x64xf32> to vector<4xf32>
    %468 = vector.shape_cast %467 : vector<4xf32> to vector<4x1xf32>
    %469 = vector.broadcast %468 : vector<4x1xf32> to vector<4x64xf32>
    %470 = arith.subf %466, %469 : vector<4x64xf32>
    %471 = math.exp %470 : vector<4x64xf32>
    %cst_447 = arith.constant dense<0.000000e+00> : vector<4xf32>
    %472 = vector.multi_reduction <add>, %471, %cst_447 [1] : vector<4x64xf32> to vector<4xf32>
    %473 = vector.shape_cast %472 : vector<4xf32> to vector<4x1xf32>
    %474 = math.log %473 : vector<4x1xf32>
    %475 = arith.addf %468, %474 : vector<4x1xf32>
    %476 = vector.broadcast %475 : vector<4x1xf32> to vector<4x64xf32>
    %477 = arith.subf %466, %476 : vector<4x64xf32>
    %c3_448 = arith.constant 3 : index
    %c0_449 = arith.constant 0 : index
    %c0_450 = arith.constant 0 : index
    %478 = vector.load %arg4[%c3_448, %c0_449, %c0_450] : memref<7x4x64xf32, #tpu.memory_space<vmem>>, vector<1x4x64xf32>
    %479 = vector.shape_cast %478 : vector<1x4x64xf32> to vector<4x64xf32>
    %480 = arith.mulf %477, %479 : vector<4x64xf32>
    %481 = vector.shape_cast %480 : vector<4x64xf32> to vector<1x4x64xf32>
    %cst_451 = arith.constant dense<0.000000e+00> : vector<1xf32>
    %482 = vector.multi_reduction <add>, %481, %cst_451 [1, 2] : vector<1x4x64xf32> to vector<1xf32>
    %483 = vector.shape_cast %482 : vector<1xf32> to vector<1x1x1xf32>
    %484 = vector.extract %483[0, 0, 0] : f32 from vector<1x1x1xf32>
    %485 = vector.broadcast %484 : f32 to vector<1x1xf32>
    %486 = arith.subf %453, %485 : vector<1x1xf32>
    %c4_452 = arith.constant 4 : index
    %c0_453 = arith.constant 0 : index
    %c0_454 = arith.constant 0 : index
    %487 = vector.load %arg43[%c4_452, %c0_453, %c0_454] : memref<7x4x64xf32, #tpu.memory_space<vmem>>, vector<1x4x64xf32>
    %488 = vector.shape_cast %487 : vector<1x4x64xf32> to vector<4x64xf32>
    %c0_455 = arith.constant 0 : index
    %c0_456 = arith.constant 0 : index
    %489 = vector.load %arg31[%c0_455, %c0_456] : memref<64x32xf32, #tpu.memory_space<vmem>>, vector<64x32xf32>
    %cst_457 = arith.constant dense<0.000000e+00> : vector<4x32xf32>
    %490 = tpu.matmul %488, %489, %cst_457 {dimension_numbers = #tpu.dot_dimension_numbers<[1], [0], [0], [1], [0, 0, 1, 1], [], []>} : vector<4x64xf32>, vector<64x32xf32>, vector<4x32xf32> -> vector<4x32xf32>
    %c0_458 = arith.constant 0 : index
    %c0_459 = arith.constant 0 : index
    %491 = vector.load %arg32[%c0_458, %c0_459] : memref<1x32xf32, #tpu.memory_space<vmem>>, vector<1x32xf32>
    %492 = vector.broadcast %491 : vector<1x32xf32> to vector<4x32xf32>
    %493 = arith.addf %490, %492 : vector<4x32xf32>
    %494 = math.tanh %493 : vector<4x32xf32>
    %c0_460 = arith.constant 0 : index
    %c0_461 = arith.constant 0 : index
    %495 = vector.load %arg33[%c0_460, %c0_461] : memref<32x64xf32, #tpu.memory_space<vmem>>, vector<32x64xf32>
    %cst_462 = arith.constant dense<0.000000e+00> : vector<4x64xf32>
    %496 = tpu.matmul %494, %495, %cst_462 {dimension_numbers = #tpu.dot_dimension_numbers<[1], [0], [0], [1], [0, 0, 1, 1], [], []>} : vector<4x32xf32>, vector<32x64xf32>, vector<4x64xf32> -> vector<4x64xf32>
    %c0_463 = arith.constant 0 : index
    %c0_464 = arith.constant 0 : index
    %497 = vector.load %arg34[%c0_463, %c0_464] : memref<1x64xf32, #tpu.memory_space<vmem>>, vector<1x64xf32>
    %498 = vector.broadcast %497 : vector<1x64xf32> to vector<4x64xf32>
    %499 = arith.addf %496, %498 : vector<4x64xf32>
    %cst_465 = arith.constant dense<0xFF800000> : vector<4xf32>
    %500 = vector.multi_reduction <maximumf>, %499, %cst_465 [1] : vector<4x64xf32> to vector<4xf32>
    %501 = vector.shape_cast %500 : vector<4xf32> to vector<4x1xf32>
    %502 = vector.broadcast %501 : vector<4x1xf32> to vector<4x64xf32>
    %503 = arith.subf %499, %502 : vector<4x64xf32>
    %504 = math.exp %503 : vector<4x64xf32>
    %cst_466 = arith.constant dense<0.000000e+00> : vector<4xf32>
    %505 = vector.multi_reduction <add>, %504, %cst_466 [1] : vector<4x64xf32> to vector<4xf32>
    %506 = vector.shape_cast %505 : vector<4xf32> to vector<4x1xf32>
    %507 = math.log %506 : vector<4x1xf32>
    %508 = arith.addf %501, %507 : vector<4x1xf32>
    %509 = vector.broadcast %508 : vector<4x1xf32> to vector<4x64xf32>
    %510 = arith.subf %499, %509 : vector<4x64xf32>
    %c4_467 = arith.constant 4 : index
    %c0_468 = arith.constant 0 : index
    %c0_469 = arith.constant 0 : index
    %511 = vector.load %arg4[%c4_467, %c0_468, %c0_469] : memref<7x4x64xf32, #tpu.memory_space<vmem>>, vector<1x4x64xf32>
    %512 = vector.shape_cast %511 : vector<1x4x64xf32> to vector<4x64xf32>
    %513 = arith.mulf %510, %512 : vector<4x64xf32>
    %514 = vector.shape_cast %513 : vector<4x64xf32> to vector<1x4x64xf32>
    %cst_470 = arith.constant dense<0.000000e+00> : vector<1xf32>
    %515 = vector.multi_reduction <add>, %514, %cst_470 [1, 2] : vector<1x4x64xf32> to vector<1xf32>
    %516 = vector.shape_cast %515 : vector<1xf32> to vector<1x1x1xf32>
    %517 = vector.extract %516[0, 0, 0] : f32 from vector<1x1x1xf32>
    %518 = vector.broadcast %517 : f32 to vector<1x1xf32>
    %519 = arith.subf %486, %518 : vector<1x1xf32>
    %c5_471 = arith.constant 5 : index
    %c0_472 = arith.constant 0 : index
    %c0_473 = arith.constant 0 : index
    %520 = vector.load %arg43[%c5_471, %c0_472, %c0_473] : memref<7x4x64xf32, #tpu.memory_space<vmem>>, vector<1x4x64xf32>
    %521 = vector.shape_cast %520 : vector<1x4x64xf32> to vector<4x64xf32>
    %c0_474 = arith.constant 0 : index
    %c0_475 = arith.constant 0 : index
    %522 = vector.load %arg31[%c0_474, %c0_475] : memref<64x32xf32, #tpu.memory_space<vmem>>, vector<64x32xf32>
    %cst_476 = arith.constant dense<0.000000e+00> : vector<4x32xf32>
    %523 = tpu.matmul %521, %522, %cst_476 {dimension_numbers = #tpu.dot_dimension_numbers<[1], [0], [0], [1], [0, 0, 1, 1], [], []>} : vector<4x64xf32>, vector<64x32xf32>, vector<4x32xf32> -> vector<4x32xf32>
    %c0_477 = arith.constant 0 : index
    %c0_478 = arith.constant 0 : index
    %524 = vector.load %arg32[%c0_477, %c0_478] : memref<1x32xf32, #tpu.memory_space<vmem>>, vector<1x32xf32>
    %525 = vector.broadcast %524 : vector<1x32xf32> to vector<4x32xf32>
    %526 = arith.addf %523, %525 : vector<4x32xf32>
    %527 = math.tanh %526 : vector<4x32xf32>
    %c0_479 = arith.constant 0 : index
    %c0_480 = arith.constant 0 : index
    %528 = vector.load %arg33[%c0_479, %c0_480] : memref<32x64xf32, #tpu.memory_space<vmem>>, vector<32x64xf32>
    %cst_481 = arith.constant dense<0.000000e+00> : vector<4x64xf32>
    %529 = tpu.matmul %527, %528, %cst_481 {dimension_numbers = #tpu.dot_dimension_numbers<[1], [0], [0], [1], [0, 0, 1, 1], [], []>} : vector<4x32xf32>, vector<32x64xf32>, vector<4x64xf32> -> vector<4x64xf32>
    %c0_482 = arith.constant 0 : index
    %c0_483 = arith.constant 0 : index
    %530 = vector.load %arg34[%c0_482, %c0_483] : memref<1x64xf32, #tpu.memory_space<vmem>>, vector<1x64xf32>
    %531 = vector.broadcast %530 : vector<1x64xf32> to vector<4x64xf32>
    %532 = arith.addf %529, %531 : vector<4x64xf32>
    %cst_484 = arith.constant dense<0xFF800000> : vector<4xf32>
    %533 = vector.multi_reduction <maximumf>, %532, %cst_484 [1] : vector<4x64xf32> to vector<4xf32>
    %534 = vector.shape_cast %533 : vector<4xf32> to vector<4x1xf32>
    %535 = vector.broadcast %534 : vector<4x1xf32> to vector<4x64xf32>
    %536 = arith.subf %532, %535 : vector<4x64xf32>
    %537 = math.exp %536 : vector<4x64xf32>
    %cst_485 = arith.constant dense<0.000000e+00> : vector<4xf32>
    %538 = vector.multi_reduction <add>, %537, %cst_485 [1] : vector<4x64xf32> to vector<4xf32>
    %539 = vector.shape_cast %538 : vector<4xf32> to vector<4x1xf32>
    %540 = math.log %539 : vector<4x1xf32>
    %541 = arith.addf %534, %540 : vector<4x1xf32>
    %542 = vector.broadcast %541 : vector<4x1xf32> to vector<4x64xf32>
    %543 = arith.subf %532, %542 : vector<4x64xf32>
    %c5_486 = arith.constant 5 : index
    %c0_487 = arith.constant 0 : index
    %c0_488 = arith.constant 0 : index
    %544 = vector.load %arg4[%c5_486, %c0_487, %c0_488] : memref<7x4x64xf32, #tpu.memory_space<vmem>>, vector<1x4x64xf32>
    %545 = vector.shape_cast %544 : vector<1x4x64xf32> to vector<4x64xf32>
    %546 = arith.mulf %543, %545 : vector<4x64xf32>
    %547 = vector.shape_cast %546 : vector<4x64xf32> to vector<1x4x64xf32>
    %cst_489 = arith.constant dense<0.000000e+00> : vector<1xf32>
    %548 = vector.multi_reduction <add>, %547, %cst_489 [1, 2] : vector<1x4x64xf32> to vector<1xf32>
    %549 = vector.shape_cast %548 : vector<1xf32> to vector<1x1x1xf32>
    %550 = vector.extract %549[0, 0, 0] : f32 from vector<1x1x1xf32>
    %551 = vector.broadcast %550 : f32 to vector<1x1xf32>
    %552 = arith.subf %519, %551 : vector<1x1xf32>
    %c6_490 = arith.constant 6 : index
    %c0_491 = arith.constant 0 : index
    %c0_492 = arith.constant 0 : index
    %553 = vector.load %arg43[%c6_490, %c0_491, %c0_492] : memref<7x4x64xf32, #tpu.memory_space<vmem>>, vector<1x4x64xf32>
    %554 = vector.shape_cast %553 : vector<1x4x64xf32> to vector<4x64xf32>
    %c0_493 = arith.constant 0 : index
    %c0_494 = arith.constant 0 : index
    %555 = vector.load %arg31[%c0_493, %c0_494] : memref<64x32xf32, #tpu.memory_space<vmem>>, vector<64x32xf32>
    %cst_495 = arith.constant dense<0.000000e+00> : vector<4x32xf32>
    %556 = tpu.matmul %554, %555, %cst_495 {dimension_numbers = #tpu.dot_dimension_numbers<[1], [0], [0], [1], [0, 0, 1, 1], [], []>} : vector<4x64xf32>, vector<64x32xf32>, vector<4x32xf32> -> vector<4x32xf32>
    %c0_496 = arith.constant 0 : index
    %c0_497 = arith.constant 0 : index
    %557 = vector.load %arg32[%c0_496, %c0_497] : memref<1x32xf32, #tpu.memory_space<vmem>>, vector<1x32xf32>
    %558 = vector.broadcast %557 : vector<1x32xf32> to vector<4x32xf32>
    %559 = arith.addf %556, %558 : vector<4x32xf32>
    %560 = math.tanh %559 : vector<4x32xf32>
    %c0_498 = arith.constant 0 : index
    %c0_499 = arith.constant 0 : index
    %561 = vector.load %arg33[%c0_498, %c0_499] : memref<32x64xf32, #tpu.memory_space<vmem>>, vector<32x64xf32>
    %cst_500 = arith.constant dense<0.000000e+00> : vector<4x64xf32>
    %562 = tpu.matmul %560, %561, %cst_500 {dimension_numbers = #tpu.dot_dimension_numbers<[1], [0], [0], [1], [0, 0, 1, 1], [], []>} : vector<4x32xf32>, vector<32x64xf32>, vector<4x64xf32> -> vector<4x64xf32>
    %c0_501 = arith.constant 0 : index
    %c0_502 = arith.constant 0 : index
    %563 = vector.load %arg34[%c0_501, %c0_502] : memref<1x64xf32, #tpu.memory_space<vmem>>, vector<1x64xf32>
    %564 = vector.broadcast %563 : vector<1x64xf32> to vector<4x64xf32>
    %565 = arith.addf %562, %564 : vector<4x64xf32>
    %cst_503 = arith.constant dense<0xFF800000> : vector<4xf32>
    %566 = vector.multi_reduction <maximumf>, %565, %cst_503 [1] : vector<4x64xf32> to vector<4xf32>
    %567 = vector.shape_cast %566 : vector<4xf32> to vector<4x1xf32>
    %568 = vector.broadcast %567 : vector<4x1xf32> to vector<4x64xf32>
    %569 = arith.subf %565, %568 : vector<4x64xf32>
    %570 = math.exp %569 : vector<4x64xf32>
    %cst_504 = arith.constant dense<0.000000e+00> : vector<4xf32>
    %571 = vector.multi_reduction <add>, %570, %cst_504 [1] : vector<4x64xf32> to vector<4xf32>
    %572 = vector.shape_cast %571 : vector<4xf32> to vector<4x1xf32>
    %573 = math.log %572 : vector<4x1xf32>
    %574 = arith.addf %567, %573 : vector<4x1xf32>
    %575 = vector.broadcast %574 : vector<4x1xf32> to vector<4x64xf32>
    %576 = arith.subf %565, %575 : vector<4x64xf32>
    %c6_505 = arith.constant 6 : index
    %c0_506 = arith.constant 0 : index
    %c0_507 = arith.constant 0 : index
    %577 = vector.load %arg4[%c6_505, %c0_506, %c0_507] : memref<7x4x64xf32, #tpu.memory_space<vmem>>, vector<1x4x64xf32>
    %578 = vector.shape_cast %577 : vector<1x4x64xf32> to vector<4x64xf32>
    %579 = arith.mulf %576, %578 : vector<4x64xf32>
    %580 = vector.shape_cast %579 : vector<4x64xf32> to vector<1x4x64xf32>
    %cst_508 = arith.constant dense<0.000000e+00> : vector<1xf32>
    %581 = vector.multi_reduction <add>, %580, %cst_508 [1, 2] : vector<1x4x64xf32> to vector<1xf32>
    %582 = vector.shape_cast %581 : vector<1xf32> to vector<1x1x1xf32>
    %583 = vector.extract %582[0, 0, 0] : f32 from vector<1x1x1xf32>
    %584 = vector.broadcast %583 : f32 to vector<1x1xf32>
    %585 = arith.subf %552, %584 : vector<1x1xf32>
    %c0_509 = arith.constant 0 : index
    %c0_510 = arith.constant 0 : index
    %586 = vector.load %arg35[%c0_509, %c0_510] : memref<1x1xf32, #tpu.memory_space<vmem>>, vector<1x1xf32>
    tpu.vector_store %arg35[%c0_509, %c0_510], %585 {strides = array<i32>} : memref<1x1xf32, #tpu.memory_space<vmem>>, vector<1x1xf32>,
    return
  }
}

</mosaic_0001>

<llo_original>
// kernel: amnmt_forward.1
$region0: #{amnmt_forward.1}
  #allocation0 [shape = 'u32[]', space=smem, size = 0x4, offset = 0x4, fixed_abs, tag = 'smem constant byte address 0x4 - core index']
  #allocation1 [shape = 'u32[144,128]{1,0:T(1,128)}', space=vmem, size = 0x12000, scoped, tag = 'internal scratch']
  #allocation2 [shape = 'f32[8,4,96]{2,1,0:T(4,128)}', space=vmem, size = 0x4000, scoped, tag = 'scratch operand']
  #allocation3 [shape = 'f32[8,4,96]{2,1,0:T(4,128)}', space=vmem, size = 0x4000, scoped, tag = 'scratch operand']
  #allocation4 [shape = 'f32[8,4,32]{2,1,0:T(4,128)}', space=vmem, size = 0x4000, scoped, tag = 'scratch operand']
  #allocation5 [shape = 'f32[8,4,32]{2,1,0:T(4,128)}', space=vmem, size = 0x4000, scoped, tag = 'scratch operand']
  #allocation6 [shape = 'f32[8,4,64]{2,1,0:T(4,128)}', space=vmem, size = 0x4000, scoped, tag = 'scratch operand']
  #allocation7 [shape = 'f32[8,4,64]{2,1,0:T(4,128)}', space=vmem, size = 0x4000, scoped, tag = 'scratch operand']
  #allocation8 [shape = 'f32[7,4,192]{2,1,0:T(4,128)}', space=vmem, size = 0x7000, scoped, tag = 'scratch operand']
  #allocation9 [shape = 'f32[7,4,64]{2,1,0:T(4,128)}', space=vmem, size = 0x3800, scoped, tag = 'scratch operand']
  %s0 = inlined_call_operand.smem [shape: u32[36], index: -1, kind: input, shape index: {}]
  %s1 = sld [smem:[%s0]]
  %s2 = scalar_lea.smem %s0, 1
  %s3 = sld [smem:[%s2]]
  %s4 = scalar_lea.smem %s0, 2
  %s5 = sld [smem:[%s4]]
  %s6 = scalar_lea.smem %s0, 3
  %s7 = sld [smem:[%s6]]
  %s8 = scalar_lea.smem %s0, 4
  %s9 = sld [smem:[%s8]]
  %s10 = scalar_lea.smem %s0, 5
  %s11 = sld [smem:[%s10]]
  %s12 = scalar_lea.smem %s0, 6
  %s13 = sld [smem:[%s12]]
  %s14 = scalar_lea.smem %s0, 7
  %s15 = sld [smem:[%s14]]
  %s16 = scalar_lea.smem %s0, 8
  %s17 = sld [smem:[%s16]]
  %s18 = scalar_lea.smem %s0, 9
  %s19 = sld [smem:[%s18]]
  %s20 = scalar_lea.smem %s0, 10
  %s21 = sld [smem:[%s20]]
  %s22 = scalar_lea.smem %s0, 11
  %s23 = sld [smem:[%s22]]
  %s24 = scalar_lea.smem %s0, 12
  %s25 = sld [smem:[%s24]]
  %s26 = scalar_lea.smem %s0, 13
  %s27 = sld [smem:[%s26]]
  %s28 = scalar_lea.smem %s0, 14
  %s29 = sld [smem:[%s28]]
  %s30 = scalar_lea.smem %s0, 15
  %s31 = sld [smem:[%s30]]
  %s32 = scalar_lea.smem %s0, 16
  %s33 = sld [smem:[%s32]]
  %s34 = scalar_lea.smem %s0, 17
  %s35 = sld [smem:[%s34]]
  %s36 = scalar_lea.smem %s0, 18
  %s37 = sld [smem:[%s36]]
  %s38 = scalar_lea.smem %s0, 19
  %s39 = sld [smem:[%s38]]
  %s40 = scalar_lea.smem %s0, 20
  %s41 = sld [smem:[%s40]]
  %s42 = scalar_lea.smem %s0, 21
  %s43 = sld [smem:[%s42]]
  %s44 = scalar_lea.smem %s0, 22
  %s45 = sld [smem:[%s44]]
  %s46 = scalar_lea.smem %s0, 23
  %s47 = sld [smem:[%s46]]
  %s48 = scalar_lea.smem %s0, 24
  %s49 = sld [smem:[%s48]]
  %s50 = scalar_lea.smem %s0, 25
  %s51 = sld [smem:[%s50]]
  %s52 = scalar_lea.smem %s0, 26
  %s53 = sld [smem:[%s52]]
  %s54 = scalar_lea.smem %s0, 27
  %s55 = sld [smem:[%s54]]
  %s56 = scalar_lea.smem %s0, 28
  %s57 = sld [smem:[%s56]]
  %s58 = scalar_lea.smem %s0, 29
  %s59 = sld [smem:[%s58]]
  %s60 = scalar_lea.smem %s0, 30
  %s61 = sld [smem:[%s60]]
  %s62 = scalar_lea.smem %s0, 31
  %s63 = sld [smem:[%s62]]
  %s64 = scalar_lea.smem %s0, 32
  %s65 = sld [smem:[%s64]]
  %s66 = scalar_lea.smem %s0, 33
  %s67 = sld [smem:[%s66]]
  %s68 = scalar_lea.smem %s0, 34
  %s69 = sld [smem:[%s68]]
  %s70 = scalar_lea.smem %s0, 35
  %s71 = sld [smem:[%s70]]
  %s72 = sld [smem:[#allocation0]]
  $region171: #{amnmt_forward.1} parent=0
    _
  %s74 = ssub.s32 1, %s72
  %s75 = scalar_select 0, %s74, %s72
  $region1: #{amnmt_forward.1} parent=0
    #allocation10 [shape = 'u8[512]{0}', space=vmem, size = 0x400, scoped, tag = 'output window, operand 0, single buffered']
    #allocation11 [shape = 's32[1]{0}', space=sflag, size = 0x4, scoped, tag = 'scoped memory for amnmt_forward.1']
    %76 = vsyncpa [#allocation11], 0
    // Predicated region
    $region2: #{amnmt_forward.1} parent=1 // pred_check
      _
    $region3: #{amnmt_forward.1} parent=1 // pred_check_branch
      %78 = sbr.rel (0) target = $region5
    $region4: #{amnmt_forward.1} parent=1 // pred_region
      _
    $region5: #{amnmt_forward.1} parent=1 // pred_fallthru
      _
    // Predicated region
    $region6: #{amnmt_forward.1} parent=1 // pred_check
      _
    $region7: #{amnmt_forward.1} parent=1 // pred_check_branch
      %80 = sbr.rel (0) target = $region9
    $region8: #{amnmt_forward.1} parent=1 // pred_region
      _
    $region9: #{amnmt_forward.1} parent=1 // pred_fallthru
      _
    // Predicated region
    $region10: #{amnmt_forward.1} parent=1 // pred_check
      _
    $region11: #{amnmt_forward.1} parent=1 // pred_check_branch
      %82 = sbr.rel (0) target = $region13
    $region12: #{amnmt_forward.1} parent=1 // pred_region
      _
    $region13: #{amnmt_forward.1} parent=1 // pred_fallthru
      _
    // Predicated region
    $region14: #{amnmt_forward.1} parent=1 // pred_check
      _
    $region15: #{amnmt_forward.1} parent=1 // pred_check_branch
      %84 = sbr.rel (0) target = $region17
    $region16: #{amnmt_forward.1} parent=1 // pred_region
      _
    $region17: #{amnmt_forward.1} parent=1 // pred_fallthru
      _
    // Predicated region
    $region18: #{amnmt_forward.1} parent=1 // pred_check
      _
    $region19: #{amnmt_forward.1} parent=1 // pred_check_branch
      %86 = sbr.rel (0) target = $region21
    $region20: #{amnmt_forward.1} parent=1 // pred_region
      _
    $region21: #{amnmt_forward.1} parent=1 // pred_fallthru
      _
    // Predicated region
    $region22: #{amnmt_forward.1} parent=1 // pred_check
      _
    $region23: #{amnmt_forward.1} parent=1 // pred_check_branch
      %88 = sbr.rel (0) target = $region25
    $region24: #{amnmt_forward.1} parent=1 // pred_region
      _
    $region25: #{amnmt_forward.1} parent=1 // pred_fallthru
      _
    // Predicated region
    $region26: #{amnmt_forward.1} parent=1 // pred_check
      _
    $region27: #{amnmt_forward.1} parent=1 // pred_check_branch
      %90 = sbr.rel (0) target = $region29
    $region28: #{amnmt_forward.1} parent=1 // pred_region
      _
    $region29: #{amnmt_forward.1} parent=1 // pred_fallthru
      _
    // Predicated region
    $region30: #{amnmt_forward.1} parent=1 // pred_check
      _
    $region31: #{amnmt_forward.1} parent=1 // pred_check_branch
      %92 = sbr.rel (0) target = $region33
    $region32: #{amnmt_forward.1} parent=1 // pred_region
      _
    $region33: #{amnmt_forward.1} parent=1 // pred_fallthru
      _
    // Predicated region
    $region34: #{amnmt_forward.1} parent=1 // pred_check
      _
    $region35: #{amnmt_forward.1} parent=1 // pred_check_branch
      %94 = sbr.rel (0) target = $region37
    $region36: #{amnmt_forward.1} parent=1 // pred_region
      _
    $region37: #{amnmt_forward.1} parent=1 // pred_fallthru
      _
    // Predicated region
    $region38: #{amnmt_forward.1} parent=1 // pred_check
      _
    $region39: #{amnmt_forward.1} parent=1 // pred_check_branch
      %96 = sbr.rel (0) target = $region41
    $region40: #{amnmt_forward.1} parent=1 // pred_region
      _
    $region41: #{amnmt_forward.1} parent=1 // pred_fallthru
      _
    // Predicated region
    $region42: #{amnmt_forward.1} parent=1 // pred_check
      _
    $region43: #{amnmt_forward.1} parent=1 // pred_check_branch
      %98 = sbr.rel (0) target = $region45
    $region44: #{amnmt_forward.1} parent=1 // pred_region
      _
    $region45: #{amnmt_forward.1} parent=1 // pred_fallthru
      _
    // Predicated region
    $region46: #{amnmt_forward.1} parent=1 // pred_check
      _
    $region47: #{amnmt_forward.1} parent=1 // pred_check_branch
      %100 = sbr.rel (0) target = $region49
    $region48: #{amnmt_forward.1} parent=1 // pred_region
      _
    $region49: #{amnmt_forward.1} parent=1 // pred_fallthru
      _
    // Predicated region
    $region50: #{amnmt_forward.1} parent=1 // pred_check
      _
    $region51: #{amnmt_forward.1} parent=1 // pred_check_branch
      %102 = sbr.rel (0) target = $region53
    $region52: #{amnmt_forward.1} parent=1 // pred_region
      _
    $region53: #{amnmt_forward.1} parent=1 // pred_fallthru
      _
    // Predicated region
    $region54: #{amnmt_forward.1} parent=1 // pred_check
      _
    $region55: #{amnmt_forward.1} parent=1 // pred_check_branch
      %104 = sbr.rel (0) target = $region57
    $region56: #{amnmt_forward.1} parent=1 // pred_region
      _
    $region57: #{amnmt_forward.1} parent=1 // pred_fallthru
      _
    // Predicated region
    $region58: #{amnmt_forward.1} parent=1 // pred_check
      _
    $region59: #{amnmt_forward.1} parent=1 // pred_check_branch
      %106 = sbr.rel (0) target = $region61
    $region60: #{amnmt_forward.1} parent=1 // pred_region
      _
    $region61: #{amnmt_forward.1} parent=1 // pred_fallthru
      _
    // Predicated region
    $region62: #{amnmt_forward.1} parent=1 // pred_check
      _
    $region63: #{amnmt_forward.1} parent=1 // pred_check_branch
      %108 = sbr.rel (0) target = $region65
    $region64: #{amnmt_forward.1} parent=1 // pred_region
      _
    $region65: #{amnmt_forward.1} parent=1 // pred_fallthru
      _
    // Predicated region
    $region66: #{amnmt_forward.1} parent=1 // pred_check
      _
    $region67: #{amnmt_forward.1} parent=1 // pred_check_branch
      %110 = sbr.rel (0) target = $region69
    $region68: #{amnmt_forward.1} parent=1 // pred_region
      _
    $region69: #{amnmt_forward.1} parent=1 // pred_fallthru
      _
    // Predicated region
    $region70: #{amnmt_forward.1} parent=1 // pred_check
      _
    $region71: #{amnmt_forward.1} parent=1 // pred_check_branch
      %112 = sbr.rel (0) target = $region73
    $region72: #{amnmt_forward.1} parent=1 // pred_region
      _
    $region73: #{amnmt_forward.1} parent=1 // pred_fallthru
      _
    // Predicated region
    $region74: #{amnmt_forward.1} parent=1 // pred_check
      _
    $region75: #{amnmt_forward.1} parent=1 // pred_check_branch
      %114 = sbr.rel (0) target = $region77
    $region76: #{amnmt_forward.1} parent=1 // pred_region
      _
    $region77: #{amnmt_forward.1} parent=1 // pred_fallthru
      _
    // Predicated region
    $region78: #{amnmt_forward.1} parent=1 // pred_check
      _
    $region79: #{amnmt_forward.1} parent=1 // pred_check_branch
      %116 = sbr.rel (0) target = $region81
    $region80: #{amnmt_forward.1} parent=1 // pred_region
      _
    $region81: #{amnmt_forward.1} parent=1 // pred_fallthru
      _
    // Predicated region
    $region82: #{amnmt_forward.1} parent=1 // pred_check
      _
    $region83: #{amnmt_forward.1} parent=1 // pred_check_branch
      %118 = sbr.rel (0) target = $region85
    $region84: #{amnmt_forward.1} parent=1 // pred_region
      _
    $region85: #{amnmt_forward.1} parent=1 // pred_fallthru
      _
    // Predicated region
    $region86: #{amnmt_forward.1} parent=1 // pred_check
      _
    $region87: #{amnmt_forward.1} parent=1 // pred_check_branch
      %120 = sbr.rel (0) target = $region89
    $region88: #{amnmt_forward.1} parent=1 // pred_region
      _
    $region89: #{amnmt_forward.1} parent=1 // pred_fallthru
      _
    // Predicated region
    $region90: #{amnmt_forward.1} parent=1 // pred_check
      _
    $region91: #{amnmt_forward.1} parent=1 // pred_check_branch
      %122 = sbr.rel (0) target = $region93
    $region92: #{amnmt_forward.1} parent=1 // pred_region
      _
    $region93: #{amnmt_forward.1} parent=1 // pred_fallthru
      _
    // Predicated region
    $region94: #{amnmt_forward.1} parent=1 // pred_check
      _
    $region95: #{amnmt_forward.1} parent=1 // pred_check_branch
      %124 = sbr.rel (0) target = $region97
    $region96: #{amnmt_forward.1} parent=1 // pred_region
      _
    $region97: #{amnmt_forward.1} parent=1 // pred_fallthru
      _
    // Predicated region
    $region98: #{amnmt_forward.1} parent=1 // pred_check
      _
    $region99: #{amnmt_forward.1} parent=1 // pred_check_branch
      %126 = sbr.rel (0) target = $region101
    $region100: #{amnmt_forward.1} parent=1 // pred_region
      _
    $region101: #{amnmt_forward.1} parent=1 // pred_fallthru
      _
    // Predicated region
    $region102: #{amnmt_forward.1} parent=1 // pred_check
      _
    $region103: #{amnmt_forward.1} parent=1 // pred_check_branch
      %128 = sbr.rel (0) target = $region105
    $region104: #{amnmt_forward.1} parent=1 // pred_region
      _
    $region105: #{amnmt_forward.1} parent=1 // pred_fallthru
      _
    // Predicated region
    $region106: #{amnmt_forward.1} parent=1 // pred_check
      _
    $region107: #{amnmt_forward.1} parent=1 // pred_check_branch
      %130 = sbr.rel (0) target = $region109
    $region108: #{amnmt_forward.1} parent=1 // pred_region
      _
    $region109: #{amnmt_forward.1} parent=1 // pred_fallthru
      _
    // Predicated region
    $region110: #{amnmt_forward.1} parent=1 // pred_check
      _
    $region111: #{amnmt_forward.1} parent=1 // pred_check_branch
      %132 = sbr.rel (0) target = $region113
    $region112: #{amnmt_forward.1} parent=1 // pred_region
      _
    $region113: #{amnmt_forward.1} parent=1 // pred_fallthru
      _
    // Predicated region
    $region114: #{amnmt_forward.1} parent=1 // pred_check
      _
    $region115: #{amnmt_forward.1} parent=1 // pred_check_branch
      %134 = sbr.rel (0) target = $region117
    $region116: #{amnmt_forward.1} parent=1 // pred_region
      _
    $region117: #{amnmt_forward.1} parent=1 // pred_fallthru
      _
    // Predicated region
    $region118: #{amnmt_forward.1} parent=1 // pred_check
      _
    $region119: #{amnmt_forward.1} parent=1 // pred_check_branch
      %136 = sbr.rel (0) target = $region121
    $region120: #{amnmt_forward.1} parent=1 // pred_region
      _
    $region121: #{amnmt_forward.1} parent=1 // pred_fallthru
      _
    // Predicated region
    $region122: #{amnmt_forward.1} parent=1 // pred_check
      _
    $region123: #{amnmt_forward.1} parent=1 // pred_check_branch
      %138 = sbr.rel (0) target = $region125
    $region124: #{amnmt_forward.1} parent=1 // pred_region
      _
    $region125: #{amnmt_forward.1} parent=1 // pred_fallthru
      _
    // Predicated region
    $region126: #{amnmt_forward.1} parent=1 // pred_check
      _
    $region127: #{amnmt_forward.1} parent=1 // pred_check_branch
      %140 = sbr.rel (0) target = $region129
    $region128: #{amnmt_forward.1} parent=1 // pred_region
      _
    $region129: #{amnmt_forward.1} parent=1 // pred_fallthru
      _
    // Predicated region
    $region130: #{amnmt_forward.1} parent=1 // pred_check
      _
    $region131: #{amnmt_forward.1} parent=1 // pred_check_branch
      %142 = sbr.rel (0) target = $region133
    $region132: #{amnmt_forward.1} parent=1 // pred_region
      _
    $region133: #{amnmt_forward.1} parent=1 // pred_fallthru
      _
    // Predicated region
    $region134: #{amnmt_forward.1} parent=1 // pred_check
      _
    $region135: #{amnmt_forward.1} parent=1 // pred_check_branch
      %144 = sbr.rel (0) target = $region137
    $region136: #{amnmt_forward.1} parent=1 // pred_region
      _
    $region137: #{amnmt_forward.1} parent=1 // pred_fallthru
      _
    // Predicated region
    $region138: #{amnmt_forward.1} parent=1 // pred_check
      _
    $region139: #{amnmt_forward.1} parent=1 // pred_check_branch
      %146 = sbr.rel (0) target = $region141
    $region140: #{amnmt_forward.1} parent=1 // pred_region
      _
    $region141: #{amnmt_forward.1} parent=1 // pred_fallthru
      _
    %v147 = vld [vmem:[%s1] sm:$0xf]
    %v148 = vld [vmem:[%s11] sm:$0xff]
    %v149 = vld [vmem:[%s11 + $0x8] sm:$0xff]
    %v150 = vld [vmem:[%s11 + $0x10] sm:$0xff]
    %v151 = vld [vmem:[%s11 + $0x18] sm:$0xff]
    %v152 = vld [vmem:[%s15] sm:$0x1]
    %v154 = vlaneseq
    %v155 = vshrl.u32 %v154, 7
    %v156 = vsub.s32 0, %v155
    %v157 = vrot.slane %v152, %v156
    %vm159 = vcmask 261120
    %v161 = vsel %vm159, %v147, 0
    %163 = vmatprep.subr.mxu0 0.0
    %164 = vmatpush1.msra.mxu0 0.0
    %165 = vmatprep.subr.mxu0 0.0
    %166 = vmatpush1.msra.mxu0 0.0
    %167 = vmatprep.subr.mxu0 0.0
    %168 = vmatpush1.msra.mxu0 0.0
    %169 = vmatprep.subr.mxu0 0.0
    %170 = vmatpush1.msra.mxu0 0.0
    %171 = vmatprep.subr.mxu0 0.0
    %172 = vmatpush1.msra.mxu0 0.0
    %173 = vmatprep.subr.mxu0 0.0
    %174 = vmatpush1.msra.mxu0 0.0
    %175 = vmatprep.subr.mxu0 0.0
    %176 = vmatpush1.msra.mxu0 0.0
    %177 = vmatprep.subr.mxu0 0.0
    %178 = vmatpush1.msra.mxu0 0.0
    %179 = vmatprep.subr.mxu0 0.0
    %180 = vmatpush1.msra.mxu0 0.0
    %181 = vmatprep.subr.mxu0 0.0
    %182 = vmatpush1.msra.mxu0 0.0
    %183 = vmatprep.subr.mxu0 0.0
    %184 = vmatpush1.msra.mxu0 0.0
    %185 = vmatprep.subr.mxu0 0.0
    %186 = vmatpush1.msra.mxu0 0.0
    %187 = vmatprep.subr.mxu0 0.0
    %188 = vmatpush1.msra.mxu0 %v151
    %189 = vmatprep.subr.mxu0 0.0
    %190 = vmatpush1.msra.mxu0 %v150
    %191 = vmatprep.subr.mxu0 0.0
    %192 = vmatpush1.msra.mxu0 %v149
    %193 = vmatprep.subr.mxu0 0.0
    %194 = vmatpush1.msra.mxu0 %v148
    %195 = vmatprep.subr.mxu0 0.0
    %196 = vmatpush2.msra.mxu0 0.0
    %197 = vmatprep.subr.mxu0 0.0
    %198 = vmatpush2.msra.mxu0 0.0
    %199 = vmatprep.subr.mxu0 0.0
    %200 = vmatpush2.msra.mxu0 0.0
    %201 = vmatprep.subr.mxu0 0.0
    %202 = vmatpush2.msra.mxu0 0.0
    %203 = vmatprep.subr.mxu0 0.0
    %204 = vmatpush2.msra.mxu0 0.0
    %205 = vmatprep.subr.mxu0 0.0
    %206 = vmatpush2.msra.mxu0 0.0
    %207 = vmatprep.subr.mxu0 0.0
    %208 = vmatpush2.msra.mxu0 0.0
    %209 = vmatprep.subr.mxu0 0.0
    %210 = vmatpush2.msra.mxu0 0.0
    %211 = vmatprep.subr.mxu0 0.0
    %212 = vmatpush2.msra.mxu0 0.0
    %213 = vmatprep.subr.mxu0 0.0
    %214 = vmatpush2.msra.mxu0 0.0
    %215 = vmatprep.subr.mxu0 0.0
    %216 = vmatpush2.msra.mxu0 0.0
    %217 = vmatprep.subr.mxu0 0.0
    %218 = vmatpush2.msra.mxu0 0.0
    %219 = vmatprep.subr.mxu0 0.0
    %220 = vmatpush2.msra.mxu0 0.0
    %221 = vmatprep.subr.mxu0 0.0
    %222 = vmatpush2.msra.mxu0 0.0
    %223 = vmatprep.subr.mxu0 0.0
    %224 = vmatpush2.msra.mxu0 0.0
    %225 = vmatprep.subr.mxu0 0.0
    %226 = vmatpush2.msra.mxu0 0.0
    %227 = vmatprep.mubr.f32.mxu0 0.0
    %228 = vmatmul.mubr.f32.gmra.mxu0 %v161
    %v229 = vpop.f32.mrf.mxu0
    %v230 = vadd.f32 %v157, %v229
    %v231 = vpop.f32.mrf.mxu0
    %232 = vdwg.mxu0
    %vm233 = vcmask 781312
    %234 = vst.msk [vmem:[#allocation2] sm:$0xf] %vm233, %v230
    %v235 = vld [vmem:[%s19] sm:$0xff]
    %v236 = vld [vmem:[%s19 + $0x8] sm:$0xff]
    %v237 = vld [vmem:[%s19 + $0x10] sm:$0xff]
    %v238 = vld [vmem:[%s19 + $0x18] sm:$0xff]
    %v239 = vld [vmem:[%s23] sm:$0x1]
    %v241 = vlaneseq
    %v242 = vshrl.u32 %v241, 7
    %v243 = vsub.s32 0, %v242
    %v244 = vrot.slane %v239, %v243
    %246 = vmatprep.subr.mxu0 0.0
    %247 = vmatpush1.msra.mxu0 0.0
    %248 = vmatprep.subr.mxu0 0.0
    %249 = vmatpush1.msra.mxu0 0.0
    %250 = vmatprep.subr.mxu0 0.0
    %251 = vmatpush1.msra.mxu0 0.0
    %252 = vmatprep.subr.mxu0 0.0
    %253 = vmatpush1.msra.mxu0 0.0
    %254 = vmatprep.subr.mxu0 0.0
    %255 = vmatpush1.msra.mxu0 0.0
    %256 = vmatprep.subr.mxu0 0.0
    %257 = vmatpush1.msra.mxu0 0.0
    %258 = vmatprep.subr.mxu0 0.0
    %259 = vmatpush1.msra.mxu0 0.0
    %260 = vmatprep.subr.mxu0 0.0
    %261 = vmatpush1.msra.mxu0 0.0
    %262 = vmatprep.subr.mxu0 0.0
    %263 = vmatpush1.msra.mxu0 0.0
    %264 = vmatprep.subr.mxu0 0.0
    %265 = vmatpush1.msra.mxu0 0.0
    %266 = vmatprep.subr.mxu0 0.0
    %267 = vmatpush1.msra.mxu0 0.0
    %268 = vmatprep.subr.mxu0 0.0
    %269 = vmatpush1.msra.mxu0 0.0
    %270 = vmatprep.subr.mxu0 0.0
    %271 = vmatpush1.msra.mxu0 %v238
    %272 = vmatprep.subr.mxu0 0.0
    %273 = vmatpush1.msra.mxu0 %v237
    %274 = vmatprep.subr.mxu0 0.0
    %275 = vmatpush1.msra.mxu0 %v236
    %276 = vmatprep.subr.mxu0 0.0
    %277 = vmatpush1.msra.mxu0 %v235
    %278 = vmatprep.subr.mxu0 0.0
    %279 = vmatpush2.msra.mxu0 0.0
    %280 = vmatprep.subr.mxu0 0.0
    %281 = vmatpush2.msra.mxu0 0.0
    %282 = vmatprep.subr.mxu0 0.0
    %283 = vmatpush2.msra.mxu0 0.0
    %284 = vmatprep.subr.mxu0 0.0
    %285 = vmatpush2.msra.mxu0 0.0
    %286 = vmatprep.subr.mxu0 0.0
    %287 = vmatpush2.msra.mxu0 0.0
    %288 = vmatprep.subr.mxu0 0.0
    %289 = vmatpush2.msra.mxu0 0.0
    %290 = vmatprep.subr.mxu0 0.0
    %291 = vmatpush2.msra.mxu0 0.0
    %292 = vmatprep.subr.mxu0 0.0
    %293 = vmatpush2.msra.mxu0 0.0
    %294 = vmatprep.subr.mxu0 0.0
    %295 = vmatpush2.msra.mxu0 0.0
    %296 = vmatprep.subr.mxu0 0.0
    %297 = vmatpush2.msra.mxu0 0.0
    %298 = vmatprep.subr.mxu0 0.0
    %299 = vmatpush2.msra.mxu0 0.0
    %300 = vmatprep.subr.mxu0 0.0
    %301 = vmatpush2.msra.mxu0 0.0
    %302 = vmatprep.subr.mxu0 0.0
    %303 = vmatpush2.msra.mxu0 0.0
    %304 = vmatprep.subr.mxu0 0.0
    %305 = vmatpush2.msra.mxu0 0.0
    %306 = vmatprep.subr.mxu0 0.0
    %307 = vmatpush2.msra.mxu0 0.0
    %308 = vmatprep.subr.mxu0 0.0
    %309 = vmatpush2.msra.mxu0 0.0
    %310 = vmatprep.mubr.f32.mxu0 0.0
    %311 = vmatmul.mubr.f32.gmra.mxu0 %v161
    %v312 = vpop.f32.mrf.mxu0
    %v313 = vadd.f32 %v244, %v312
    %v314 = vpop.f32.mrf.mxu0
    %315 = vdwg.mxu0
    %316 = vst.msk [vmem:[#allocation3] sm:$0xf] %vm233, %v313
    %s317 = scalar_lea.vmem %s1, 4
    %v318 = vld [vmem:[%s317] sm:$0xf]
    %v319 = vld [vmem:[%s11] sm:$0xff]
    %v320 = vld [vmem:[%s11 + $0x8] sm:$0xff]
    %v321 = vld [vmem:[%s11 + $0x10] sm:$0xff]
    %v322 = vld [vmem:[%s11 + $0x18] sm:$0xff]
    %v323 = vld [vmem:[%s15] sm:$0x1]
    %v325 = vlaneseq
    %v326 = vshrl.u32 %v325, 7
    %v327 = vsub.s32 0, %v326
    %v328 = vrot.slane %v323, %v327
    %v331 = vsel %vm159, %v318, 0
    %333 = vmatprep.subr.mxu0 0.0
    %334 = vmatpush1.msra.mxu0 0.0
    %335 = vmatprep.subr.mxu0 0.0
    %336 = vmatpush1.msra.mxu0 0.0
    %337 = vmatprep.subr.mxu0 0.0
    %338 = vmatpush1.msra.mxu0 0.0
    %339 = vmatprep.subr.mxu0 0.0
    %340 = vmatpush1.msra.mxu0 0.0
    %341 = vmatprep.subr.mxu0 0.0
    %342 = vmatpush1.msra.mxu0 0.0
    %343 = vmatprep.subr.mxu0 0.0
    %344 = vmatpush1.msra.mxu0 0.0
    %345 = vmatprep.subr.mxu0 0.0
    %346 = vmatpush1.msra.mxu0 0.0
    %347 = vmatprep.subr.mxu0 0.0
    %348 = vmatpush1.msra.mxu0 0.0
    %349 = vmatprep.subr.mxu0 0.0
    %350 = vmatpush1.msra.mxu0 0.0
    %351 = vmatprep.subr.mxu0 0.0
    %352 = vmatpush1.msra.mxu0 0.0
    %353 = vmatprep.subr.mxu0 0.0
    %354 = vmatpush1.msra.mxu0 0.0
    %355 = vmatprep.subr.mxu0 0.0
    %356 = vmatpush1.msra.mxu0 0.0
    %357 = vmatprep.subr.mxu0 0.0
    %358 = vmatpush1.msra.mxu0 %v322
    %359 = vmatprep.subr.mxu0 0.0
    %360 = vmatpush1.msra.mxu0 %v321
    %361 = vmatprep.subr.mxu0 0.0
    %362 = vmatpush1.msra.mxu0 %v320
    %363 = vmatprep.subr.mxu0 0.0
    %364 = vmatpush1.msra.mxu0 %v319
    %365 = vmatprep.subr.mxu0 0.0
    %366 = vmatpush2.msra.mxu0 0.0
    %367 = vmatprep.subr.mxu0 0.0
    %368 = vmatpush2.msra.mxu0 0.0
    %369 = vmatprep.subr.mxu0 0.0
    %370 = vmatpush2.msra.mxu0 0.0
    %371 = vmatprep.subr.mxu0 0.0
    %372 = vmatpush2.msra.mxu0 0.0
    %373 = vmatprep.subr.mxu0 0.0
    %374 = vmatpush2.msra.mxu0 0.0
    %375 = vmatprep.subr.mxu0 0.0
    %376 = vmatpush2.msra.mxu0 0.0
    %377 = vmatprep.subr.mxu0 0.0
    %378 = vmatpush2.msra.mxu0 0.0
    %379 = vmatprep.subr.mxu0 0.0
    %380 = vmatpush2.msra.mxu0 0.0
    %381 = vmatprep.subr.mxu0 0.0
    %382 = vmatpush2.msra.mxu0 0.0
    %383 = vmatprep.subr.mxu0 0.0
    %384 = vmatpush2.msra.mxu0 0.0
    %385 = vmatprep.subr.mxu0 0.0
    %386 = vmatpush2.msra.mxu0 0.0
    %387 = vmatprep.subr.mxu0 0.0
    %388 = vmatpush2.msra.mxu0 0.0
    %389 = vmatprep.subr.mxu0 0.0
    %390 = vmatpush2.msra.mxu0 0.0
    %391 = vmatprep.subr.mxu0 0.0
    %392 = vmatpush2.msra.mxu0 0.0
    %393 = vmatprep.subr.mxu0 0.0
    %394 = vmatpush2.msra.mxu0 0.0
    %395 = vmatprep.subr.mxu0 0.0
    %396 = vmatpush2.msra.mxu0 0.0
    %397 = vmatprep.mubr.f32.mxu0 0.0
    %398 = vmatmul.mubr.f32.gmra.mxu0 %v331
    %v399 = vpop.f32.mrf.mxu0
    %v400 = vadd.f32 %v328, %v399
    %v401 = vpop.f32.mrf.mxu0
    %402 = vdwg.mxu0
    %s403 = scalar_lea.vmem [#allocation2], 4
    %404 = vst.msk [vmem:[%s403] sm:$0xf] %vm233, %v400
    %v405 = vld [vmem:[%s19] sm:$0xff]
    %v406 = vld [vmem:[%s19 + $0x8] sm:$0xff]
    %v407 = vld [vmem:[%s19 + $0x10] sm:$0xff]
    %v408 = vld [vmem:[%s19 + $0x18] sm:$0xff]
    %v409 = vld [vmem:[%s23] sm:$0x1]
    %v411 = vlaneseq
    %v412 = vshrl.u32 %v411, 7
    %v413 = vsub.s32 0, %v412
    %v414 = vrot.slane %v409, %v413
    %416 = vmatprep.subr.mxu0 0.0
    %417 = vmatpush1.msra.mxu0 0.0
    %418 = vmatprep.subr.mxu0 0.0
    %419 = vmatpush1.msra.mxu0 0.0
    %420 = vmatprep.subr.mxu0 0.0
    %421 = vmatpush1.msra.mxu0 0.0
    %422 = vmatprep.subr.mxu0 0.0
    %423 = vmatpush1.msra.mxu0 0.0
    %424 = vmatprep.subr.mxu0 0.0
    %425 = vmatpush1.msra.mxu0 0.0
    %426 = vmatprep.subr.mxu0 0.0
    %427 = vmatpush1.msra.mxu0 0.0
    %428 = vmatprep.subr.mxu0 0.0
    %429 = vmatpush1.msra.mxu0 0.0
    %430 = vmatprep.subr.mxu0 0.0
    %431 = vmatpush1.msra.mxu0 0.0
    %432 = vmatprep.subr.mxu0 0.0
    %433 = vmatpush1.msra.mxu0 0.0
    %434 = vmatprep.subr.mxu0 0.0
    %435 = vmatpush1.msra.mxu0 0.0
    %436 = vmatprep.subr.mxu0 0.0
    %437 = vmatpush1.msra.mxu0 0.0
    %438 = vmatprep.subr.mxu0 0.0
    %439 = vmatpush1.msra.mxu0 0.0
    %440 = vmatprep.subr.mxu0 0.0
    %441 = vmatpush1.msra.mxu0 %v408
    %442 = vmatprep.subr.mxu0 0.0
    %443 = vmatpush1.msra.mxu0 %v407
    %444 = vmatprep.subr.mxu0 0.0
    %445 = vmatpush1.msra.mxu0 %v406
    %446 = vmatprep.subr.mxu0 0.0
    %447 = vmatpush1.msra.mxu0 %v405
    %448 = vmatprep.subr.mxu0 0.0
    %449 = vmatpush2.msra.mxu0 0.0
    %450 = vmatprep.subr.mxu0 0.0
    %451 = vmatpush2.msra.mxu0 0.0
    %452 = vmatprep.subr.mxu0 0.0
    %453 = vmatpush2.msra.mxu0 0.0
    %454 = vmatprep.subr.mxu0 0.0
    %455 = vmatpush2.msra.mxu0 0.0
    %456 = vmatprep.subr.mxu0 0.0
    %457 = vmatpush2.msra.mxu0 0.0
    %458 = vmatprep.subr.mxu0 0.0
    %459 = vmatpush2.msra.mxu0 0.0
    %460 = vmatprep.subr.mxu0 0.0
    %461 = vmatpush2.msra.mxu0 0.0
    %462 = vmatprep.subr.mxu0 0.0
    %463 = vmatpush2.msra.mxu0 0.0
    %464 = vmatprep.subr.mxu0 0.0
    %465 = vmatpush2.msra.mxu0 0.0
    %466 = vmatprep.subr.mxu0 0.0
    %467 = vmatpush2.msra.mxu0 0.0
    %468 = vmatprep.subr.mxu0 0.0
    %469 = vmatpush2.msra.mxu0 0.0
    %470 = vmatprep.subr.mxu0 0.0
    %471 = vmatpush2.msra.mxu0 0.0
    %472 = vmatprep.subr.mxu0 0.0
    %473 = vmatpush2.msra.mxu0 0.0
    %474 = vmatprep.subr.mxu0 0.0
    %475 = vmatpush2.msra.mxu0 0.0
    %476 = vmatprep.subr.mxu0 0.0
    %477 = vmatpush2.msra.mxu0 0.0
    %478 = vmatprep.subr.mxu0 0.0
    %479 = vmatpush2.msra.mxu0 0.0
    %480 = vmatprep.mubr.f32.mxu0 0.0
    %481 = vmatmul.mubr.f32.gmra.mxu0 %v331
    %v482 = vpop.f32.mrf.mxu0
    %v483 = vadd.f32 %v414, %v482
    %v484 = vpop.f32.mrf.mxu0
    %485 = vdwg.mxu0
    %s486 = scalar_lea.vmem [#allocation3], 4
    %487 = vst.msk [vmem:[%s486] sm:$0xf] %vm233, %v483
    %s488 = scalar_lea.vmem %s1, 8
    %v489 = vld [vmem:[%s488] sm:$0xf]
    %v490 = vld [vmem:[%s11] sm:$0xff]
    %v491 = vld [vmem:[%s11 + $0x8] sm:$0xff]
    %v492 = vld [vmem:[%s11 + $0x10] sm:$0xff]
    %v493 = vld [vmem:[%s11 + $0x18] sm:$0xff]
    %v494 = vld [vmem:[%s15] sm:$0x1]
    %v496 = vlaneseq
    %v497 = vshrl.u32 %v496, 7
    %v498 = vsub.s32 0, %v497
    %v499 = vrot.slane %v494, %v498
    %v502 = vsel %vm159, %v489, 0
    %504 = vmatprep.subr.mxu0 0.0
    %505 = vmatpush1.msra.mxu0 0.0
    %506 = vmatprep.subr.mxu0 0.0
    %507 = vmatpush1.msra.mxu0 0.0
    %508 = vmatprep.subr.mxu0 0.0
    %509 = vmatpush1.msra.mxu0 0.0
    %510 = vmatprep.subr.mxu0 0.0
    %511 = vmatpush1.msra.mxu0 0.0
    %512 = vmatprep.subr.mxu0 0.0
    %513 = vmatpush1.msra.mxu0 0.0
    %514 = vmatprep.subr.mxu0 0.0
    %515 = vmatpush1.msra.mxu0 0.0
    %516 = vmatprep.subr.mxu0 0.0
    %517 = vmatpush1.msra.mxu0 0.0
    %518 = vmatprep.subr.mxu0 0.0
    %519 = vmatpush1.msra.mxu0 0.0
    %520 = vmatprep.subr.mxu0 0.0
    %521 = vmatpush1.msra.mxu0 0.0
    %522 = vmatprep.subr.mxu0 0.0
    %523 = vmatpush1.msra.mxu0 0.0
    %524 = vmatprep.subr.mxu0 0.0
    %525 = vmatpush1.msra.mxu0 0.0
    %526 = vmatprep.subr.mxu0 0.0
    %527 = vmatpush1.msra.mxu0 0.0
    %528 = vmatprep.subr.mxu0 0.0
    %529 = vmatpush1.msra.mxu0 %v493
    %530 = vmatprep.subr.mxu0 0.0
    %531 = vmatpush1.msra.mxu0 %v492
    %532 = vmatprep.subr.mxu0 0.0
    %533 = vmatpush1.msra.mxu0 %v491
    %534 = vmatprep.subr.mxu0 0.0
    %535 = vmatpush1.msra.mxu0 %v490
    %536 = vmatprep.subr.mxu0 0.0
    %537 = vmatpush2.msra.mxu0 0.0
    %538 = vmatprep.subr.mxu0 0.0
    %539 = vmatpush2.msra.mxu0 0.0
    %540 = vmatprep.subr.mxu0 0.0
    %541 = vmatpush2.msra.mxu0 0.0
    %542 = vmatprep.subr.mxu0 0.0
    %543 = vmatpush2.msra.mxu0 0.0
    %544 = vmatprep.subr.mxu0 0.0
    %545 = vmatpush2.msra.mxu0 0.0
    %546 = vmatprep.subr.mxu0 0.0
    %547 = vmatpush2.msra.mxu0 0.0
    %548 = vmatprep.subr.mxu0 0.0
    %549 = vmatpush2.msra.mxu0 0.0
    %550 = vmatprep.subr.mxu0 0.0
    %551 = vmatpush2.msra.mxu0 0.0
    %552 = vmatprep.subr.mxu0 0.0
    %553 = vmatpush2.msra.mxu0 0.0
    %554 = vmatprep.subr.mxu0 0.0
    %555 = vmatpush2.msra.mxu0 0.0
    %556 = vmatprep.subr.mxu0 0.0
    %557 = vmatpush2.msra.mxu0 0.0
    %558 = vmatprep.subr.mxu0 0.0
    %559 = vmatpush2.msra.mxu0 0.0
    %560 = vmatprep.subr.mxu0 0.0
    %561 = vmatpush2.msra.mxu0 0.0
    %562 = vmatprep.subr.mxu0 0.0
    %563 = vmatpush2.msra.mxu0 0.0
    %564 = vmatprep.subr.mxu0 0.0
    %565 = vmatpush2.msra.mxu0 0.0
    %566 = vmatprep.subr.mxu0 0.0
    %567 = vmatpush2.msra.mxu0 0.0
    %568 = vmatprep.mubr.f32.mxu0 0.0
    %569 = vmatmul.mubr.f32.gmra.mxu0 %v502
    %v570 = vpop.f32.mrf.mxu0
    %v571 = vadd.f32 %v499, %v570
    %v572 = vpop.f32.mrf.mxu0
    %573 = vdwg.mxu0
    %s574 = scalar_lea.vmem [#allocation2], 8
    %575 = vst.msk [vmem:[%s574] sm:$0xf] %vm233, %v571
    %v576 = vld [vmem:[%s19] sm:$0xff]
    %v577 = vld [vmem:[%s19 + $0x8] sm:$0xff]
    %v578 = vld [vmem:[%s19 + $0x10] sm:$0xff]
    %v579 = vld [vmem:[%s19 + $0x18] sm:$0xff]
    %v580 = vld [vmem:[%s23] sm:$0x1]
    %v582 = vlaneseq
    %v583 = vshrl.u32 %v582, 7
    %v584 = vsub.s32 0, %v583
    %v585 = vrot.slane %v580, %v584
    %587 = vmatprep.subr.mxu0 0.0
    %588 = vmatpush1.msra.mxu0 0.0
    %589 = vmatprep.subr.mxu0 0.0
    %590 = vmatpush1.msra.mxu0 0.0
    %591 = vmatprep.subr.mxu0 0.0
    %592 = vmatpush1.msra.mxu0 0.0
    %593 = vmatprep.subr.mxu0 0.0
    %594 = vmatpush1.msra.mxu0 0.0
    %595 = vmatprep.subr.mxu0 0.0
    %596 = vmatpush1.msra.mxu0 0.0
    %597 = vmatprep.subr.mxu0 0.0
    %598 = vmatpush1.msra.mxu0 0.0
    %599 = vmatprep.subr.mxu0 0.0
    %600 = vmatpush1.msra.mxu0 0.0
    %601 = vmatprep.subr.mxu0 0.0
    %602 = vmatpush1.msra.mxu0 0.0
    %603 = vmatprep.subr.mxu0 0.0
    %604 = vmatpush1.msra.mxu0 0.0
    %605 = vmatprep.subr.mxu0 0.0
    %606 = vmatpush1.msra.mxu0 0.0
    %607 = vmatprep.subr.mxu0 0.0
    %608 = vmatpush1.msra.mxu0 0.0
    %609 = vmatprep.subr.mxu0 0.0
    %610 = vmatpush1.msra.mxu0 0.0
    %611 = vmatprep.subr.mxu0 0.0
    %612 = vmatpush1.msra.mxu0 %v579
    %613 = vmatprep.subr.mxu0 0.0
    %614 = vmatpush1.msra.mxu0 %v578
    %615 = vmatprep.subr.mxu0 0.0
    %616 = vmatpush1.msra.mxu0 %v577
    %617 = vmatprep.subr.mxu0 0.0
    %618 = vmatpush1.msra.mxu0 %v576
    %619 = vmatprep.subr.mxu0 0.0
    %620 = vmatpush2.msra.mxu0 0.0
    %621 = vmatprep.subr.mxu0 0.0
    %622 = vmatpush2.msra.mxu0 0.0
    %623 = vmatprep.subr.mxu0 0.0
    %624 = vmatpush2.msra.mxu0 0.0
    %625 = vmatprep.subr.mxu0 0.0
    %626 = vmatpush2.msra.mxu0 0.0
    %627 = vmatprep.subr.mxu0 0.0
    %628 = vmatpush2.msra.mxu0 0.0
    %629 = vmatprep.subr.mxu0 0.0
    %630 = vmatpush2.msra.mxu0 0.0
    %631 = vmatprep.subr.mxu0 0.0
    %632 = vmatpush2.msra.mxu0 0.0
    %633 = vmatprep.subr.mxu0 0.0
    %634 = vmatpush2.msra.mxu0 0.0
    %635 = vmatprep.subr.mxu0 0.0
    %636 = vmatpush2.msra.mxu0 0.0
    %637 = vmatprep.subr.mxu0 0.0
    %638 = vmatpush2.msra.mxu0 0.0
    %639 = vmatprep.subr.mxu0 0.0
    %640 = vmatpush2.msra.mxu0 0.0
    %641 = vmatprep.subr.mxu0 0.0
    %642 = vmatpush2.msra.mxu0 0.0
    %643 = vmatprep.subr.mxu0 0.0
    %644 = vmatpush2.msra.mxu0 0.0
    %645 = vmatprep.subr.mxu0 0.0
    %646 = vmatpush2.msra.mxu0 0.0
    %647 = vmatprep.subr.mxu0 0.0
    %648 = vmatpush2.msra.mxu0 0.0
    %649 = vmatprep.subr.mxu0 0.0
    %650 = vmatpush2.msra.mxu0 0.0
    %651 = vmatprep.mubr.f32.mxu0 0.0
    %652 = vmatmul.mubr.f32.gmra.mxu0 %v502
    %v653 = vpop.f32.mrf.mxu0
    %v654 = vadd.f32 %v585, %v653
    %v655 = vpop.f32.mrf.mxu0
    %656 = vdwg.mxu0
    %s657 = scalar_lea.vmem [#allocation3], 8
    %658 = vst.msk [vmem:[%s657] sm:$0xf] %vm233, %v654
    %s659 = scalar_lea.vmem %s1, 12
    %v660 = vld [vmem:[%s659] sm:$0xf]
    %v661 = vld [vmem:[%s11] sm:$0xff]
    %v662 = vld [vmem:[%s11 + $0x8] sm:$0xff]
    %v663 = vld [vmem:[%s11 + $0x10] sm:$0xff]
    %v664 = vld [vmem:[%s11 + $0x18] sm:$0xff]
    %v665 = vld [vmem:[%s15] sm:$0x1]
    %v667 = vlaneseq
    %v668 = vshrl.u32 %v667, 7
    %v669 = vsub.s32 0, %v668
    %v670 = vrot.slane %v665, %v669
    %v673 = vsel %vm159, %v660, 0
    %675 = vmatprep.subr.mxu0 0.0
    %676 = vmatpush1.msra.mxu0 0.0
    %677 = vmatprep.subr.mxu0 0.0
    %678 = vmatpush1.msra.mxu0 0.0
    %679 = vmatprep.subr.mxu0 0.0
    %680 = vmatpush1.msra.mxu0 0.0
    %681 = vmatprep.subr.mxu0 0.0
    %682 = vmatpush1.msra.mxu0 0.0
    %683 = vmatprep.subr.mxu0 0.0
    %684 = vmatpush1.msra.mxu0 0.0
    %685 = vmatprep.subr.mxu0 0.0
    %686 = vmatpush1.msra.mxu0 0.0
    %687 = vmatprep.subr.mxu0 0.0
    %688 = vmatpush1.msra.mxu0 0.0
    %689 = vmatprep.subr.mxu0 0.0
    %690 = vmatpush1.msra.mxu0 0.0
    %691 = vmatprep.subr.mxu0 0.0
    %692 = vmatpush1.msra.mxu0 0.0
    %693 = vmatprep.subr.mxu0 0.0
    %694 = vmatpush1.msra.mxu0 0.0
    %695 = vmatprep.subr.mxu0 0.0
    %696 = vmatpush1.msra.mxu0 0.0
    %697 = vmatprep.subr.mxu0 0.0
    %698 = vmatpush1.msra.mxu0 0.0
    %699 = vmatprep.subr.mxu0 0.0
    %700 = vmatpush1.msra.mxu0 %v664
    %701 = vmatprep.subr.mxu0 0.0
    %702 = vmatpush1.msra.mxu0 %v663
    %703 = vmatprep.subr.mxu0 0.0
    %704 = vmatpush1.msra.mxu0 %v662
    %705 = vmatprep.subr.mxu0 0.0
    %706 = vmatpush1.msra.mxu0 %v661
    %707 = vmatprep.subr.mxu0 0.0
    %708 = vmatpush2.msra.mxu0 0.0
    %709 = vmatprep.subr.mxu0 0.0
    %710 = vmatpush2.msra.mxu0 0.0
    %711 = vmatprep.subr.mxu0 0.0
    %712 = vmatpush2.msra.mxu0 0.0
    %713 = vmatprep.subr.mxu0 0.0
    %714 = vmatpush2.msra.mxu0 0.0
    %715 = vmatprep.subr.mxu0 0.0
    %716 = vmatpush2.msra.mxu0 0.0
    %717 = vmatprep.subr.mxu0 0.0
    %718 = vmatpush2.msra.mxu0 0.0
    %719 = vmatprep.subr.mxu0 0.0
    %720 = vmatpush2.msra.mxu0 0.0
    %721 = vmatprep.subr.mxu0 0.0
    %722 = vmatpush2.msra.mxu0 0.0
    %723 = vmatprep.subr.mxu0 0.0
    %724 = vmatpush2.msra.mxu0 0.0
    %725 = vmatprep.subr.mxu0 0.0
    %726 = vmatpush2.msra.mxu0 0.0
    %727 = vmatprep.subr.mxu0 0.0
    %728 = vmatpush2.msra.mxu0 0.0
    %729 = vmatprep.subr.mxu0 0.0
    %730 = vmatpush2.msra.mxu0 0.0
    %731 = vmatprep.subr.mxu0 0.0
    %732 = vmatpush2.msra.mxu0 0.0
    %733 = vmatprep.subr.mxu0 0.0
    %734 = vmatpush2.msra.mxu0 0.0
    %735 = vmatprep.subr.mxu0 0.0
    %736 = vmatpush2.msra.mxu0 0.0
    %737 = vmatprep.subr.mxu0 0.0
    %738 = vmatpush2.msra.mxu0 0.0
    %739 = vmatprep.mubr.f32.mxu0 0.0
    %740 = vmatmul.mubr.f32.gmra.mxu0 %v673
    %v741 = vpop.f32.mrf.mxu0
    %v742 = vadd.f32 %v670, %v741
    %v743 = vpop.f32.mrf.mxu0
    %744 = vdwg.mxu0
    %s745 = scalar_lea.vmem [#allocation2], 12
    %746 = vst.msk [vmem:[%s745] sm:$0xf] %vm233, %v742
    %v747 = vld [vmem:[%s19] sm:$0xff]
    %v748 = vld [vmem:[%s19 + $0x8] sm:$0xff]
    %v749 = vld [vmem:[%s19 + $0x10] sm:$0xff]
    %v750 = vld [vmem:[%s19 + $0x18] sm:$0xff]
    %v751 = vld [vmem:[%s23] sm:$0x1]
    %v753 = vlaneseq
    %v754 = vshrl.u32 %v753, 7
    %v755 = vsub.s32 0, %v754
    %v756 = vrot.slane %v751, %v755
    %758 = vmatprep.subr.mxu0 0.0
    %759 = vmatpush1.msra.mxu0 0.0
    %760 = vmatprep.subr.mxu0 0.0
    %761 = vmatpush1.msra.mxu0 0.0
    %762 = vmatprep.subr.mxu0 0.0
    %763 = vmatpush1.msra.mxu0 0.0
    %764 = vmatprep.subr.mxu0 0.0
    %765 = vmatpush1.msra.mxu0 0.0
    %766 = vmatprep.subr.mxu0 0.0
    %767 = vmatpush1.msra.mxu0 0.0
    %768 = vmatprep.subr.mxu0 0.0
    %769 = vmatpush1.msra.mxu0 0.0
    %770 = vmatprep.subr.mxu0 0.0
    %771 = vmatpush1.msra.mxu0 0.0
    %772 = vmatprep.subr.mxu0 0.0
    %773 = vmatpush1.msra.mxu0 0.0
    %774 = vmatprep.subr.mxu0 0.0
    %775 = vmatpush1.msra.mxu0 0.0
    %776 = vmatprep.subr.mxu0 0.0
    %777 = vmatpush1.msra.mxu0 0.0
    %778 = vmatprep.subr.mxu0 0.0
    %779 = vmatpush1.msra.mxu0 0.0
    %780 = vmatprep.subr.mxu0 0.0
    %781 = vmatpush1.msra.mxu0 0.0
    %782 = vmatprep.subr.mxu0 0.0
    %783 = vmatpush1.msra.mxu0 %v750
    %784 = vmatprep.subr.mxu0 0.0
    %785 = vmatpush1.msra.mxu0 %v749
    %786 = vmatprep.subr.mxu0 0.0
    %787 = vmatpush1.msra.mxu0 %v748
    %788 = vmatprep.subr.mxu0 0.0
    %789 = vmatpush1.msra.mxu0 %v747
    %790 = vmatprep.subr.mxu0 0.0
    %791 = vmatpush2.msra.mxu0 0.0
    %792 = vmatprep.subr.mxu0 0.0
    %793 = vmatpush2.msra.mxu0 0.0
    %794 = vmatprep.subr.mxu0 0.0
    %795 = vmatpush2.msra.mxu0 0.0
    %796 = vmatprep.subr.mxu0 0.0
    %797 = vmatpush2.msra.mxu0 0.0
    %798 = vmatprep.subr.mxu0 0.0
    %799 = vmatpush2.msra.mxu0 0.0
    %800 = vmatprep.subr.mxu0 0.0
    %801 = vmatpush2.msra.mxu0 0.0
    %802 = vmatprep.subr.mxu0 0.0
    %803 = vmatpush2.msra.mxu0 0.0
    %804 = vmatprep.subr.mxu0 0.0
    %805 = vmatpush2.msra.mxu0 0.0
    %806 = vmatprep.subr.mxu0 0.0
    %807 = vmatpush2.msra.mxu0 0.0
    %808 = vmatprep.subr.mxu0 0.0
    %809 = vmatpush2.msra.mxu0 0.0
    %810 = vmatprep.subr.mxu0 0.0
    %811 = vmatpush2.msra.mxu0 0.0
    %812 = vmatprep.subr.mxu0 0.0
    %813 = vmatpush2.msra.mxu0 0.0
    %814 = vmatprep.subr.mxu0 0.0
    %815 = vmatpush2.msra.mxu0 0.0
    %816 = vmatprep.subr.mxu0 0.0
    %817 = vmatpush2.msra.mxu0 0.0
    %818 = vmatprep.subr.mxu0 0.0
    %819 = vmatpush2.msra.mxu0 0.0
    %820 = vmatprep.subr.mxu0 0.0
    %821 = vmatpush2.msra.mxu0 0.0
    %822 = vmatprep.mubr.f32.mxu0 0.0
    %823 = vmatmul.mubr.f32.gmra.mxu0 %v673
    %v824 = vpop.f32.mrf.mxu0
    %v825 = vadd.f32 %v756, %v824
    %v826 = vpop.f32.mrf.mxu0
    %827 = vdwg.mxu0
    %s828 = scalar_lea.vmem [#allocation3], 12
    %829 = vst.msk [vmem:[%s828] sm:$0xf] %vm233, %v825
    %s830 = scalar_lea.vmem %s1, 16
    %v831 = vld [vmem:[%s830] sm:$0xf]
    %v832 = vld [vmem:[%s11] sm:$0xff]
    %v833 = vld [vmem:[%s11 + $0x8] sm:$0xff]
    %v834 = vld [vmem:[%s11 + $0x10] sm:$0xff]
    %v835 = vld [vmem:[%s11 + $0x18] sm:$0xff]
    %v836 = vld [vmem:[%s15] sm:$0x1]
    %v838 = vlaneseq
    %v839 = vshrl.u32 %v838, 7
    %v840 = vsub.s32 0, %v839
    %v841 = vrot.slane %v836, %v840
    %v844 = vsel %vm159, %v831, 0
    %846 = vmatprep.subr.mxu0 0.0
    %847 = vmatpush1.msra.mxu0 0.0
    %848 = vmatprep.subr.mxu0 0.0
    %849 = vmatpush1.msra.mxu0 0.0
    %850 = vmatprep.subr.mxu0 0.0
    %851 = vmatpush1.msra.mxu0 0.0
    %852 = vmatprep.subr.mxu0 0.0
    %853 = vmatpush1.msra.mxu0 0.0
    %854 = vmatprep.subr.mxu0 0.0
    %855 = vmatpush1.msra.mxu0 0.0
    %856 = vmatprep.subr.mxu0 0.0
    %857 = vmatpush1.msra.mxu0 0.0
    %858 = vmatprep.subr.mxu0 0.0
    %859 = vmatpush1.msra.mxu0 0.0
    %860 = vmatprep.subr.mxu0 0.0
    %861 = vmatpush1.msra.mxu0 0.0
    %862 = vmatprep.subr.mxu0 0.0
    %863 = vmatpush1.msra.mxu0 0.0
    %864 = vmatprep.subr.mxu0 0.0
    %865 = vmatpush1.msra.mxu0 0.0
    %866 = vmatprep.subr.mxu0 0.0
    %867 = vmatpush1.msra.mxu0 0.0
    %868 = vmatprep.subr.mxu0 0.0
    %869 = vmatpush1.msra.mxu0 0.0
    %870 = vmatprep.subr.mxu0 0.0
    %871 = vmatpush1.msra.mxu0 %v835
    %872 = vmatprep.subr.mxu0 0.0
    %873 = vmatpush1.msra.mxu0 %v834
    %874 = vmatprep.subr.mxu0 0.0
    %875 = vmatpush1.msra.mxu0 %v833
    %876 = vmatprep.subr.mxu0 0.0
    %877 = vmatpush1.msra.mxu0 %v832
    %878 = vmatprep.subr.mxu0 0.0
    %879 = vmatpush2.msra.mxu0 0.0
    %880 = vmatprep.subr.mxu0 0.0
    %881 = vmatpush2.msra.mxu0 0.0
    %882 = vmatprep.subr.mxu0 0.0
    %883 = vmatpush2.msra.mxu0 0.0
    %884 = vmatprep.subr.mxu0 0.0
    %885 = vmatpush2.msra.mxu0 0.0
    %886 = vmatprep.subr.mxu0 0.0
    %887 = vmatpush2.msra.mxu0 0.0
    %888 = vmatprep.subr.mxu0 0.0
    %889 = vmatpush2.msra.mxu0 0.0
    %890 = vmatprep.subr.mxu0 0.0
    %891 = vmatpush2.msra.mxu0 0.0
    %892 = vmatprep.subr.mxu0 0.0
    %893 = vmatpush2.msra.mxu0 0.0
    %894 = vmatprep.subr.mxu0 0.0
    %895 = vmatpush2.msra.mxu0 0.0
    %896 = vmatprep.subr.mxu0 0.0
    %897 = vmatpush2.msra.mxu0 0.0
    %898 = vmatprep.subr.mxu0 0.0
    %899 = vmatpush2.msra.mxu0 0.0
    %900 = vmatprep.subr.mxu0 0.0
    %901 = vmatpush2.msra.mxu0 0.0
    %902 = vmatprep.subr.mxu0 0.0
    %903 = vmatpush2.msra.mxu0 0.0
    %904 = vmatprep.subr.mxu0 0.0
    %905 = vmatpush2.msra.mxu0 0.0
    %906 = vmatprep.subr.mxu0 0.0
    %907 = vmatpush2.msra.mxu0 0.0
    %908 = vmatprep.subr.mxu0 0.0
    %909 = vmatpush2.msra.mxu0 0.0
    %910 = vmatprep.mubr.f32.mxu0 0.0
    %911 = vmatmul.mubr.f32.gmra.mxu0 %v844
    %v912 = vpop.f32.mrf.mxu0
    %v913 = vadd.f32 %v841, %v912
    %v914 = vpop.f32.mrf.mxu0
    %915 = vdwg.mxu0
    %s916 = scalar_lea.vmem [#allocation2], 16
    %917 = vst.msk [vmem:[%s916] sm:$0xf] %vm233, %v913
    %v918 = vld [vmem:[%s19] sm:$0xff]
    %v919 = vld [vmem:[%s19 + $0x8] sm:$0xff]
    %v920 = vld [vmem:[%s19 + $0x10] sm:$0xff]
    %v921 = vld [vmem:[%s19 + $0x18] sm:$0xff]
    %v922 = vld [vmem:[%s23] sm:$0x1]
    %v924 = vlaneseq
    %v925 = vshrl.u32 %v924, 7
    %v926 = vsub.s32 0, %v925
    %v927 = vrot.slane %v922, %v926
    %929 = vmatprep.subr.mxu0 0.0
    %930 = vmatpush1.msra.mxu0 0.0
    %931 = vmatprep.subr.mxu0 0.0
    %932 = vmatpush1.msra.mxu0 0.0
    %933 = vmatprep.subr.mxu0 0.0
    %934 = vmatpush1.msra.mxu0 0.0
    %935 = vmatprep.subr.mxu0 0.0
    %936 = vmatpush1.msra.mxu0 0.0
    %937 = vmatprep.subr.mxu0 0.0
    %938 = vmatpush1.msra.mxu0 0.0
    %939 = vmatprep.subr.mxu0 0.0
    %940 = vmatpush1.msra.mxu0 0.0
    %941 = vmatprep.subr.mxu0 0.0
    %942 = vmatpush1.msra.mxu0 0.0
    %943 = vmatprep.subr.mxu0 0.0
    %944 = vmatpush1.msra.mxu0 0.0
    %945 = vmatprep.subr.mxu0 0.0
    %946 = vmatpush1.msra.mxu0 0.0
    %947 = vmatprep.subr.mxu0 0.0
    %948 = vmatpush1.msra.mxu0 0.0
    %949 = vmatprep.subr.mxu0 0.0
    %950 = vmatpush1.msra.mxu0 0.0
    %951 = vmatprep.subr.mxu0 0.0
    %952 = vmatpush1.msra.mxu0 0.0
    %953 = vmatprep.subr.mxu0 0.0
    %954 = vmatpush1.msra.mxu0 %v921
    %955 = vmatprep.subr.mxu0 0.0
    %956 = vmatpush1.msra.mxu0 %v920
    %957 = vmatprep.subr.mxu0 0.0
    %958 = vmatpush1.msra.mxu0 %v919
    %959 = vmatprep.subr.mxu0 0.0
    %960 = vmatpush1.msra.mxu0 %v918
    %961 = vmatprep.subr.mxu0 0.0
    %962 = vmatpush2.msra.mxu0 0.0
    %963 = vmatprep.subr.mxu0 0.0
    %964 = vmatpush2.msra.mxu0 0.0
    %965 = vmatprep.subr.mxu0 0.0
    %966 = vmatpush2.msra.mxu0 0.0
    %967 = vmatprep.subr.mxu0 0.0
    %968 = vmatpush2.msra.mxu0 0.0
    %969 = vmatprep.subr.mxu0 0.0
    %970 = vmatpush2.msra.mxu0 0.0
    %971 = vmatprep.subr.mxu0 0.0
    %972 = vmatpush2.msra.mxu0 0.0
    %973 = vmatprep.subr.mxu0 0.0
    %974 = vmatpush2.msra.mxu0 0.0
    %975 = vmatprep.subr.mxu0 0.0
    %976 = vmatpush2.msra.mxu0 0.0
    %977 = vmatprep.subr.mxu0 0.0
    %978 = vmatpush2.msra.mxu0 0.0
    %979 = vmatprep.subr.mxu0 0.0
    %980 = vmatpush2.msra.mxu0 0.0
    %981 = vmatprep.subr.mxu0 0.0
    %982 = vmatpush2.msra.mxu0 0.0
    %983 = vmatprep.subr.mxu0 0.0
    %984 = vmatpush2.msra.mxu0 0.0
    %985 = vmatprep.subr.mxu0 0.0
    %986 = vmatpush2.msra.mxu0 0.0
    %987 = vmatprep.subr.mxu0 0.0
    %988 = vmatpush2.msra.mxu0 0.0
    %989 = vmatprep.subr.mxu0 0.0
    %990 = vmatpush2.msra.mxu0 0.0
    %991 = vmatprep.subr.mxu0 0.0
    %992 = vmatpush2.msra.mxu0 0.0
    %993 = vmatprep.mubr.f32.mxu0 0.0
    %994 = vmatmul.mubr.f32.gmra.mxu0 %v844
    %v995 = vpop.f32.mrf.mxu0
    %v996 = vadd.f32 %v927, %v995
    %v997 = vpop.f32.mrf.mxu0
    %998 = vdwg.mxu0
    %s999 = scalar_lea.vmem [#allocation3], 16
    %1000 = vst.msk [vmem:[%s999] sm:$0xf] %vm233, %v996
    %s1001 = scalar_lea.vmem %s1, 20
    %v1002 = vld [vmem:[%s1001] sm:$0xf]
    %v1003 = vld [vmem:[%s11] sm:$0xff]
    %v1004 = vld [vmem:[%s11 + $0x8] sm:$0xff]
    %v1005 = vld [vmem:[%s11 + $0x10] sm:$0xff]
    %v1006 = vld [vmem:[%s11 + $0x18] sm:$0xff]
    %v1007 = vld [vmem:[%s15] sm:$0x1]
    %v1009 = vlaneseq
    %v1010 = vshrl.u32 %v1009, 7
    %v1011 = vsub.s32 0, %v1010
    %v1012 = vrot.slane %v1007, %v1011
    %v1015 = vsel %vm159, %v1002, 0
    %1017 = vmatprep.subr.mxu0 0.0
    %1018 = vmatpush1.msra.mxu0 0.0
    %1019 = vmatprep.subr.mxu0 0.0
    %1020 = vmatpush1.msra.mxu0 0.0
    %1021 = vmatprep.subr.mxu0 0.0
    %1022 = vmatpush1.msra.mxu0 0.0
    %1023 = vmatprep.subr.mxu0 0.0
    %1024 = vmatpush1.msra.mxu0 0.0
    %1025 = vmatprep.subr.mxu0 0.0
    %1026 = vmatpush1.msra.mxu0 0.0
    %1027 = vmatprep.subr.mxu0 0.0
    %1028 = vmatpush1.msra.mxu0 0.0
    %1029 = vmatprep.subr.mxu0 0.0
    %1030 = vmatpush1.msra.mxu0 0.0
    %1031 = vmatprep.subr.mxu0 0.0
    %1032 = vmatpush1.msra.mxu0 0.0
    %1033 = vmatprep.subr.mxu0 0.0
    %1034 = vmatpush1.msra.mxu0 0.0
    %1035 = vmatprep.subr.mxu0 0.0
    %1036 = vmatpush1.msra.mxu0 0.0
    %1037 = vmatprep.subr.mxu0 0.0
    %1038 = vmatpush1.msra.mxu0 0.0
    %1039 = vmatprep.subr.mxu0 0.0
    %1040 = vmatpush1.msra.mxu0 0.0
    %1041 = vmatprep.subr.mxu0 0.0
    %1042 = vmatpush1.msra.mxu0 %v1006
    %1043 = vmatprep.subr.mxu0 0.0
    %1044 = vmatpush1.msra.mxu0 %v1005
    %1045 = vmatprep.subr.mxu0 0.0
    %1046 = vmatpush1.msra.mxu0 %v1004
    %1047 = vmatprep.subr.mxu0 0.0
    %1048 = vmatpush1.msra.mxu0 %v1003
    %1049 = vmatprep.subr.mxu0 0.0
    %1050 = vmatpush2.msra.mxu0 0.0
    %1051 = vmatprep.subr.mxu0 0.0
    %1052 = vmatpush2.msra.mxu0 0.0
    %1053 = vmatprep.subr.mxu0 0.0
    %1054 = vmatpush2.msra.mxu0 0.0
    %1055 = vmatprep.subr.mxu0 0.0
    %1056 = vmatpush2.msra.mxu0 0.0
    %1057 = vmatprep.subr.mxu0 0.0
    %1058 = vmatpush2.msra.mxu0 0.0
    %1059 = vmatprep.subr.mxu0 0.0
    %1060 = vmatpush2.msra.mxu0 0.0
    %1061 = vmatprep.subr.mxu0 0.0
    %1062 = vmatpush2.msra.mxu0 0.0
    %1063 = vmatprep.subr.mxu0 0.0
    %1064 = vmatpush2.msra.mxu0 0.0
    %1065 = vmatprep.subr.mxu0 0.0
    %1066 = vmatpush2.msra.mxu0 0.0
    %1067 = vmatprep.subr.mxu0 0.0
    %1068 = vmatpush2.msra.mxu0 0.0
    %1069 = vmatprep.subr.mxu0 0.0
    %1070 = vmatpush2.msra.mxu0 0.0
    %1071 = vmatprep.subr.mxu0 0.0
    %1072 = vmatpush2.msra.mxu0 0.0
    %1073 = vmatprep.subr.mxu0 0.0
    %1074 = vmatpush2.msra.mxu0 0.0
    %1075 = vmatprep.subr.mxu0 0.0
    %1076 = vmatpush2.msra.mxu0 0.0
    %1077 = vmatprep.subr.mxu0 0.0
    %1078 = vmatpush2.msra.mxu0 0.0
    %1079 = vmatprep.subr.mxu0 0.0
    %1080 = vmatpush2.msra.mxu0 0.0
    %1081 = vmatprep.mubr.f32.mxu0 0.0
    %1082 = vmatmul.mubr.f32.gmra.mxu0 %v1015
    %v1083 = vpop.f32.mrf.mxu0
    %v1084 = vadd.f32 %v1012, %v1083
    %v1085 = vpop.f32.mrf.mxu0
    %1086 = vdwg.mxu0
    %s1087 = scalar_lea.vmem [#allocation2], 20
    %1088 = vst.msk [vmem:[%s1087] sm:$0xf] %vm233, %v1084
    %v1089 = vld [vmem:[%s19] sm:$0xff]
    %v1090 = vld [vmem:[%s19 + $0x8] sm:$0xff]
    %v1091 = vld [vmem:[%s19 + $0x10] sm:$0xff]
    %v1092 = vld [vmem:[%s19 + $0x18] sm:$0xff]
    %v1093 = vld [vmem:[%s23] sm:$0x1]
    %v1095 = vlaneseq
    %v1096 = vshrl.u32 %v1095, 7
    %v1097 = vsub.s32 0, %v1096
    %v1098 = vrot.slane %v1093, %v1097
    %1100 = vmatprep.subr.mxu0 0.0
    %1101 = vmatpush1.msra.mxu0 0.0
    %1102 = vmatprep.subr.mxu0 0.0
    %1103 = vmatpush1.msra.mxu0 0.0
    %1104 = vmatprep.subr.mxu0 0.0
    %1105 = vmatpush1.msra.mxu0 0.0
    %1106 = vmatprep.subr.mxu0 0.0
    %1107 = vmatpush1.msra.mxu0 0.0
    %1108 = vmatprep.subr.mxu0 0.0
    %1109 = vmatpush1.msra.mxu0 0.0
    %1110 = vmatprep.subr.mxu0 0.0
    %1111 = vmatpush1.msra.mxu0 0.0
    %1112 = vmatprep.subr.mxu0 0.0
    %1113 = vmatpush1.msra.mxu0 0.0
    %1114 = vmatprep.subr.mxu0 0.0
    %1115 = vmatpush1.msra.mxu0 0.0
    %1116 = vmatprep.subr.mxu0 0.0
    %1117 = vmatpush1.msra.mxu0 0.0
    %1118 = vmatprep.subr.mxu0 0.0
    %1119 = vmatpush1.msra.mxu0 0.0
    %1120 = vmatprep.subr.mxu0 0.0
    %1121 = vmatpush1.msra.mxu0 0.0
    %1122 = vmatprep.subr.mxu0 0.0
    %1123 = vmatpush1.msra.mxu0 0.0
    %1124 = vmatprep.subr.mxu0 0.0
    %1125 = vmatpush1.msra.mxu0 %v1092
    %1126 = vmatprep.subr.mxu0 0.0
    %1127 = vmatpush1.msra.mxu0 %v1091
    %1128 = vmatprep.subr.mxu0 0.0
    %1129 = vmatpush1.msra.mxu0 %v1090
    %1130 = vmatprep.subr.mxu0 0.0
    %1131 = vmatpush1.msra.mxu0 %v1089
    %1132 = vmatprep.subr.mxu0 0.0
    %1133 = vmatpush2.msra.mxu0 0.0
    %1134 = vmatprep.subr.mxu0 0.0
    %1135 = vmatpush2.msra.mxu0 0.0
    %1136 = vmatprep.subr.mxu0 0.0
    %1137 = vmatpush2.msra.mxu0 0.0
    %1138 = vmatprep.subr.mxu0 0.0
    %1139 = vmatpush2.msra.mxu0 0.0
    %1140 = vmatprep.subr.mxu0 0.0
    %1141 = vmatpush2.msra.mxu0 0.0
    %1142 = vmatprep.subr.mxu0 0.0
    %1143 = vmatpush2.msra.mxu0 0.0
    %1144 = vmatprep.subr.mxu0 0.0
    %1145 = vmatpush2.msra.mxu0 0.0
    %1146 = vmatprep.subr.mxu0 0.0
    %1147 = vmatpush2.msra.mxu0 0.0
    %1148 = vmatprep.subr.mxu0 0.0
    %1149 = vmatpush2.msra.mxu0 0.0
    %1150 = vmatprep.subr.mxu0 0.0
    %1151 = vmatpush2.msra.mxu0 0.0
    %1152 = vmatprep.subr.mxu0 0.0
    %1153 = vmatpush2.msra.mxu0 0.0
    %1154 = vmatprep.subr.mxu0 0.0
    %1155 = vmatpush2.msra.mxu0 0.0
    %1156 = vmatprep.subr.mxu0 0.0
    %1157 = vmatpush2.msra.mxu0 0.0
    %1158 = vmatprep.subr.mxu0 0.0
    %1159 = vmatpush2.msra.mxu0 0.0
    %1160 = vmatprep.subr.mxu0 0.0
    %1161 = vmatpush2.msra.mxu0 0.0
    %1162 = vmatprep.subr.mxu0 0.0
    %1163 = vmatpush2.msra.mxu0 0.0
    %1164 = vmatprep.mubr.f32.mxu0 0.0
    %1165 = vmatmul.mubr.f32.gmra.mxu0 %v1015
    %v1166 = vpop.f32.mrf.mxu0
    %v1167 = vadd.f32 %v1098, %v1166
    %v1168 = vpop.f32.mrf.mxu0
    %1169 = vdwg.mxu0
    %s1170 = scalar_lea.vmem [#allocation3], 20
    %1171 = vst.msk [vmem:[%s1170] sm:$0xf] %vm233, %v1167
    %s1172 = scalar_lea.vmem %s1, 24
    %v1173 = vld [vmem:[%s1172] sm:$0xf]
    %v1174 = vld [vmem:[%s11] sm:$0xff]
    %v1175 = vld [vmem:[%s11 + $0x8] sm:$0xff]
    %v1176 = vld [vmem:[%s11 + $0x10] sm:$0xff]
    %v1177 = vld [vmem:[%s11 + $0x18] sm:$0xff]
    %v1178 = vld [vmem:[%s15] sm:$0x1]
    %v1180 = vlaneseq
    %v1181 = vshrl.u32 %v1180, 7
    %v1182 = vsub.s32 0, %v1181
    %v1183 = vrot.slane %v1178, %v1182
    %v1186 = vsel %vm159, %v1173, 0
    %1188 = vmatprep.subr.mxu0 0.0
    %1189 = vmatpush1.msra.mxu0 0.0
    %1190 = vmatprep.subr.mxu0 0.0
    %1191 = vmatpush1.msra.mxu0 0.0
    %1192 = vmatprep.subr.mxu0 0.0
    %1193 = vmatpush1.msra.mxu0 0.0
    %1194 = vmatprep.subr.mxu0 0.0
    %1195 = vmatpush1.msra.mxu0 0.0
    %1196 = vmatprep.subr.mxu0 0.0
    %1197 = vmatpush1.msra.mxu0 0.0
    %1198 = vmatprep.subr.mxu0 0.0
    %1199 = vmatpush1.msra.mxu0 0.0
    %1200 = vmatprep.subr.mxu0 0.0
    %1201 = vmatpush1.msra.mxu0 0.0
    %1202 = vmatprep.subr.mxu0 0.0
    %1203 = vmatpush1.msra.mxu0 0.0
    %1204 = vmatprep.subr.mxu0 0.0
    %1205 = vmatpush1.msra.mxu0 0.0
    %1206 = vmatprep.subr.mxu0 0.0
    %1207 = vmatpush1.msra.mxu0 0.0
    %1208 = vmatprep.subr.mxu0 0.0
    %1209 = vmatpush1.msra.mxu0 0.0
    %1210 = vmatprep.subr.mxu0 0.0
    %1211 = vmatpush1.msra.mxu0 0.0
    %1212 = vmatprep.subr.mxu0 0.0
    %1213 = vmatpush1.msra.mxu0 %v1177
    %1214 = vmatprep.subr.mxu0 0.0
    %1215 = vmatpush1.msra.mxu0 %v1176
    %1216 = vmatprep.subr.mxu0 0.0
    %1217 = vmatpush1.msra.mxu0 %v1175
    %1218 = vmatprep.subr.mxu0 0.0
    %1219 = vmatpush1.msra.mxu0 %v1174
    %1220 = vmatprep.subr.mxu0 0.0
    %1221 = vmatpush2.msra.mxu0 0.0
    %1222 = vmatprep.subr.mxu0 0.0
    %1223 = vmatpush2.msra.mxu0 0.0
    %1224 = vmatprep.subr.mxu0 0.0
    %1225 = vmatpush2.msra.mxu0 0.0
    %1226 = vmatprep.subr.mxu0 0.0
    %1227 = vmatpush2.msra.mxu0 0.0
    %1228 = vmatprep.subr.mxu0 0.0
    %1229 = vmatpush2.msra.mxu0 0.0
    %1230 = vmatprep.subr.mxu0 0.0
    %1231 = vmatpush2.msra.mxu0 0.0
    %1232 = vmatprep.subr.mxu0 0.0
    %1233 = vmatpush2.msra.mxu0 0.0
    %1234 = vmatprep.subr.mxu0 0.0
    %1235 = vmatpush2.msra.mxu0 0.0
    %1236 = vmatprep.subr.mxu0 0.0
    %1237 = vmatpush2.msra.mxu0 0.0
    %1238 = vmatprep.subr.mxu0 0.0
    %1239 = vmatpush2.msra.mxu0 0.0
    %1240 = vmatprep.subr.mxu0 0.0
    %1241 = vmatpush2.msra.mxu0 0.0
    %1242 = vmatprep.subr.mxu0 0.0
    %1243 = vmatpush2.msra.mxu0 0.0
    %1244 = vmatprep.subr.mxu0 0.0
    %1245 = vmatpush2.msra.mxu0 0.0
    %1246 = vmatprep.subr.mxu0 0.0
    %1247 = vmatpush2.msra.mxu0 0.0
    %1248 = vmatprep.subr.mxu0 0.0
    %1249 = vmatpush2.msra.mxu0 0.0
    %1250 = vmatprep.subr.mxu0 0.0
    %1251 = vmatpush2.msra.mxu0 0.0
    %1252 = vmatprep.mubr.f32.mxu0 0.0
    %1253 = vmatmul.mubr.f32.gmra.mxu0 %v1186
    %v1254 = vpop.f32.mrf.mxu0
    %v1255 = vadd.f32 %v1183, %v1254
    %v1256 = vpop.f32.mrf.mxu0
    %1257 = vdwg.mxu0
    %s1258 = scalar_lea.vmem [#allocation2], 24
    %1259 = vst.msk [vmem:[%s1258] sm:$0xf] %vm233, %v1255
    %v1260 = vld [vmem:[%s19] sm:$0xff]
    %v1261 = vld [vmem:[%s19 + $0x8] sm:$0xff]
    %v1262 = vld [vmem:[%s19 + $0x10] sm:$0xff]
    %v1263 = vld [vmem:[%s19 + $0x18] sm:$0xff]
    %v1264 = vld [vmem:[%s23] sm:$0x1]
    %v1266 = vlaneseq
    %v1267 = vshrl.u32 %v1266, 7
    %v1268 = vsub.s32 0, %v1267
    %v1269 = vrot.slane %v1264, %v1268
    %1271 = vmatprep.subr.mxu0 0.0
    %1272 = vmatpush1.msra.mxu0 0.0
    %1273 = vmatprep.subr.mxu0 0.0
    %1274 = vmatpush1.msra.mxu0 0.0
    %1275 = vmatprep.subr.mxu0 0.0
    %1276 = vmatpush1.msra.mxu0 0.0
    %1277 = vmatprep.subr.mxu0 0.0
    %1278 = vmatpush1.msra.mxu0 0.0
    %1279 = vmatprep.subr.mxu0 0.0
    %1280 = vmatpush1.msra.mxu0 0.0
    %1281 = vmatprep.subr.mxu0 0.0
    %1282 = vmatpush1.msra.mxu0 0.0
    %1283 = vmatprep.subr.mxu0 0.0
    %1284 = vmatpush1.msra.mxu0 0.0
    %1285 = vmatprep.subr.mxu0 0.0
    %1286 = vmatpush1.msra.mxu0 0.0
    %1287 = vmatprep.subr.mxu0 0.0
    %1288 = vmatpush1.msra.mxu0 0.0
    %1289 = vmatprep.subr.mxu0 0.0
    %1290 = vmatpush1.msra.mxu0 0.0
    %1291 = vmatprep.subr.mxu0 0.0
    %1292 = vmatpush1.msra.mxu0 0.0
    %1293 = vmatprep.subr.mxu0 0.0
    %1294 = vmatpush1.msra.mxu0 0.0
    %1295 = vmatprep.subr.mxu0 0.0
    %1296 = vmatpush1.msra.mxu0 %v1263
    %1297 = vmatprep.subr.mxu0 0.0
    %1298 = vmatpush1.msra.mxu0 %v1262
    %1299 = vmatprep.subr.mxu0 0.0
    %1300 = vmatpush1.msra.mxu0 %v1261
    %1301 = vmatprep.subr.mxu0 0.0
    %1302 = vmatpush1.msra.mxu0 %v1260
    %1303 = vmatprep.subr.mxu0 0.0
    %1304 = vmatpush2.msra.mxu0 0.0
    %1305 = vmatprep.subr.mxu0 0.0
    %1306 = vmatpush2.msra.mxu0 0.0
    %1307 = vmatprep.subr.mxu0 0.0
    %1308 = vmatpush2.msra.mxu0 0.0
    %1309 = vmatprep.subr.mxu0 0.0
    %1310 = vmatpush2.msra.mxu0 0.0
    %1311 = vmatprep.subr.mxu0 0.0
    %1312 = vmatpush2.msra.mxu0 0.0
    %1313 = vmatprep.subr.mxu0 0.0
    %1314 = vmatpush2.msra.mxu0 0.0
    %1315 = vmatprep.subr.mxu0 0.0
    %1316 = vmatpush2.msra.mxu0 0.0
    %1317 = vmatprep.subr.mxu0 0.0
    %1318 = vmatpush2.msra.mxu0 0.0
    %1319 = vmatprep.subr.mxu0 0.0
    %1320 = vmatpush2.msra.mxu0 0.0
    %1321 = vmatprep.subr.mxu0 0.0
    %1322 = vmatpush2.msra.mxu0 0.0
    %1323 = vmatprep.subr.mxu0 0.0
    %1324 = vmatpush2.msra.mxu0 0.0
    %1325 = vmatprep.subr.mxu0 0.0
    %1326 = vmatpush2.msra.mxu0 0.0
    %1327 = vmatprep.subr.mxu0 0.0
    %1328 = vmatpush2.msra.mxu0 0.0
    %1329 = vmatprep.subr.mxu0 0.0
    %1330 = vmatpush2.msra.mxu0 0.0
    %1331 = vmatprep.subr.mxu0 0.0
    %1332 = vmatpush2.msra.mxu0 0.0
    %1333 = vmatprep.subr.mxu0 0.0
    %1334 = vmatpush2.msra.mxu0 0.0
    %1335 = vmatprep.mubr.f32.mxu0 0.0
    %1336 = vmatmul.mubr.f32.gmra.mxu0 %v1186
    %v1337 = vpop.f32.mrf.mxu0
    %v1338 = vadd.f32 %v1269, %v1337
    %v1339 = vpop.f32.mrf.mxu0
    %1340 = vdwg.mxu0
    %s1341 = scalar_lea.vmem [#allocation3], 24
    %1342 = vst.msk [vmem:[%s1341] sm:$0xf] %vm233, %v1338
    %s1343 = scalar_lea.vmem %s1, 28
    %v1344 = vld [vmem:[%s1343] sm:$0xf]
    %v1345 = vld [vmem:[%s11] sm:$0xff]
    %v1346 = vld [vmem:[%s11 + $0x8] sm:$0xff]
    %v1347 = vld [vmem:[%s11 + $0x10] sm:$0xff]
    %v1348 = vld [vmem:[%s11 + $0x18] sm:$0xff]
    %v1349 = vld [vmem:[%s15] sm:$0x1]
    %v1351 = vlaneseq
    %v1352 = vshrl.u32 %v1351, 7
    %v1353 = vsub.s32 0, %v1352
    %v1354 = vrot.slane %v1349, %v1353
    %v1357 = vsel %vm159, %v1344, 0
    %1359 = vmatprep.subr.mxu0 0.0
    %1360 = vmatpush1.msra.mxu0 0.0
    %1361 = vmatprep.subr.mxu0 0.0
    %1362 = vmatpush1.msra.mxu0 0.0
    %1363 = vmatprep.subr.mxu0 0.0
    %1364 = vmatpush1.msra.mxu0 0.0
    %1365 = vmatprep.subr.mxu0 0.0
    %1366 = vmatpush1.msra.mxu0 0.0
    %1367 = vmatprep.subr.mxu0 0.0
    %1368 = vmatpush1.msra.mxu0 0.0
    %1369 = vmatprep.subr.mxu0 0.0
    %1370 = vmatpush1.msra.mxu0 0.0
    %1371 = vmatprep.subr.mxu0 0.0
    %1372 = vmatpush1.msra.mxu0 0.0
    %1373 = vmatprep.subr.mxu0 0.0
    %1374 = vmatpush1.msra.mxu0 0.0
    %1375 = vmatprep.subr.mxu0 0.0
    %1376 = vmatpush1.msra.mxu0 0.0
    %1377 = vmatprep.subr.mxu0 0.0
    %1378 = vmatpush1.msra.mxu0 0.0
    %1379 = vmatprep.subr.mxu0 0.0
    %1380 = vmatpush1.msra.mxu0 0.0
    %1381 = vmatprep.subr.mxu0 0.0
    %1382 = vmatpush1.msra.mxu0 0.0
    %1383 = vmatprep.subr.mxu0 0.0
    %1384 = vmatpush1.msra.mxu0 %v1348
    %1385 = vmatprep.subr.mxu0 0.0
    %1386 = vmatpush1.msra.mxu0 %v1347
    %1387 = vmatprep.subr.mxu0 0.0
    %1388 = vmatpush1.msra.mxu0 %v1346
    %1389 = vmatprep.subr.mxu0 0.0
    %1390 = vmatpush1.msra.mxu0 %v1345
    %1391 = vmatprep.subr.mxu0 0.0
    %1392 = vmatpush2.msra.mxu0 0.0
    %1393 = vmatprep.subr.mxu0 0.0
    %1394 = vmatpush2.msra.mxu0 0.0
    %1395 = vmatprep.subr.mxu0 0.0
    %1396 = vmatpush2.msra.mxu0 0.0
    %1397 = vmatprep.subr.mxu0 0.0
    %1398 = vmatpush2.msra.mxu0 0.0
    %1399 = vmatprep.subr.mxu0 0.0
    %1400 = vmatpush2.msra.mxu0 0.0
    %1401 = vmatprep.subr.mxu0 0.0
    %1402 = vmatpush2.msra.mxu0 0.0
    %1403 = vmatprep.subr.mxu0 0.0
    %1404 = vmatpush2.msra.mxu0 0.0
    %1405 = vmatprep.subr.mxu0 0.0
    %1406 = vmatpush2.msra.mxu0 0.0
    %1407 = vmatprep.subr.mxu0 0.0
    %1408 = vmatpush2.msra.mxu0 0.0
    %1409 = vmatprep.subr.mxu0 0.0
    %1410 = vmatpush2.msra.mxu0 0.0
    %1411 = vmatprep.subr.mxu0 0.0
    %1412 = vmatpush2.msra.mxu0 0.0
    %1413 = vmatprep.subr.mxu0 0.0
    %1414 = vmatpush2.msra.mxu0 0.0
    %1415 = vmatprep.subr.mxu0 0.0
    %1416 = vmatpush2.msra.mxu0 0.0
    %1417 = vmatprep.subr.mxu0 0.0
    %1418 = vmatpush2.msra.mxu0 0.0
    %1419 = vmatprep.subr.mxu0 0.0
    %1420 = vmatpush2.msra.mxu0 0.0
    %1421 = vmatprep.subr.mxu0 0.0
    %1422 = vmatpush2.msra.mxu0 0.0
    %1423 = vmatprep.mubr.f32.mxu0 0.0
    %1424 = vmatmul.mubr.f32.gmra.mxu0 %v1357
    %v1425 = vpop.f32.mrf.mxu0
    %v1426 = vadd.f32 %v1354, %v1425
    %v1427 = vpop.f32.mrf.mxu0
    %1428 = vdwg.mxu0
    %s1429 = scalar_lea.vmem [#allocation2], 28
    %1430 = vst.msk [vmem:[%s1429] sm:$0xf] %vm233, %v1426
    %v1431 = vld [vmem:[%s19] sm:$0xff]
    %v1432 = vld [vmem:[%s19 + $0x8] sm:$0xff]
    %v1433 = vld [vmem:[%s19 + $0x10] sm:$0xff]
    %v1434 = vld [vmem:[%s19 + $0x18] sm:$0xff]
    %v1435 = vld [vmem:[%s23] sm:$0x1]
    %v1437 = vlaneseq
    %v1438 = vshrl.u32 %v1437, 7
    %v1439 = vsub.s32 0, %v1438
    %v1440 = vrot.slane %v1435, %v1439
    %1442 = vmatprep.subr.mxu0 0.0
    %1443 = vmatpush1.msra.mxu0 0.0
    %1444 = vmatprep.subr.mxu0 0.0
    %1445 = vmatpush1.msra.mxu0 0.0
    %1446 = vmatprep.subr.mxu0 0.0
    %1447 = vmatpush1.msra.mxu0 0.0
    %1448 = vmatprep.subr.mxu0 0.0
    %1449 = vmatpush1.msra.mxu0 0.0
    %1450 = vmatprep.subr.mxu0 0.0
    %1451 = vmatpush1.msra.mxu0 0.0
    %1452 = vmatprep.subr.mxu0 0.0
    %1453 = vmatpush1.msra.mxu0 0.0
    %1454 = vmatprep.subr.mxu0 0.0
    %1455 = vmatpush1.msra.mxu0 0.0
    %1456 = vmatprep.subr.mxu0 0.0
    %1457 = vmatpush1.msra.mxu0 0.0
    %1458 = vmatprep.subr.mxu0 0.0
    %1459 = vmatpush1.msra.mxu0 0.0
    %1460 = vmatprep.subr.mxu0 0.0
    %1461 = vmatpush1.msra.mxu0 0.0
    %1462 = vmatprep.subr.mxu0 0.0
    %1463 = vmatpush1.msra.mxu0 0.0
    %1464 = vmatprep.subr.mxu0 0.0
    %1465 = vmatpush1.msra.mxu0 0.0
    %1466 = vmatprep.subr.mxu0 0.0
    %1467 = vmatpush1.msra.mxu0 %v1434
    %1468 = vmatprep.subr.mxu0 0.0
    %1469 = vmatpush1.msra.mxu0 %v1433
    %1470 = vmatprep.subr.mxu0 0.0
    %1471 = vmatpush1.msra.mxu0 %v1432
    %1472 = vmatprep.subr.mxu0 0.0
    %1473 = vmatpush1.msra.mxu0 %v1431
    %1474 = vmatprep.subr.mxu0 0.0
    %1475 = vmatpush2.msra.mxu0 0.0
    %1476 = vmatprep.subr.mxu0 0.0
    %1477 = vmatpush2.msra.mxu0 0.0
    %1478 = vmatprep.subr.mxu0 0.0
    %1479 = vmatpush2.msra.mxu0 0.0
    %1480 = vmatprep.subr.mxu0 0.0
    %1481 = vmatpush2.msra.mxu0 0.0
    %1482 = vmatprep.subr.mxu0 0.0
    %1483 = vmatpush2.msra.mxu0 0.0
    %1484 = vmatprep.subr.mxu0 0.0
    %1485 = vmatpush2.msra.mxu0 0.0
    %1486 = vmatprep.subr.mxu0 0.0
    %1487 = vmatpush2.msra.mxu0 0.0
    %1488 = vmatprep.subr.mxu0 0.0
    %1489 = vmatpush2.msra.mxu0 0.0
    %1490 = vmatprep.subr.mxu0 0.0
    %1491 = vmatpush2.msra.mxu0 0.0
    %1492 = vmatprep.subr.mxu0 0.0
    %1493 = vmatpush2.msra.mxu0 0.0
    %1494 = vmatprep.subr.mxu0 0.0
    %1495 = vmatpush2.msra.mxu0 0.0
    %1496 = vmatprep.subr.mxu0 0.0
    %1497 = vmatpush2.msra.mxu0 0.0
    %1498 = vmatprep.subr.mxu0 0.0
    %1499 = vmatpush2.msra.mxu0 0.0
    %1500 = vmatprep.subr.mxu0 0.0
    %1501 = vmatpush2.msra.mxu0 0.0
    %1502 = vmatprep.subr.mxu0 0.0
    %1503 = vmatpush2.msra.mxu0 0.0
    %1504 = vmatprep.subr.mxu0 0.0
    %1505 = vmatpush2.msra.mxu0 0.0
    %1506 = vmatprep.mubr.f32.mxu0 0.0
    %1507 = vmatmul.mubr.f32.gmra.mxu0 %v1357
    %v1508 = vpop.f32.mrf.mxu0
    %v1509 = vadd.f32 %v1440, %v1508
    %v1510 = vpop.f32.mrf.mxu0
    %1511 = vdwg.mxu0
    %s1512 = scalar_lea.vmem [#allocation3], 28
    %1513 = vst.msk [vmem:[%s1512] sm:$0xf] %vm233, %v1509
    loop: start=0, step=1, limit=8
    $region142: #{amnmt_forward.1} parent=1 // loop_pre_header
      _
    $region143: #{amnmt_forward.1} parent=1 // loop_header
      %s1515 = sphi 0, %s1519
      %p1516 = scmp.ge.s32.totalorder %s1515, 8
      %v1520 = vphi 0.0, %v1635
    $region144: #{amnmt_forward.1} parent=1 // loop_header_branch
      %1518 = sbr.rel (%p1516) target = $region148
    $region145: #{amnmt_forward.1} parent=1 // loop_body
      %s1521 = smul.u32 %s1515, 4
      %s1522 = scalar_lea.vmem [#allocation2], %s1521
      %v1523 = vld [vmem:[%s1522] sm:$0xf]
      %v1524 = vld [vmem:[%s13] sm:$0xff]
      %v1525 = vld [vmem:[%s13 + $0x8] sm:$0xff]
      %v1526 = vld [vmem:[%s13 + $0x10] sm:$0xff]
      %v1527 = vld [vmem:[%s13 + $0x18] sm:$0xff]
      %v1528 = vld [vmem:[%s17] sm:$0x1]
      %v1530 = vlaneseq
      %v1531 = vshrl.u32 %v1530, 7
      %v1532 = vsub.s32 0, %v1531
      %v1533 = vrot.slane %v1528, %v1532
      %1536 = vrot.lane.b32.xlu0 %v1520, 96
      %v1537 = vpop.permute.xlu0 %1536
      %v1538 = vsel %vm159, %v1537, 0
      %1540 = vmatprep.subr.mxu0 0.0
      %1541 = vmatpush1.msra.mxu0 0.0
      %1542 = vmatprep.subr.mxu0 0.0
      %1543 = vmatpush1.msra.mxu0 0.0
      %1544 = vmatprep.subr.mxu0 0.0
      %1545 = vmatpush1.msra.mxu0 0.0
      %1546 = vmatprep.subr.mxu0 0.0
      %1547 = vmatpush1.msra.mxu0 0.0
      %1548 = vmatprep.subr.mxu0 0.0
      %1549 = vmatpush1.msra.mxu0 0.0
      %1550 = vmatprep.subr.mxu0 0.0
      %1551 = vmatpush1.msra.mxu0 0.0
      %1552 = vmatprep.subr.mxu0 0.0
      %1553 = vmatpush1.msra.mxu0 0.0
      %1554 = vmatprep.subr.mxu0 0.0
      %1555 = vmatpush1.msra.mxu0 0.0
      %1556 = vmatprep.subr.mxu0 0.0
      %1557 = vmatpush1.msra.mxu0 0.0
      %1558 = vmatprep.subr.mxu0 0.0
      %1559 = vmatpush1.msra.mxu0 0.0
      %1560 = vmatprep.subr.mxu0 0.0
      %1561 = vmatpush1.msra.mxu0 0.0
      %1562 = vmatprep.subr.mxu0 0.0
      %1563 = vmatpush1.msra.mxu0 0.0
      %1564 = vmatprep.subr.mxu0 0.0
      %1565 = vmatpush1.msra.mxu0 %v1527
      %1566 = vmatprep.subr.mxu0 0.0
      %1567 = vmatpush1.msra.mxu0 %v1526
      %1568 = vmatprep.subr.mxu0 0.0
      %1569 = vmatpush1.msra.mxu0 %v1525
      %1570 = vmatprep.subr.mxu0 0.0
      %1571 = vmatpush1.msra.mxu0 %v1524
      %1572 = vmatprep.subr.mxu0 0.0
      %1573 = vmatpush2.msra.mxu0 0.0
      %1574 = vmatprep.subr.mxu0 0.0
      %1575 = vmatpush2.msra.mxu0 0.0
      %1576 = vmatprep.subr.mxu0 0.0
      %1577 = vmatpush2.msra.mxu0 0.0
      %1578 = vmatprep.subr.mxu0 0.0
      %1579 = vmatpush2.msra.mxu0 0.0
      %1580 = vmatprep.subr.mxu0 0.0
      %1581 = vmatpush2.msra.mxu0 0.0
      %1582 = vmatprep.subr.mxu0 0.0
      %1583 = vmatpush2.msra.mxu0 0.0
      %1584 = vmatprep.subr.mxu0 0.0
      %1585 = vmatpush2.msra.mxu0 0.0
      %1586 = vmatprep.subr.mxu0 0.0
      %1587 = vmatpush2.msra.mxu0 0.0
      %1588 = vmatprep.subr.mxu0 0.0
      %1589 = vmatpush2.msra.mxu0 0.0
      %1590 = vmatprep.subr.mxu0 0.0
      %1591 = vmatpush2.msra.mxu0 0.0
      %1592 = vmatprep.subr.mxu0 0.0
      %1593 = vmatpush2.msra.mxu0 0.0
      %1594 = vmatprep.subr.mxu0 0.0
      %1595 = vmatpush2.msra.mxu0 0.0
      %1596 = vmatprep.subr.mxu0 0.0
      %1597 = vmatpush2.msra.mxu0 0.0
      %1598 = vmatprep.subr.mxu0 0.0
      %1599 = vmatpush2.msra.mxu0 0.0
      %1600 = vmatprep.subr.mxu0 0.0
      %1601 = vmatpush2.msra.mxu0 0.0
      %1602 = vmatprep.subr.mxu0 0.0
      %1603 = vmatpush2.msra.mxu0 0.0
      %1604 = vmatprep.mubr.f32.mxu0 0.0
      %1605 = vmatmul.mubr.f32.gmra.mxu0 %v1538
      %v1606 = vpop.f32.mrf.mxu0
      %v1607 = vadd.f32 %v1533, %v1606
      %v1608 = vpop.f32.mrf.mxu0
      %1609 = vdwg.mxu0
      %v1610 = vadd.f32 %v1523, %v1607
      %v1611 = vxor.u32 %v1610, 2147483648
      %v1612 = vmul.f32 %v1611, 1.442695
      %v1613 = vpow.pop %v1612
      %v1614 = vadd.f32 %v1613, 1.0
      %v1615 = vrcp.pop %v1614
      %v1616 = vmul.f32 1.0, %v1615
      %1618 = vrot.lane.b32.xlu0 %v1607, 64
      %v1619 = vpop.permute.xlu0 %1618
      %v1621 = vmul.f32 %v1616, %v1619
      %1623 = vrot.lane.b32.xlu0 %v1621, 64
      %v1624 = vpop.permute.xlu0 %1623
      %v1626 = vadd.f32 %v1523, %v1624
      %v1627 = vtanh.pop %v1626
      %v1628 = vsub.f32 1.0, %v1616
      %1630 = vrot.lane.b32.xlu0 %v1627, 96
      %v1631 = vpop.permute.xlu0 %1630
      %v1633 = vmul.f32 %v1628, %v1631
      %v1634 = vmul.f32 %v1616, %v1520
      %v1635 = vadd.f32 %v1633, %v1634
      %1637 = vrot.lane.b32.xlu0 %v1635, 96
      %v1638 = vpop.permute.xlu0 %1637
      %s1640 = scalar_lea.vmem [#allocation4], %s1521
      %vm1641 = vcmask 257024
      %1642 = vst.msk [vmem:[%s1640] sm:$0xf] %vm1641, %v1638
    $region146: #{amnmt_forward.1} parent=1 // loop_footer
      %s1519 = sadd.s32 1, %s1515
    $region147: #{amnmt_forward.1} parent=1 // loop_footer_branch
      %1514 = sbr.rel target = $region143
    $region148: #{amnmt_forward.1} parent=1 // loop_exit
      _
    loop: start=0, step=1, limit=8
    $region149: #{amnmt_forward.1} parent=1 // loop_pre_header
      _
    $region150: #{amnmt_forward.1} parent=1 // loop_header
      %s1644 = sphi 0, %s1648
      %p1645 = scmp.ge.s32.totalorder %s1644, 8
      %v1649 = vphi 0.0, %v1765
    $region151: #{amnmt_forward.1} parent=1 // loop_header_branch
      %1647 = sbr.rel (%p1645) target = $region155
    $region152: #{amnmt_forward.1} parent=1 // loop_body
      %s1650 = ssub.s32 7, %s1644
      %s1651 = smul.u32 %s1650, 4
      %s1652 = scalar_lea.vmem [#allocation3], %s1651
      %v1653 = vld [vmem:[%s1652] sm:$0xf]
      %v1654 = vld [vmem:[%s21] sm:$0xff]
      %v1655 = vld [vmem:[%s21 + $0x8] sm:$0xff]
      %v1656 = vld [vmem:[%s21 + $0x10] sm:$0xff]
      %v1657 = vld [vmem:[%s21 + $0x18] sm:$0xff]
      %v1658 = vld [vmem:[%s25] sm:$0x1]
      %v1660 = vlaneseq
      %v1661 = vshrl.u32 %v1660, 7
      %v1662 = vsub.s32 0, %v1661
      %v1663 = vrot.slane %v1658, %v1662
      %1666 = vrot.lane.b32.xlu0 %v1649, 96
      %v1667 = vpop.permute.xlu0 %1666
      %v1668 = vsel %vm159, %v1667, 0
      %1670 = vmatprep.subr.mxu0 0.0
      %1671 = vmatpush1.msra.mxu0 0.0
      %1672 = vmatprep.subr.mxu0 0.0
      %1673 = vmatpush1.msra.mxu0 0.0
      %1674 = vmatprep.subr.mxu0 0.0
      %1675 = vmatpush1.msra.mxu0 0.0
      %1676 = vmatprep.subr.mxu0 0.0
      %1677 = vmatpush1.msra.mxu0 0.0
      %1678 = vmatprep.subr.mxu0 0.0
      %1679 = vmatpush1.msra.mxu0 0.0
      %1680 = vmatprep.subr.mxu0 0.0
      %1681 = vmatpush1.msra.mxu0 0.0
      %1682 = vmatprep.subr.mxu0 0.0
      %1683 = vmatpush1.msra.mxu0 0.0
      %1684 = vmatprep.subr.mxu0 0.0
      %1685 = vmatpush1.msra.mxu0 0.0
      %1686 = vmatprep.subr.mxu0 0.0
      %1687 = vmatpush1.msra.mxu0 0.0
      %1688 = vmatprep.subr.mxu0 0.0
      %1689 = vmatpush1.msra.mxu0 0.0
      %1690 = vmatprep.subr.mxu0 0.0
      %1691 = vmatpush1.msra.mxu0 0.0
      %1692 = vmatprep.subr.mxu0 0.0
      %1693 = vmatpush1.msra.mxu0 0.0
      %1694 = vmatprep.subr.mxu0 0.0
      %1695 = vmatpush1.msra.mxu0 %v1657
      %1696 = vmatprep.subr.mxu0 0.0
      %1697 = vmatpush1.msra.mxu0 %v1656
      %1698 = vmatprep.subr.mxu0 0.0
      %1699 = vmatpush1.msra.mxu0 %v1655
      %1700 = vmatprep.subr.mxu0 0.0
      %1701 = vmatpush1.msra.mxu0 %v1654
      %1702 = vmatprep.subr.mxu0 0.0
      %1703 = vmatpush2.msra.mxu0 0.0
      %1704 = vmatprep.subr.mxu0 0.0
      %1705 = vmatpush2.msra.mxu0 0.0
      %1706 = vmatprep.subr.mxu0 0.0
      %1707 = vmatpush2.msra.mxu0 0.0
      %1708 = vmatprep.subr.mxu0 0.0
      %1709 = vmatpush2.msra.mxu0 0.0
      %1710 = vmatprep.subr.mxu0 0.0
      %1711 = vmatpush2.msra.mxu0 0.0
      %1712 = vmatprep.subr.mxu0 0.0
      %1713 = vmatpush2.msra.mxu0 0.0
      %1714 = vmatprep.subr.mxu0 0.0
      %1715 = vmatpush2.msra.mxu0 0.0
      %1716 = vmatprep.subr.mxu0 0.0
      %1717 = vmatpush2.msra.mxu0 0.0
      %1718 = vmatprep.subr.mxu0 0.0
      %1719 = vmatpush2.msra.mxu0 0.0
      %1720 = vmatprep.subr.mxu0 0.0
      %1721 = vmatpush2.msra.mxu0 0.0
      %1722 = vmatprep.subr.mxu0 0.0
      %1723 = vmatpush2.msra.mxu0 0.0
      %1724 = vmatprep.subr.mxu0 0.0
      %1725 = vmatpush2.msra.mxu0 0.0
      %1726 = vmatprep.subr.mxu0 0.0
      %1727 = vmatpush2.msra.mxu0 0.0
      %1728 = vmatprep.subr.mxu0 0.0
      %1729 = vmatpush2.msra.mxu0 0.0
      %1730 = vmatprep.subr.mxu0 0.0
      %1731 = vmatpush2.msra.mxu0 0.0
      %1732 = vmatprep.subr.mxu0 0.0
      %1733 = vmatpush2.msra.mxu0 0.0
      %1734 = vmatprep.mubr.f32.mxu0 0.0
      %1735 = vmatmul.mubr.f32.gmra.mxu0 %v1668
      %v1736 = vpop.f32.mrf.mxu0
      %v1737 = vadd.f32 %v1663, %v1736
      %v1738 = vpop.f32.mrf.mxu0
      %1739 = vdwg.mxu0
      %v1740 = vadd.f32 %v1653, %v1737
      %v1741 = vxor.u32 %v1740, 2147483648
      %v1742 = vmul.f32 %v1741, 1.442695
      %v1743 = vpow.pop %v1742
      %v1744 = vadd.f32 %v1743, 1.0
      %v1745 = vrcp.pop %v1744
      %v1746 = vmul.f32 1.0, %v1745
      %1748 = vrot.lane.b32.xlu0 %v1737, 64
      %v1749 = vpop.permute.xlu0 %1748
      %v1751 = vmul.f32 %v1746, %v1749
      %1753 = vrot.lane.b32.xlu0 %v1751, 64
      %v1754 = vpop.permute.xlu0 %1753
      %v1756 = vadd.f32 %v1653, %v1754
      %v1757 = vtanh.pop %v1756
      %v1758 = vsub.f32 1.0, %v1746
      %1760 = vrot.lane.b32.xlu0 %v1757, 96
      %v1761 = vpop.permute.xlu0 %1760
      %v1763 = vmul.f32 %v1758, %v1761
      %v1764 = vmul.f32 %v1746, %v1649
      %v1765 = vadd.f32 %v1763, %v1764
      %1767 = vrot.lane.b32.xlu0 %v1765, 96
      %v1768 = vpop.permute.xlu0 %1767
      %s1770 = scalar_lea.vmem [#allocation5], %s1651
      %vm1771 = vcmask 257024
      %1772 = vst.msk [vmem:[%s1770] sm:$0xf] %vm1771, %v1768
    $region153: #{amnmt_forward.1} parent=1 // loop_footer
      %s1648 = sadd.s32 1, %s1644
    $region154: #{amnmt_forward.1} parent=1 // loop_footer_branch
      %1643 = sbr.rel target = $region150
    $region155: #{amnmt_forward.1} parent=1 // loop_exit
      _
    %v1773 = vld [vmem:[#allocation4] sm:$0xf]
    %v1774 = vld [vmem:[#allocation4 + $0x4] sm:$0xf]
    %v1775 = vld [vmem:[#allocation4 + $0x8] sm:$0xf]
    %v1776 = vld [vmem:[#allocation4 + $0xc] sm:$0xf]
    %v1777 = vld [vmem:[#allocation4 + $0x10] sm:$0xf]
    %v1778 = vld [vmem:[#allocation4 + $0x14] sm:$0xf]
    %v1779 = vld [vmem:[#allocation4 + $0x18] sm:$0xf]
    %v1780 = vld [vmem:[#allocation4 + $0x1c] sm:$0xf]
    %v1781 = vld [vmem:[#allocation5] sm:$0xf]
    %v1782 = vld [vmem:[#allocation5 + $0x4] sm:$0xf]
    %v1783 = vld [vmem:[#allocation5 + $0x8] sm:$0xf]
    %v1784 = vld [vmem:[#allocation5 + $0xc] sm:$0xf]
    %v1785 = vld [vmem:[#allocation5 + $0x10] sm:$0xf]
    %v1786 = vld [vmem:[#allocation5 + $0x14] sm:$0xf]
    %v1787 = vld [vmem:[#allocation5 + $0x18] sm:$0xf]
    %v1788 = vld [vmem:[#allocation5 + $0x1c] sm:$0xf]
    %1797 = vrot.lane.b32.xlu0 %v1781, 32
    %v1798 = vpop.permute.xlu0 %1797
    %1799 = vrot.lane.b32.xlu0 %v1782, 32
    %v1800 = vpop.permute.xlu0 %1799
    %1801 = vrot.lane.b32.xlu0 %v1783, 32
    %v1802 = vpop.permute.xlu0 %1801
    %1803 = vrot.lane.b32.xlu0 %v1784, 32
    %v1804 = vpop.permute.xlu0 %1803
    %1805 = vrot.lane.b32.xlu0 %v1785, 32
    %v1806 = vpop.permute.xlu0 %1805
    %1807 = vrot.lane.b32.xlu0 %v1786, 32
    %v1808 = vpop.permute.xlu0 %1807
    %1809 = vrot.lane.b32.xlu0 %v1787, 32
    %v1810 = vpop.permute.xlu0 %1809
    %1811 = vrot.lane.b32.xlu0 %v1788, 32
    %v1812 = vpop.permute.xlu0 %1811
    %v1821 = vsel %vm159, %v1773, %v1798
    %v1822 = vsel %vm159, %v1774, %v1800
    %v1823 = vsel %vm159, %v1775, %v1802
    %v1824 = vsel %vm159, %v1776, %v1804
    %v1825 = vsel %vm159, %v1777, %v1806
    %v1826 = vsel %vm159, %v1778, %v1808
    %v1827 = vsel %vm159, %v1779, %v1810
    %v1828 = vsel %vm159, %v1780, %v1812
    %v1829 = vld [vmem:[%s5] sm:$0xf]
    %v1830 = vld [vmem:[%s5 + $0x4] sm:$0xf]
    %v1831 = vld [vmem:[%s5 + $0x8] sm:$0xf]
    %v1832 = vld [vmem:[%s5 + $0xc] sm:$0xf]
    %v1833 = vld [vmem:[%s5 + $0x10] sm:$0xf]
    %v1834 = vld [vmem:[%s5 + $0x14] sm:$0xf]
    %v1835 = vld [vmem:[%s5 + $0x18] sm:$0xf]
    %v1836 = vld [vmem:[%s5 + $0x1c] sm:$0xf]
    %v1837 = vld [vmem:[%s3] sm:$0xf]
    %v1838 = vld [vmem:[%s3 + $0x4] sm:$0xf]
    %v1839 = vld [vmem:[%s3 + $0x8] sm:$0xf]
    %v1840 = vld [vmem:[%s3 + $0xc] sm:$0xf]
    %v1841 = vld [vmem:[%s3 + $0x10] sm:$0xf]
    %v1842 = vld [vmem:[%s3 + $0x14] sm:$0xf]
    %v1843 = vld [vmem:[%s3 + $0x18] sm:$0xf]
    %v1844 = vld [vmem:[%s3 + $0x1c] sm:$0xf]
    %v1845 = vld [vmem:[%s47] sm:$0xff]
    %v1846 = vld [vmem:[%s47 + $0x8] sm:$0xff]
    %v1847 = vld [vmem:[%s47 + $0x10] sm:$0xff]
    %v1848 = vld [vmem:[%s47 + $0x18] sm:$0xff]
    %v1849 = vld [vmem:[%s47 + $0x20] sm:$0xff]
    %v1850 = vld [vmem:[%s47 + $0x28] sm:$0xff]
    %v1851 = vld [vmem:[%s47 + $0x30] sm:$0xff]
    %v1852 = vld [vmem:[%s47 + $0x38] sm:$0xff]
    %vm1853 = vcmask 523264
    %v1855 = vsel %vm1853, %v1821, 0
    %1857 = vmatprep.subr.mxu0 0.0
    %1858 = vmatpush1.msra.mxu0 0.0
    %1859 = vmatprep.subr.mxu0 0.0
    %1860 = vmatpush1.msra.mxu0 0.0
    %1861 = vmatprep.subr.mxu0 0.0
    %1862 = vmatpush1.msra.mxu0 0.0
    %1863 = vmatprep.subr.mxu0 0.0
    %1864 = vmatpush1.msra.mxu0 0.0
    %1865 = vmatprep.subr.mxu0 0.0
    %1866 = vmatpush1.msra.mxu0 0.0
    %1867 = vmatprep.subr.mxu0 0.0
    %1868 = vmatpush1.msra.mxu0 0.0
    %1869 = vmatprep.subr.mxu0 0.0
    %1870 = vmatpush1.msra.mxu0 0.0
    %1871 = vmatprep.subr.mxu0 0.0
    %1872 = vmatpush1.msra.mxu0 0.0
    %1873 = vmatprep.subr.mxu0 0.0
    %1874 = vmatpush1.msra.mxu0 %v1852
    %1875 = vmatprep.subr.mxu0 0.0
    %1876 = vmatpush1.msra.mxu0 %v1851
    %1877 = vmatprep.subr.mxu0 0.0
    %1878 = vmatpush1.msra.mxu0 %v1850
    %1879 = vmatprep.subr.mxu0 0.0
    %1880 = vmatpush1.msra.mxu0 %v1849
    %1881 = vmatprep.subr.mxu0 0.0
    %1882 = vmatpush1.msra.mxu0 %v1848
    %1883 = vmatprep.subr.mxu0 0.0
    %1884 = vmatpush1.msra.mxu0 %v1847
    %1885 = vmatprep.subr.mxu0 0.0
    %1886 = vmatpush1.msra.mxu0 %v1846
    %1887 = vmatprep.subr.mxu0 0.0
    %1888 = vmatpush1.msra.mxu0 %v1845
    %1889 = vmatprep.subr.mxu0 0.0
    %1890 = vmatpush2.msra.mxu0 0.0
    %1891 = vmatprep.subr.mxu0 0.0
    %1892 = vmatpush2.msra.mxu0 0.0
    %1893 = vmatprep.subr.mxu0 0.0
    %1894 = vmatpush2.msra.mxu0 0.0
    %1895 = vmatprep.subr.mxu0 0.0
    %1896 = vmatpush2.msra.mxu0 0.0
    %1897 = vmatprep.subr.mxu0 0.0
    %1898 = vmatpush2.msra.mxu0 0.0
    %1899 = vmatprep.subr.mxu0 0.0
    %1900 = vmatpush2.msra.mxu0 0.0
    %1901 = vmatprep.subr.mxu0 0.0
    %1902 = vmatpush2.msra.mxu0 0.0
    %1903 = vmatprep.subr.mxu0 0.0
    %1904 = vmatpush2.msra.mxu0 0.0
    %1905 = vmatprep.subr.mxu0 0.0
    %1906 = vmatpush2.msra.mxu0 0.0
    %1907 = vmatprep.subr.mxu0 0.0
    %1908 = vmatpush2.msra.mxu0 0.0
    %1909 = vmatprep.subr.mxu0 0.0
    %1910 = vmatpush2.msra.mxu0 0.0
    %1911 = vmatprep.subr.mxu0 0.0
    %1912 = vmatpush2.msra.mxu0 0.0
    %1913 = vmatprep.subr.mxu0 0.0
    %1914 = vmatpush2.msra.mxu0 0.0
    %1915 = vmatprep.subr.mxu0 0.0
    %1916 = vmatpush2.msra.mxu0 0.0
    %1917 = vmatprep.subr.mxu0 0.0
    %1918 = vmatpush2.msra.mxu0 0.0
    %1919 = vmatprep.subr.mxu0 0.0
    %1920 = vmatpush2.msra.mxu0 0.0
    %1921 = vmatprep.mubr.f32.mxu0 0.0
    %1922 = vmatmul.mubr.f32.gmra.mxu0 %v1855
    %v1923 = vpop.f32.mrf.mxu0
    %v1924 = vadd.f32 0.0, %v1923
    %v1925 = vpop.f32.mrf.mxu0
    %1926 = vdwg.mxu0
    %vm1927 = vcmask 519168
    %1928 = vst.msk [vmem:[#allocation6] sm:$0xf] %vm1927, %v1924
    %v1929 = vld [vmem:[%s47] sm:$0xff]
    %v1930 = vld [vmem:[%s47 + $0x8] sm:$0xff]
    %v1931 = vld [vmem:[%s47 + $0x10] sm:$0xff]
    %v1932 = vld [vmem:[%s47 + $0x18] sm:$0xff]
    %v1933 = vld [vmem:[%s47 + $0x20] sm:$0xff]
    %v1934 = vld [vmem:[%s47 + $0x28] sm:$0xff]
    %v1935 = vld [vmem:[%s47 + $0x30] sm:$0xff]
    %v1936 = vld [vmem:[%s47 + $0x38] sm:$0xff]
    %v1938 = vsel %vm1853, %v1822, 0
    %1940 = vmatprep.subr.mxu0 0.0
    %1941 = vmatpush1.msra.mxu0 0.0
    %1942 = vmatprep.subr.mxu0 0.0
    %1943 = vmatpush1.msra.mxu0 0.0
    %1944 = vmatprep.subr.mxu0 0.0
    %1945 = vmatpush1.msra.mxu0 0.0
    %1946 = vmatprep.subr.mxu0 0.0
    %1947 = vmatpush1.msra.mxu0 0.0
    %1948 = vmatprep.subr.mxu0 0.0
    %1949 = vmatpush1.msra.mxu0 0.0
    %1950 = vmatprep.subr.mxu0 0.0
    %1951 = vmatpush1.msra.mxu0 0.0
    %1952 = vmatprep.subr.mxu0 0.0
    %1953 = vmatpush1.msra.mxu0 0.0
    %1954 = vmatprep.subr.mxu0 0.0
    %1955 = vmatpush1.msra.mxu0 0.0
    %1956 = vmatprep.subr.mxu0 0.0
    %1957 = vmatpush1.msra.mxu0 %v1936
    %1958 = vmatprep.subr.mxu0 0.0
    %1959 = vmatpush1.msra.mxu0 %v1935
    %1960 = vmatprep.subr.mxu0 0.0
    %1961 = vmatpush1.msra.mxu0 %v1934
    %1962 = vmatprep.subr.mxu0 0.0
    %1963 = vmatpush1.msra.mxu0 %v1933
    %1964 = vmatprep.subr.mxu0 0.0
    %1965 = vmatpush1.msra.mxu0 %v1932
    %1966 = vmatprep.subr.mxu0 0.0
    %1967 = vmatpush1.msra.mxu0 %v1931
    %1968 = vmatprep.subr.mxu0 0.0
    %1969 = vmatpush1.msra.mxu0 %v1930
    %1970 = vmatprep.subr.mxu0 0.0
    %1971 = vmatpush1.msra.mxu0 %v1929
    %1972 = vmatprep.subr.mxu0 0.0
    %1973 = vmatpush2.msra.mxu0 0.0
    %1974 = vmatprep.subr.mxu0 0.0
    %1975 = vmatpush2.msra.mxu0 0.0
    %1976 = vmatprep.subr.mxu0 0.0
    %1977 = vmatpush2.msra.mxu0 0.0
    %1978 = vmatprep.subr.mxu0 0.0
    %1979 = vmatpush2.msra.mxu0 0.0
    %1980 = vmatprep.subr.mxu0 0.0
    %1981 = vmatpush2.msra.mxu0 0.0
    %1982 = vmatprep.subr.mxu0 0.0
    %1983 = vmatpush2.msra.mxu0 0.0
    %1984 = vmatprep.subr.mxu0 0.0
    %1985 = vmatpush2.msra.mxu0 0.0
    %1986 = vmatprep.subr.mxu0 0.0
    %1987 = vmatpush2.msra.mxu0 0.0
    %1988 = vmatprep.subr.mxu0 0.0
    %1989 = vmatpush2.msra.mxu0 0.0
    %1990 = vmatprep.subr.mxu0 0.0
    %1991 = vmatpush2.msra.mxu0 0.0
    %1992 = vmatprep.subr.mxu0 0.0
    %1993 = vmatpush2.msra.mxu0 0.0
    %1994 = vmatprep.subr.mxu0 0.0
    %1995 = vmatpush2.msra.mxu0 0.0
    %1996 = vmatprep.subr.mxu0 0.0
    %1997 = vmatpush2.msra.mxu0 0.0
    %1998 = vmatprep.subr.mxu0 0.0
    %1999 = vmatpush2.msra.mxu0 0.0
    %2000 = vmatprep.subr.mxu0 0.0
    %2001 = vmatpush2.msra.mxu0 0.0
    %2002 = vmatprep.subr.mxu0 0.0
    %2003 = vmatpush2.msra.mxu0 0.0
    %2004 = vmatprep.mubr.f32.mxu0 0.0
    %2005 = vmatmul.mubr.f32.gmra.mxu0 %v1938
    %v2006 = vpop.f32.mrf.mxu0
    %v2007 = vadd.f32 0.0, %v2006
    %v2008 = vpop.f32.mrf.mxu0
    %2009 = vdwg.mxu0
    %s2010 = scalar_lea.vmem [#allocation6], 4
    %2011 = vst.msk [vmem:[%s2010] sm:$0xf] %vm1927, %v2007
    %v2012 = vld [vmem:[%s47] sm:$0xff]
    %v2013 = vld [vmem:[%s47 + $0x8] sm:$0xff]
    %v2014 = vld [vmem:[%s47 + $0x10] sm:$0xff]
    %v2015 = vld [vmem:[%s47 + $0x18] sm:$0xff]
    %v2016 = vld [vmem:[%s47 + $0x20] sm:$0xff]
    %v2017 = vld [vmem:[%s47 + $0x28] sm:$0xff]
    %v2018 = vld [vmem:[%s47 + $0x30] sm:$0xff]
    %v2019 = vld [vmem:[%s47 + $0x38] sm:$0xff]
    %v2021 = vsel %vm1853, %v1823, 0
    %2023 = vmatprep.subr.mxu0 0.0
    %2024 = vmatpush1.msra.mxu0 0.0
    %2025 = vmatprep.subr.mxu0 0.0
    %2026 = vmatpush1.msra.mxu0 0.0
    %2027 = vmatprep.subr.mxu0 0.0
    %2028 = vmatpush1.msra.mxu0 0.0
    %2029 = vmatprep.subr.mxu0 0.0
    %2030 = vmatpush1.msra.mxu0 0.0
    %2031 = vmatprep.subr.mxu0 0.0
    %2032 = vmatpush1.msra.mxu0 0.0
    %2033 = vmatprep.subr.mxu0 0.0
    %2034 = vmatpush1.msra.mxu0 0.0
    %2035 = vmatprep.subr.mxu0 0.0
    %2036 = vmatpush1.msra.mxu0 0.0
    %2037 = vmatprep.subr.mxu0 0.0
    %2038 = vmatpush1.msra.mxu0 0.0
    %2039 = vmatprep.subr.mxu0 0.0
    %2040 = vmatpush1.msra.mxu0 %v2019
    %2041 = vmatprep.subr.mxu0 0.0
    %2042 = vmatpush1.msra.mxu0 %v2018
    %2043 = vmatprep.subr.mxu0 0.0
    %2044 = vmatpush1.msra.mxu0 %v2017
    %2045 = vmatprep.subr.mxu0 0.0
    %2046 = vmatpush1.msra.mxu0 %v2016
    %2047 = vmatprep.subr.mxu0 0.0
    %2048 = vmatpush1.msra.mxu0 %v2015
    %2049 = vmatprep.subr.mxu0 0.0
    %2050 = vmatpush1.msra.mxu0 %v2014
    %2051 = vmatprep.subr.mxu0 0.0
    %2052 = vmatpush1.msra.mxu0 %v2013
    %2053 = vmatprep.subr.mxu0 0.0
    %2054 = vmatpush1.msra.mxu0 %v2012
    %2055 = vmatprep.subr.mxu0 0.0
    %2056 = vmatpush2.msra.mxu0 0.0
    %2057 = vmatprep.subr.mxu0 0.0
    %2058 = vmatpush2.msra.mxu0 0.0
    %2059 = vmatprep.subr.mxu0 0.0
    %2060 = vmatpush2.msra.mxu0 0.0
    %2061 = vmatprep.subr.mxu0 0.0
    %2062 = vmatpush2.msra.mxu0 0.0
    %2063 = vmatprep.subr.mxu0 0.0
    %2064 = vmatpush2.msra.mxu0 0.0
    %2065 = vmatprep.subr.mxu0 0.0
    %2066 = vmatpush2.msra.mxu0 0.0
    %2067 = vmatprep.subr.mxu0 0.0
    %2068 = vmatpush2.msra.mxu0 0.0
    %2069 = vmatprep.subr.mxu0 0.0
    %2070 = vmatpush2.msra.mxu0 0.0
    %2071 = vmatprep.subr.mxu0 0.0
    %2072 = vmatpush2.msra.mxu0 0.0
    %2073 = vmatprep.subr.mxu0 0.0
    %2074 = vmatpush2.msra.mxu0 0.0
    %2075 = vmatprep.subr.mxu0 0.0
    %2076 = vmatpush2.msra.mxu0 0.0
    %2077 = vmatprep.subr.mxu0 0.0
    %2078 = vmatpush2.msra.mxu0 0.0
    %2079 = vmatprep.subr.mxu0 0.0
    %2080 = vmatpush2.msra.mxu0 0.0
    %2081 = vmatprep.subr.mxu0 0.0
    %2082 = vmatpush2.msra.mxu0 0.0
    %2083 = vmatprep.subr.mxu0 0.0
    %2084 = vmatpush2.msra.mxu0 0.0
    %2085 = vmatprep.subr.mxu0 0.0
    %2086 = vmatpush2.msra.mxu0 0.0
    %2087 = vmatprep.mubr.f32.mxu0 0.0
    %2088 = vmatmul.mubr.f32.gmra.mxu0 %v2021
    %v2089 = vpop.f32.mrf.mxu0
    %v2090 = vadd.f32 0.0, %v2089
    %v2091 = vpop.f32.mrf.mxu0
    %2092 = vdwg.mxu0
    %s2093 = scalar_lea.vmem [#allocation6], 8
    %2094 = vst.msk [vmem:[%s2093] sm:$0xf] %vm1927, %v2090
    %v2095 = vld [vmem:[%s47] sm:$0xff]
    %v2096 = vld [vmem:[%s47 + $0x8] sm:$0xff]
    %v2097 = vld [vmem:[%s47 + $0x10] sm:$0xff]
    %v2098 = vld [vmem:[%s47 + $0x18] sm:$0xff]
    %v2099 = vld [vmem:[%s47 + $0x20] sm:$0xff]
    %v2100 = vld [vmem:[%s47 + $0x28] sm:$0xff]
    %v2101 = vld [vmem:[%s47 + $0x30] sm:$0xff]
    %v2102 = vld [vmem:[%s47 + $0x38] sm:$0xff]
    %v2104 = vsel %vm1853, %v1824, 0
    %2106 = vmatprep.subr.mxu0 0.0
    %2107 = vmatpush1.msra.mxu0 0.0
    %2108 = vmatprep.subr.mxu0 0.0
    %2109 = vmatpush1.msra.mxu0 0.0
    %2110 = vmatprep.subr.mxu0 0.0
    %2111 = vmatpush1.msra.mxu0 0.0
    %2112 = vmatprep.subr.mxu0 0.0
    %2113 = vmatpush1.msra.mxu0 0.0
    %2114 = vmatprep.subr.mxu0 0.0
    %2115 = vmatpush1.msra.mxu0 0.0
    %2116 = vmatprep.subr.mxu0 0.0
    %2117 = vmatpush1.msra.mxu0 0.0
    %2118 = vmatprep.subr.mxu0 0.0
    %2119 = vmatpush1.msra.mxu0 0.0
    %2120 = vmatprep.subr.mxu0 0.0
    %2121 = vmatpush1.msra.mxu0 0.0
    %2122 = vmatprep.subr.mxu0 0.0
    %2123 = vmatpush1.msra.mxu0 %v2102
    %2124 = vmatprep.subr.mxu0 0.0
    %2125 = vmatpush1.msra.mxu0 %v2101
    %2126 = vmatprep.subr.mxu0 0.0
    %2127 = vmatpush1.msra.mxu0 %v2100
    %2128 = vmatprep.subr.mxu0 0.0
    %2129 = vmatpush1.msra.mxu0 %v2099
    %2130 = vmatprep.subr.mxu0 0.0
    %2131 = vmatpush1.msra.mxu0 %v2098
    %2132 = vmatprep.subr.mxu0 0.0
    %2133 = vmatpush1.msra.mxu0 %v2097
    %2134 = vmatprep.subr.mxu0 0.0
    %2135 = vmatpush1.msra.mxu0 %v2096
    %2136 = vmatprep.subr.mxu0 0.0
    %2137 = vmatpush1.msra.mxu0 %v2095
    %2138 = vmatprep.subr.mxu0 0.0
    %2139 = vmatpush2.msra.mxu0 0.0
    %2140 = vmatprep.subr.mxu0 0.0
    %2141 = vmatpush2.msra.mxu0 0.0
    %2142 = vmatprep.subr.mxu0 0.0
    %2143 = vmatpush2.msra.mxu0 0.0
    %2144 = vmatprep.subr.mxu0 0.0
    %2145 = vmatpush2.msra.mxu0 0.0
    %2146 = vmatprep.subr.mxu0 0.0
    %2147 = vmatpush2.msra.mxu0 0.0
    %2148 = vmatprep.subr.mxu0 0.0
    %2149 = vmatpush2.msra.mxu0 0.0
    %2150 = vmatprep.subr.mxu0 0.0
    %2151 = vmatpush2.msra.mxu0 0.0
    %2152 = vmatprep.subr.mxu0 0.0
    %2153 = vmatpush2.msra.mxu0 0.0
    %2154 = vmatprep.subr.mxu0 0.0
    %2155 = vmatpush2.msra.mxu0 0.0
    %2156 = vmatprep.subr.mxu0 0.0
    %2157 = vmatpush2.msra.mxu0 0.0
    %2158 = vmatprep.subr.mxu0 0.0
    %2159 = vmatpush2.msra.mxu0 0.0
    %2160 = vmatprep.subr.mxu0 0.0
    %2161 = vmatpush2.msra.mxu0 0.0
    %2162 = vmatprep.subr.mxu0 0.0
    %2163 = vmatpush2.msra.mxu0 0.0
    %2164 = vmatprep.subr.mxu0 0.0
    %2165 = vmatpush2.msra.mxu0 0.0
    %2166 = vmatprep.subr.mxu0 0.0
    %2167 = vmatpush2.msra.mxu0 0.0
    %2168 = vmatprep.subr.mxu0 0.0
    %2169 = vmatpush2.msra.mxu0 0.0
    %2170 = vmatprep.mubr.f32.mxu0 0.0
    %2171 = vmatmul.mubr.f32.gmra.mxu0 %v2104
    %v2172 = vpop.f32.mrf.mxu0
    %v2173 = vadd.f32 0.0, %v2172
    %v2174 = vpop.f32.mrf.mxu0
    %2175 = vdwg.mxu0
    %s2176 = scalar_lea.vmem [#allocation6], 12
    %2177 = vst.msk [vmem:[%s2176] sm:$0xf] %vm1927, %v2173
    %v2178 = vld [vmem:[%s47] sm:$0xff]
    %v2179 = vld [vmem:[%s47 + $0x8] sm:$0xff]
    %v2180 = vld [vmem:[%s47 + $0x10] sm:$0xff]
    %v2181 = vld [vmem:[%s47 + $0x18] sm:$0xff]
    %v2182 = vld [vmem:[%s47 + $0x20] sm:$0xff]
    %v2183 = vld [vmem:[%s47 + $0x28] sm:$0xff]
    %v2184 = vld [vmem:[%s47 + $0x30] sm:$0xff]
    %v2185 = vld [vmem:[%s47 + $0x38] sm:$0xff]
    %v2187 = vsel %vm1853, %v1825, 0
    %2189 = vmatprep.subr.mxu0 0.0
    %2190 = vmatpush1.msra.mxu0 0.0
    %2191 = vmatprep.subr.mxu0 0.0
    %2192 = vmatpush1.msra.mxu0 0.0
    %2193 = vmatprep.subr.mxu0 0.0
    %2194 = vmatpush1.msra.mxu0 0.0
    %2195 = vmatprep.subr.mxu0 0.0
    %2196 = vmatpush1.msra.mxu0 0.0
    %2197 = vmatprep.subr.mxu0 0.0
    %2198 = vmatpush1.msra.mxu0 0.0
    %2199 = vmatprep.subr.mxu0 0.0
    %2200 = vmatpush1.msra.mxu0 0.0
    %2201 = vmatprep.subr.mxu0 0.0
    %2202 = vmatpush1.msra.mxu0 0.0
    %2203 = vmatprep.subr.mxu0 0.0
    %2204 = vmatpush1.msra.mxu0 0.0
    %2205 = vmatprep.subr.mxu0 0.0
    %2206 = vmatpush1.msra.mxu0 %v2185
    %2207 = vmatprep.subr.mxu0 0.0
    %2208 = vmatpush1.msra.mxu0 %v2184
    %2209 = vmatprep.subr.mxu0 0.0
    %2210 = vmatpush1.msra.mxu0 %v2183
    %2211 = vmatprep.subr.mxu0 0.0
    %2212 = vmatpush1.msra.mxu0 %v2182
    %2213 = vmatprep.subr.mxu0 0.0
    %2214 = vmatpush1.msra.mxu0 %v2181
    %2215 = vmatprep.subr.mxu0 0.0
    %2216 = vmatpush1.msra.mxu0 %v2180
    %2217 = vmatprep.subr.mxu0 0.0
    %2218 = vmatpush1.msra.mxu0 %v2179
    %2219 = vmatprep.subr.mxu0 0.0
    %2220 = vmatpush1.msra.mxu0 %v2178
    %2221 = vmatprep.subr.mxu0 0.0
    %2222 = vmatpush2.msra.mxu0 0.0
    %2223 = vmatprep.subr.mxu0 0.0
    %2224 = vmatpush2.msra.mxu0 0.0
    %2225 = vmatprep.subr.mxu0 0.0
    %2226 = vmatpush2.msra.mxu0 0.0
    %2227 = vmatprep.subr.mxu0 0.0
    %2228 = vmatpush2.msra.mxu0 0.0
    %2229 = vmatprep.subr.mxu0 0.0
    %2230 = vmatpush2.msra.mxu0 0.0
    %2231 = vmatprep.subr.mxu0 0.0
    %2232 = vmatpush2.msra.mxu0 0.0
    %2233 = vmatprep.subr.mxu0 0.0
    %2234 = vmatpush2.msra.mxu0 0.0
    %2235 = vmatprep.subr.mxu0 0.0
    %2236 = vmatpush2.msra.mxu0 0.0
    %2237 = vmatprep.subr.mxu0 0.0
    %2238 = vmatpush2.msra.mxu0 0.0
    %2239 = vmatprep.subr.mxu0 0.0
    %2240 = vmatpush2.msra.mxu0 0.0
    %2241 = vmatprep.subr.mxu0 0.0
    %2242 = vmatpush2.msra.mxu0 0.0
    %2243 = vmatprep.subr.mxu0 0.0
    %2244 = vmatpush2.msra.mxu0 0.0
    %2245 = vmatprep.subr.mxu0 0.0
    %2246 = vmatpush2.msra.mxu0 0.0
    %2247 = vmatprep.subr.mxu0 0.0
    %2248 = vmatpush2.msra.mxu0 0.0
    %2249 = vmatprep.subr.mxu0 0.0
    %2250 = vmatpush2.msra.mxu0 0.0
    %2251 = vmatprep.subr.mxu0 0.0
    %2252 = vmatpush2.msra.mxu0 0.0
    %2253 = vmatprep.mubr.f32.mxu0 0.0
    %2254 = vmatmul.mubr.f32.gmra.mxu0 %v2187
    %v2255 = vpop.f32.mrf.mxu0
    %v2256 = vadd.f32 0.0, %v2255
    %v2257 = vpop.f32.mrf.mxu0
    %2258 = vdwg.mxu0
    %s2259 = scalar_lea.vmem [#allocation6], 16
    %2260 = vst.msk [vmem:[%s2259] sm:$0xf] %vm1927, %v2256
    %v2261 = vld [vmem:[%s47] sm:$0xff]
    %v2262 = vld [vmem:[%s47 + $0x8] sm:$0xff]
    %v2263 = vld [vmem:[%s47 + $0x10] sm:$0xff]
    %v2264 = vld [vmem:[%s47 + $0x18] sm:$0xff]
    %v2265 = vld [vmem:[%s47 + $0x20] sm:$0xff]
    %v2266 = vld [vmem:[%s47 + $0x28] sm:$0xff]
    %v2267 = vld [vmem:[%s47 + $0x30] sm:$0xff]
    %v2268 = vld [vmem:[%s47 + $0x38] sm:$0xff]
    %v2270 = vsel %vm1853, %v1826, 0
    %2272 = vmatprep.subr.mxu0 0.0
    %2273 = vmatpush1.msra.mxu0 0.0
    %2274 = vmatprep.subr.mxu0 0.0
    %2275 = vmatpush1.msra.mxu0 0.0
    %2276 = vmatprep.subr.mxu0 0.0
    %2277 = vmatpush1.msra.mxu0 0.0
    %2278 = vmatprep.subr.mxu0 0.0
    %2279 = vmatpush1.msra.mxu0 0.0
    %2280 = vmatprep.subr.mxu0 0.0
    %2281 = vmatpush1.msra.mxu0 0.0
    %2282 = vmatprep.subr.mxu0 0.0
    %2283 = vmatpush1.msra.mxu0 0.0
    %2284 = vmatprep.subr.mxu0 0.0
    %2285 = vmatpush1.msra.mxu0 0.0
    %2286 = vmatprep.subr.mxu0 0.0
    %2287 = vmatpush1.msra.mxu0 0.0
    %2288 = vmatprep.subr.mxu0 0.0
    %2289 = vmatpush1.msra.mxu0 %v2268
    %2290 = vmatprep.subr.mxu0 0.0
    %2291 = vmatpush1.msra.mxu0 %v2267
    %2292 = vmatprep.subr.mxu0 0.0
    %2293 = vmatpush1.msra.mxu0 %v2266
    %2294 = vmatprep.subr.mxu0 0.0
    %2295 = vmatpush1.msra.mxu0 %v2265
    %2296 = vmatprep.subr.mxu0 0.0
    %2297 = vmatpush1.msra.mxu0 %v2264
    %2298 = vmatprep.subr.mxu0 0.0
    %2299 = vmatpush1.msra.mxu0 %v2263
    %2300 = vmatprep.subr.mxu0 0.0
    %2301 = vmatpush1.msra.mxu0 %v2262
    %2302 = vmatprep.subr.mxu0 0.0
    %2303 = vmatpush1.msra.mxu0 %v2261
    %2304 = vmatprep.subr.mxu0 0.0
    %2305 = vmatpush2.msra.mxu0 0.0
    %2306 = vmatprep.subr.mxu0 0.0
    %2307 = vmatpush2.msra.mxu0 0.0
    %2308 = vmatprep.subr.mxu0 0.0
    %2309 = vmatpush2.msra.mxu0 0.0
    %2310 = vmatprep.subr.mxu0 0.0
    %2311 = vmatpush2.msra.mxu0 0.0
    %2312 = vmatprep.subr.mxu0 0.0
    %2313 = vmatpush2.msra.mxu0 0.0
    %2314 = vmatprep.subr.mxu0 0.0
    %2315 = vmatpush2.msra.mxu0 0.0
    %2316 = vmatprep.subr.mxu0 0.0
    %2317 = vmatpush2.msra.mxu0 0.0
    %2318 = vmatprep.subr.mxu0 0.0
    %2319 = vmatpush2.msra.mxu0 0.0
    %2320 = vmatprep.subr.mxu0 0.0
    %2321 = vmatpush2.msra.mxu0 0.0
    %2322 = vmatprep.subr.mxu0 0.0
    %2323 = vmatpush2.msra.mxu0 0.0
    %2324 = vmatprep.subr.mxu0 0.0
    %2325 = vmatpush2.msra.mxu0 0.0
    %2326 = vmatprep.subr.mxu0 0.0
    %2327 = vmatpush2.msra.mxu0 0.0
    %2328 = vmatprep.subr.mxu0 0.0
    %2329 = vmatpush2.msra.mxu0 0.0
    %2330 = vmatprep.subr.mxu0 0.0
    %2331 = vmatpush2.msra.mxu0 0.0
    %2332 = vmatprep.subr.mxu0 0.0
    %2333 = vmatpush2.msra.mxu0 0.0
    %2334 = vmatprep.subr.mxu0 0.0
    %2335 = vmatpush2.msra.mxu0 0.0
    %2336 = vmatprep.mubr.f32.mxu0 0.0
    %2337 = vmatmul.mubr.f32.gmra.mxu0 %v2270
    %v2338 = vpop.f32.mrf.mxu0
    %v2339 = vadd.f32 0.0, %v2338
    %v2340 = vpop.f32.mrf.mxu0
    %2341 = vdwg.mxu0
    %s2342 = scalar_lea.vmem [#allocation6], 20
    %2343 = vst.msk [vmem:[%s2342] sm:$0xf] %vm1927, %v2339
    %v2344 = vld [vmem:[%s47] sm:$0xff]
    %v2345 = vld [vmem:[%s47 + $0x8] sm:$0xff]
    %v2346 = vld [vmem:[%s47 + $0x10] sm:$0xff]
    %v2347 = vld [vmem:[%s47 + $0x18] sm:$0xff]
    %v2348 = vld [vmem:[%s47 + $0x20] sm:$0xff]
    %v2349 = vld [vmem:[%s47 + $0x28] sm:$0xff]
    %v2350 = vld [vmem:[%s47 + $0x30] sm:$0xff]
    %v2351 = vld [vmem:[%s47 + $0x38] sm:$0xff]
    %v2353 = vsel %vm1853, %v1827, 0
    %2355 = vmatprep.subr.mxu0 0.0
    %2356 = vmatpush1.msra.mxu0 0.0
    %2357 = vmatprep.subr.mxu0 0.0
    %2358 = vmatpush1.msra.mxu0 0.0
    %2359 = vmatprep.subr.mxu0 0.0
    %2360 = vmatpush1.msra.mxu0 0.0
    %2361 = vmatprep.subr.mxu0 0.0
    %2362 = vmatpush1.msra.mxu0 0.0
    %2363 = vmatprep.subr.mxu0 0.0
    %2364 = vmatpush1.msra.mxu0 0.0
    %2365 = vmatprep.subr.mxu0 0.0
    %2366 = vmatpush1.msra.mxu0 0.0
    %2367 = vmatprep.subr.mxu0 0.0
    %2368 = vmatpush1.msra.mxu0 0.0
    %2369 = vmatprep.subr.mxu0 0.0
    %2370 = vmatpush1.msra.mxu0 0.0
    %2371 = vmatprep.subr.mxu0 0.0
    %2372 = vmatpush1.msra.mxu0 %v2351
    %2373 = vmatprep.subr.mxu0 0.0
    %2374 = vmatpush1.msra.mxu0 %v2350
    %2375 = vmatprep.subr.mxu0 0.0
    %2376 = vmatpush1.msra.mxu0 %v2349
    %2377 = vmatprep.subr.mxu0 0.0
    %2378 = vmatpush1.msra.mxu0 %v2348
    %2379 = vmatprep.subr.mxu0 0.0
    %2380 = vmatpush1.msra.mxu0 %v2347
    %2381 = vmatprep.subr.mxu0 0.0
    %2382 = vmatpush1.msra.mxu0 %v2346
    %2383 = vmatprep.subr.mxu0 0.0
    %2384 = vmatpush1.msra.mxu0 %v2345
    %2385 = vmatprep.subr.mxu0 0.0
    %2386 = vmatpush1.msra.mxu0 %v2344
    %2387 = vmatprep.subr.mxu0 0.0
    %2388 = vmatpush2.msra.mxu0 0.0
    %2389 = vmatprep.subr.mxu0 0.0
    %2390 = vmatpush2.msra.mxu0 0.0
    %2391 = vmatprep.subr.mxu0 0.0
    %2392 = vmatpush2.msra.mxu0 0.0
    %2393 = vmatprep.subr.mxu0 0.0
    %2394 = vmatpush2.msra.mxu0 0.0
    %2395 = vmatprep.subr.mxu0 0.0
    %2396 = vmatpush2.msra.mxu0 0.0
    %2397 = vmatprep.subr.mxu0 0.0
    %2398 = vmatpush2.msra.mxu0 0.0
    %2399 = vmatprep.subr.mxu0 0.0
    %2400 = vmatpush2.msra.mxu0 0.0
    %2401 = vmatprep.subr.mxu0 0.0
    %2402 = vmatpush2.msra.mxu0 0.0
    %2403 = vmatprep.subr.mxu0 0.0
    %2404 = vmatpush2.msra.mxu0 0.0
    %2405 = vmatprep.subr.mxu0 0.0
    %2406 = vmatpush2.msra.mxu0 0.0
    %2407 = vmatprep.subr.mxu0 0.0
    %2408 = vmatpush2.msra.mxu0 0.0
    %2409 = vmatprep.subr.mxu0 0.0
    %2410 = vmatpush2.msra.mxu0 0.0
    %2411 = vmatprep.subr.mxu0 0.0
    %2412 = vmatpush2.msra.mxu0 0.0
    %2413 = vmatprep.subr.mxu0 0.0
    %2414 = vmatpush2.msra.mxu0 0.0
    %2415 = vmatprep.subr.mxu0 0.0
    %2416 = vmatpush2.msra.mxu0 0.0
    %2417 = vmatprep.subr.mxu0 0.0
    %2418 = vmatpush2.msra.mxu0 0.0
    %2419 = vmatprep.mubr.f32.mxu0 0.0
    %2420 = vmatmul.mubr.f32.gmra.mxu0 %v2353
    %v2421 = vpop.f32.mrf.mxu0
    %v2422 = vadd.f32 0.0, %v2421
    %v2423 = vpop.f32.mrf.mxu0
    %2424 = vdwg.mxu0
    %s2425 = scalar_lea.vmem [#allocation6], 24
    %2426 = vst.msk [vmem:[%s2425] sm:$0xf] %vm1927, %v2422
    %v2427 = vld [vmem:[%s47] sm:$0xff]
    %v2428 = vld [vmem:[%s47 + $0x8] sm:$0xff]
    %v2429 = vld [vmem:[%s47 + $0x10] sm:$0xff]
    %v2430 = vld [vmem:[%s47 + $0x18] sm:$0xff]
    %v2431 = vld [vmem:[%s47 + $0x20] sm:$0xff]
    %v2432 = vld [vmem:[%s47 + $0x28] sm:$0xff]
    %v2433 = vld [vmem:[%s47 + $0x30] sm:$0xff]
    %v2434 = vld [vmem:[%s47 + $0x38] sm:$0xff]
    %v2436 = vsel %vm1853, %v1828, 0
    %2438 = vmatprep.subr.mxu0 0.0
    %2439 = vmatpush1.msra.mxu0 0.0
    %2440 = vmatprep.subr.mxu0 0.0
    %2441 = vmatpush1.msra.mxu0 0.0
    %2442 = vmatprep.subr.mxu0 0.0
    %2443 = vmatpush1.msra.mxu0 0.0
    %2444 = vmatprep.subr.mxu0 0.0
    %2445 = vmatpush1.msra.mxu0 0.0
    %2446 = vmatprep.subr.mxu0 0.0
    %2447 = vmatpush1.msra.mxu0 0.0
    %2448 = vmatprep.subr.mxu0 0.0
    %2449 = vmatpush1.msra.mxu0 0.0
    %2450 = vmatprep.subr.mxu0 0.0
    %2451 = vmatpush1.msra.mxu0 0.0
    %2452 = vmatprep.subr.mxu0 0.0
    %2453 = vmatpush1.msra.mxu0 0.0
    %2454 = vmatprep.subr.mxu0 0.0
    %2455 = vmatpush1.msra.mxu0 %v2434
    %2456 = vmatprep.subr.mxu0 0.0
    %2457 = vmatpush1.msra.mxu0 %v2433
    %2458 = vmatprep.subr.mxu0 0.0
    %2459 = vmatpush1.msra.mxu0 %v2432
    %2460 = vmatprep.subr.mxu0 0.0
    %2461 = vmatpush1.msra.mxu0 %v2431
    %2462 = vmatprep.subr.mxu0 0.0
    %2463 = vmatpush1.msra.mxu0 %v2430
    %2464 = vmatprep.subr.mxu0 0.0
    %2465 = vmatpush1.msra.mxu0 %v2429
    %2466 = vmatprep.subr.mxu0 0.0
    %2467 = vmatpush1.msra.mxu0 %v2428
    %2468 = vmatprep.subr.mxu0 0.0
    %2469 = vmatpush1.msra.mxu0 %v2427
    %2470 = vmatprep.subr.mxu0 0.0
    %2471 = vmatpush2.msra.mxu0 0.0
    %2472 = vmatprep.subr.mxu0 0.0
    %2473 = vmatpush2.msra.mxu0 0.0
    %2474 = vmatprep.subr.mxu0 0.0
    %2475 = vmatpush2.msra.mxu0 0.0
    %2476 = vmatprep.subr.mxu0 0.0
    %2477 = vmatpush2.msra.mxu0 0.0
    %2478 = vmatprep.subr.mxu0 0.0
    %2479 = vmatpush2.msra.mxu0 0.0
    %2480 = vmatprep.subr.mxu0 0.0
    %2481 = vmatpush2.msra.mxu0 0.0
    %2482 = vmatprep.subr.mxu0 0.0
    %2483 = vmatpush2.msra.mxu0 0.0
    %2484 = vmatprep.subr.mxu0 0.0
    %2485 = vmatpush2.msra.mxu0 0.0
    %2486 = vmatprep.subr.mxu0 0.0
    %2487 = vmatpush2.msra.mxu0 0.0
    %2488 = vmatprep.subr.mxu0 0.0
    %2489 = vmatpush2.msra.mxu0 0.0
    %2490 = vmatprep.subr.mxu0 0.0
    %2491 = vmatpush2.msra.mxu0 0.0
    %2492 = vmatprep.subr.mxu0 0.0
    %2493 = vmatpush2.msra.mxu0 0.0
    %2494 = vmatprep.subr.mxu0 0.0
    %2495 = vmatpush2.msra.mxu0 0.0
    %2496 = vmatprep.subr.mxu0 0.0
    %2497 = vmatpush2.msra.mxu0 0.0
    %2498 = vmatprep.subr.mxu0 0.0
    %2499 = vmatpush2.msra.mxu0 0.0
    %2500 = vmatprep.subr.mxu0 0.0
    %2501 = vmatpush2.msra.mxu0 0.0
    %2502 = vmatprep.mubr.f32.mxu0 0.0
    %2503 = vmatmul.mubr.f32.gmra.mxu0 %v2436
    %v2504 = vpop.f32.mrf.mxu0
    %v2505 = vadd.f32 0.0, %v2504
    %v2506 = vpop.f32.mrf.mxu0
    %2507 = vdwg.mxu0
    %s2508 = scalar_lea.vmem [#allocation6], 28
    %2509 = vst.msk [vmem:[%s2508] sm:$0xf] %vm1927, %v2505
    %v2510 = vld [vmem:[%s5] sm:$0xf]
    %v2511 = vld [vmem:[%s55] sm:$0xff]
    %v2512 = vld [vmem:[%s55 + $0x8] sm:$0xff]
    %v2513 = vld [vmem:[%s55 + $0x10] sm:$0xff]
    %v2514 = vld [vmem:[%s55 + $0x18] sm:$0xff]
    %v2515 = vld [vmem:[%s55 + $0x20] sm:$0xff]
    %v2516 = vld [vmem:[%s55 + $0x28] sm:$0xff]
    %v2517 = vld [vmem:[%s55 + $0x30] sm:$0xff]
    %v2518 = vld [vmem:[%s55 + $0x38] sm:$0xff]
    %v2520 = vsel %vm1853, %v2510, 0
    %2522 = vmatprep.subr.mxu0 0.0
    %2523 = vmatpush1.msra.mxu0 0.0
    %2524 = vmatprep.subr.mxu0 0.0
    %2525 = vmatpush1.msra.mxu0 0.0
    %2526 = vmatprep.subr.mxu0 0.0
    %2527 = vmatpush1.msra.mxu0 0.0
    %2528 = vmatprep.subr.mxu0 0.0
    %2529 = vmatpush1.msra.mxu0 0.0
    %2530 = vmatprep.subr.mxu0 0.0
    %2531 = vmatpush1.msra.mxu0 0.0
    %2532 = vmatprep.subr.mxu0 0.0
    %2533 = vmatpush1.msra.mxu0 0.0
    %2534 = vmatprep.subr.mxu0 0.0
    %2535 = vmatpush1.msra.mxu0 0.0
    %2536 = vmatprep.subr.mxu0 0.0
    %2537 = vmatpush1.msra.mxu0 0.0
    %2538 = vmatprep.subr.mxu0 0.0
    %2539 = vmatpush1.msra.mxu0 %v2518
    %2540 = vmatprep.subr.mxu0 0.0
    %2541 = vmatpush1.msra.mxu0 %v2517
    %2542 = vmatprep.subr.mxu0 0.0
    %2543 = vmatpush1.msra.mxu0 %v2516
    %2544 = vmatprep.subr.mxu0 0.0
    %2545 = vmatpush1.msra.mxu0 %v2515
    %2546 = vmatprep.subr.mxu0 0.0
    %2547 = vmatpush1.msra.mxu0 %v2514
    %2548 = vmatprep.subr.mxu0 0.0
    %2549 = vmatpush1.msra.mxu0 %v2513
    %2550 = vmatprep.subr.mxu0 0.0
    %2551 = vmatpush1.msra.mxu0 %v2512
    %2552 = vmatprep.subr.mxu0 0.0
    %2553 = vmatpush1.msra.mxu0 %v2511
    %2554 = vmatprep.subr.mxu0 0.0
    %2555 = vmatpush2.msra.mxu0 0.0
    %2556 = vmatprep.subr.mxu0 0.0
    %2557 = vmatpush2.msra.mxu0 0.0
    %2558 = vmatprep.subr.mxu0 0.0
    %2559 = vmatpush2.msra.mxu0 0.0
    %2560 = vmatprep.subr.mxu0 0.0
    %2561 = vmatpush2.msra.mxu0 0.0
    %2562 = vmatprep.subr.mxu0 0.0
    %2563 = vmatpush2.msra.mxu0 0.0
    %2564 = vmatprep.subr.mxu0 0.0
    %2565 = vmatpush2.msra.mxu0 0.0
    %2566 = vmatprep.subr.mxu0 0.0
    %2567 = vmatpush2.msra.mxu0 0.0
    %2568 = vmatprep.subr.mxu0 0.0
    %2569 = vmatpush2.msra.mxu0 0.0
    %2570 = vmatprep.subr.mxu0 0.0
    %2571 = vmatpush2.msra.mxu0 0.0
    %2572 = vmatprep.subr.mxu0 0.0
    %2573 = vmatpush2.msra.mxu0 0.0
    %2574 = vmatprep.subr.mxu0 0.0
    %2575 = vmatpush2.msra.mxu0 0.0
    %2576 = vmatprep.subr.mxu0 0.0
    %2577 = vmatpush2.msra.mxu0 0.0
    %2578 = vmatprep.subr.mxu0 0.0
    %2579 = vmatpush2.msra.mxu0 0.0
    %2580 = vmatprep.subr.mxu0 0.0
    %2581 = vmatpush2.msra.mxu0 0.0
    %2582 = vmatprep.subr.mxu0 0.0
    %2583 = vmatpush2.msra.mxu0 0.0
    %2584 = vmatprep.subr.mxu0 0.0
    %2585 = vmatpush2.msra.mxu0 0.0
    %2586 = vmatprep.mubr.f32.mxu0 0.0
    %2587 = vmatmul.mubr.f32.gmra.mxu0 %v2520
    %v2588 = vpop.f32.mrf.mxu0
    %v2589 = vadd.f32 0.0, %v2588
    %v2590 = vpop.f32.mrf.mxu0
    %2591 = vdwg.mxu0
    %2592 = vst.msk [vmem:[#allocation7] sm:$0xf] %vm1927, %v2589
    %s2593 = scalar_lea.vmem %s5, 4
    %v2594 = vld [vmem:[%s2593] sm:$0xf]
    %v2595 = vld [vmem:[%s55] sm:$0xff]
    %v2596 = vld [vmem:[%s55 + $0x8] sm:$0xff]
    %v2597 = vld [vmem:[%s55 + $0x10] sm:$0xff]
    %v2598 = vld [vmem:[%s55 + $0x18] sm:$0xff]
    %v2599 = vld [vmem:[%s55 + $0x20] sm:$0xff]
    %v2600 = vld [vmem:[%s55 + $0x28] sm:$0xff]
    %v2601 = vld [vmem:[%s55 + $0x30] sm:$0xff]
    %v2602 = vld [vmem:[%s55 + $0x38] sm:$0xff]
    %v2604 = vsel %vm1853, %v2594, 0
    %2606 = vmatprep.subr.mxu0 0.0
    %2607 = vmatpush1.msra.mxu0 0.0
    %2608 = vmatprep.subr.mxu0 0.0
    %2609 = vmatpush1.msra.mxu0 0.0
    %2610 = vmatprep.subr.mxu0 0.0
    %2611 = vmatpush1.msra.mxu0 0.0
    %2612 = vmatprep.subr.mxu0 0.0
    %2613 = vmatpush1.msra.mxu0 0.0
    %2614 = vmatprep.subr.mxu0 0.0
    %2615 = vmatpush1.msra.mxu0 0.0
    %2616 = vmatprep.subr.mxu0 0.0
    %2617 = vmatpush1.msra.mxu0 0.0
    %2618 = vmatprep.subr.mxu0 0.0
    %2619 = vmatpush1.msra.mxu0 0.0
    %2620 = vmatprep.subr.mxu0 0.0
    %2621 = vmatpush1.msra.mxu0 0.0
    %2622 = vmatprep.subr.mxu0 0.0
    %2623 = vmatpush1.msra.mxu0 %v2602
    %2624 = vmatprep.subr.mxu0 0.0
    %2625 = vmatpush1.msra.mxu0 %v2601
    %2626 = vmatprep.subr.mxu0 0.0
    %2627 = vmatpush1.msra.mxu0 %v2600
    %2628 = vmatprep.subr.mxu0 0.0
    %2629 = vmatpush1.msra.mxu0 %v2599
    %2630 = vmatprep.subr.mxu0 0.0
    %2631 = vmatpush1.msra.mxu0 %v2598
    %2632 = vmatprep.subr.mxu0 0.0
    %2633 = vmatpush1.msra.mxu0 %v2597
    %2634 = vmatprep.subr.mxu0 0.0
    %2635 = vmatpush1.msra.mxu0 %v2596
    %2636 = vmatprep.subr.mxu0 0.0
    %2637 = vmatpush1.msra.mxu0 %v2595
    %2638 = vmatprep.subr.mxu0 0.0
    %2639 = vmatpush2.msra.mxu0 0.0
    %2640 = vmatprep.subr.mxu0 0.0
    %2641 = vmatpush2.msra.mxu0 0.0
    %2642 = vmatprep.subr.mxu0 0.0
    %2643 = vmatpush2.msra.mxu0 0.0
    %2644 = vmatprep.subr.mxu0 0.0
    %2645 = vmatpush2.msra.mxu0 0.0
    %2646 = vmatprep.subr.mxu0 0.0
    %2647 = vmatpush2.msra.mxu0 0.0
    %2648 = vmatprep.subr.mxu0 0.0
    %2649 = vmatpush2.msra.mxu0 0.0
    %2650 = vmatprep.subr.mxu0 0.0
    %2651 = vmatpush2.msra.mxu0 0.0
    %2652 = vmatprep.subr.mxu0 0.0
    %2653 = vmatpush2.msra.mxu0 0.0
    %2654 = vmatprep.subr.mxu0 0.0
    %2655 = vmatpush2.msra.mxu0 0.0
    %2656 = vmatprep.subr.mxu0 0.0
    %2657 = vmatpush2.msra.mxu0 0.0
    %2658 = vmatprep.subr.mxu0 0.0
    %2659 = vmatpush2.msra.mxu0 0.0
    %2660 = vmatprep.subr.mxu0 0.0
    %2661 = vmatpush2.msra.mxu0 0.0
    %2662 = vmatprep.subr.mxu0 0.0
    %2663 = vmatpush2.msra.mxu0 0.0
    %2664 = vmatprep.subr.mxu0 0.0
    %2665 = vmatpush2.msra.mxu0 0.0
    %2666 = vmatprep.subr.mxu0 0.0
    %2667 = vmatpush2.msra.mxu0 0.0
    %2668 = vmatprep.subr.mxu0 0.0
    %2669 = vmatpush2.msra.mxu0 0.0
    %2670 = vmatprep.mubr.f32.mxu0 0.0
    %2671 = vmatmul.mubr.f32.gmra.mxu0 %v2604
    %v2672 = vpop.f32.mrf.mxu0
    %v2673 = vadd.f32 0.0, %v2672
    %v2674 = vpop.f32.mrf.mxu0
    %2675 = vdwg.mxu0
    %s2676 = scalar_lea.vmem [#allocation7], 4
    %2677 = vst.msk [vmem:[%s2676] sm:$0xf] %vm1927, %v2673
    %s2678 = scalar_lea.vmem %s5, 8
    %v2679 = vld [vmem:[%s2678] sm:$0xf]
    %v2680 = vld [vmem:[%s55] sm:$0xff]
    %v2681 = vld [vmem:[%s55 + $0x8] sm:$0xff]
    %v2682 = vld [vmem:[%s55 + $0x10] sm:$0xff]
    %v2683 = vld [vmem:[%s55 + $0x18] sm:$0xff]
    %v2684 = vld [vmem:[%s55 + $0x20] sm:$0xff]
    %v2685 = vld [vmem:[%s55 + $0x28] sm:$0xff]
    %v2686 = vld [vmem:[%s55 + $0x30] sm:$0xff]
    %v2687 = vld [vmem:[%s55 + $0x38] sm:$0xff]
    %v2689 = vsel %vm1853, %v2679, 0
    %2691 = vmatprep.subr.mxu0 0.0
    %2692 = vmatpush1.msra.mxu0 0.0
    %2693 = vmatprep.subr.mxu0 0.0
    %2694 = vmatpush1.msra.mxu0 0.0
    %2695 = vmatprep.subr.mxu0 0.0
    %2696 = vmatpush1.msra.mxu0 0.0
    %2697 = vmatprep.subr.mxu0 0.0
    %2698 = vmatpush1.msra.mxu0 0.0
    %2699 = vmatprep.subr.mxu0 0.0
    %2700 = vmatpush1.msra.mxu0 0.0
    %2701 = vmatprep.subr.mxu0 0.0
    %2702 = vmatpush1.msra.mxu0 0.0
    %2703 = vmatprep.subr.mxu0 0.0
    %2704 = vmatpush1.msra.mxu0 0.0
    %2705 = vmatprep.subr.mxu0 0.0
    %2706 = vmatpush1.msra.mxu0 0.0
    %2707 = vmatprep.subr.mxu0 0.0
    %2708 = vmatpush1.msra.mxu0 %v2687
    %2709 = vmatprep.subr.mxu0 0.0
    %2710 = vmatpush1.msra.mxu0 %v2686
    %2711 = vmatprep.subr.mxu0 0.0
    %2712 = vmatpush1.msra.mxu0 %v2685
    %2713 = vmatprep.subr.mxu0 0.0
    %2714 = vmatpush1.msra.mxu0 %v2684
    %2715 = vmatprep.subr.mxu0 0.0
    %2716 = vmatpush1.msra.mxu0 %v2683
    %2717 = vmatprep.subr.mxu0 0.0
    %2718 = vmatpush1.msra.mxu0 %v2682
    %2719 = vmatprep.subr.mxu0 0.0
    %2720 = vmatpush1.msra.mxu0 %v2681
    %2721 = vmatprep.subr.mxu0 0.0
    %2722 = vmatpush1.msra.mxu0 %v2680
    %2723 = vmatprep.subr.mxu0 0.0
    %2724 = vmatpush2.msra.mxu0 0.0
    %2725 = vmatprep.subr.mxu0 0.0
    %2726 = vmatpush2.msra.mxu0 0.0
    %2727 = vmatprep.subr.mxu0 0.0
    %2728 = vmatpush2.msra.mxu0 0.0
    %2729 = vmatprep.subr.mxu0 0.0
    %2730 = vmatpush2.msra.mxu0 0.0
    %2731 = vmatprep.subr.mxu0 0.0
    %2732 = vmatpush2.msra.mxu0 0.0
    %2733 = vmatprep.subr.mxu0 0.0
    %2734 = vmatpush2.msra.mxu0 0.0
    %2735 = vmatprep.subr.mxu0 0.0
    %2736 = vmatpush2.msra.mxu0 0.0
    %2737 = vmatprep.subr.mxu0 0.0
    %2738 = vmatpush2.msra.mxu0 0.0
    %2739 = vmatprep.subr.mxu0 0.0
    %2740 = vmatpush2.msra.mxu0 0.0
    %2741 = vmatprep.subr.mxu0 0.0
    %2742 = vmatpush2.msra.mxu0 0.0
    %2743 = vmatprep.subr.mxu0 0.0
    %2744 = vmatpush2.msra.mxu0 0.0
    %2745 = vmatprep.subr.mxu0 0.0
    %2746 = vmatpush2.msra.mxu0 0.0
    %2747 = vmatprep.subr.mxu0 0.0
    %2748 = vmatpush2.msra.mxu0 0.0
    %2749 = vmatprep.subr.mxu0 0.0
    %2750 = vmatpush2.msra.mxu0 0.0
    %2751 = vmatprep.subr.mxu0 0.0
    %2752 = vmatpush2.msra.mxu0 0.0
    %2753 = vmatprep.subr.mxu0 0.0
    %2754 = vmatpush2.msra.mxu0 0.0
    %2755 = vmatprep.mubr.f32.mxu0 0.0
    %2756 = vmatmul.mubr.f32.gmra.mxu0 %v2689
    %v2757 = vpop.f32.mrf.mxu0
    %v2758 = vadd.f32 0.0, %v2757
    %v2759 = vpop.f32.mrf.mxu0
    %2760 = vdwg.mxu0
    %s2761 = scalar_lea.vmem [#allocation7], 8
    %2762 = vst.msk [vmem:[%s2761] sm:$0xf] %vm1927, %v2758
    %s2763 = scalar_lea.vmem %s5, 12
    %v2764 = vld [vmem:[%s2763] sm:$0xf]
    %v2765 = vld [vmem:[%s55] sm:$0xff]
    %v2766 = vld [vmem:[%s55 + $0x8] sm:$0xff]
    %v2767 = vld [vmem:[%s55 + $0x10] sm:$0xff]
    %v2768 = vld [vmem:[%s55 + $0x18] sm:$0xff]
    %v2769 = vld [vmem:[%s55 + $0x20] sm:$0xff]
    %v2770 = vld [vmem:[%s55 + $0x28] sm:$0xff]
    %v2771 = vld [vmem:[%s55 + $0x30] sm:$0xff]
    %v2772 = vld [vmem:[%s55 + $0x38] sm:$0xff]
    %v2774 = vsel %vm1853, %v2764, 0
    %2776 = vmatprep.subr.mxu0 0.0
    %2777 = vmatpush1.msra.mxu0 0.0
    %2778 = vmatprep.subr.mxu0 0.0
    %2779 = vmatpush1.msra.mxu0 0.0
    %2780 = vmatprep.subr.mxu0 0.0
    %2781 = vmatpush1.msra.mxu0 0.0
    %2782 = vmatprep.subr.mxu0 0.0
    %2783 = vmatpush1.msra.mxu0 0.0
    %2784 = vmatprep.subr.mxu0 0.0
    %2785 = vmatpush1.msra.mxu0 0.0
    %2786 = vmatprep.subr.mxu0 0.0
    %2787 = vmatpush1.msra.mxu0 0.0
    %2788 = vmatprep.subr.mxu0 0.0
    %2789 = vmatpush1.msra.mxu0 0.0
    %2790 = vmatprep.subr.mxu0 0.0
    %2791 = vmatpush1.msra.mxu0 0.0
    %2792 = vmatprep.subr.mxu0 0.0
    %2793 = vmatpush1.msra.mxu0 %v2772
    %2794 = vmatprep.subr.mxu0 0.0
    %2795 = vmatpush1.msra.mxu0 %v2771
    %2796 = vmatprep.subr.mxu0 0.0
    %2797 = vmatpush1.msra.mxu0 %v2770
    %2798 = vmatprep.subr.mxu0 0.0
    %2799 = vmatpush1.msra.mxu0 %v2769
    %2800 = vmatprep.subr.mxu0 0.0
    %2801 = vmatpush1.msra.mxu0 %v2768
    %2802 = vmatprep.subr.mxu0 0.0
    %2803 = vmatpush1.msra.mxu0 %v2767
    %2804 = vmatprep.subr.mxu0 0.0
    %2805 = vmatpush1.msra.mxu0 %v2766
    %2806 = vmatprep.subr.mxu0 0.0
    %2807 = vmatpush1.msra.mxu0 %v2765
    %2808 = vmatprep.subr.mxu0 0.0
    %2809 = vmatpush2.msra.mxu0 0.0
    %2810 = vmatprep.subr.mxu0 0.0
    %2811 = vmatpush2.msra.mxu0 0.0
    %2812 = vmatprep.subr.mxu0 0.0
    %2813 = vmatpush2.msra.mxu0 0.0
    %2814 = vmatprep.subr.mxu0 0.0
    %2815 = vmatpush2.msra.mxu0 0.0
    %2816 = vmatprep.subr.mxu0 0.0
    %2817 = vmatpush2.msra.mxu0 0.0
    %2818 = vmatprep.subr.mxu0 0.0
    %2819 = vmatpush2.msra.mxu0 0.0
    %2820 = vmatprep.subr.mxu0 0.0
    %2821 = vmatpush2.msra.mxu0 0.0
    %2822 = vmatprep.subr.mxu0 0.0
    %2823 = vmatpush2.msra.mxu0 0.0
    %2824 = vmatprep.subr.mxu0 0.0
    %2825 = vmatpush2.msra.mxu0 0.0
    %2826 = vmatprep.subr.mxu0 0.0
    %2827 = vmatpush2.msra.mxu0 0.0
    %2828 = vmatprep.subr.mxu0 0.0
    %2829 = vmatpush2.msra.mxu0 0.0
    %2830 = vmatprep.subr.mxu0 0.0
    %2831 = vmatpush2.msra.mxu0 0.0
    %2832 = vmatprep.subr.mxu0 0.0
    %2833 = vmatpush2.msra.mxu0 0.0
    %2834 = vmatprep.subr.mxu0 0.0
    %2835 = vmatpush2.msra.mxu0 0.0
    %2836 = vmatprep.subr.mxu0 0.0
    %2837 = vmatpush2.msra.mxu0 0.0
    %2838 = vmatprep.subr.mxu0 0.0
    %2839 = vmatpush2.msra.mxu0 0.0
    %2840 = vmatprep.mubr.f32.mxu0 0.0
    %2841 = vmatmul.mubr.f32.gmra.mxu0 %v2774
    %v2842 = vpop.f32.mrf.mxu0
    %v2843 = vadd.f32 0.0, %v2842
    %v2844 = vpop.f32.mrf.mxu0
    %2845 = vdwg.mxu0
    %s2846 = scalar_lea.vmem [#allocation7], 12
    %2847 = vst.msk [vmem:[%s2846] sm:$0xf] %vm1927, %v2843
    %s2848 = scalar_lea.vmem %s5, 16
    %v2849 = vld [vmem:[%s2848] sm:$0xf]
    %v2850 = vld [vmem:[%s55] sm:$0xff]
    %v2851 = vld [vmem:[%s55 + $0x8] sm:$0xff]
    %v2852 = vld [vmem:[%s55 + $0x10] sm:$0xff]
    %v2853 = vld [vmem:[%s55 + $0x18] sm:$0xff]
    %v2854 = vld [vmem:[%s55 + $0x20] sm:$0xff]
    %v2855 = vld [vmem:[%s55 + $0x28] sm:$0xff]
    %v2856 = vld [vmem:[%s55 + $0x30] sm:$0xff]
    %v2857 = vld [vmem:[%s55 + $0x38] sm:$0xff]
    %v2859 = vsel %vm1853, %v2849, 0
    %2861 = vmatprep.subr.mxu0 0.0
    %2862 = vmatpush1.msra.mxu0 0.0
    %2863 = vmatprep.subr.mxu0 0.0
    %2864 = vmatpush1.msra.mxu0 0.0
    %2865 = vmatprep.subr.mxu0 0.0
    %2866 = vmatpush1.msra.mxu0 0.0
    %2867 = vmatprep.subr.mxu0 0.0
    %2868 = vmatpush1.msra.mxu0 0.0
    %2869 = vmatprep.subr.mxu0 0.0
    %2870 = vmatpush1.msra.mxu0 0.0
    %2871 = vmatprep.subr.mxu0 0.0
    %2872 = vmatpush1.msra.mxu0 0.0
    %2873 = vmatprep.subr.mxu0 0.0
    %2874 = vmatpush1.msra.mxu0 0.0
    %2875 = vmatprep.subr.mxu0 0.0
    %2876 = vmatpush1.msra.mxu0 0.0
    %2877 = vmatprep.subr.mxu0 0.0
    %2878 = vmatpush1.msra.mxu0 %v2857
    %2879 = vmatprep.subr.mxu0 0.0
    %2880 = vmatpush1.msra.mxu0 %v2856
    %2881 = vmatprep.subr.mxu0 0.0
    %2882 = vmatpush1.msra.mxu0 %v2855
    %2883 = vmatprep.subr.mxu0 0.0
    %2884 = vmatpush1.msra.mxu0 %v2854
    %2885 = vmatprep.subr.mxu0 0.0
    %2886 = vmatpush1.msra.mxu0 %v2853
    %2887 = vmatprep.subr.mxu0 0.0
    %2888 = vmatpush1.msra.mxu0 %v2852
    %2889 = vmatprep.subr.mxu0 0.0
    %2890 = vmatpush1.msra.mxu0 %v2851
    %2891 = vmatprep.subr.mxu0 0.0
    %2892 = vmatpush1.msra.mxu0 %v2850
    %2893 = vmatprep.subr.mxu0 0.0
    %2894 = vmatpush2.msra.mxu0 0.0
    %2895 = vmatprep.subr.mxu0 0.0
    %2896 = vmatpush2.msra.mxu0 0.0
    %2897 = vmatprep.subr.mxu0 0.0
    %2898 = vmatpush2.msra.mxu0 0.0
    %2899 = vmatprep.subr.mxu0 0.0
    %2900 = vmatpush2.msra.mxu0 0.0
    %2901 = vmatprep.subr.mxu0 0.0
    %2902 = vmatpush2.msra.mxu0 0.0
    %2903 = vmatprep.subr.mxu0 0.0
    %2904 = vmatpush2.msra.mxu0 0.0
    %2905 = vmatprep.subr.mxu0 0.0
    %2906 = vmatpush2.msra.mxu0 0.0
    %2907 = vmatprep.subr.mxu0 0.0
    %2908 = vmatpush2.msra.mxu0 0.0
    %2909 = vmatprep.subr.mxu0 0.0
    %2910 = vmatpush2.msra.mxu0 0.0
    %2911 = vmatprep.subr.mxu0 0.0
    %2912 = vmatpush2.msra.mxu0 0.0
    %2913 = vmatprep.subr.mxu0 0.0
    %2914 = vmatpush2.msra.mxu0 0.0
    %2915 = vmatprep.subr.mxu0 0.0
    %2916 = vmatpush2.msra.mxu0 0.0
    %2917 = vmatprep.subr.mxu0 0.0
    %2918 = vmatpush2.msra.mxu0 0.0
    %2919 = vmatprep.subr.mxu0 0.0
    %2920 = vmatpush2.msra.mxu0 0.0
    %2921 = vmatprep.subr.mxu0 0.0
    %2922 = vmatpush2.msra.mxu0 0.0
    %2923 = vmatprep.subr.mxu0 0.0
    %2924 = vmatpush2.msra.mxu0 0.0
    %2925 = vmatprep.mubr.f32.mxu0 0.0
    %2926 = vmatmul.mubr.f32.gmra.mxu0 %v2859
    %v2927 = vpop.f32.mrf.mxu0
    %v2928 = vadd.f32 0.0, %v2927
    %v2929 = vpop.f32.mrf.mxu0
    %2930 = vdwg.mxu0
    %s2931 = scalar_lea.vmem [#allocation7], 16
    %2932 = vst.msk [vmem:[%s2931] sm:$0xf] %vm1927, %v2928
    %s2933 = scalar_lea.vmem %s5, 20
    %v2934 = vld [vmem:[%s2933] sm:$0xf]
    %v2935 = vld [vmem:[%s55] sm:$0xff]
    %v2936 = vld [vmem:[%s55 + $0x8] sm:$0xff]
    %v2937 = vld [vmem:[%s55 + $0x10] sm:$0xff]
    %v2938 = vld [vmem:[%s55 + $0x18] sm:$0xff]
    %v2939 = vld [vmem:[%s55 + $0x20] sm:$0xff]
    %v2940 = vld [vmem:[%s55 + $0x28] sm:$0xff]
    %v2941 = vld [vmem:[%s55 + $0x30] sm:$0xff]
    %v2942 = vld [vmem:[%s55 + $0x38] sm:$0xff]
    %v2944 = vsel %vm1853, %v2934, 0
    %2946 = vmatprep.subr.mxu0 0.0
    %2947 = vmatpush1.msra.mxu0 0.0
    %2948 = vmatprep.subr.mxu0 0.0
    %2949 = vmatpush1.msra.mxu0 0.0
    %2950 = vmatprep.subr.mxu0 0.0
    %2951 = vmatpush1.msra.mxu0 0.0
    %2952 = vmatprep.subr.mxu0 0.0
    %2953 = vmatpush1.msra.mxu0 0.0
    %2954 = vmatprep.subr.mxu0 0.0
    %2955 = vmatpush1.msra.mxu0 0.0
    %2956 = vmatprep.subr.mxu0 0.0
    %2957 = vmatpush1.msra.mxu0 0.0
    %2958 = vmatprep.subr.mxu0 0.0
    %2959 = vmatpush1.msra.mxu0 0.0
    %2960 = vmatprep.subr.mxu0 0.0
    %2961 = vmatpush1.msra.mxu0 0.0
    %2962 = vmatprep.subr.mxu0 0.0
    %2963 = vmatpush1.msra.mxu0 %v2942
    %2964 = vmatprep.subr.mxu0 0.0
    %2965 = vmatpush1.msra.mxu0 %v2941
    %2966 = vmatprep.subr.mxu0 0.0
    %2967 = vmatpush1.msra.mxu0 %v2940
    %2968 = vmatprep.subr.mxu0 0.0
    %2969 = vmatpush1.msra.mxu0 %v2939
    %2970 = vmatprep.subr.mxu0 0.0
    %2971 = vmatpush1.msra.mxu0 %v2938
    %2972 = vmatprep.subr.mxu0 0.0
    %2973 = vmatpush1.msra.mxu0 %v2937
    %2974 = vmatprep.subr.mxu0 0.0
    %2975 = vmatpush1.msra.mxu0 %v2936
    %2976 = vmatprep.subr.mxu0 0.0
    %2977 = vmatpush1.msra.mxu0 %v2935
    %2978 = vmatprep.subr.mxu0 0.0
    %2979 = vmatpush2.msra.mxu0 0.0
    %2980 = vmatprep.subr.mxu0 0.0
    %2981 = vmatpush2.msra.mxu0 0.0
    %2982 = vmatprep.subr.mxu0 0.0
    %2983 = vmatpush2.msra.mxu0 0.0
    %2984 = vmatprep.subr.mxu0 0.0
    %2985 = vmatpush2.msra.mxu0 0.0
    %2986 = vmatprep.subr.mxu0 0.0
    %2987 = vmatpush2.msra.mxu0 0.0
    %2988 = vmatprep.subr.mxu0 0.0
    %2989 = vmatpush2.msra.mxu0 0.0
    %2990 = vmatprep.subr.mxu0 0.0
    %2991 = vmatpush2.msra.mxu0 0.0
    %2992 = vmatprep.subr.mxu0 0.0
    %2993 = vmatpush2.msra.mxu0 0.0
    %2994 = vmatprep.subr.mxu0 0.0
    %2995 = vmatpush2.msra.mxu0 0.0
    %2996 = vmatprep.subr.mxu0 0.0
    %2997 = vmatpush2.msra.mxu0 0.0
    %2998 = vmatprep.subr.mxu0 0.0
    %2999 = vmatpush2.msra.mxu0 0.0
    %3000 = vmatprep.subr.mxu0 0.0
    %3001 = vmatpush2.msra.mxu0 0.0
    %3002 = vmatprep.subr.mxu0 0.0
    %3003 = vmatpush2.msra.mxu0 0.0
    %3004 = vmatprep.subr.mxu0 0.0
    %3005 = vmatpush2.msra.mxu0 0.0
    %3006 = vmatprep.subr.mxu0 0.0
    %3007 = vmatpush2.msra.mxu0 0.0
    %3008 = vmatprep.subr.mxu0 0.0
    %3009 = vmatpush2.msra.mxu0 0.0
    %3010 = vmatprep.mubr.f32.mxu0 0.0
    %3011 = vmatmul.mubr.f32.gmra.mxu0 %v2944
    %v3012 = vpop.f32.mrf.mxu0
    %v3013 = vadd.f32 0.0, %v3012
    %v3014 = vpop.f32.mrf.mxu0
    %3015 = vdwg.mxu0
    %s3016 = scalar_lea.vmem [#allocation7], 20
    %3017 = vst.msk [vmem:[%s3016] sm:$0xf] %vm1927, %v3013
    %s3018 = scalar_lea.vmem %s5, 24
    %v3019 = vld [vmem:[%s3018] sm:$0xf]
    %v3020 = vld [vmem:[%s55] sm:$0xff]
    %v3021 = vld [vmem:[%s55 + $0x8] sm:$0xff]
    %v3022 = vld [vmem:[%s55 + $0x10] sm:$0xff]
    %v3023 = vld [vmem:[%s55 + $0x18] sm:$0xff]
    %v3024 = vld [vmem:[%s55 + $0x20] sm:$0xff]
    %v3025 = vld [vmem:[%s55 + $0x28] sm:$0xff]
    %v3026 = vld [vmem:[%s55 + $0x30] sm:$0xff]
    %v3027 = vld [vmem:[%s55 + $0x38] sm:$0xff]
    %v3029 = vsel %vm1853, %v3019, 0
    %3031 = vmatprep.subr.mxu0 0.0
    %3032 = vmatpush1.msra.mxu0 0.0
    %3033 = vmatprep.subr.mxu0 0.0
    %3034 = vmatpush1.msra.mxu0 0.0
    %3035 = vmatprep.subr.mxu0 0.0
    %3036 = vmatpush1.msra.mxu0 0.0
    %3037 = vmatprep.subr.mxu0 0.0
    %3038 = vmatpush1.msra.mxu0 0.0
    %3039 = vmatprep.subr.mxu0 0.0
    %3040 = vmatpush1.msra.mxu0 0.0
    %3041 = vmatprep.subr.mxu0 0.0
    %3042 = vmatpush1.msra.mxu0 0.0
    %3043 = vmatprep.subr.mxu0 0.0
    %3044 = vmatpush1.msra.mxu0 0.0
    %3045 = vmatprep.subr.mxu0 0.0
    %3046 = vmatpush1.msra.mxu0 0.0
    %3047 = vmatprep.subr.mxu0 0.0
    %3048 = vmatpush1.msra.mxu0 %v3027
    %3049 = vmatprep.subr.mxu0 0.0
    %3050 = vmatpush1.msra.mxu0 %v3026
    %3051 = vmatprep.subr.mxu0 0.0
    %3052 = vmatpush1.msra.mxu0 %v3025
    %3053 = vmatprep.subr.mxu0 0.0
    %3054 = vmatpush1.msra.mxu0 %v3024
    %3055 = vmatprep.subr.mxu0 0.0
    %3056 = vmatpush1.msra.mxu0 %v3023
    %3057 = vmatprep.subr.mxu0 0.0
    %3058 = vmatpush1.msra.mxu0 %v3022
    %3059 = vmatprep.subr.mxu0 0.0
    %3060 = vmatpush1.msra.mxu0 %v3021
    %3061 = vmatprep.subr.mxu0 0.0
    %3062 = vmatpush1.msra.mxu0 %v3020
    %3063 = vmatprep.subr.mxu0 0.0
    %3064 = vmatpush2.msra.mxu0 0.0
    %3065 = vmatprep.subr.mxu0 0.0
    %3066 = vmatpush2.msra.mxu0 0.0
    %3067 = vmatprep.subr.mxu0 0.0
    %3068 = vmatpush2.msra.mxu0 0.0
    %3069 = vmatprep.subr.mxu0 0.0
    %3070 = vmatpush2.msra.mxu0 0.0
    %3071 = vmatprep.subr.mxu0 0.0
    %3072 = vmatpush2.msra.mxu0 0.0
    %3073 = vmatprep.subr.mxu0 0.0
    %3074 = vmatpush2.msra.mxu0 0.0
    %3075 = vmatprep.subr.mxu0 0.0
    %3076 = vmatpush2.msra.mxu0 0.0
    %3077 = vmatprep.subr.mxu0 0.0
    %3078 = vmatpush2.msra.mxu0 0.0
    %3079 = vmatprep.subr.mxu0 0.0
    %3080 = vmatpush2.msra.mxu0 0.0
    %3081 = vmatprep.subr.mxu0 0.0
    %3082 = vmatpush2.msra.mxu0 0.0
    %3083 = vmatprep.subr.mxu0 0.0
    %3084 = vmatpush2.msra.mxu0 0.0
    %3085 = vmatprep.subr.mxu0 0.0
    %3086 = vmatpush2.msra.mxu0 0.0
    %3087 = vmatprep.subr.mxu0 0.0
    %3088 = vmatpush2.msra.mxu0 0.0
    %3089 = vmatprep.subr.mxu0 0.0
    %3090 = vmatpush2.msra.mxu0 0.0
    %3091 = vmatprep.subr.mxu0 0.0
    %3092 = vmatpush2.msra.mxu0 0.0
    %3093 = vmatprep.subr.mxu0 0.0
    %3094 = vmatpush2.msra.mxu0 0.0
    %3095 = vmatprep.mubr.f32.mxu0 0.0
    %3096 = vmatmul.mubr.f32.gmra.mxu0 %v3029
    %v3097 = vpop.f32.mrf.mxu0
    %v3098 = vadd.f32 0.0, %v3097
    %v3099 = vpop.f32.mrf.mxu0
    %3100 = vdwg.mxu0
    %s3101 = scalar_lea.vmem [#allocation7], 24
    %3102 = vst.msk [vmem:[%s3101] sm:$0xf] %vm1927, %v3098
    %s3103 = scalar_lea.vmem %s5, 28
    %v3104 = vld [vmem:[%s3103] sm:$0xf]
    %v3105 = vld [vmem:[%s55] sm:$0xff]
    %v3106 = vld [vmem:[%s55 + $0x8] sm:$0xff]
    %v3107 = vld [vmem:[%s55 + $0x10] sm:$0xff]
    %v3108 = vld [vmem:[%s55 + $0x18] sm:$0xff]
    %v3109 = vld [vmem:[%s55 + $0x20] sm:$0xff]
    %v3110 = vld [vmem:[%s55 + $0x28] sm:$0xff]
    %v3111 = vld [vmem:[%s55 + $0x30] sm:$0xff]
    %v3112 = vld [vmem:[%s55 + $0x38] sm:$0xff]
    %v3114 = vsel %vm1853, %v3104, 0
    %3116 = vmatprep.subr.mxu0 0.0
    %3117 = vmatpush1.msra.mxu0 0.0
    %3118 = vmatprep.subr.mxu0 0.0
    %3119 = vmatpush1.msra.mxu0 0.0
    %3120 = vmatprep.subr.mxu0 0.0
    %3121 = vmatpush1.msra.mxu0 0.0
    %3122 = vmatprep.subr.mxu0 0.0
    %3123 = vmatpush1.msra.mxu0 0.0
    %3124 = vmatprep.subr.mxu0 0.0
    %3125 = vmatpush1.msra.mxu0 0.0
    %3126 = vmatprep.subr.mxu0 0.0
    %3127 = vmatpush1.msra.mxu0 0.0
    %3128 = vmatprep.subr.mxu0 0.0
    %3129 = vmatpush1.msra.mxu0 0.0
    %3130 = vmatprep.subr.mxu0 0.0
    %3131 = vmatpush1.msra.mxu0 0.0
    %3132 = vmatprep.subr.mxu0 0.0
    %3133 = vmatpush1.msra.mxu0 %v3112
    %3134 = vmatprep.subr.mxu0 0.0
    %3135 = vmatpush1.msra.mxu0 %v3111
    %3136 = vmatprep.subr.mxu0 0.0
    %3137 = vmatpush1.msra.mxu0 %v3110
    %3138 = vmatprep.subr.mxu0 0.0
    %3139 = vmatpush1.msra.mxu0 %v3109
    %3140 = vmatprep.subr.mxu0 0.0
    %3141 = vmatpush1.msra.mxu0 %v3108
    %3142 = vmatprep.subr.mxu0 0.0
    %3143 = vmatpush1.msra.mxu0 %v3107
    %3144 = vmatprep.subr.mxu0 0.0
    %3145 = vmatpush1.msra.mxu0 %v3106
    %3146 = vmatprep.subr.mxu0 0.0
    %3147 = vmatpush1.msra.mxu0 %v3105
    %3148 = vmatprep.subr.mxu0 0.0
    %3149 = vmatpush2.msra.mxu0 0.0
    %3150 = vmatprep.subr.mxu0 0.0
    %3151 = vmatpush2.msra.mxu0 0.0
    %3152 = vmatprep.subr.mxu0 0.0
    %3153 = vmatpush2.msra.mxu0 0.0
    %3154 = vmatprep.subr.mxu0 0.0
    %3155 = vmatpush2.msra.mxu0 0.0
    %3156 = vmatprep.subr.mxu0 0.0
    %3157 = vmatpush2.msra.mxu0 0.0
    %3158 = vmatprep.subr.mxu0 0.0
    %3159 = vmatpush2.msra.mxu0 0.0
    %3160 = vmatprep.subr.mxu0 0.0
    %3161 = vmatpush2.msra.mxu0 0.0
    %3162 = vmatprep.subr.mxu0 0.0
    %3163 = vmatpush2.msra.mxu0 0.0
    %3164 = vmatprep.subr.mxu0 0.0
    %3165 = vmatpush2.msra.mxu0 0.0
    %3166 = vmatprep.subr.mxu0 0.0
    %3167 = vmatpush2.msra.mxu0 0.0
    %3168 = vmatprep.subr.mxu0 0.0
    %3169 = vmatpush2.msra.mxu0 0.0
    %3170 = vmatprep.subr.mxu0 0.0
    %3171 = vmatpush2.msra.mxu0 0.0
    %3172 = vmatprep.subr.mxu0 0.0
    %3173 = vmatpush2.msra.mxu0 0.0
    %3174 = vmatprep.subr.mxu0 0.0
    %3175 = vmatpush2.msra.mxu0 0.0
    %3176 = vmatprep.subr.mxu0 0.0
    %3177 = vmatpush2.msra.mxu0 0.0
    %3178 = vmatprep.subr.mxu0 0.0
    %3179 = vmatpush2.msra.mxu0 0.0
    %3180 = vmatprep.mubr.f32.mxu0 0.0
    %3181 = vmatmul.mubr.f32.gmra.mxu0 %v3114
    %v3182 = vpop.f32.mrf.mxu0
    %v3183 = vadd.f32 0.0, %v3182
    %v3184 = vpop.f32.mrf.mxu0
    %3185 = vdwg.mxu0
    %s3186 = scalar_lea.vmem [#allocation7], 28
    %3187 = vst.msk [vmem:[%s3186] sm:$0xf] %vm1927, %v3183
    %v3188 = vld [vmem:[%s7] sm:$0xf]
    %v3189 = vld [vmem:[%s31] sm:$0xff]
    %v3190 = vld [vmem:[%s31 + $0x8] sm:$0xff]
    %v3191 = vld [vmem:[%s31 + $0x10] sm:$0xff]
    %v3192 = vld [vmem:[%s31 + $0x18] sm:$0xff]
    %v3193 = vld [vmem:[%s31 + $0x20] sm:$0xff]
    %v3194 = vld [vmem:[%s31 + $0x28] sm:$0xff]
    %v3195 = vld [vmem:[%s31 + $0x30] sm:$0xff]
    %v3196 = vld [vmem:[%s31 + $0x38] sm:$0xff]
    %v3197 = vld [vmem:[%s35] sm:$0x3]
    %v3199 = vlaneseq
    %v3200 = vshrl.u32 %v3199, 7
    %v3201 = vsub.s32 0, %v3200
    %v3202 = vrot.slane %v3197, %v3201
    %v3203 = vlaneseq
    %v3204 = vshrl.u32 %v3203, 7
    %v3205 = vsub.s32 1, %v3204
    %v3206 = vrot.slane %v3197, %v3205
    %v3210 = vsel %vm159, %v3188, 0
    %3212 = vmatprep.subr.mxu0 0.0
    %3213 = vmatpush1.msra.mxu0 0.0
    %3214 = vmatprep.subr.mxu0 0.0
    %3215 = vmatpush1.msra.mxu0 0.0
    %3216 = vmatprep.subr.mxu0 0.0
    %3217 = vmatpush1.msra.mxu0 0.0
    %3218 = vmatprep.subr.mxu0 0.0
    %3219 = vmatpush1.msra.mxu0 0.0
    %3220 = vmatprep.subr.mxu0 0.0
    %3221 = vmatpush1.msra.mxu0 0.0
    %3222 = vmatprep.subr.mxu0 0.0
    %3223 = vmatpush1.msra.mxu0 0.0
    %3224 = vmatprep.subr.mxu0 0.0
    %3225 = vmatpush1.msra.mxu0 0.0
    %3226 = vmatprep.subr.mxu0 0.0
    %3227 = vmatpush1.msra.mxu0 0.0
    %3228 = vmatprep.subr.mxu0 0.0
    %3229 = vmatpush1.msra.mxu0 0.0
    %3230 = vmatprep.subr.mxu0 0.0
    %3231 = vmatpush1.msra.mxu0 0.0
    %3232 = vmatprep.subr.mxu0 0.0
    %3233 = vmatpush1.msra.mxu0 0.0
    %3234 = vmatprep.subr.mxu0 0.0
    %3235 = vmatpush1.msra.mxu0 0.0
    %3236 = vmatprep.subr.mxu0 %v3196
    %3237 = vmatpush1.msra.mxu0 %v3195
    %3238 = vmatprep.subr.mxu0 %v3194
    %3239 = vmatpush1.msra.mxu0 %v3193
    %3240 = vmatprep.subr.mxu0 %v3192
    %3241 = vmatpush1.msra.mxu0 %v3191
    %3242 = vmatprep.subr.mxu0 %v3190
    %3243 = vmatpush1.msra.mxu0 %v3189
    %3244 = vmatprep.subr.mxu0 0.0
    %3245 = vmatpush2.msra.mxu0 0.0
    %3246 = vmatprep.subr.mxu0 0.0
    %3247 = vmatpush2.msra.mxu0 0.0
    %3248 = vmatprep.subr.mxu0 0.0
    %3249 = vmatpush2.msra.mxu0 0.0
    %3250 = vmatprep.subr.mxu0 0.0
    %3251 = vmatpush2.msra.mxu0 0.0
    %3252 = vmatprep.subr.mxu0 0.0
    %3253 = vmatpush2.msra.mxu0 0.0
    %3254 = vmatprep.subr.mxu0 0.0
    %3255 = vmatpush2.msra.mxu0 0.0
    %3256 = vmatprep.subr.mxu0 0.0
    %3257 = vmatpush2.msra.mxu0 0.0
    %3258 = vmatprep.subr.mxu0 0.0
    %3259 = vmatpush2.msra.mxu0 0.0
    %3260 = vmatprep.subr.mxu0 0.0
    %3261 = vmatpush2.msra.mxu0 0.0
    %3262 = vmatprep.subr.mxu0 0.0
    %3263 = vmatpush2.msra.mxu0 0.0
    %3264 = vmatprep.subr.mxu0 0.0
    %3265 = vmatpush2.msra.mxu0 0.0
    %3266 = vmatprep.subr.mxu0 0.0
    %3267 = vmatpush2.msra.mxu0 0.0
    %3268 = vmatprep.subr.mxu0 0.0
    %3269 = vmatpush2.msra.mxu0 0.0
    %3270 = vmatprep.subr.mxu0 0.0
    %3271 = vmatpush2.msra.mxu0 0.0
    %3272 = vmatprep.subr.mxu0 0.0
    %3273 = vmatpush2.msra.mxu0 0.0
    %3274 = vmatprep.subr.mxu0 0.0
    %3275 = vmatpush2.msra.mxu0 0.0
    %3276 = vmatprep.mubr.f32.mxu0 0.0
    %3277 = vmatmul.mubr.f32.gmra.mxu0 %v3210
    %v3278 = vpop.f32.mrf.mxu0
    %v3279 = vadd.f32 %v3202, %v3278
    %v3280 = vpop.f32.mrf.mxu0
    %v3281 = vadd.f32 %v3206, %v3280
    %3282 = vdwg.mxu0
    %v3285 = vcombine.low %v3279, %v3281
    %vm3287 = vcmask 1043456
    %vm3288 = vcmask 523268
    %vm3289 = vmor %vm3288, %vm3287
    %3290 = vst.msk [vmem:[#allocation8] sm:$0xff] %vm3289, %v3285
    %s3291 = scalar_lea.vmem %s7, 4
    %v3292 = vld [vmem:[%s3291] sm:$0xf]
    %v3293 = vld [vmem:[%s31] sm:$0xff]
    %v3294 = vld [vmem:[%s31 + $0x8] sm:$0xff]
    %v3295 = vld [vmem:[%s31 + $0x10] sm:$0xff]
    %v3296 = vld [vmem:[%s31 + $0x18] sm:$0xff]
    %v3297 = vld [vmem:[%s31 + $0x20] sm:$0xff]
    %v3298 = vld [vmem:[%s31 + $0x28] sm:$0xff]
    %v3299 = vld [vmem:[%s31 + $0x30] sm:$0xff]
    %v3300 = vld [vmem:[%s31 + $0x38] sm:$0xff]
    %v3301 = vld [vmem:[%s35] sm:$0x3]
    %v3303 = vlaneseq
    %v3304 = vshrl.u32 %v3303, 7
    %v3305 = vsub.s32 0, %v3304
    %v3306 = vrot.slane %v3301, %v3305
    %v3307 = vlaneseq
    %v3308 = vshrl.u32 %v3307, 7
    %v3309 = vsub.s32 1, %v3308
    %v3310 = vrot.slane %v3301, %v3309
    %v3314 = vsel %vm159, %v3292, 0
    %3316 = vmatprep.subr.mxu0 0.0
    %3317 = vmatpush1.msra.mxu0 0.0
    %3318 = vmatprep.subr.mxu0 0.0
    %3319 = vmatpush1.msra.mxu0 0.0
    %3320 = vmatprep.subr.mxu0 0.0
    %3321 = vmatpush1.msra.mxu0 0.0
    %3322 = vmatprep.subr.mxu0 0.0
    %3323 = vmatpush1.msra.mxu0 0.0
    %3324 = vmatprep.subr.mxu0 0.0
    %3325 = vmatpush1.msra.mxu0 0.0
    %3326 = vmatprep.subr.mxu0 0.0
    %3327 = vmatpush1.msra.mxu0 0.0
    %3328 = vmatprep.subr.mxu0 0.0
    %3329 = vmatpush1.msra.mxu0 0.0
    %3330 = vmatprep.subr.mxu0 0.0
    %3331 = vmatpush1.msra.mxu0 0.0
    %3332 = vmatprep.subr.mxu0 0.0
    %3333 = vmatpush1.msra.mxu0 0.0
    %3334 = vmatprep.subr.mxu0 0.0
    %3335 = vmatpush1.msra.mxu0 0.0
    %3336 = vmatprep.subr.mxu0 0.0
    %3337 = vmatpush1.msra.mxu0 0.0
    %3338 = vmatprep.subr.mxu0 0.0
    %3339 = vmatpush1.msra.mxu0 0.0
    %3340 = vmatprep.subr.mxu0 %v3300
    %3341 = vmatpush1.msra.mxu0 %v3299
    %3342 = vmatprep.subr.mxu0 %v3298
    %3343 = vmatpush1.msra.mxu0 %v3297
    %3344 = vmatprep.subr.mxu0 %v3296
    %3345 = vmatpush1.msra.mxu0 %v3295
    %3346 = vmatprep.subr.mxu0 %v3294
    %3347 = vmatpush1.msra.mxu0 %v3293
    %3348 = vmatprep.subr.mxu0 0.0
    %3349 = vmatpush2.msra.mxu0 0.0
    %3350 = vmatprep.subr.mxu0 0.0
    %3351 = vmatpush2.msra.mxu0 0.0
    %3352 = vmatprep.subr.mxu0 0.0
    %3353 = vmatpush2.msra.mxu0 0.0
    %3354 = vmatprep.subr.mxu0 0.0
    %3355 = vmatpush2.msra.mxu0 0.0
    %3356 = vmatprep.subr.mxu0 0.0
    %3357 = vmatpush2.msra.mxu0 0.0
    %3358 = vmatprep.subr.mxu0 0.0
    %3359 = vmatpush2.msra.mxu0 0.0
    %3360 = vmatprep.subr.mxu0 0.0
    %3361 = vmatpush2.msra.mxu0 0.0
    %3362 = vmatprep.subr.mxu0 0.0
    %3363 = vmatpush2.msra.mxu0 0.0
    %3364 = vmatprep.subr.mxu0 0.0
    %3365 = vmatpush2.msra.mxu0 0.0
    %3366 = vmatprep.subr.mxu0 0.0
    %3367 = vmatpush2.msra.mxu0 0.0
    %3368 = vmatprep.subr.mxu0 0.0
    %3369 = vmatpush2.msra.mxu0 0.0
    %3370 = vmatprep.subr.mxu0 0.0
    %3371 = vmatpush2.msra.mxu0 0.0
    %3372 = vmatprep.subr.mxu0 0.0
    %3373 = vmatpush2.msra.mxu0 0.0
    %3374 = vmatprep.subr.mxu0 0.0
    %3375 = vmatpush2.msra.mxu0 0.0
    %3376 = vmatprep.subr.mxu0 0.0
    %3377 = vmatpush2.msra.mxu0 0.0
    %3378 = vmatprep.subr.mxu0 0.0
    %3379 = vmatpush2.msra.mxu0 0.0
    %3380 = vmatprep.mubr.f32.mxu0 0.0
    %3381 = vmatmul.mubr.f32.gmra.mxu0 %v3314
    %v3382 = vpop.f32.mrf.mxu0
    %v3383 = vadd.f32 %v3306, %v3382
    %v3384 = vpop.f32.mrf.mxu0
    %v3385 = vadd.f32 %v3310, %v3384
    %3386 = vdwg.mxu0
    %v3389 = vcombine.low %v3383, %v3385
    %s3391 = scalar_lea.vmem [#allocation8], 8
    %3392 = vst.msk [vmem:[%s3391] sm:$0xff] %vm3289, %v3389
    %s3393 = scalar_lea.vmem %s7, 8
    %v3394 = vld [vmem:[%s3393] sm:$0xf]
    %v3395 = vld [vmem:[%s31] sm:$0xff]
    %v3396 = vld [vmem:[%s31 + $0x8] sm:$0xff]
    %v3397 = vld [vmem:[%s31 + $0x10] sm:$0xff]
    %v3398 = vld [vmem:[%s31 + $0x18] sm:$0xff]
    %v3399 = vld [vmem:[%s31 + $0x20] sm:$0xff]
    %v3400 = vld [vmem:[%s31 + $0x28] sm:$0xff]
    %v3401 = vld [vmem:[%s31 + $0x30] sm:$0xff]
    %v3402 = vld [vmem:[%s31 + $0x38] sm:$0xff]
    %v3403 = vld [vmem:[%s35] sm:$0x3]
    %v3405 = vlaneseq
    %v3406 = vshrl.u32 %v3405, 7
    %v3407 = vsub.s32 0, %v3406
    %v3408 = vrot.slane %v3403, %v3407
    %v3409 = vlaneseq
    %v3410 = vshrl.u32 %v3409, 7
    %v3411 = vsub.s32 1, %v3410
    %v3412 = vrot.slane %v3403, %v3411
    %v3416 = vsel %vm159, %v3394, 0
    %3418 = vmatprep.subr.mxu0 0.0
    %3419 = vmatpush1.msra.mxu0 0.0
    %3420 = vmatprep.subr.mxu0 0.0
    %3421 = vmatpush1.msra.mxu0 0.0
    %3422 = vmatprep.subr.mxu0 0.0
    %3423 = vmatpush1.msra.mxu0 0.0
    %3424 = vmatprep.subr.mxu0 0.0
    %3425 = vmatpush1.msra.mxu0 0.0
    %3426 = vmatprep.subr.mxu0 0.0
    %3427 = vmatpush1.msra.mxu0 0.0
    %3428 = vmatprep.subr.mxu0 0.0
    %3429 = vmatpush1.msra.mxu0 0.0
    %3430 = vmatprep.subr.mxu0 0.0
    %3431 = vmatpush1.msra.mxu0 0.0
    %3432 = vmatprep.subr.mxu0 0.0
    %3433 = vmatpush1.msra.mxu0 0.0
    %3434 = vmatprep.subr.mxu0 0.0
    %3435 = vmatpush1.msra.mxu0 0.0
    %3436 = vmatprep.subr.mxu0 0.0
    %3437 = vmatpush1.msra.mxu0 0.0
    %3438 = vmatprep.subr.mxu0 0.0
    %3439 = vmatpush1.msra.mxu0 0.0
    %3440 = vmatprep.subr.mxu0 0.0
    %3441 = vmatpush1.msra.mxu0 0.0
    %3442 = vmatprep.subr.mxu0 %v3402
    %3443 = vmatpush1.msra.mxu0 %v3401
    %3444 = vmatprep.subr.mxu0 %v3400
    %3445 = vmatpush1.msra.mxu0 %v3399
    %3446 = vmatprep.subr.mxu0 %v3398
    %3447 = vmatpush1.msra.mxu0 %v3397
    %3448 = vmatprep.subr.mxu0 %v3396
    %3449 = vmatpush1.msra.mxu0 %v3395
    %3450 = vmatprep.subr.mxu0 0.0
    %3451 = vmatpush2.msra.mxu0 0.0
    %3452 = vmatprep.subr.mxu0 0.0
    %3453 = vmatpush2.msra.mxu0 0.0
    %3454 = vmatprep.subr.mxu0 0.0
    %3455 = vmatpush2.msra.mxu0 0.0
    %3456 = vmatprep.subr.mxu0 0.0
    %3457 = vmatpush2.msra.mxu0 0.0
    %3458 = vmatprep.subr.mxu0 0.0
    %3459 = vmatpush2.msra.mxu0 0.0
    %3460 = vmatprep.subr.mxu0 0.0
    %3461 = vmatpush2.msra.mxu0 0.0
    %3462 = vmatprep.subr.mxu0 0.0
    %3463 = vmatpush2.msra.mxu0 0.0
    %3464 = vmatprep.subr.mxu0 0.0
    %3465 = vmatpush2.msra.mxu0 0.0
    %3466 = vmatprep.subr.mxu0 0.0
    %3467 = vmatpush2.msra.mxu0 0.0
    %3468 = vmatprep.subr.mxu0 0.0
    %3469 = vmatpush2.msra.mxu0 0.0
    %3470 = vmatprep.subr.mxu0 0.0
    %3471 = vmatpush2.msra.mxu0 0.0
    %3472 = vmatprep.subr.mxu0 0.0
    %3473 = vmatpush2.msra.mxu0 0.0
    %3474 = vmatprep.subr.mxu0 0.0
    %3475 = vmatpush2.msra.mxu0 0.0
    %3476 = vmatprep.subr.mxu0 0.0
    %3477 = vmatpush2.msra.mxu0 0.0
    %3478 = vmatprep.subr.mxu0 0.0
    %3479 = vmatpush2.msra.mxu0 0.0
    %3480 = vmatprep.subr.mxu0 0.0
    %3481 = vmatpush2.msra.mxu0 0.0
    %3482 = vmatprep.mubr.f32.mxu0 0.0
    %3483 = vmatmul.mubr.f32.gmra.mxu0 %v3416
    %v3484 = vpop.f32.mrf.mxu0
    %v3485 = vadd.f32 %v3408, %v3484
    %v3486 = vpop.f32.mrf.mxu0
    %v3487 = vadd.f32 %v3412, %v3486
    %3488 = vdwg.mxu0
    %v3491 = vcombine.low %v3485, %v3487
    %s3493 = scalar_lea.vmem [#allocation8], 16
    %3494 = vst.msk [vmem:[%s3493] sm:$0xff] %vm3289, %v3491
    %s3495 = scalar_lea.vmem %s7, 12
    %v3496 = vld [vmem:[%s3495] sm:$0xf]
    %v3497 = vld [vmem:[%s31] sm:$0xff]
    %v3498 = vld [vmem:[%s31 + $0x8] sm:$0xff]
    %v3499 = vld [vmem:[%s31 + $0x10] sm:$0xff]
    %v3500 = vld [vmem:[%s31 + $0x18] sm:$0xff]
    %v3501 = vld [vmem:[%s31 + $0x20] sm:$0xff]
    %v3502 = vld [vmem:[%s31 + $0x28] sm:$0xff]
    %v3503 = vld [vmem:[%s31 + $0x30] sm:$0xff]
    %v3504 = vld [vmem:[%s31 + $0x38] sm:$0xff]
    %v3505 = vld [vmem:[%s35] sm:$0x3]
    %v3507 = vlaneseq
    %v3508 = vshrl.u32 %v3507, 7
    %v3509 = vsub.s32 0, %v3508
    %v3510 = vrot.slane %v3505, %v3509
    %v3511 = vlaneseq
    %v3512 = vshrl.u32 %v3511, 7
    %v3513 = vsub.s32 1, %v3512
    %v3514 = vrot.slane %v3505, %v3513
    %v3518 = vsel %vm159, %v3496, 0
    %3520 = vmatprep.subr.mxu0 0.0
    %3521 = vmatpush1.msra.mxu0 0.0
    %3522 = vmatprep.subr.mxu0 0.0
    %3523 = vmatpush1.msra.mxu0 0.0
    %3524 = vmatprep.subr.mxu0 0.0
    %3525 = vmatpush1.msra.mxu0 0.0
    %3526 = vmatprep.subr.mxu0 0.0
    %3527 = vmatpush1.msra.mxu0 0.0
    %3528 = vmatprep.subr.mxu0 0.0
    %3529 = vmatpush1.msra.mxu0 0.0
    %3530 = vmatprep.subr.mxu0 0.0
    %3531 = vmatpush1.msra.mxu0 0.0
    %3532 = vmatprep.subr.mxu0 0.0
    %3533 = vmatpush1.msra.mxu0 0.0
    %3534 = vmatprep.subr.mxu0 0.0
    %3535 = vmatpush1.msra.mxu0 0.0
    %3536 = vmatprep.subr.mxu0 0.0
    %3537 = vmatpush1.msra.mxu0 0.0
    %3538 = vmatprep.subr.mxu0 0.0
    %3539 = vmatpush1.msra.mxu0 0.0
    %3540 = vmatprep.subr.mxu0 0.0
    %3541 = vmatpush1.msra.mxu0 0.0
    %3542 = vmatprep.subr.mxu0 0.0
    %3543 = vmatpush1.msra.mxu0 0.0
    %3544 = vmatprep.subr.mxu0 %v3504
    %3545 = vmatpush1.msra.mxu0 %v3503
    %3546 = vmatprep.subr.mxu0 %v3502
    %3547 = vmatpush1.msra.mxu0 %v3501
    %3548 = vmatprep.subr.mxu0 %v3500
    %3549 = vmatpush1.msra.mxu0 %v3499
    %3550 = vmatprep.subr.mxu0 %v3498
    %3551 = vmatpush1.msra.mxu0 %v3497
    %3552 = vmatprep.subr.mxu0 0.0
    %3553 = vmatpush2.msra.mxu0 0.0
    %3554 = vmatprep.subr.mxu0 0.0
    %3555 = vmatpush2.msra.mxu0 0.0
    %3556 = vmatprep.subr.mxu0 0.0
    %3557 = vmatpush2.msra.mxu0 0.0
    %3558 = vmatprep.subr.mxu0 0.0
    %3559 = vmatpush2.msra.mxu0 0.0
    %3560 = vmatprep.subr.mxu0 0.0
    %3561 = vmatpush2.msra.mxu0 0.0
    %3562 = vmatprep.subr.mxu0 0.0
    %3563 = vmatpush2.msra.mxu0 0.0
    %3564 = vmatprep.subr.mxu0 0.0
    %3565 = vmatpush2.msra.mxu0 0.0
    %3566 = vmatprep.subr.mxu0 0.0
    %3567 = vmatpush2.msra.mxu0 0.0
    %3568 = vmatprep.subr.mxu0 0.0
    %3569 = vmatpush2.msra.mxu0 0.0
    %3570 = vmatprep.subr.mxu0 0.0
    %3571 = vmatpush2.msra.mxu0 0.0
    %3572 = vmatprep.subr.mxu0 0.0
    %3573 = vmatpush2.msra.mxu0 0.0
    %3574 = vmatprep.subr.mxu0 0.0
    %3575 = vmatpush2.msra.mxu0 0.0
    %3576 = vmatprep.subr.mxu0 0.0
    %3577 = vmatpush2.msra.mxu0 0.0
    %3578 = vmatprep.subr.mxu0 0.0
    %3579 = vmatpush2.msra.mxu0 0.0
    %3580 = vmatprep.subr.mxu0 0.0
    %3581 = vmatpush2.msra.mxu0 0.0
    %3582 = vmatprep.subr.mxu0 0.0
    %3583 = vmatpush2.msra.mxu0 0.0
    %3584 = vmatprep.mubr.f32.mxu0 0.0
    %3585 = vmatmul.mubr.f32.gmra.mxu0 %v3518
    %v3586 = vpop.f32.mrf.mxu0
    %v3587 = vadd.f32 %v3510, %v3586
    %v3588 = vpop.f32.mrf.mxu0
    %v3589 = vadd.f32 %v3514, %v3588
    %3590 = vdwg.mxu0
    %v3593 = vcombine.low %v3587, %v3589
    %s3595 = scalar_lea.vmem [#allocation8], 24
    %3596 = vst.msk [vmem:[%s3595] sm:$0xff] %vm3289, %v3593
    %s3597 = scalar_lea.vmem %s7, 16
    %v3598 = vld [vmem:[%s3597] sm:$0xf]
    %v3599 = vld [vmem:[%s31] sm:$0xff]
    %v3600 = vld [vmem:[%s31 + $0x8] sm:$0xff]
    %v3601 = vld [vmem:[%s31 + $0x10] sm:$0xff]
    %v3602 = vld [vmem:[%s31 + $0x18] sm:$0xff]
    %v3603 = vld [vmem:[%s31 + $0x20] sm:$0xff]
    %v3604 = vld [vmem:[%s31 + $0x28] sm:$0xff]
    %v3605 = vld [vmem:[%s31 + $0x30] sm:$0xff]
    %v3606 = vld [vmem:[%s31 + $0x38] sm:$0xff]
    %v3607 = vld [vmem:[%s35] sm:$0x3]
    %v3609 = vlaneseq
    %v3610 = vshrl.u32 %v3609, 7
    %v3611 = vsub.s32 0, %v3610
    %v3612 = vrot.slane %v3607, %v3611
    %v3613 = vlaneseq
    %v3614 = vshrl.u32 %v3613, 7
    %v3615 = vsub.s32 1, %v3614
    %v3616 = vrot.slane %v3607, %v3615
    %v3620 = vsel %vm159, %v3598, 0
    %3622 = vmatprep.subr.mxu0 0.0
    %3623 = vmatpush1.msra.mxu0 0.0
    %3624 = vmatprep.subr.mxu0 0.0
    %3625 = vmatpush1.msra.mxu0 0.0
    %3626 = vmatprep.subr.mxu0 0.0
    %3627 = vmatpush1.msra.mxu0 0.0
    %3628 = vmatprep.subr.mxu0 0.0
    %3629 = vmatpush1.msra.mxu0 0.0
    %3630 = vmatprep.subr.mxu0 0.0
    %3631 = vmatpush1.msra.mxu0 0.0
    %3632 = vmatprep.subr.mxu0 0.0
    %3633 = vmatpush1.msra.mxu0 0.0
    %3634 = vmatprep.subr.mxu0 0.0
    %3635 = vmatpush1.msra.mxu0 0.0
    %3636 = vmatprep.subr.mxu0 0.0
    %3637 = vmatpush1.msra.mxu0 0.0
    %3638 = vmatprep.subr.mxu0 0.0
    %3639 = vmatpush1.msra.mxu0 0.0
    %3640 = vmatprep.subr.mxu0 0.0
    %3641 = vmatpush1.msra.mxu0 0.0
    %3642 = vmatprep.subr.mxu0 0.0
    %3643 = vmatpush1.msra.mxu0 0.0
    %3644 = vmatprep.subr.mxu0 0.0
    %3645 = vmatpush1.msra.mxu0 0.0
    %3646 = vmatprep.subr.mxu0 %v3606
    %3647 = vmatpush1.msra.mxu0 %v3605
    %3648 = vmatprep.subr.mxu0 %v3604
    %3649 = vmatpush1.msra.mxu0 %v3603
    %3650 = vmatprep.subr.mxu0 %v3602
    %3651 = vmatpush1.msra.mxu0 %v3601
    %3652 = vmatprep.subr.mxu0 %v3600
    %3653 = vmatpush1.msra.mxu0 %v3599
    %3654 = vmatprep.subr.mxu0 0.0
    %3655 = vmatpush2.msra.mxu0 0.0
    %3656 = vmatprep.subr.mxu0 0.0
    %3657 = vmatpush2.msra.mxu0 0.0
    %3658 = vmatprep.subr.mxu0 0.0
    %3659 = vmatpush2.msra.mxu0 0.0
    %3660 = vmatprep.subr.mxu0 0.0
    %3661 = vmatpush2.msra.mxu0 0.0
    %3662 = vmatprep.subr.mxu0 0.0
    %3663 = vmatpush2.msra.mxu0 0.0
    %3664 = vmatprep.subr.mxu0 0.0
    %3665 = vmatpush2.msra.mxu0 0.0
    %3666 = vmatprep.subr.mxu0 0.0
    %3667 = vmatpush2.msra.mxu0 0.0
    %3668 = vmatprep.subr.mxu0 0.0
    %3669 = vmatpush2.msra.mxu0 0.0
    %3670 = vmatprep.subr.mxu0 0.0
    %3671 = vmatpush2.msra.mxu0 0.0
    %3672 = vmatprep.subr.mxu0 0.0
    %3673 = vmatpush2.msra.mxu0 0.0
    %3674 = vmatprep.subr.mxu0 0.0
    %3675 = vmatpush2.msra.mxu0 0.0
    %3676 = vmatprep.subr.mxu0 0.0
    %3677 = vmatpush2.msra.mxu0 0.0
    %3678 = vmatprep.subr.mxu0 0.0
    %3679 = vmatpush2.msra.mxu0 0.0
    %3680 = vmatprep.subr.mxu0 0.0
    %3681 = vmatpush2.msra.mxu0 0.0
    %3682 = vmatprep.subr.mxu0 0.0
    %3683 = vmatpush2.msra.mxu0 0.0
    %3684 = vmatprep.subr.mxu0 0.0
    %3685 = vmatpush2.msra.mxu0 0.0
    %3686 = vmatprep.mubr.f32.mxu0 0.0
    %3687 = vmatmul.mubr.f32.gmra.mxu0 %v3620
    %v3688 = vpop.f32.mrf.mxu0
    %v3689 = vadd.f32 %v3612, %v3688
    %v3690 = vpop.f32.mrf.mxu0
    %v3691 = vadd.f32 %v3616, %v3690
    %3692 = vdwg.mxu0
    %v3695 = vcombine.low %v3689, %v3691
    %s3697 = scalar_lea.vmem [#allocation8], 32
    %3698 = vst.msk [vmem:[%s3697] sm:$0xff] %vm3289, %v3695
    %s3699 = scalar_lea.vmem %s7, 20
    %v3700 = vld [vmem:[%s3699] sm:$0xf]
    %v3701 = vld [vmem:[%s31] sm:$0xff]
    %v3702 = vld [vmem:[%s31 + $0x8] sm:$0xff]
    %v3703 = vld [vmem:[%s31 + $0x10] sm:$0xff]
    %v3704 = vld [vmem:[%s31 + $0x18] sm:$0xff]
    %v3705 = vld [vmem:[%s31 + $0x20] sm:$0xff]
    %v3706 = vld [vmem:[%s31 + $0x28] sm:$0xff]
    %v3707 = vld [vmem:[%s31 + $0x30] sm:$0xff]
    %v3708 = vld [vmem:[%s31 + $0x38] sm:$0xff]
    %v3709 = vld [vmem:[%s35] sm:$0x3]
    %v3711 = vlaneseq
    %v3712 = vshrl.u32 %v3711, 7
    %v3713 = vsub.s32 0, %v3712
    %v3714 = vrot.slane %v3709, %v3713
    %v3715 = vlaneseq
    %v3716 = vshrl.u32 %v3715, 7
    %v3717 = vsub.s32 1, %v3716
    %v3718 = vrot.slane %v3709, %v3717
    %v3722 = vsel %vm159, %v3700, 0
    %3724 = vmatprep.subr.mxu0 0.0
    %3725 = vmatpush1.msra.mxu0 0.0
    %3726 = vmatprep.subr.mxu0 0.0
    %3727 = vmatpush1.msra.mxu0 0.0
    %3728 = vmatprep.subr.mxu0 0.0
    %3729 = vmatpush1.msra.mxu0 0.0
    %3730 = vmatprep.subr.mxu0 0.0
    %3731 = vmatpush1.msra.mxu0 0.0
    %3732 = vmatprep.subr.mxu0 0.0
    %3733 = vmatpush1.msra.mxu0 0.0
    %3734 = vmatprep.subr.mxu0 0.0
    %3735 = vmatpush1.msra.mxu0 0.0
    %3736 = vmatprep.subr.mxu0 0.0
    %3737 = vmatpush1.msra.mxu0 0.0
    %3738 = vmatprep.subr.mxu0 0.0
    %3739 = vmatpush1.msra.mxu0 0.0
    %3740 = vmatprep.subr.mxu0 0.0
    %3741 = vmatpush1.msra.mxu0 0.0
    %3742 = vmatprep.subr.mxu0 0.0
    %3743 = vmatpush1.msra.mxu0 0.0
    %3744 = vmatprep.subr.mxu0 0.0
    %3745 = vmatpush1.msra.mxu0 0.0
    %3746 = vmatprep.subr.mxu0 0.0
    %3747 = vmatpush1.msra.mxu0 0.0
    %3748 = vmatprep.subr.mxu0 %v3708
    %3749 = vmatpush1.msra.mxu0 %v3707
    %3750 = vmatprep.subr.mxu0 %v3706
    %3751 = vmatpush1.msra.mxu0 %v3705
    %3752 = vmatprep.subr.mxu0 %v3704
    %3753 = vmatpush1.msra.mxu0 %v3703
    %3754 = vmatprep.subr.mxu0 %v3702
    %3755 = vmatpush1.msra.mxu0 %v3701
    %3756 = vmatprep.subr.mxu0 0.0
    %3757 = vmatpush2.msra.mxu0 0.0
    %3758 = vmatprep.subr.mxu0 0.0
    %3759 = vmatpush2.msra.mxu0 0.0
    %3760 = vmatprep.subr.mxu0 0.0
    %3761 = vmatpush2.msra.mxu0 0.0
    %3762 = vmatprep.subr.mxu0 0.0
    %3763 = vmatpush2.msra.mxu0 0.0
    %3764 = vmatprep.subr.mxu0 0.0
    %3765 = vmatpush2.msra.mxu0 0.0
    %3766 = vmatprep.subr.mxu0 0.0
    %3767 = vmatpush2.msra.mxu0 0.0
    %3768 = vmatprep.subr.mxu0 0.0
    %3769 = vmatpush2.msra.mxu0 0.0
    %3770 = vmatprep.subr.mxu0 0.0
    %3771 = vmatpush2.msra.mxu0 0.0
    %3772 = vmatprep.subr.mxu0 0.0
    %3773 = vmatpush2.msra.mxu0 0.0
    %3774 = vmatprep.subr.mxu0 0.0
    %3775 = vmatpush2.msra.mxu0 0.0
    %3776 = vmatprep.subr.mxu0 0.0
    %3777 = vmatpush2.msra.mxu0 0.0
    %3778 = vmatprep.subr.mxu0 0.0
    %3779 = vmatpush2.msra.mxu0 0.0
    %3780 = vmatprep.subr.mxu0 0.0
    %3781 = vmatpush2.msra.mxu0 0.0
    %3782 = vmatprep.subr.mxu0 0.0
    %3783 = vmatpush2.msra.mxu0 0.0
    %3784 = vmatprep.subr.mxu0 0.0
    %3785 = vmatpush2.msra.mxu0 0.0
    %3786 = vmatprep.subr.mxu0 0.0
    %3787 = vmatpush2.msra.mxu0 0.0
    %3788 = vmatprep.mubr.f32.mxu0 0.0
    %3789 = vmatmul.mubr.f32.gmra.mxu0 %v3722
    %v3790 = vpop.f32.mrf.mxu0
    %v3791 = vadd.f32 %v3714, %v3790
    %v3792 = vpop.f32.mrf.mxu0
    %v3793 = vadd.f32 %v3718, %v3792
    %3794 = vdwg.mxu0
    %v3797 = vcombine.low %v3791, %v3793
    %s3799 = scalar_lea.vmem [#allocation8], 40
    %3800 = vst.msk [vmem:[%s3799] sm:$0xff] %vm3289, %v3797
    %s3801 = scalar_lea.vmem %s7, 24
    %v3802 = vld [vmem:[%s3801] sm:$0xf]
    %v3803 = vld [vmem:[%s31] sm:$0xff]
    %v3804 = vld [vmem:[%s31 + $0x8] sm:$0xff]
    %v3805 = vld [vmem:[%s31 + $0x10] sm:$0xff]
    %v3806 = vld [vmem:[%s31 + $0x18] sm:$0xff]
    %v3807 = vld [vmem:[%s31 + $0x20] sm:$0xff]
    %v3808 = vld [vmem:[%s31 + $0x28] sm:$0xff]
    %v3809 = vld [vmem:[%s31 + $0x30] sm:$0xff]
    %v3810 = vld [vmem:[%s31 + $0x38] sm:$0xff]
    %v3811 = vld [vmem:[%s35] sm:$0x3]
    %v3813 = vlaneseq
    %v3814 = vshrl.u32 %v3813, 7
    %v3815 = vsub.s32 0, %v3814
    %v3816 = vrot.slane %v3811, %v3815
    %v3817 = vlaneseq
    %v3818 = vshrl.u32 %v3817, 7
    %v3819 = vsub.s32 1, %v3818
    %v3820 = vrot.slane %v3811, %v3819
    %v3824 = vsel %vm159, %v3802, 0
    %3826 = vmatprep.subr.mxu0 0.0
    %3827 = vmatpush1.msra.mxu0 0.0
    %3828 = vmatprep.subr.mxu0 0.0
    %3829 = vmatpush1.msra.mxu0 0.0
    %3830 = vmatprep.subr.mxu0 0.0
    %3831 = vmatpush1.msra.mxu0 0.0
    %3832 = vmatprep.subr.mxu0 0.0
    %3833 = vmatpush1.msra.mxu0 0.0
    %3834 = vmatprep.subr.mxu0 0.0
    %3835 = vmatpush1.msra.mxu0 0.0
    %3836 = vmatprep.subr.mxu0 0.0
    %3837 = vmatpush1.msra.mxu0 0.0
    %3838 = vmatprep.subr.mxu0 0.0
    %3839 = vmatpush1.msra.mxu0 0.0
    %3840 = vmatprep.subr.mxu0 0.0
    %3841 = vmatpush1.msra.mxu0 0.0
    %3842 = vmatprep.subr.mxu0 0.0
    %3843 = vmatpush1.msra.mxu0 0.0
    %3844 = vmatprep.subr.mxu0 0.0
    %3845 = vmatpush1.msra.mxu0 0.0
    %3846 = vmatprep.subr.mxu0 0.0
    %3847 = vmatpush1.msra.mxu0 0.0
    %3848 = vmatprep.subr.mxu0 0.0
    %3849 = vmatpush1.msra.mxu0 0.0
    %3850 = vmatprep.subr.mxu0 %v3810
    %3851 = vmatpush1.msra.mxu0 %v3809
    %3852 = vmatprep.subr.mxu0 %v3808
    %3853 = vmatpush1.msra.mxu0 %v3807
    %3854 = vmatprep.subr.mxu0 %v3806
    %3855 = vmatpush1.msra.mxu0 %v3805
    %3856 = vmatprep.subr.mxu0 %v3804
    %3857 = vmatpush1.msra.mxu0 %v3803
    %3858 = vmatprep.subr.mxu0 0.0
    %3859 = vmatpush2.msra.mxu0 0.0
    %3860 = vmatprep.subr.mxu0 0.0
    %3861 = vmatpush2.msra.mxu0 0.0
    %3862 = vmatprep.subr.mxu0 0.0
    %3863 = vmatpush2.msra.mxu0 0.0
    %3864 = vmatprep.subr.mxu0 0.0
    %3865 = vmatpush2.msra.mxu0 0.0
    %3866 = vmatprep.subr.mxu0 0.0
    %3867 = vmatpush2.msra.mxu0 0.0
    %3868 = vmatprep.subr.mxu0 0.0
    %3869 = vmatpush2.msra.mxu0 0.0
    %3870 = vmatprep.subr.mxu0 0.0
    %3871 = vmatpush2.msra.mxu0 0.0
    %3872 = vmatprep.subr.mxu0 0.0
    %3873 = vmatpush2.msra.mxu0 0.0
    %3874 = vmatprep.subr.mxu0 0.0
    %3875 = vmatpush2.msra.mxu0 0.0
    %3876 = vmatprep.subr.mxu0 0.0
    %3877 = vmatpush2.msra.mxu0 0.0
    %3878 = vmatprep.subr.mxu0 0.0
    %3879 = vmatpush2.msra.mxu0 0.0
    %3880 = vmatprep.subr.mxu0 0.0
    %3881 = vmatpush2.msra.mxu0 0.0
    %3882 = vmatprep.subr.mxu0 0.0
    %3883 = vmatpush2.msra.mxu0 0.0
    %3884 = vmatprep.subr.mxu0 0.0
    %3885 = vmatpush2.msra.mxu0 0.0
    %3886 = vmatprep.subr.mxu0 0.0
    %3887 = vmatpush2.msra.mxu0 0.0
    %3888 = vmatprep.subr.mxu0 0.0
    %3889 = vmatpush2.msra.mxu0 0.0
    %3890 = vmatprep.mubr.f32.mxu0 0.0
    %3891 = vmatmul.mubr.f32.gmra.mxu0 %v3824
    %v3892 = vpop.f32.mrf.mxu0
    %v3893 = vadd.f32 %v3816, %v3892
    %v3894 = vpop.f32.mrf.mxu0
    %v3895 = vadd.f32 %v3820, %v3894
    %3896 = vdwg.mxu0
    %v3899 = vcombine.low %v3893, %v3895
    %s3901 = scalar_lea.vmem [#allocation8], 48
    %3902 = vst.msk [vmem:[%s3901] sm:$0xff] %vm3289, %v3899
    %v3903 = vld [vmem:[#allocation6] sm:$0xf]
    %v3904 = vld [vmem:[#allocation6 + $0x4] sm:$0xf]
    %v3905 = vld [vmem:[#allocation6 + $0x8] sm:$0xf]
    %v3906 = vld [vmem:[#allocation6 + $0xc] sm:$0xf]
    %v3907 = vld [vmem:[#allocation6 + $0x10] sm:$0xf]
    %v3908 = vld [vmem:[#allocation6 + $0x14] sm:$0xf]
    %v3909 = vld [vmem:[#allocation6 + $0x18] sm:$0xf]
    %v3910 = vld [vmem:[#allocation6 + $0x1c] sm:$0xf]
    %v3911 = vld [vmem:[#allocation7] sm:$0xf]
    %v3912 = vld [vmem:[#allocation7 + $0x4] sm:$0xf]
    %v3913 = vld [vmem:[#allocation7 + $0x8] sm:$0xf]
    %v3914 = vld [vmem:[#allocation7 + $0xc] sm:$0xf]
    %v3915 = vld [vmem:[#allocation7 + $0x10] sm:$0xf]
    %v3916 = vld [vmem:[#allocation7 + $0x14] sm:$0xf]
    %v3917 = vld [vmem:[#allocation7 + $0x18] sm:$0xf]
    %v3918 = vld [vmem:[#allocation7 + $0x1c] sm:$0xf]
    %vm3919 = vcmask 3072
    %v3920 = vsel %vm3919, %v1837, 0.0
    %v3921 = vsel %vm3919, %v1838, 0.0
    %v3922 = vadd.f32 %v3920, %v3921
    %v3923 = vsel %vm3919, %v1839, 0.0
    %v3924 = vadd.f32 %v3922, %v3923
    %v3925 = vsel %vm3919, %v1840, 0.0
    %v3926 = vadd.f32 %v3924, %v3925
    %v3927 = vsel %vm3919, %v1841, 0.0
    %v3928 = vadd.f32 %v3926, %v3927
    %v3929 = vsel %vm3919, %v1842, 0.0
    %v3930 = vadd.f32 %v3928, %v3929
    %v3931 = vsel %vm3919, %v1843, 0.0
    %v3932 = vadd.f32 %v3930, %v3931
    %v3933 = vsel %vm3919, %v1844, 0.0
    %v3934 = vadd.f32 %v3932, %v3933
    %v3935 = vmax.f32 %v3934, 1.0
    %3937 = vset.pattern.permute.xlu0 0
    %3938 = vperm.xlu0 %3937, %v1837
    %v3939 = vpop.permute.xlu0 %3938
    %3942 = vset.pattern.permute.xlu0 0
    %3943 = vperm.xlu0 %3942, %v1838
    %v3944 = vpop.permute.xlu0 %3943
    %3947 = vset.pattern.permute.xlu0 0
    %3948 = vperm.xlu0 %3947, %v1839
    %v3949 = vpop.permute.xlu0 %3948
    %3952 = vset.pattern.permute.xlu0 0
    %3953 = vperm.xlu0 %3952, %v1840
    %v3954 = vpop.permute.xlu0 %3953
    %3957 = vset.pattern.permute.xlu0 0
    %3958 = vperm.xlu0 %3957, %v1841
    %v3959 = vpop.permute.xlu0 %3958
    %3962 = vset.pattern.permute.xlu0 0
    %3963 = vperm.xlu0 %3962, %v1842
    %v3964 = vpop.permute.xlu0 %3963
    %3967 = vset.pattern.permute.xlu0 0
    %3968 = vperm.xlu0 %3967, %v1843
    %v3969 = vpop.permute.xlu0 %3968
    %3972 = vset.pattern.permute.xlu0 0
    %3973 = vperm.xlu0 %3972, %v1844
    %v3974 = vpop.permute.xlu0 %3973
    %v3976 = vmul.f32 %v1821, %v3939
    %v3977 = vmul.f32 %v1822, %v3944
    %v3978 = vmul.f32 %v1823, %v3949
    %v3979 = vmul.f32 %v1824, %v3954
    %v3980 = vmul.f32 %v1825, %v3959
    %v3981 = vmul.f32 %v1826, %v3964
    %v3982 = vmul.f32 %v1827, %v3969
    %v3983 = vmul.f32 %v1828, %v3974
    %v3984 = vsel %vm1927, %v3976, 0.0
    %v3985 = vsel %vm1927, %v3977, 0.0
    %v3986 = vadd.f32 %v3984, %v3985
    %v3987 = vsel %vm1927, %v3978, 0.0
    %v3988 = vadd.f32 %v3986, %v3987
    %v3989 = vsel %vm1927, %v3979, 0.0
    %v3990 = vadd.f32 %v3988, %v3989
    %v3991 = vsel %vm1927, %v3980, 0.0
    %v3992 = vadd.f32 %v3990, %v3991
    %v3993 = vsel %vm1927, %v3981, 0.0
    %v3994 = vadd.f32 %v3992, %v3993
    %v3995 = vsel %vm1927, %v3982, 0.0
    %v3996 = vadd.f32 %v3994, %v3995
    %v3997 = vsel %vm1927, %v3983, 0.0
    %v3998 = vadd.f32 %v3996, %v3997
    %4000 = vset.pattern.permute.xlu0 0
    %4001 = vperm.xlu0 %4000, %v3935
    %v4002 = vpop.permute.xlu0 %4001
    %v4004 = vrcp.pop %v4002
    %v4005 = vmul.f32 %v3998, %v4004
    %v4006 = vld [vmem:[%s27] sm:$0xff]
    %v4007 = vld [vmem:[%s27 + $0x8] sm:$0xff]
    %v4008 = vld [vmem:[%s27 + $0x10] sm:$0xff]
    %v4009 = vld [vmem:[%s27 + $0x18] sm:$0xff]
    %v4010 = vld [vmem:[%s27 + $0x20] sm:$0xff]
    %v4011 = vld [vmem:[%s27 + $0x28] sm:$0xff]
    %v4012 = vld [vmem:[%s27 + $0x30] sm:$0xff]
    %v4013 = vld [vmem:[%s27 + $0x38] sm:$0xff]
    %v4014 = vld [vmem:[%s29] sm:$0x1]
    %v4016 = vlaneseq
    %v4017 = vshrl.u32 %v4016, 7
    %v4018 = vsub.s32 0, %v4017
    %v4019 = vrot.slane %v4014, %v4018
    %v4022 = vsel %vm1853, %v4005, 0
    %4024 = vmatprep.subr.mxu0 0.0
    %4025 = vmatpush1.msra.mxu0 0.0
    %4026 = vmatprep.subr.mxu0 0.0
    %4027 = vmatpush1.msra.mxu0 0.0
    %4028 = vmatprep.subr.mxu0 0.0
    %4029 = vmatpush1.msra.mxu0 0.0
    %4030 = vmatprep.subr.mxu0 0.0
    %4031 = vmatpush1.msra.mxu0 0.0
    %4032 = vmatprep.subr.mxu0 0.0
    %4033 = vmatpush1.msra.mxu0 0.0
    %4034 = vmatprep.subr.mxu0 0.0
    %4035 = vmatpush1.msra.mxu0 0.0
    %4036 = vmatprep.subr.mxu0 0.0
    %4037 = vmatpush1.msra.mxu0 0.0
    %4038 = vmatprep.subr.mxu0 0.0
    %4039 = vmatpush1.msra.mxu0 0.0
    %4040 = vmatprep.subr.mxu0 0.0
    %4041 = vmatpush1.msra.mxu0 %v4013
    %4042 = vmatprep.subr.mxu0 0.0
    %4043 = vmatpush1.msra.mxu0 %v4012
    %4044 = vmatprep.subr.mxu0 0.0
    %4045 = vmatpush1.msra.mxu0 %v4011
    %4046 = vmatprep.subr.mxu0 0.0
    %4047 = vmatpush1.msra.mxu0 %v4010
    %4048 = vmatprep.subr.mxu0 0.0
    %4049 = vmatpush1.msra.mxu0 %v4009
    %4050 = vmatprep.subr.mxu0 0.0
    %4051 = vmatpush1.msra.mxu0 %v4008
    %4052 = vmatprep.subr.mxu0 0.0
    %4053 = vmatpush1.msra.mxu0 %v4007
    %4054 = vmatprep.subr.mxu0 0.0
    %4055 = vmatpush1.msra.mxu0 %v4006
    %4056 = vmatprep.subr.mxu0 0.0
    %4057 = vmatpush2.msra.mxu0 0.0
    %4058 = vmatprep.subr.mxu0 0.0
    %4059 = vmatpush2.msra.mxu0 0.0
    %4060 = vmatprep.subr.mxu0 0.0
    %4061 = vmatpush2.msra.mxu0 0.0
    %4062 = vmatprep.subr.mxu0 0.0
    %4063 = vmatpush2.msra.mxu0 0.0
    %4064 = vmatprep.subr.mxu0 0.0
    %4065 = vmatpush2.msra.mxu0 0.0
    %4066 = vmatprep.subr.mxu0 0.0
    %4067 = vmatpush2.msra.mxu0 0.0
    %4068 = vmatprep.subr.mxu0 0.0
    %4069 = vmatpush2.msra.mxu0 0.0
    %4070 = vmatprep.subr.mxu0 0.0
    %4071 = vmatpush2.msra.mxu0 0.0
    %4072 = vmatprep.subr.mxu0 0.0
    %4073 = vmatpush2.msra.mxu0 0.0
    %4074 = vmatprep.subr.mxu0 0.0
    %4075 = vmatpush2.msra.mxu0 0.0
    %4076 = vmatprep.subr.mxu0 0.0
    %4077 = vmatpush2.msra.mxu0 0.0
    %4078 = vmatprep.subr.mxu0 0.0
    %4079 = vmatpush2.msra.mxu0 0.0
    %4080 = vmatprep.subr.mxu0 0.0
    %4081 = vmatpush2.msra.mxu0 0.0
    %4082 = vmatprep.subr.mxu0 0.0
    %4083 = vmatpush2.msra.mxu0 0.0
    %4084 = vmatprep.subr.mxu0 0.0
    %4085 = vmatpush2.msra.mxu0 0.0
    %4086 = vmatprep.subr.mxu0 0.0
    %4087 = vmatpush2.msra.mxu0 0.0
    %4088 = vmatprep.mubr.f32.mxu0 0.0
    %4089 = vmatmul.mubr.f32.gmra.mxu0 %v4022
    %v4090 = vpop.f32.mrf.mxu0
    %v4091 = vadd.f32 %v4019, %v4090
    %v4092 = vpop.f32.mrf.mxu0
    %4093 = vdwg.mxu0
    %v4094 = vtanh.pop %v4091
    loop: start=0, step=1, limit=7
    $region156: #{amnmt_forward.1} parent=1 // loop_pre_header
      _
    $region157: #{amnmt_forward.1} parent=1 // loop_header
      %s4096 = sphi 0, %s4100
      %p4097 = scmp.ge.s32.totalorder %s4096, 7
      %v4101 = vphi %v4094, %v5114
    $region158: #{amnmt_forward.1} parent=1 // loop_header_branch
      %4099 = sbr.rel (%p4097) target = $region162
    $region159: #{amnmt_forward.1} parent=1 // loop_body
      %s4102 = smul.u32 %s4096, 2
      %s4103 = smul.addr %s4102, 4
      %s4104 = scalar_lea.vmem [#allocation8], %s4103
      %v4105 = vld [vmem:[%s4104] sm:$0xff]
      %v4106 = vld [vmem:[%s33] sm:$0xff]
      %v4107 = vld [vmem:[%s33 + $0x8] sm:$0xff]
      %v4108 = vld [vmem:[%s33 + $0x10] sm:$0xff]
      %v4109 = vld [vmem:[%s33 + $0x18] sm:$0xff]
      %v4110 = vld [vmem:[%s33 + $0x20] sm:$0xff]
      %v4111 = vld [vmem:[%s33 + $0x28] sm:$0xff]
      %v4112 = vld [vmem:[%s33 + $0x30] sm:$0xff]
      %v4113 = vld [vmem:[%s33 + $0x38] sm:$0xff]
      %v4114 = vld [vmem:[%s33 + $0x40] sm:$0xff]
      %v4115 = vld [vmem:[%s33 + $0x48] sm:$0xff]
      %v4116 = vld [vmem:[%s33 + $0x50] sm:$0xff]
      %v4117 = vld [vmem:[%s33 + $0x58] sm:$0xff]
      %v4118 = vld [vmem:[%s33 + $0x60] sm:$0xff]
      %v4119 = vld [vmem:[%s33 + $0x68] sm:$0xff]
      %v4120 = vld [vmem:[%s33 + $0x70] sm:$0xff]
      %v4121 = vld [vmem:[%s33 + $0x78] sm:$0xff]
      %v4122 = vld [vmem:[%s37] sm:$0x3]
      %v4124 = vlaneseq
      %v4125 = vshrl.u32 %v4124, 7
      %v4126 = vsub.s32 0, %v4125
      %v4127 = vrot.slane %v4122, %v4126
      %v4128 = vlaneseq
      %v4129 = vshrl.u32 %v4128, 7
      %v4130 = vsub.s32 1, %v4129
      %v4131 = vrot.slane %v4122, %v4130
      %v4135 = vsel %vm1853, %v4101, 0
      %4137 = vmatprep.subr.mxu0 0.0
      %4138 = vmatpush1.msra.mxu0 0.0
      %4139 = vmatprep.subr.mxu0 0.0
      %4140 = vmatpush1.msra.mxu0 0.0
      %4141 = vmatprep.subr.mxu0 0.0
      %4142 = vmatpush1.msra.mxu0 0.0
      %4143 = vmatprep.subr.mxu0 0.0
      %4144 = vmatpush1.msra.mxu0 0.0
      %4145 = vmatprep.subr.mxu0 0.0
      %4146 = vmatpush1.msra.mxu0 0.0
      %4147 = vmatprep.subr.mxu0 0.0
      %4148 = vmatpush1.msra.mxu0 0.0
      %4149 = vmatprep.subr.mxu0 0.0
      %4150 = vmatpush1.msra.mxu0 0.0
      %4151 = vmatprep.subr.mxu0 0.0
      %4152 = vmatpush1.msra.mxu0 0.0
      %4153 = vmatprep.subr.mxu0 %v4121
      %4154 = vmatpush1.msra.mxu0 %v4120
      %4155 = vmatprep.subr.mxu0 %v4119
      %4156 = vmatpush1.msra.mxu0 %v4118
      %4157 = vmatprep.subr.mxu0 %v4117
      %4158 = vmatpush1.msra.mxu0 %v4116
      %4159 = vmatprep.subr.mxu0 %v4115
      %4160 = vmatpush1.msra.mxu0 %v4114
      %4161 = vmatprep.subr.mxu0 %v4113
      %4162 = vmatpush1.msra.mxu0 %v4112
      %4163 = vmatprep.subr.mxu0 %v4111
      %4164 = vmatpush1.msra.mxu0 %v4110
      %4165 = vmatprep.subr.mxu0 %v4109
      %4166 = vmatpush1.msra.mxu0 %v4108
      %4167 = vmatprep.subr.mxu0 %v4107
      %4168 = vmatpush1.msra.mxu0 %v4106
      %4169 = vmatprep.subr.mxu0 0.0
      %4170 = vmatpush2.msra.mxu0 0.0
      %4171 = vmatprep.subr.mxu0 0.0
      %4172 = vmatpush2.msra.mxu0 0.0
      %4173 = vmatprep.subr.mxu0 0.0
      %4174 = vmatpush2.msra.mxu0 0.0
      %4175 = vmatprep.subr.mxu0 0.0
      %4176 = vmatpush2.msra.mxu0 0.0
      %4177 = vmatprep.subr.mxu0 0.0
      %4178 = vmatpush2.msra.mxu0 0.0
      %4179 = vmatprep.subr.mxu0 0.0
      %4180 = vmatpush2.msra.mxu0 0.0
      %4181 = vmatprep.subr.mxu0 0.0
      %4182 = vmatpush2.msra.mxu0 0.0
      %4183 = vmatprep.subr.mxu0 0.0
      %4184 = vmatpush2.msra.mxu0 0.0
      %4185 = vmatprep.subr.mxu0 0.0
      %4186 = vmatpush2.msra.mxu0 0.0
      %4187 = vmatprep.subr.mxu0 0.0
      %4188 = vmatpush2.msra.mxu0 0.0
      %4189 = vmatprep.subr.mxu0 0.0
      %4190 = vmatpush2.msra.mxu0 0.0
      %4191 = vmatprep.subr.mxu0 0.0
      %4192 = vmatpush2.msra.mxu0 0.0
      %4193 = vmatprep.subr.mxu0 0.0
      %4194 = vmatpush2.msra.mxu0 0.0
      %4195 = vmatprep.subr.mxu0 0.0
      %4196 = vmatpush2.msra.mxu0 0.0
      %4197 = vmatprep.subr.mxu0 0.0
      %4198 = vmatpush2.msra.mxu0 0.0
      %4199 = vmatprep.subr.mxu0 0.0
      %4200 = vmatpush2.msra.mxu0 0.0
      %4201 = vmatprep.mubr.f32.mxu0 0.0
      %4202 = vmatmul.mubr.f32.gmra.mxu0 %v4135
      %v4203 = vpop.f32.mrf.mxu0
      %v4204 = vadd.f32 %v4127, %v4203
      %v4205 = vpop.f32.mrf.mxu0
      %v4206 = vadd.f32 %v4131, %v4205
      %4207 = vdwg.mxu0
      %v4208 = vadd.f32 %v4105, %v4204
      %v4209 = vxor.u32 %v4208, 2147483648
      %v4210 = vmul.f32 %v4209, 1.442695
      %v4211 = vpow.pop %v4210
      %v4212 = vadd.f32 %v4211, 1.0
      %v4213 = vrcp.pop %v4212
      %v4214 = vmul.f32 1.0, %v4213
      %v4215 = vmul.f32 %v4214, %v4206
      %v4217 = vrot.slane %v4105, 4
      %v4219 = vadd.f32 %v4217, %v4215
      %v4220 = vtanh.pop %v4219
      %v4221 = vsub.f32 1.0, %v4214
      %4223 = vrot.lane.b32.xlu0 %v4220, 64
      %v4224 = vpop.permute.xlu0 %4223
      %v4226 = vmul.f32 %v4221, %v4224
      %4227 = vrot.lane.b32.xlu0 %v4101, 64
      %v4228 = vpop.permute.xlu0 %4227
      %v4230 = vmul.f32 %v4214, %v4228
      %v4231 = vadd.f32 %v4226, %v4230
      %v4232 = vld [vmem:[%s49] sm:$0xff]
      %v4233 = vld [vmem:[%s49 + $0x8] sm:$0xff]
      %v4234 = vld [vmem:[%s49 + $0x10] sm:$0xff]
      %v4235 = vld [vmem:[%s49 + $0x18] sm:$0xff]
      %v4236 = vld [vmem:[%s49 + $0x20] sm:$0xff]
      %v4237 = vld [vmem:[%s49 + $0x28] sm:$0xff]
      %v4238 = vld [vmem:[%s49 + $0x30] sm:$0xff]
      %v4239 = vld [vmem:[%s49 + $0x38] sm:$0xff]
      %4241 = vrot.lane.b32.xlu0 %v4231, 64
      %v4242 = vpop.permute.xlu0 %4241
      %v4243 = vsel %vm1853, %v4242, 0
      %4245 = vmatprep.subr.mxu0 0.0
      %4246 = vmatpush1.msra.mxu0 0.0
      %4247 = vmatprep.subr.mxu0 0.0
      %4248 = vmatpush1.msra.mxu0 0.0
      %4249 = vmatprep.subr.mxu0 0.0
      %4250 = vmatpush1.msra.mxu0 0.0
      %4251 = vmatprep.subr.mxu0 0.0
      %4252 = vmatpush1.msra.mxu0 0.0
      %4253 = vmatprep.subr.mxu0 0.0
      %4254 = vmatpush1.msra.mxu0 0.0
      %4255 = vmatprep.subr.mxu0 0.0
      %4256 = vmatpush1.msra.mxu0 0.0
      %4257 = vmatprep.subr.mxu0 0.0
      %4258 = vmatpush1.msra.mxu0 0.0
      %4259 = vmatprep.subr.mxu0 0.0
      %4260 = vmatpush1.msra.mxu0 0.0
      %4261 = vmatprep.subr.mxu0 0.0
      %4262 = vmatpush1.msra.mxu0 %v4239
      %4263 = vmatprep.subr.mxu0 0.0
      %4264 = vmatpush1.msra.mxu0 %v4238
      %4265 = vmatprep.subr.mxu0 0.0
      %4266 = vmatpush1.msra.mxu0 %v4237
      %4267 = vmatprep.subr.mxu0 0.0
      %4268 = vmatpush1.msra.mxu0 %v4236
      %4269 = vmatprep.subr.mxu0 0.0
      %4270 = vmatpush1.msra.mxu0 %v4235
      %4271 = vmatprep.subr.mxu0 0.0
      %4272 = vmatpush1.msra.mxu0 %v4234
      %4273 = vmatprep.subr.mxu0 0.0
      %4274 = vmatpush1.msra.mxu0 %v4233
      %4275 = vmatprep.subr.mxu0 0.0
      %4276 = vmatpush1.msra.mxu0 %v4232
      %4277 = vmatprep.subr.mxu0 0.0
      %4278 = vmatpush2.msra.mxu0 0.0
      %4279 = vmatprep.subr.mxu0 0.0
      %4280 = vmatpush2.msra.mxu0 0.0
      %4281 = vmatprep.subr.mxu0 0.0
      %4282 = vmatpush2.msra.mxu0 0.0
      %4283 = vmatprep.subr.mxu0 0.0
      %4284 = vmatpush2.msra.mxu0 0.0
      %4285 = vmatprep.subr.mxu0 0.0
      %4286 = vmatpush2.msra.mxu0 0.0
      %4287 = vmatprep.subr.mxu0 0.0
      %4288 = vmatpush2.msra.mxu0 0.0
      %4289 = vmatprep.subr.mxu0 0.0
      %4290 = vmatpush2.msra.mxu0 0.0
      %4291 = vmatprep.subr.mxu0 0.0
      %4292 = vmatpush2.msra.mxu0 0.0
      %4293 = vmatprep.subr.mxu0 0.0
      %4294 = vmatpush2.msra.mxu0 0.0
      %4295 = vmatprep.subr.mxu0 0.0
      %4296 = vmatpush2.msra.mxu0 0.0
      %4297 = vmatprep.subr.mxu0 0.0
      %4298 = vmatpush2.msra.mxu0 0.0
      %4299 = vmatprep.subr.mxu0 0.0
      %4300 = vmatpush2.msra.mxu0 0.0
      %4301 = vmatprep.subr.mxu0 0.0
      %4302 = vmatpush2.msra.mxu0 0.0
      %4303 = vmatprep.subr.mxu0 0.0
      %4304 = vmatpush2.msra.mxu0 0.0
      %4305 = vmatprep.subr.mxu0 0.0
      %4306 = vmatpush2.msra.mxu0 0.0
      %4307 = vmatprep.subr.mxu0 0.0
      %4308 = vmatpush2.msra.mxu0 0.0
      %4309 = vmatprep.mubr.f32.mxu0 0.0
      %4310 = vmatmul.mubr.f32.gmra.mxu0 %v4243
      %v4311 = vpop.f32.mrf.mxu0
      %v4312 = vadd.f32 0.0, %v4311
      %v4313 = vpop.f32.mrf.mxu0
      %4314 = vdwg.mxu0
      %v4315 = vadd.f32 %v3903, %v4312
      %v4316 = vadd.f32 %v3904, %v4312
      %v4317 = vadd.f32 %v3905, %v4312
      %v4318 = vadd.f32 %v3906, %v4312
      %v4319 = vadd.f32 %v3907, %v4312
      %v4320 = vadd.f32 %v3908, %v4312
      %v4321 = vadd.f32 %v3909, %v4312
      %v4322 = vadd.f32 %v3910, %v4312
      %v4323 = vtanh.pop %v4315
      %v4324 = vtanh.pop %v4316
      %v4325 = vtanh.pop %v4317
      %v4326 = vtanh.pop %v4318
      %v4327 = vtanh.pop %v4319
      %v4328 = vtanh.pop %v4320
      %v4329 = vtanh.pop %v4321
      %v4330 = vtanh.pop %v4322
      %v4331 = vld [vmem:[%s51] sm:$0x1]
      %v4333 = vlaneseq
      %v4334 = vshrl.u32 %v4333, 7
      %v4335 = vsub.s32 0, %v4334
      %v4336 = vrot.slane %v4331, %v4335
      %v4338 = vmul.f32 %v4323, %v4336
      %v4339 = vmul.f32 %v4324, %v4336
      %v4340 = vmul.f32 %v4325, %v4336
      %v4341 = vmul.f32 %v4326, %v4336
      %v4342 = vmul.f32 %v4327, %v4336
      %v4343 = vmul.f32 %v4328, %v4336
      %v4344 = vmul.f32 %v4329, %v4336
      %v4345 = vmul.f32 %v4330, %v4336
      %v4346 = vsel %vm1927, %v4338, 0.0
      %4347 = vadd.xlane.f32.xlu0 %v4346
      %v4348 = vpop.xlane.xlu0 %4347
      %v4349 = vsel %vm1927, %v4339, 0.0
      %4350 = vadd.xlane.f32.xlu0 %v4349
      %v4351 = vpop.xlane.xlu0 %4350
      %v4352 = vsel %vm1927, %v4340, 0.0
      %4353 = vadd.xlane.f32.xlu0 %v4352
      %v4354 = vpop.xlane.xlu0 %4353
      %v4355 = vsel %vm1927, %v4341, 0.0
      %4356 = vadd.xlane.f32.xlu0 %v4355
      %v4357 = vpop.xlane.xlu0 %4356
      %v4358 = vsel %vm1927, %v4342, 0.0
      %4359 = vadd.xlane.f32.xlu0 %v4358
      %v4360 = vpop.xlane.xlu0 %4359
      %v4361 = vsel %vm1927, %v4343, 0.0
      %4362 = vadd.xlane.f32.xlu0 %v4361
      %v4363 = vpop.xlane.xlu0 %4362
      %v4364 = vsel %vm1927, %v4344, 0.0
      %4365 = vadd.xlane.f32.xlu0 %v4364
      %v4366 = vpop.xlane.xlu0 %4365
      %v4367 = vsel %vm1927, %v4345, 0.0
      %4368 = vadd.xlane.f32.xlu0 %v4367
      %v4369 = vpop.xlane.xlu0 %4368
      %vm4370 = vcmp.gt.f32.partialorder %v1837, 0.0
      %vm4371 = vcmp.gt.f32.partialorder %v1838, 0.0
      %vm4372 = vcmp.gt.f32.partialorder %v1839, 0.0
      %vm4373 = vcmp.gt.f32.partialorder %v1840, 0.0
      %vm4374 = vcmp.gt.f32.partialorder %v1841, 0.0
      %vm4375 = vcmp.gt.f32.partialorder %v1842, 0.0
      %vm4376 = vcmp.gt.f32.partialorder %v1843, 0.0
      %vm4377 = vcmp.gt.f32.partialorder %v1844, 0.0
      %v4378 = vsel %vm4370, %v4348, -1e+08
      %v4379 = vsel %vm4371, %v4351, -1e+08
      %v4380 = vsel %vm4372, %v4354, -1e+08
      %v4381 = vsel %vm4373, %v4357, -1e+08
      %v4382 = vsel %vm4374, %v4360, -1e+08
      %v4383 = vsel %vm4375, %v4363, -1e+08
      %v4384 = vsel %vm4376, %v4366, -1e+08
      %v4385 = vsel %vm4377, %v4369, -1e+08
      %v4386 = vsel %vm3919, %v4378, -inf
      %v4387 = vsel %vm3919, %v4379, -inf
      %v4388 = vsel %vm3919, %v4380, -inf
      %v4389 = vsel %vm3919, %v4381, -inf
      %v4390 = vsel %vm3919, %v4382, -inf
      %v4391 = vmax.f32 %v4386, %v4390
      %v4392 = vsel %vm3919, %v4383, -inf
      %v4393 = vmax.f32 %v4387, %v4392
      %v4394 = vsel %vm3919, %v4384, -inf
      %v4395 = vmax.f32 %v4388, %v4394
      %v4396 = vsel %vm3919, %v4385, -inf
      %v4397 = vmax.f32 %v4389, %v4396
      %v4398 = vmax.f32 %v4391, %v4393
      %v4399 = vmax.f32 %v4395, %v4397
      %v4400 = vmax.f32 %v4398, %v4399
      %v4401 = vsub.f32 %v4378, %v4400
      %v4402 = vsub.f32 %v4379, %v4400
      %v4403 = vsub.f32 %v4380, %v4400
      %v4404 = vsub.f32 %v4381, %v4400
      %v4405 = vsub.f32 %v4382, %v4400
      %v4406 = vsub.f32 %v4383, %v4400
      %v4407 = vsub.f32 %v4384, %v4400
      %v4408 = vsub.f32 %v4385, %v4400
      %v4409 = vmul.f32 %v4401, 1.442695
      %v4410 = vpow.pop %v4409
      %v4411 = vmul.f32 %v4402, 1.442695
      %v4412 = vpow.pop %v4411
      %v4413 = vmul.f32 %v4403, 1.442695
      %v4414 = vpow.pop %v4413
      %v4415 = vmul.f32 %v4404, 1.442695
      %v4416 = vpow.pop %v4415
      %v4417 = vmul.f32 %v4405, 1.442695
      %v4418 = vpow.pop %v4417
      %v4419 = vmul.f32 %v4406, 1.442695
      %v4420 = vpow.pop %v4419
      %v4421 = vmul.f32 %v4407, 1.442695
      %v4422 = vpow.pop %v4421
      %v4423 = vmul.f32 %v4408, 1.442695
      %v4424 = vpow.pop %v4423
      %v4425 = vsel %vm3919, %v4410, 0.0
      %v4426 = vsel %vm3919, %v4412, 0.0
      %v4427 = vadd.f32 %v4425, %v4426
      %v4428 = vsel %vm3919, %v4414, 0.0
      %v4429 = vadd.f32 %v4427, %v4428
      %v4430 = vsel %vm3919, %v4416, 0.0
      %v4431 = vadd.f32 %v4429, %v4430
      %v4432 = vsel %vm3919, %v4418, 0.0
      %v4433 = vadd.f32 %v4431, %v4432
      %v4434 = vsel %vm3919, %v4420, 0.0
      %v4435 = vadd.f32 %v4433, %v4434
      %v4436 = vsel %vm3919, %v4422, 0.0
      %v4437 = vadd.f32 %v4435, %v4436
      %v4438 = vsel %vm3919, %v4424, 0.0
      %v4439 = vadd.f32 %v4437, %v4438
      %v4440 = vrcp.pop %v4439
      %v4441 = vmul.f32 %v4410, %v4440
      %v4442 = vmul.f32 %v4412, %v4440
      %v4443 = vmul.f32 %v4414, %v4440
      %v4444 = vmul.f32 %v4416, %v4440
      %v4445 = vmul.f32 %v4418, %v4440
      %v4446 = vmul.f32 %v4420, %v4440
      %v4447 = vmul.f32 %v4422, %v4440
      %v4448 = vmul.f32 %v4424, %v4440
      %4450 = vset.pattern.permute.xlu0 0
      %4451 = vperm.xlu0 %4450, %v4441
      %v4452 = vpop.permute.xlu0 %4451
      %4455 = vset.pattern.permute.xlu0 0
      %4456 = vperm.xlu0 %4455, %v4442
      %v4457 = vpop.permute.xlu0 %4456
      %4460 = vset.pattern.permute.xlu0 0
      %4461 = vperm.xlu0 %4460, %v4443
      %v4462 = vpop.permute.xlu0 %4461
      %4465 = vset.pattern.permute.xlu0 0
      %4466 = vperm.xlu0 %4465, %v4444
      %v4467 = vpop.permute.xlu0 %4466
      %4470 = vset.pattern.permute.xlu0 0
      %4471 = vperm.xlu0 %4470, %v4445
      %v4472 = vpop.permute.xlu0 %4471
      %4475 = vset.pattern.permute.xlu0 0
      %4476 = vperm.xlu0 %4475, %v4446
      %v4477 = vpop.permute.xlu0 %4476
      %4480 = vset.pattern.permute.xlu0 0
      %4481 = vperm.xlu0 %4480, %v4447
      %v4482 = vpop.permute.xlu0 %4481
      %4485 = vset.pattern.permute.xlu0 0
      %4486 = vperm.xlu0 %4485, %v4448
      %v4487 = vpop.permute.xlu0 %4486
      %v4489 = vmul.f32 %v4452, %v1821
      %v4490 = vmul.f32 %v4457, %v1822
      %v4491 = vmul.f32 %v4462, %v1823
      %v4492 = vmul.f32 %v4467, %v1824
      %v4493 = vmul.f32 %v4472, %v1825
      %v4494 = vmul.f32 %v4477, %v1826
      %v4495 = vmul.f32 %v4482, %v1827
      %v4496 = vmul.f32 %v4487, %v1828
      %v4497 = vsel %vm1927, %v4489, 0.0
      %v4498 = vsel %vm1927, %v4490, 0.0
      %v4499 = vadd.f32 %v4497, %v4498
      %v4500 = vsel %vm1927, %v4491, 0.0
      %v4501 = vadd.f32 %v4499, %v4500
      %v4502 = vsel %vm1927, %v4492, 0.0
      %v4503 = vadd.f32 %v4501, %v4502
      %v4504 = vsel %vm1927, %v4493, 0.0
      %v4505 = vadd.f32 %v4503, %v4504
      %v4506 = vsel %vm1927, %v4494, 0.0
      %v4507 = vadd.f32 %v4505, %v4506
      %v4508 = vsel %vm1927, %v4495, 0.0
      %v4509 = vadd.f32 %v4507, %v4508
      %v4510 = vsel %vm1927, %v4496, 0.0
      %v4511 = vadd.f32 %v4509, %v4510
      %v4512 = vld [vmem:[%s53] sm:$0xff]
      %v4513 = vld [vmem:[%s53 + $0x8] sm:$0xff]
      %v4514 = vld [vmem:[%s53 + $0x10] sm:$0xff]
      %v4515 = vld [vmem:[%s53 + $0x18] sm:$0xff]
      %v4516 = vld [vmem:[%s53 + $0x20] sm:$0xff]
      %v4517 = vld [vmem:[%s53 + $0x28] sm:$0xff]
      %v4518 = vld [vmem:[%s53 + $0x30] sm:$0xff]
      %v4519 = vld [vmem:[%s53 + $0x38] sm:$0xff]
      %v4520 = vld [vmem:[%s57] sm:$0xff]
      %v4521 = vld [vmem:[%s57 + $0x8] sm:$0xff]
      %v4522 = vld [vmem:[%s57 + $0x10] sm:$0xff]
      %v4523 = vld [vmem:[%s57 + $0x18] sm:$0xff]
      %v4524 = vld [vmem:[%s57 + $0x20] sm:$0xff]
      %v4525 = vld [vmem:[%s57 + $0x28] sm:$0xff]
      %v4526 = vld [vmem:[%s57 + $0x30] sm:$0xff]
      %v4527 = vld [vmem:[%s57 + $0x38] sm:$0xff]
      %4528 = vmatprep.subr.mxu0 0.0
      %4529 = vmatpush1.msra.mxu0 0.0
      %4530 = vmatprep.subr.mxu0 0.0
      %4531 = vmatpush1.msra.mxu0 0.0
      %4532 = vmatprep.subr.mxu0 0.0
      %4533 = vmatpush1.msra.mxu0 0.0
      %4534 = vmatprep.subr.mxu0 0.0
      %4535 = vmatpush1.msra.mxu0 0.0
      %4536 = vmatprep.subr.mxu0 0.0
      %4537 = vmatpush1.msra.mxu0 0.0
      %4538 = vmatprep.subr.mxu0 0.0
      %4539 = vmatpush1.msra.mxu0 0.0
      %4540 = vmatprep.subr.mxu0 0.0
      %4541 = vmatpush1.msra.mxu0 0.0
      %4542 = vmatprep.subr.mxu0 0.0
      %4543 = vmatpush1.msra.mxu0 0.0
      %4544 = vmatprep.subr.mxu0 0.0
      %4545 = vmatpush1.msra.mxu0 %v4527
      %4546 = vmatprep.subr.mxu0 0.0
      %4547 = vmatpush1.msra.mxu0 %v4526
      %4548 = vmatprep.subr.mxu0 0.0
      %4549 = vmatpush1.msra.mxu0 %v4525
      %4550 = vmatprep.subr.mxu0 0.0
      %4551 = vmatpush1.msra.mxu0 %v4524
      %4552 = vmatprep.subr.mxu0 0.0
      %4553 = vmatpush1.msra.mxu0 %v4523
      %4554 = vmatprep.subr.mxu0 0.0
      %4555 = vmatpush1.msra.mxu0 %v4522
      %4556 = vmatprep.subr.mxu0 0.0
      %4557 = vmatpush1.msra.mxu0 %v4521
      %4558 = vmatprep.subr.mxu0 0.0
      %4559 = vmatpush1.msra.mxu0 %v4520
      %4560 = vmatprep.subr.mxu0 0.0
      %4561 = vmatpush2.msra.mxu0 0.0
      %4562 = vmatprep.subr.mxu0 0.0
      %4563 = vmatpush2.msra.mxu0 0.0
      %4564 = vmatprep.subr.mxu0 0.0
      %4565 = vmatpush2.msra.mxu0 0.0
      %4566 = vmatprep.subr.mxu0 0.0
      %4567 = vmatpush2.msra.mxu0 0.0
      %4568 = vmatprep.subr.mxu0 0.0
      %4569 = vmatpush2.msra.mxu0 0.0
      %4570 = vmatprep.subr.mxu0 0.0
      %4571 = vmatpush2.msra.mxu0 0.0
      %4572 = vmatprep.subr.mxu0 0.0
      %4573 = vmatpush2.msra.mxu0 0.0
      %4574 = vmatprep.subr.mxu0 0.0
      %4575 = vmatpush2.msra.mxu0 0.0
      %4576 = vmatprep.subr.mxu0 0.0
      %4577 = vmatpush2.msra.mxu0 0.0
      %4578 = vmatprep.subr.mxu0 0.0
      %4579 = vmatpush2.msra.mxu0 0.0
      %4580 = vmatprep.subr.mxu0 0.0
      %4581 = vmatpush2.msra.mxu0 0.0
      %4582 = vmatprep.subr.mxu0 0.0
      %4583 = vmatpush2.msra.mxu0 0.0
      %4584 = vmatprep.subr.mxu0 0.0
      %4585 = vmatpush2.msra.mxu0 0.0
      %4586 = vmatprep.subr.mxu0 0.0
      %4587 = vmatpush2.msra.mxu0 0.0
      %4588 = vmatprep.subr.mxu0 0.0
      %4589 = vmatpush2.msra.mxu0 0.0
      %4590 = vmatprep.subr.mxu0 0.0
      %4591 = vmatpush2.msra.mxu0 0.0
      %4592 = vmatprep.mubr.f32.mxu0 0.0
      %4593 = vmatmul.mubr.f32.gmra.mxu0 %v4243
      %v4594 = vpop.f32.mrf.mxu0
      %v4595 = vadd.f32 0.0, %v4594
      %v4596 = vpop.f32.mrf.mxu0
      %4597 = vdwg.mxu0
      %v4598 = vadd.f32 %v3911, %v4595
      %v4599 = vadd.f32 %v3912, %v4595
      %v4600 = vadd.f32 %v3913, %v4595
      %v4601 = vadd.f32 %v3914, %v4595
      %v4602 = vadd.f32 %v3915, %v4595
      %v4603 = vadd.f32 %v3916, %v4595
      %v4604 = vadd.f32 %v3917, %v4595
      %v4605 = vadd.f32 %v3918, %v4595
      %v4606 = vtanh.pop %v4598
      %v4607 = vtanh.pop %v4599
      %v4608 = vtanh.pop %v4600
      %v4609 = vtanh.pop %v4601
      %v4610 = vtanh.pop %v4602
      %v4611 = vtanh.pop %v4603
      %v4612 = vtanh.pop %v4604
      %v4613 = vtanh.pop %v4605
      %v4614 = vld [vmem:[%s59] sm:$0x1]
      %v4616 = vlaneseq
      %v4617 = vshrl.u32 %v4616, 7
      %v4618 = vsub.s32 0, %v4617
      %v4619 = vrot.slane %v4614, %v4618
      %v4621 = vmul.f32 %v4606, %v4619
      %v4622 = vmul.f32 %v4607, %v4619
      %v4623 = vmul.f32 %v4608, %v4619
      %v4624 = vmul.f32 %v4609, %v4619
      %v4625 = vmul.f32 %v4610, %v4619
      %v4626 = vmul.f32 %v4611, %v4619
      %v4627 = vmul.f32 %v4612, %v4619
      %v4628 = vmul.f32 %v4613, %v4619
      %v4629 = vsel %vm1927, %v4621, 0.0
      %4630 = vadd.xlane.f32.xlu0 %v4629
      %v4631 = vpop.xlane.xlu0 %4630
      %v4632 = vsel %vm1927, %v4622, 0.0
      %4633 = vadd.xlane.f32.xlu0 %v4632
      %v4634 = vpop.xlane.xlu0 %4633
      %v4635 = vsel %vm1927, %v4623, 0.0
      %4636 = vadd.xlane.f32.xlu0 %v4635
      %v4637 = vpop.xlane.xlu0 %4636
      %v4638 = vsel %vm1927, %v4624, 0.0
      %4639 = vadd.xlane.f32.xlu0 %v4638
      %v4640 = vpop.xlane.xlu0 %4639
      %v4641 = vsel %vm1927, %v4625, 0.0
      %4642 = vadd.xlane.f32.xlu0 %v4641
      %v4643 = vpop.xlane.xlu0 %4642
      %v4644 = vsel %vm1927, %v4626, 0.0
      %4645 = vadd.xlane.f32.xlu0 %v4644
      %v4646 = vpop.xlane.xlu0 %4645
      %v4647 = vsel %vm1927, %v4627, 0.0
      %4648 = vadd.xlane.f32.xlu0 %v4647
      %v4649 = vpop.xlane.xlu0 %4648
      %v4650 = vsel %vm1927, %v4628, 0.0
      %4651 = vadd.xlane.f32.xlu0 %v4650
      %v4652 = vpop.xlane.xlu0 %4651
      %v4653 = vsel %vm3287, %v4631, -inf
      %v4654 = vsel %vm3287, %v4634, -inf
      %v4655 = vsel %vm3287, %v4637, -inf
      %v4656 = vsel %vm3287, %v4640, -inf
      %v4657 = vsel %vm3287, %v4643, -inf
      %v4658 = vmax.f32 %v4653, %v4657
      %v4659 = vsel %vm3287, %v4646, -inf
      %v4660 = vmax.f32 %v4654, %v4659
      %v4661 = vsel %vm3287, %v4649, -inf
      %v4662 = vmax.f32 %v4655, %v4661
      %v4663 = vsel %vm3287, %v4652, -inf
      %v4664 = vmax.f32 %v4656, %v4663
      %v4665 = vmax.f32 %v4658, %v4660
      %v4666 = vmax.f32 %v4662, %v4664
      %v4667 = vmax.f32 %v4665, %v4666
      %v4668 = vsub.f32 %v4631, %v4667
      %v4669 = vsub.f32 %v4634, %v4667
      %v4670 = vsub.f32 %v4637, %v4667
      %v4671 = vsub.f32 %v4640, %v4667
      %v4672 = vsub.f32 %v4643, %v4667
      %v4673 = vsub.f32 %v4646, %v4667
      %v4674 = vsub.f32 %v4649, %v4667
      %v4675 = vsub.f32 %v4652, %v4667
      %v4676 = vmul.f32 %v4668, 1.442695
      %v4677 = vpow.pop %v4676
      %v4678 = vmul.f32 %v4669, 1.442695
      %v4679 = vpow.pop %v4678
      %v4680 = vmul.f32 %v4670, 1.442695
      %v4681 = vpow.pop %v4680
      %v4682 = vmul.f32 %v4671, 1.442695
      %v4683 = vpow.pop %v4682
      %v4684 = vmul.f32 %v4672, 1.442695
      %v4685 = vpow.pop %v4684
      %v4686 = vmul.f32 %v4673, 1.442695
      %v4687 = vpow.pop %v4686
      %v4688 = vmul.f32 %v4674, 1.442695
      %v4689 = vpow.pop %v4688
      %v4690 = vmul.f32 %v4675, 1.442695
      %v4691 = vpow.pop %v4690
      %v4692 = vsel %vm3287, %v4677, 0.0
      %v4693 = vsel %vm3287, %v4679, 0.0
      %v4694 = vadd.f32 %v4692, %v4693
      %v4695 = vsel %vm3287, %v4681, 0.0
      %v4696 = vadd.f32 %v4694, %v4695
      %v4697 = vsel %vm3287, %v4683, 0.0
      %v4698 = vadd.f32 %v4696, %v4697
      %v4699 = vsel %vm3287, %v4685, 0.0
      %v4700 = vadd.f32 %v4698, %v4699
      %v4701 = vsel %vm3287, %v4687, 0.0
      %v4702 = vadd.f32 %v4700, %v4701
      %v4703 = vsel %vm3287, %v4689, 0.0
      %v4704 = vadd.f32 %v4702, %v4703
      %v4705 = vsel %vm3287, %v4691, 0.0
      %v4706 = vadd.f32 %v4704, %v4705
      %v4707 = vrcp.pop %v4706
      %v4708 = vmul.f32 %v4677, %v4707
      %v4709 = vmul.f32 %v4679, %v4707
      %v4710 = vmul.f32 %v4681, %v4707
      %v4711 = vmul.f32 %v4683, %v4707
      %v4712 = vmul.f32 %v4685, %v4707
      %v4713 = vmul.f32 %v4687, %v4707
      %v4714 = vmul.f32 %v4689, %v4707
      %v4715 = vmul.f32 %v4691, %v4707
      %v4716 = vmul.f32 %v4708, %v1829
      %v4717 = vmul.f32 %v4709, %v1830
      %v4718 = vmul.f32 %v4710, %v1831
      %v4719 = vmul.f32 %v4711, %v1832
      %v4720 = vmul.f32 %v4712, %v1833
      %v4721 = vmul.f32 %v4713, %v1834
      %v4722 = vmul.f32 %v4714, %v1835
      %v4723 = vmul.f32 %v4715, %v1836
      %v4724 = vsel %vm1927, %v4716, 0.0
      %v4725 = vsel %vm1927, %v4717, 0.0
      %v4726 = vadd.f32 %v4724, %v4725
      %v4727 = vsel %vm1927, %v4718, 0.0
      %v4728 = vadd.f32 %v4726, %v4727
      %v4729 = vsel %vm1927, %v4719, 0.0
      %v4730 = vadd.f32 %v4728, %v4729
      %v4731 = vsel %vm1927, %v4720, 0.0
      %v4732 = vadd.f32 %v4730, %v4731
      %v4733 = vsel %vm1927, %v4721, 0.0
      %v4734 = vadd.f32 %v4732, %v4733
      %v4735 = vsel %vm1927, %v4722, 0.0
      %v4736 = vadd.f32 %v4734, %v4735
      %v4737 = vsel %vm1927, %v4723, 0.0
      %v4738 = vadd.f32 %v4736, %v4737
      %v4739 = vld [vmem:[%s61] sm:$0xff]
      %v4740 = vld [vmem:[%s61 + $0x8] sm:$0xff]
      %v4741 = vld [vmem:[%s61 + $0x10] sm:$0xff]
      %v4742 = vld [vmem:[%s61 + $0x18] sm:$0xff]
      %v4743 = vld [vmem:[%s61 + $0x20] sm:$0xff]
      %v4744 = vld [vmem:[%s61 + $0x28] sm:$0xff]
      %v4745 = vld [vmem:[%s61 + $0x30] sm:$0xff]
      %v4746 = vld [vmem:[%s61 + $0x38] sm:$0xff]
      %v4748 = vsel %vm1853, %v4738, 0
      %4750 = vmatprep.subr.mxu0 0.0
      %4751 = vmatpush1.msra.mxu0 0.0
      %4752 = vmatprep.subr.mxu0 0.0
      %4753 = vmatpush1.msra.mxu0 0.0
      %4754 = vmatprep.subr.mxu0 0.0
      %4755 = vmatpush1.msra.mxu0 0.0
      %4756 = vmatprep.subr.mxu0 0.0
      %4757 = vmatpush1.msra.mxu0 0.0
      %4758 = vmatprep.subr.mxu0 0.0
      %4759 = vmatpush1.msra.mxu0 0.0
      %4760 = vmatprep.subr.mxu0 0.0
      %4761 = vmatpush1.msra.mxu0 0.0
      %4762 = vmatprep.subr.mxu0 0.0
      %4763 = vmatpush1.msra.mxu0 0.0
      %4764 = vmatprep.subr.mxu0 0.0
      %4765 = vmatpush1.msra.mxu0 0.0
      %4766 = vmatprep.subr.mxu0 0.0
      %4767 = vmatpush1.msra.mxu0 %v4746
      %4768 = vmatprep.subr.mxu0 0.0
      %4769 = vmatpush1.msra.mxu0 %v4745
      %4770 = vmatprep.subr.mxu0 0.0
      %4771 = vmatpush1.msra.mxu0 %v4744
      %4772 = vmatprep.subr.mxu0 0.0
      %4773 = vmatpush1.msra.mxu0 %v4743
      %4774 = vmatprep.subr.mxu0 0.0
      %4775 = vmatpush1.msra.mxu0 %v4742
      %4776 = vmatprep.subr.mxu0 0.0
      %4777 = vmatpush1.msra.mxu0 %v4741
      %4778 = vmatprep.subr.mxu0 0.0
      %4779 = vmatpush1.msra.mxu0 %v4740
      %4780 = vmatprep.subr.mxu0 0.0
      %4781 = vmatpush1.msra.mxu0 %v4739
      %4782 = vmatprep.subr.mxu0 0.0
      %4783 = vmatpush2.msra.mxu0 0.0
      %4784 = vmatprep.subr.mxu0 0.0
      %4785 = vmatpush2.msra.mxu0 0.0
      %4786 = vmatprep.subr.mxu0 0.0
      %4787 = vmatpush2.msra.mxu0 0.0
      %4788 = vmatprep.subr.mxu0 0.0
      %4789 = vmatpush2.msra.mxu0 0.0
      %4790 = vmatprep.subr.mxu0 0.0
      %4791 = vmatpush2.msra.mxu0 0.0
      %4792 = vmatprep.subr.mxu0 0.0
      %4793 = vmatpush2.msra.mxu0 0.0
      %4794 = vmatprep.subr.mxu0 0.0
      %4795 = vmatpush2.msra.mxu0 0.0
      %4796 = vmatprep.subr.mxu0 0.0
      %4797 = vmatpush2.msra.mxu0 0.0
      %4798 = vmatprep.subr.mxu0 0.0
      %4799 = vmatpush2.msra.mxu0 0.0
      %4800 = vmatprep.subr.mxu0 0.0
      %4801 = vmatpush2.msra.mxu0 0.0
      %4802 = vmatprep.subr.mxu0 0.0
      %4803 = vmatpush2.msra.mxu0 0.0
      %4804 = vmatprep.subr.mxu0 0.0
      %4805 = vmatpush2.msra.mxu0 0.0
      %4806 = vmatprep.subr.mxu0 0.0
      %4807 = vmatpush2.msra.mxu0 0.0
      %4808 = vmatprep.subr.mxu0 0.0
      %4809 = vmatpush2.msra.mxu0 0.0
      %4810 = vmatprep.subr.mxu0 0.0
      %4811 = vmatpush2.msra.mxu0 0.0
      %4812 = vmatprep.subr.mxu0 0.0
      %4813 = vmatpush2.msra.mxu0 0.0
      %4814 = vmatprep.mubr.f32.mxu0 0.0
      %4815 = vmatmul.mubr.f32.gmra.mxu0 %v4748
      %v4816 = vpop.f32.mrf.mxu0
      %v4817 = vadd.f32 0.0, %v4816
      %v4818 = vpop.f32.mrf.mxu0
      %4819 = vdwg.mxu0
      %v4821 = vsel %vm1853, %v4511, 0
      %4823 = vmatprep.subr.mxu0 0.0
      %4824 = vmatpush1.msra.mxu0 0.0
      %4825 = vmatprep.subr.mxu0 0.0
      %4826 = vmatpush1.msra.mxu0 0.0
      %4827 = vmatprep.subr.mxu0 0.0
      %4828 = vmatpush1.msra.mxu0 0.0
      %4829 = vmatprep.subr.mxu0 0.0
      %4830 = vmatpush1.msra.mxu0 0.0
      %4831 = vmatprep.subr.mxu0 0.0
      %4832 = vmatpush1.msra.mxu0 0.0
      %4833 = vmatprep.subr.mxu0 0.0
      %4834 = vmatpush1.msra.mxu0 0.0
      %4835 = vmatprep.subr.mxu0 0.0
      %4836 = vmatpush1.msra.mxu0 0.0
      %4837 = vmatprep.subr.mxu0 0.0
      %4838 = vmatpush1.msra.mxu0 0.0
      %4839 = vmatprep.subr.mxu0 0.0
      %4840 = vmatpush1.msra.mxu0 %v4519
      %4841 = vmatprep.subr.mxu0 0.0
      %4842 = vmatpush1.msra.mxu0 %v4518
      %4843 = vmatprep.subr.mxu0 0.0
      %4844 = vmatpush1.msra.mxu0 %v4517
      %4845 = vmatprep.subr.mxu0 0.0
      %4846 = vmatpush1.msra.mxu0 %v4516
      %4847 = vmatprep.subr.mxu0 0.0
      %4848 = vmatpush1.msra.mxu0 %v4515
      %4849 = vmatprep.subr.mxu0 0.0
      %4850 = vmatpush1.msra.mxu0 %v4514
      %4851 = vmatprep.subr.mxu0 0.0
      %4852 = vmatpush1.msra.mxu0 %v4513
      %4853 = vmatprep.subr.mxu0 0.0
      %4854 = vmatpush1.msra.mxu0 %v4512
      %4855 = vmatprep.subr.mxu0 0.0
      %4856 = vmatpush2.msra.mxu0 0.0
      %4857 = vmatprep.subr.mxu0 0.0
      %4858 = vmatpush2.msra.mxu0 0.0
      %4859 = vmatprep.subr.mxu0 0.0
      %4860 = vmatpush2.msra.mxu0 0.0
      %4861 = vmatprep.subr.mxu0 0.0
      %4862 = vmatpush2.msra.mxu0 0.0
      %4863 = vmatprep.subr.mxu0 0.0
      %4864 = vmatpush2.msra.mxu0 0.0
      %4865 = vmatprep.subr.mxu0 0.0
      %4866 = vmatpush2.msra.mxu0 0.0
      %4867 = vmatprep.subr.mxu0 0.0
      %4868 = vmatpush2.msra.mxu0 0.0
      %4869 = vmatprep.subr.mxu0 0.0
      %4870 = vmatpush2.msra.mxu0 0.0
      %4871 = vmatprep.subr.mxu0 0.0
      %4872 = vmatpush2.msra.mxu0 0.0
      %4873 = vmatprep.subr.mxu0 0.0
      %4874 = vmatpush2.msra.mxu0 0.0
      %4875 = vmatprep.subr.mxu0 0.0
      %4876 = vmatpush2.msra.mxu0 0.0
      %4877 = vmatprep.subr.mxu0 0.0
      %4878 = vmatpush2.msra.mxu0 0.0
      %4879 = vmatprep.subr.mxu0 0.0
      %4880 = vmatpush2.msra.mxu0 0.0
      %4881 = vmatprep.subr.mxu0 0.0
      %4882 = vmatpush2.msra.mxu0 0.0
      %4883 = vmatprep.subr.mxu0 0.0
      %4884 = vmatpush2.msra.mxu0 0.0
      %4885 = vmatprep.subr.mxu0 0.0
      %4886 = vmatpush2.msra.mxu0 0.0
      %4887 = vmatprep.mubr.f32.mxu0 0.0
      %4888 = vmatmul.mubr.f32.gmra.mxu0 %v4821
      %v4889 = vpop.f32.mrf.mxu0
      %v4890 = vadd.f32 %v4817, %v4889
      %v4891 = vpop.f32.mrf.mxu0
      %4892 = vdwg.mxu0
      %v4893 = vld [vmem:[%s39] sm:$0xff]
      %v4894 = vld [vmem:[%s39 + $0x8] sm:$0xff]
      %v4895 = vld [vmem:[%s39 + $0x10] sm:$0xff]
      %v4896 = vld [vmem:[%s39 + $0x18] sm:$0xff]
      %v4897 = vld [vmem:[%s39 + $0x20] sm:$0xff]
      %v4898 = vld [vmem:[%s39 + $0x28] sm:$0xff]
      %v4899 = vld [vmem:[%s39 + $0x30] sm:$0xff]
      %v4900 = vld [vmem:[%s39 + $0x38] sm:$0xff]
      %v4901 = vld [vmem:[%s39 + $0x40] sm:$0xff]
      %v4902 = vld [vmem:[%s39 + $0x48] sm:$0xff]
      %v4903 = vld [vmem:[%s39 + $0x50] sm:$0xff]
      %v4904 = vld [vmem:[%s39 + $0x58] sm:$0xff]
      %v4905 = vld [vmem:[%s39 + $0x60] sm:$0xff]
      %v4906 = vld [vmem:[%s39 + $0x68] sm:$0xff]
      %v4907 = vld [vmem:[%s39 + $0x70] sm:$0xff]
      %v4908 = vld [vmem:[%s39 + $0x78] sm:$0xff]
      %v4909 = vld [vmem:[%s43] sm:$0x3]
      %v4911 = vlaneseq
      %v4912 = vshrl.u32 %v4911, 7
      %v4913 = vsub.s32 0, %v4912
      %v4914 = vrot.slane %v4909, %v4913
      %v4915 = vlaneseq
      %v4916 = vshrl.u32 %v4915, 7
      %v4917 = vsub.s32 1, %v4916
      %v4918 = vrot.slane %v4909, %v4917
      %v4922 = vsel %vm1853, %v4890, 0
      %4924 = vmatprep.subr.mxu0 0.0
      %4925 = vmatpush1.msra.mxu0 0.0
      %4926 = vmatprep.subr.mxu0 0.0
      %4927 = vmatpush1.msra.mxu0 0.0
      %4928 = vmatprep.subr.mxu0 0.0
      %4929 = vmatpush1.msra.mxu0 0.0
      %4930 = vmatprep.subr.mxu0 0.0
      %4931 = vmatpush1.msra.mxu0 0.0
      %4932 = vmatprep.subr.mxu0 0.0
      %4933 = vmatpush1.msra.mxu0 0.0
      %4934 = vmatprep.subr.mxu0 0.0
      %4935 = vmatpush1.msra.mxu0 0.0
      %4936 = vmatprep.subr.mxu0 0.0
      %4937 = vmatpush1.msra.mxu0 0.0
      %4938 = vmatprep.subr.mxu0 0.0
      %4939 = vmatpush1.msra.mxu0 0.0
      %4940 = vmatprep.subr.mxu0 %v4908
      %4941 = vmatpush1.msra.mxu0 %v4907
      %4942 = vmatprep.subr.mxu0 %v4906
      %4943 = vmatpush1.msra.mxu0 %v4905
      %4944 = vmatprep.subr.mxu0 %v4904
      %4945 = vmatpush1.msra.mxu0 %v4903
      %4946 = vmatprep.subr.mxu0 %v4902
      %4947 = vmatpush1.msra.mxu0 %v4901
      %4948 = vmatprep.subr.mxu0 %v4900
      %4949 = vmatpush1.msra.mxu0 %v4899
      %4950 = vmatprep.subr.mxu0 %v4898
      %4951 = vmatpush1.msra.mxu0 %v4897
      %4952 = vmatprep.subr.mxu0 %v4896
      %4953 = vmatpush1.msra.mxu0 %v4895
      %4954 = vmatprep.subr.mxu0 %v4894
      %4955 = vmatpush1.msra.mxu0 %v4893
      %4956 = vmatprep.subr.mxu0 0.0
      %4957 = vmatpush2.msra.mxu0 0.0
      %4958 = vmatprep.subr.mxu0 0.0
      %4959 = vmatpush2.msra.mxu0 0.0
      %4960 = vmatprep.subr.mxu0 0.0
      %4961 = vmatpush2.msra.mxu0 0.0
      %4962 = vmatprep.subr.mxu0 0.0
      %4963 = vmatpush2.msra.mxu0 0.0
      %4964 = vmatprep.subr.mxu0 0.0
      %4965 = vmatpush2.msra.mxu0 0.0
      %4966 = vmatprep.subr.mxu0 0.0
      %4967 = vmatpush2.msra.mxu0 0.0
      %4968 = vmatprep.subr.mxu0 0.0
      %4969 = vmatpush2.msra.mxu0 0.0
      %4970 = vmatprep.subr.mxu0 0.0
      %4971 = vmatpush2.msra.mxu0 0.0
      %4972 = vmatprep.subr.mxu0 0.0
      %4973 = vmatpush2.msra.mxu0 0.0
      %4974 = vmatprep.subr.mxu0 0.0
      %4975 = vmatpush2.msra.mxu0 0.0
      %4976 = vmatprep.subr.mxu0 0.0
      %4977 = vmatpush2.msra.mxu0 0.0
      %4978 = vmatprep.subr.mxu0 0.0
      %4979 = vmatpush2.msra.mxu0 0.0
      %4980 = vmatprep.subr.mxu0 0.0
      %4981 = vmatpush2.msra.mxu0 0.0
      %4982 = vmatprep.subr.mxu0 0.0
      %4983 = vmatpush2.msra.mxu0 0.0
      %4984 = vmatprep.subr.mxu0 0.0
      %4985 = vmatpush2.msra.mxu0 0.0
      %4986 = vmatprep.subr.mxu0 0.0
      %4987 = vmatpush2.msra.mxu0 0.0
      %4988 = vmatprep.mubr.f32.mxu0 0.0
      %4989 = vmatmul.mubr.f32.gmra.mxu0 %v4922
      %v4990 = vpop.f32.mrf.mxu0
      %v4991 = vadd.f32 %v4914, %v4990
      %v4992 = vpop.f32.mrf.mxu0
      %v4993 = vadd.f32 %v4918, %v4992
      %4994 = vdwg.mxu0
      %v4995 = vld [vmem:[%s41] sm:$0xff]
      %v4996 = vld [vmem:[%s41 + $0x8] sm:$0xff]
      %v4997 = vld [vmem:[%s41 + $0x10] sm:$0xff]
      %v4998 = vld [vmem:[%s41 + $0x18] sm:$0xff]
      %v4999 = vld [vmem:[%s41 + $0x20] sm:$0xff]
      %v5000 = vld [vmem:[%s41 + $0x28] sm:$0xff]
      %v5001 = vld [vmem:[%s41 + $0x30] sm:$0xff]
      %v5002 = vld [vmem:[%s41 + $0x38] sm:$0xff]
      %v5003 = vld [vmem:[%s41 + $0x40] sm:$0xff]
      %v5004 = vld [vmem:[%s41 + $0x48] sm:$0xff]
      %v5005 = vld [vmem:[%s41 + $0x50] sm:$0xff]
      %v5006 = vld [vmem:[%s41 + $0x58] sm:$0xff]
      %v5007 = vld [vmem:[%s41 + $0x60] sm:$0xff]
      %v5008 = vld [vmem:[%s41 + $0x68] sm:$0xff]
      %v5009 = vld [vmem:[%s41 + $0x70] sm:$0xff]
      %v5010 = vld [vmem:[%s41 + $0x78] sm:$0xff]
      %v5011 = vld [vmem:[%s45] sm:$0x3]
      %v5013 = vlaneseq
      %v5014 = vshrl.u32 %v5013, 7
      %v5015 = vsub.s32 0, %v5014
      %v5016 = vrot.slane %v5011, %v5015
      %v5017 = vlaneseq
      %v5018 = vshrl.u32 %v5017, 7
      %v5019 = vsub.s32 1, %v5018
      %v5020 = vrot.slane %v5011, %v5019
      %5023 = vmatprep.subr.mxu0 0.0
      %5024 = vmatpush1.msra.mxu0 0.0
      %5025 = vmatprep.subr.mxu0 0.0
      %5026 = vmatpush1.msra.mxu0 0.0
      %5027 = vmatprep.subr.mxu0 0.0
      %5028 = vmatpush1.msra.mxu0 0.0
      %5029 = vmatprep.subr.mxu0 0.0
      %5030 = vmatpush1.msra.mxu0 0.0
      %5031 = vmatprep.subr.mxu0 0.0
      %5032 = vmatpush1.msra.mxu0 0.0
      %5033 = vmatprep.subr.mxu0 0.0
      %5034 = vmatpush1.msra.mxu0 0.0
      %5035 = vmatprep.subr.mxu0 0.0
      %5036 = vmatpush1.msra.mxu0 0.0
      %5037 = vmatprep.subr.mxu0 0.0
      %5038 = vmatpush1.msra.mxu0 0.0
      %5039 = vmatprep.subr.mxu0 %v5010
      %5040 = vmatpush1.msra.mxu0 %v5009
      %5041 = vmatprep.subr.mxu0 %v5008
      %5042 = vmatpush1.msra.mxu0 %v5007
      %5043 = vmatprep.subr.mxu0 %v5006
      %5044 = vmatpush1.msra.mxu0 %v5005
      %5045 = vmatprep.subr.mxu0 %v5004
      %5046 = vmatpush1.msra.mxu0 %v5003
      %5047 = vmatprep.subr.mxu0 %v5002
      %5048 = vmatpush1.msra.mxu0 %v5001
      %5049 = vmatprep.subr.mxu0 %v5000
      %5050 = vmatpush1.msra.mxu0 %v4999
      %5051 = vmatprep.subr.mxu0 %v4998
      %5052 = vmatpush1.msra.mxu0 %v4997
      %5053 = vmatprep.subr.mxu0 %v4996
      %5054 = vmatpush1.msra.mxu0 %v4995
      %5055 = vmatprep.subr.mxu0 0.0
      %5056 = vmatpush2.msra.mxu0 0.0
      %5057 = vmatprep.subr.mxu0 0.0
      %5058 = vmatpush2.msra.mxu0 0.0
      %5059 = vmatprep.subr.mxu0 0.0
      %5060 = vmatpush2.msra.mxu0 0.0
      %5061 = vmatprep.subr.mxu0 0.0
      %5062 = vmatpush2.msra.mxu0 0.0
      %5063 = vmatprep.subr.mxu0 0.0
      %5064 = vmatpush2.msra.mxu0 0.0
      %5065 = vmatprep.subr.mxu0 0.0
      %5066 = vmatpush2.msra.mxu0 0.0
      %5067 = vmatprep.subr.mxu0 0.0
      %5068 = vmatpush2.msra.mxu0 0.0
      %5069 = vmatprep.subr.mxu0 0.0
      %5070 = vmatpush2.msra.mxu0 0.0
      %5071 = vmatprep.subr.mxu0 0.0
      %5072 = vmatpush2.msra.mxu0 0.0
      %5073 = vmatprep.subr.mxu0 0.0
      %5074 = vmatpush2.msra.mxu0 0.0
      %5075 = vmatprep.subr.mxu0 0.0
      %5076 = vmatpush2.msra.mxu0 0.0
      %5077 = vmatprep.subr.mxu0 0.0
      %5078 = vmatpush2.msra.mxu0 0.0
      %5079 = vmatprep.subr.mxu0 0.0
      %5080 = vmatpush2.msra.mxu0 0.0
      %5081 = vmatprep.subr.mxu0 0.0
      %5082 = vmatpush2.msra.mxu0 0.0
      %5083 = vmatprep.subr.mxu0 0.0
      %5084 = vmatpush2.msra.mxu0 0.0
      %5085 = vmatprep.subr.mxu0 0.0
      %5086 = vmatpush2.msra.mxu0 0.0
      %5087 = vmatprep.mubr.f32.mxu0 0.0
      %5088 = vmatmul.mubr.f32.gmra.mxu0 %v4243
      %v5089 = vpop.f32.mrf.mxu0
      %v5090 = vadd.f32 %v5016, %v5089
      %v5091 = vpop.f32.mrf.mxu0
      %v5092 = vadd.f32 %v5020, %v5091
      %5093 = vdwg.mxu0
      %v5094 = vadd.f32 %v4991, %v5090
      %v5095 = vxor.u32 %v5094, 2147483648
      %v5096 = vmul.f32 %v5095, 1.442695
      %v5097 = vpow.pop %v5096
      %v5098 = vadd.f32 %v5097, 1.0
      %v5099 = vrcp.pop %v5098
      %v5100 = vmul.f32 1.0, %v5099
      %v5101 = vmul.f32 %v5100, %v5092
      %v5102 = vadd.f32 %v4993, %v5101
      %v5103 = vtanh.pop %v5102
      %v5104 = vsub.f32 1.0, %v5100
      %5106 = vrot.lane.b32.xlu0 %v5103, 64
      %v5107 = vpop.permute.xlu0 %5106
      %v5109 = vmul.f32 %v5104, %v5107
      %v5110 = vmul.f32 %v5100, %v4231
      %v5111 = vadd.f32 %v5109, %v5110
      %5113 = vrot.lane.b32.xlu0 %v5111, 64
      %v5114 = vpop.permute.xlu0 %5113
      %s5116 = smul.u32 %s4096, 4
      %s5117 = scalar_lea.vmem [#allocation9], %s5116
      %5118 = vst.msk [vmem:[%s5117] sm:$0xf] %vm1927, %v5114
    $region160: #{amnmt_forward.1} parent=1 // loop_footer
      %s4100 = sadd.s32 1, %s4096
    $region161: #{amnmt_forward.1} parent=1 // loop_footer_branch
      %4095 = sbr.rel target = $region157
    $region162: #{amnmt_forward.1} parent=1 // loop_exit
      _
    %v5119 = vld [vmem:[#allocation9] sm:$0xf]
    %v5120 = vld [vmem:[%s63] sm:$0xff]
    %v5121 = vld [vmem:[%s63 + $0x8] sm:$0xff]
    %v5122 = vld [vmem:[%s63 + $0x10] sm:$0xff]
    %v5123 = vld [vmem:[%s63 + $0x18] sm:$0xff]
    %v5124 = vld [vmem:[%s63 + $0x20] sm:$0xff]
    %v5125 = vld [vmem:[%s63 + $0x28] sm:$0xff]
    %v5126 = vld [vmem:[%s63 + $0x30] sm:$0xff]
    %v5127 = vld [vmem:[%s63 + $0x38] sm:$0xff]
    %v5128 = vld [vmem:[%s65] sm:$0x1]
    %v5130 = vlaneseq
    %v5131 = vshrl.u32 %v5130, 7
    %v5132 = vsub.s32 0, %v5131
    %v5133 = vrot.slane %v5128, %v5132
    %v5136 = vsel %vm1853, %v5119, 0
    %5138 = vmatprep.subr.mxu0 0.0
    %5139 = vmatpush1.msra.mxu0 0.0
    %5140 = vmatprep.subr.mxu0 0.0
    %5141 = vmatpush1.msra.mxu0 0.0
    %5142 = vmatprep.subr.mxu0 0.0
    %5143 = vmatpush1.msra.mxu0 0.0
    %5144 = vmatprep.subr.mxu0 0.0
    %5145 = vmatpush1.msra.mxu0 0.0
    %5146 = vmatprep.subr.mxu0 0.0
    %5147 = vmatpush1.msra.mxu0 0.0
    %5148 = vmatprep.subr.mxu0 0.0
    %5149 = vmatpush1.msra.mxu0 0.0
    %5150 = vmatprep.subr.mxu0 0.0
    %5151 = vmatpush1.msra.mxu0 0.0
    %5152 = vmatprep.subr.mxu0 0.0
    %5153 = vmatpush1.msra.mxu0 0.0
    %5154 = vmatprep.subr.mxu0 0.0
    %5155 = vmatpush1.msra.mxu0 %v5127
    %5156 = vmatprep.subr.mxu0 0.0
    %5157 = vmatpush1.msra.mxu0 %v5126
    %5158 = vmatprep.subr.mxu0 0.0
    %5159 = vmatpush1.msra.mxu0 %v5125
    %5160 = vmatprep.subr.mxu0 0.0
    %5161 = vmatpush1.msra.mxu0 %v5124
    %5162 = vmatprep.subr.mxu0 0.0
    %5163 = vmatpush1.msra.mxu0 %v5123
    %5164 = vmatprep.subr.mxu0 0.0
    %5165 = vmatpush1.msra.mxu0 %v5122
    %5166 = vmatprep.subr.mxu0 0.0
    %5167 = vmatpush1.msra.mxu0 %v5121
    %5168 = vmatprep.subr.mxu0 0.0
    %5169 = vmatpush1.msra.mxu0 %v5120
    %5170 = vmatprep.subr.mxu0 0.0
    %5171 = vmatpush2.msra.mxu0 0.0
    %5172 = vmatprep.subr.mxu0 0.0
    %5173 = vmatpush2.msra.mxu0 0.0
    %5174 = vmatprep.subr.mxu0 0.0
    %5175 = vmatpush2.msra.mxu0 0.0
    %5176 = vmatprep.subr.mxu0 0.0
    %5177 = vmatpush2.msra.mxu0 0.0
    %5178 = vmatprep.subr.mxu0 0.0
    %5179 = vmatpush2.msra.mxu0 0.0
    %5180 = vmatprep.subr.mxu0 0.0
    %5181 = vmatpush2.msra.mxu0 0.0
    %5182 = vmatprep.subr.mxu0 0.0
    %5183 = vmatpush2.msra.mxu0 0.0
    %5184 = vmatprep.subr.mxu0 0.0
    %5185 = vmatpush2.msra.mxu0 0.0
    %5186 = vmatprep.subr.mxu0 0.0
    %5187 = vmatpush2.msra.mxu0 0.0
    %5188 = vmatprep.subr.mxu0 0.0
    %5189 = vmatpush2.msra.mxu0 0.0
    %5190 = vmatprep.subr.mxu0 0.0
    %5191 = vmatpush2.msra.mxu0 0.0
    %5192 = vmatprep.subr.mxu0 0.0
    %5193 = vmatpush2.msra.mxu0 0.0
    %5194 = vmatprep.subr.mxu0 0.0
    %5195 = vmatpush2.msra.mxu0 0.0
    %5196 = vmatprep.subr.mxu0 0.0
    %5197 = vmatpush2.msra.mxu0 0.0
    %5198 = vmatprep.subr.mxu0 0.0
    %5199 = vmatpush2.msra.mxu0 0.0
    %5200 = vmatprep.subr.mxu0 0.0
    %5201 = vmatpush2.msra.mxu0 0.0
    %5202 = vmatprep.mubr.f32.mxu0 0.0
    %5203 = vmatmul.mubr.f32.gmra.mxu0 %v5136
    %v5204 = vpop.f32.mrf.mxu0
    %v5205 = vadd.f32 %v5133, %v5204
    %v5206 = vpop.f32.mrf.mxu0
    %5207 = vdwg.mxu0
    %v5208 = vtanh.pop %v5205
    %v5209 = vld [vmem:[%s67] sm:$0xff]
    %v5210 = vld [vmem:[%s67 + $0x8] sm:$0xff]
    %v5211 = vld [vmem:[%s67 + $0x10] sm:$0xff]
    %v5212 = vld [vmem:[%s67 + $0x18] sm:$0xff]
    %v5213 = vld [vmem:[%s69] sm:$0x1]
    %v5215 = vlaneseq
    %v5216 = vshrl.u32 %v5215, 7
    %v5217 = vsub.s32 0, %v5216
    %v5218 = vrot.slane %v5213, %v5217
    %v5221 = vsel %vm159, %v5208, 0
    %5223 = vmatprep.subr.mxu0 0.0
    %5224 = vmatpush1.msra.mxu0 0.0
    %5225 = vmatprep.subr.mxu0 0.0
    %5226 = vmatpush1.msra.mxu0 0.0
    %5227 = vmatprep.subr.mxu0 0.0
    %5228 = vmatpush1.msra.mxu0 0.0
    %5229 = vmatprep.subr.mxu0 0.0
    %5230 = vmatpush1.msra.mxu0 0.0
    %5231 = vmatprep.subr.mxu0 0.0
    %5232 = vmatpush1.msra.mxu0 0.0
    %5233 = vmatprep.subr.mxu0 0.0
    %5234 = vmatpush1.msra.mxu0 0.0
    %5235 = vmatprep.subr.mxu0 0.0
    %5236 = vmatpush1.msra.mxu0 0.0
    %5237 = vmatprep.subr.mxu0 0.0
    %5238 = vmatpush1.msra.mxu0 0.0
    %5239 = vmatprep.subr.mxu0 0.0
    %5240 = vmatpush1.msra.mxu0 0.0
    %5241 = vmatprep.subr.mxu0 0.0
    %5242 = vmatpush1.msra.mxu0 0.0
    %5243 = vmatprep.subr.mxu0 0.0
    %5244 = vmatpush1.msra.mxu0 0.0
    %5245 = vmatprep.subr.mxu0 0.0
    %5246 = vmatpush1.msra.mxu0 0.0
    %5247 = vmatprep.subr.mxu0 0.0
    %5248 = vmatpush1.msra.mxu0 %v5212
    %5249 = vmatprep.subr.mxu0 0.0
    %5250 = vmatpush1.msra.mxu0 %v5211
    %5251 = vmatprep.subr.mxu0 0.0
    %5252 = vmatpush1.msra.mxu0 %v5210
    %5253 = vmatprep.subr.mxu0 0.0
    %5254 = vmatpush1.msra.mxu0 %v5209
    %5255 = vmatprep.subr.mxu0 0.0
    %5256 = vmatpush2.msra.mxu0 0.0
    %5257 = vmatprep.subr.mxu0 0.0
    %5258 = vmatpush2.msra.mxu0 0.0
    %5259 = vmatprep.subr.mxu0 0.0
    %5260 = vmatpush2.msra.mxu0 0.0
    %5261 = vmatprep.subr.mxu0 0.0
    %5262 = vmatpush2.msra.mxu0 0.0
    %5263 = vmatprep.subr.mxu0 0.0
    %5264 = vmatpush2.msra.mxu0 0.0
    %5265 = vmatprep.subr.mxu0 0.0
    %5266 = vmatpush2.msra.mxu0 0.0
    %5267 = vmatprep.subr.mxu0 0.0
    %5268 = vmatpush2.msra.mxu0 0.0
    %5269 = vmatprep.subr.mxu0 0.0
    %5270 = vmatpush2.msra.mxu0 0.0
    %5271 = vmatprep.subr.mxu0 0.0
    %5272 = vmatpush2.msra.mxu0 0.0
    %5273 = vmatprep.subr.mxu0 0.0
    %5274 = vmatpush2.msra.mxu0 0.0
    %5275 = vmatprep.subr.mxu0 0.0
    %5276 = vmatpush2.msra.mxu0 0.0
    %5277 = vmatprep.subr.mxu0 0.0
    %5278 = vmatpush2.msra.mxu0 0.0
    %5279 = vmatprep.subr.mxu0 0.0
    %5280 = vmatpush2.msra.mxu0 0.0
    %5281 = vmatprep.subr.mxu0 0.0
    %5282 = vmatpush2.msra.mxu0 0.0
    %5283 = vmatprep.subr.mxu0 0.0
    %5284 = vmatpush2.msra.mxu0 0.0
    %5285 = vmatprep.subr.mxu0 0.0
    %5286 = vmatpush2.msra.mxu0 0.0
    %5287 = vmatprep.mubr.f32.mxu0 0.0
    %5288 = vmatmul.mubr.f32.gmra.mxu0 %v5221
    %v5289 = vpop.f32.mrf.mxu0
    %v5290 = vadd.f32 %v5218, %v5289
    %v5291 = vpop.f32.mrf.mxu0
    %5292 = vdwg.mxu0
    %v5293 = vsel %vm1927, %v5290, -inf
    %5294 = vmax.xlane.f32.xlu0 %v5293
    %v5295 = vpop.xlane.xlu0 %5294
    %v5296 = vsub.f32 %v5290, %v5295
    %v5297 = vmul.f32 %v5296, 1.442695
    %v5298 = vpow.pop %v5297
    %v5299 = vsel %vm1927, %v5298, 0.0
    %5300 = vadd.xlane.f32.xlu0 %v5299
    %v5301 = vpop.xlane.xlu0 %5300
    %v5302 = vlog2.pop %v5301
    %v5303 = vmul.f32 %v5302, 0.6931472
    %v5304 = vadd.f32 %v5295, %v5303
    %v5305 = vsub.f32 %v5290, %v5304
    %v5306 = vld [vmem:[%s9] sm:$0xf]
    %v5307 = vmul.f32 %v5305, %v5306
    %v5308 = vsel %vm1927, %v5307, 0.0
    %5309 = vadd.xlane.f32.xlu0 %v5308
    %v5310 = vpop.xlane.xlu0 %5309
    %v5311 = vrot.slane %v5310, 4
    %v5312 = vadd.f32 %v5310, %v5311
    %v5313 = vrot.slane %v5312, 2
    %v5314 = vadd.f32 %v5312, %v5313
    %v5315 = vrot.slane %v5314, 1
    %v5316 = vadd.f32 %v5314, %v5315
    %s5317 = vtos %v5316
    %v5318 = vstv %s5317
    %v5319 = vsub.f32 0.0, %v5318
    %s5320 = scalar_lea.vmem [#allocation9], 4
    %v5321 = vld [vmem:[%s5320] sm:$0xf]
    %v5323 = vsel %vm1853, %v5321, 0
    %5325 = vmatprep.subr.mxu0 0.0
    %5326 = vmatpush1.msra.mxu0 0.0
    %5327 = vmatprep.subr.mxu0 0.0
    %5328 = vmatpush1.msra.mxu0 0.0
    %5329 = vmatprep.subr.mxu0 0.0
    %5330 = vmatpush1.msra.mxu0 0.0
    %5331 = vmatprep.subr.mxu0 0.0
    %5332 = vmatpush1.msra.mxu0 0.0
    %5333 = vmatprep.subr.mxu0 0.0
    %5334 = vmatpush1.msra.mxu0 0.0
    %5335 = vmatprep.subr.mxu0 0.0
    %5336 = vmatpush1.msra.mxu0 0.0
    %5337 = vmatprep.subr.mxu0 0.0
    %5338 = vmatpush1.msra.mxu0 0.0
    %5339 = vmatprep.subr.mxu0 0.0
    %5340 = vmatpush1.msra.mxu0 0.0
    %5341 = vmatprep.subr.mxu0 0.0
    %5342 = vmatpush1.msra.mxu0 %v5127
    %5343 = vmatprep.subr.mxu0 0.0
    %5344 = vmatpush1.msra.mxu0 %v5126
    %5345 = vmatprep.subr.mxu0 0.0
    %5346 = vmatpush1.msra.mxu0 %v5125
    %5347 = vmatprep.subr.mxu0 0.0
    %5348 = vmatpush1.msra.mxu0 %v5124
    %5349 = vmatprep.subr.mxu0 0.0
    %5350 = vmatpush1.msra.mxu0 %v5123
    %5351 = vmatprep.subr.mxu0 0.0
    %5352 = vmatpush1.msra.mxu0 %v5122
    %5353 = vmatprep.subr.mxu0 0.0
    %5354 = vmatpush1.msra.mxu0 %v5121
    %5355 = vmatprep.subr.mxu0 0.0
    %5356 = vmatpush1.msra.mxu0 %v5120
    %5357 = vmatprep.subr.mxu0 0.0
    %5358 = vmatpush2.msra.mxu0 0.0
    %5359 = vmatprep.subr.mxu0 0.0
    %5360 = vmatpush2.msra.mxu0 0.0
    %5361 = vmatprep.subr.mxu0 0.0
    %5362 = vmatpush2.msra.mxu0 0.0
    %5363 = vmatprep.subr.mxu0 0.0
    %5364 = vmatpush2.msra.mxu0 0.0
    %5365 = vmatprep.subr.mxu0 0.0
    %5366 = vmatpush2.msra.mxu0 0.0
    %5367 = vmatprep.subr.mxu0 0.0
    %5368 = vmatpush2.msra.mxu0 0.0
    %5369 = vmatprep.subr.mxu0 0.0
    %5370 = vmatpush2.msra.mxu0 0.0
    %5371 = vmatprep.subr.mxu0 0.0
    %5372 = vmatpush2.msra.mxu0 0.0
    %5373 = vmatprep.subr.mxu0 0.0
    %5374 = vmatpush2.msra.mxu0 0.0
    %5375 = vmatprep.subr.mxu0 0.0
    %5376 = vmatpush2.msra.mxu0 0.0
    %5377 = vmatprep.subr.mxu0 0.0
    %5378 = vmatpush2.msra.mxu0 0.0
    %5379 = vmatprep.subr.mxu0 0.0
    %5380 = vmatpush2.msra.mxu0 0.0
    %5381 = vmatprep.subr.mxu0 0.0
    %5382 = vmatpush2.msra.mxu0 0.0
    %5383 = vmatprep.subr.mxu0 0.0
    %5384 = vmatpush2.msra.mxu0 0.0
    %5385 = vmatprep.subr.mxu0 0.0
    %5386 = vmatpush2.msra.mxu0 0.0
    %5387 = vmatprep.subr.mxu0 0.0
    %5388 = vmatpush2.msra.mxu0 0.0
    %5389 = vmatprep.mubr.f32.mxu0 0.0
    %5390 = vmatmul.mubr.f32.gmra.mxu0 %v5323
    %v5391 = vpop.f32.mrf.mxu0
    %v5392 = vadd.f32 %v5133, %v5391
    %v5393 = vpop.f32.mrf.mxu0
    %5394 = vdwg.mxu0
    %v5395 = vtanh.pop %v5392
    %v5397 = vsel %vm159, %v5395, 0
    %5399 = vmatprep.subr.mxu0 0.0
    %5400 = vmatpush1.msra.mxu0 0.0
    %5401 = vmatprep.subr.mxu0 0.0
    %5402 = vmatpush1.msra.mxu0 0.0
    %5403 = vmatprep.subr.mxu0 0.0
    %5404 = vmatpush1.msra.mxu0 0.0
    %5405 = vmatprep.subr.mxu0 0.0
    %5406 = vmatpush1.msra.mxu0 0.0
    %5407 = vmatprep.subr.mxu0 0.0
    %5408 = vmatpush1.msra.mxu0 0.0
    %5409 = vmatprep.subr.mxu0 0.0
    %5410 = vmatpush1.msra.mxu0 0.0
    %5411 = vmatprep.subr.mxu0 0.0
    %5412 = vmatpush1.msra.mxu0 0.0
    %5413 = vmatprep.subr.mxu0 0.0
    %5414 = vmatpush1.msra.mxu0 0.0
    %5415 = vmatprep.subr.mxu0 0.0
    %5416 = vmatpush1.msra.mxu0 0.0
    %5417 = vmatprep.subr.mxu0 0.0
    %5418 = vmatpush1.msra.mxu0 0.0
    %5419 = vmatprep.subr.mxu0 0.0
    %5420 = vmatpush1.msra.mxu0 0.0
    %5421 = vmatprep.subr.mxu0 0.0
    %5422 = vmatpush1.msra.mxu0 0.0
    %5423 = vmatprep.subr.mxu0 0.0
    %5424 = vmatpush1.msra.mxu0 %v5212
    %5425 = vmatprep.subr.mxu0 0.0
    %5426 = vmatpush1.msra.mxu0 %v5211
    %5427 = vmatprep.subr.mxu0 0.0
    %5428 = vmatpush1.msra.mxu0 %v5210
    %5429 = vmatprep.subr.mxu0 0.0
    %5430 = vmatpush1.msra.mxu0 %v5209
    %5431 = vmatprep.subr.mxu0 0.0
    %5432 = vmatpush2.msra.mxu0 0.0
    %5433 = vmatprep.subr.mxu0 0.0
    %5434 = vmatpush2.msra.mxu0 0.0
    %5435 = vmatprep.subr.mxu0 0.0
    %5436 = vmatpush2.msra.mxu0 0.0
    %5437 = vmatprep.subr.mxu0 0.0
    %5438 = vmatpush2.msra.mxu0 0.0
    %5439 = vmatprep.subr.mxu0 0.0
    %5440 = vmatpush2.msra.mxu0 0.0
    %5441 = vmatprep.subr.mxu0 0.0
    %5442 = vmatpush2.msra.mxu0 0.0
    %5443 = vmatprep.subr.mxu0 0.0
    %5444 = vmatpush2.msra.mxu0 0.0
    %5445 = vmatprep.subr.mxu0 0.0
    %5446 = vmatpush2.msra.mxu0 0.0
    %5447 = vmatprep.subr.mxu0 0.0
    %5448 = vmatpush2.msra.mxu0 0.0
    %5449 = vmatprep.subr.mxu0 0.0
    %5450 = vmatpush2.msra.mxu0 0.0
    %5451 = vmatprep.subr.mxu0 0.0
    %5452 = vmatpush2.msra.mxu0 0.0
    %5453 = vmatprep.subr.mxu0 0.0
    %5454 = vmatpush2.msra.mxu0 0.0
    %5455 = vmatprep.subr.mxu0 0.0
    %5456 = vmatpush2.msra.mxu0 0.0
    %5457 = vmatprep.subr.mxu0 0.0
    %5458 = vmatpush2.msra.mxu0 0.0
    %5459 = vmatprep.subr.mxu0 0.0
    %5460 = vmatpush2.msra.mxu0 0.0
    %5461 = vmatprep.subr.mxu0 0.0
    %5462 = vmatpush2.msra.mxu0 0.0
    %5463 = vmatprep.mubr.f32.mxu0 0.0
    %5464 = vmatmul.mubr.f32.gmra.mxu0 %v5397
    %v5465 = vpop.f32.mrf.mxu0
    %v5466 = vadd.f32 %v5218, %v5465
    %v5467 = vpop.f32.mrf.mxu0
    %5468 = vdwg.mxu0
    %v5469 = vsel %vm1927, %v5466, -inf
    %5470 = vmax.xlane.f32.xlu0 %v5469
    %v5471 = vpop.xlane.xlu0 %5470
    %v5472 = vsub.f32 %v5466, %v5471
    %v5473 = vmul.f32 %v5472, 1.442695
    %v5474 = vpow.pop %v5473
    %v5475 = vsel %vm1927, %v5474, 0.0
    %5476 = vadd.xlane.f32.xlu0 %v5475
    %v5477 = vpop.xlane.xlu0 %5476
    %v5478 = vlog2.pop %v5477
    %v5479 = vmul.f32 %v5478, 0.6931472
    %v5480 = vadd.f32 %v5471, %v5479
    %v5481 = vsub.f32 %v5466, %v5480
    %s5482 = scalar_lea.vmem %s9, 4
    %v5483 = vld [vmem:[%s5482] sm:$0xf]
    %v5484 = vmul.f32 %v5481, %v5483
    %v5485 = vsel %vm1927, %v5484, 0.0
    %5486 = vadd.xlane.f32.xlu0 %v5485
    %v5487 = vpop.xlane.xlu0 %5486
    %v5488 = vrot.slane %v5487, 4
    %v5489 = vadd.f32 %v5487, %v5488
    %v5490 = vrot.slane %v5489, 2
    %v5491 = vadd.f32 %v5489, %v5490
    %v5492 = vrot.slane %v5491, 1
    %v5493 = vadd.f32 %v5491, %v5492
    %s5494 = vtos %v5493
    %v5495 = vstv %s5494
    %v5496 = vsub.f32 %v5319, %v5495
    %s5497 = scalar_lea.vmem [#allocation9], 8
    %v5498 = vld [vmem:[%s5497] sm:$0xf]
    %v5500 = vsel %vm1853, %v5498, 0
    %5502 = vmatprep.subr.mxu0 0.0
    %5503 = vmatpush1.msra.mxu0 0.0
    %5504 = vmatprep.subr.mxu0 0.0
    %5505 = vmatpush1.msra.mxu0 0.0
    %5506 = vmatprep.subr.mxu0 0.0
    %5507 = vmatpush1.msra.mxu0 0.0
    %5508 = vmatprep.subr.mxu0 0.0
    %5509 = vmatpush1.msra.mxu0 0.0
    %5510 = vmatprep.subr.mxu0 0.0
    %5511 = vmatpush1.msra.mxu0 0.0
    %5512 = vmatprep.subr.mxu0 0.0
    %5513 = vmatpush1.msra.mxu0 0.0
    %5514 = vmatprep.subr.mxu0 0.0
    %5515 = vmatpush1.msra.mxu0 0.0
    %5516 = vmatprep.subr.mxu0 0.0
    %5517 = vmatpush1.msra.mxu0 0.0
    %5518 = vmatprep.subr.mxu0 0.0
    %5519 = vmatpush1.msra.mxu0 %v5127
    %5520 = vmatprep.subr.mxu0 0.0
    %5521 = vmatpush1.msra.mxu0 %v5126
    %5522 = vmatprep.subr.mxu0 0.0
    %5523 = vmatpush1.msra.mxu0 %v5125
    %5524 = vmatprep.subr.mxu0 0.0
    %5525 = vmatpush1.msra.mxu0 %v5124
    %5526 = vmatprep.subr.mxu0 0.0
    %5527 = vmatpush1.msra.mxu0 %v5123
    %5528 = vmatprep.subr.mxu0 0.0
    %5529 = vmatpush1.msra.mxu0 %v5122
    %5530 = vmatprep.subr.mxu0 0.0
    %5531 = vmatpush1.msra.mxu0 %v5121
    %5532 = vmatprep.subr.mxu0 0.0
    %5533 = vmatpush1.msra.mxu0 %v5120
    %5534 = vmatprep.subr.mxu0 0.0
    %5535 = vmatpush2.msra.mxu0 0.0
    %5536 = vmatprep.subr.mxu0 0.0
    %5537 = vmatpush2.msra.mxu0 0.0
    %5538 = vmatprep.subr.mxu0 0.0
    %5539 = vmatpush2.msra.mxu0 0.0
    %5540 = vmatprep.subr.mxu0 0.0
    %5541 = vmatpush2.msra.mxu0 0.0
    %5542 = vmatprep.subr.mxu0 0.0
    %5543 = vmatpush2.msra.mxu0 0.0
    %5544 = vmatprep.subr.mxu0 0.0
    %5545 = vmatpush2.msra.mxu0 0.0
    %5546 = vmatprep.subr.mxu0 0.0
    %5547 = vmatpush2.msra.mxu0 0.0
    %5548 = vmatprep.subr.mxu0 0.0
    %5549 = vmatpush2.msra.mxu0 0.0
    %5550 = vmatprep.subr.mxu0 0.0
    %5551 = vmatpush2.msra.mxu0 0.0
    %5552 = vmatprep.subr.mxu0 0.0
    %5553 = vmatpush2.msra.mxu0 0.0
    %5554 = vmatprep.subr.mxu0 0.0
    %5555 = vmatpush2.msra.mxu0 0.0
    %5556 = vmatprep.subr.mxu0 0.0
    %5557 = vmatpush2.msra.mxu0 0.0
    %5558 = vmatprep.subr.mxu0 0.0
    %5559 = vmatpush2.msra.mxu0 0.0
    %5560 = vmatprep.subr.mxu0 0.0
    %5561 = vmatpush2.msra.mxu0 0.0
    %5562 = vmatprep.subr.mxu0 0.0
    %5563 = vmatpush2.msra.mxu0 0.0
    %5564 = vmatprep.subr.mxu0 0.0
    %5565 = vmatpush2.msra.mxu0 0.0
    %5566 = vmatprep.mubr.f32.mxu0 0.0
    %5567 = vmatmul.mubr.f32.gmra.mxu0 %v5500
    %v5568 = vpop.f32.mrf.mxu0
    %v5569 = vadd.f32 %v5133, %v5568
    %v5570 = vpop.f32.mrf.mxu0
    %5571 = vdwg.mxu0
    %v5572 = vtanh.pop %v5569
    %v5574 = vsel %vm159, %v5572, 0
    %5576 = vmatprep.subr.mxu0 0.0
    %5577 = vmatpush1.msra.mxu0 0.0
    %5578 = vmatprep.subr.mxu0 0.0
    %5579 = vmatpush1.msra.mxu0 0.0
    %5580 = vmatprep.subr.mxu0 0.0
    %5581 = vmatpush1.msra.mxu0 0.0
    %5582 = vmatprep.subr.mxu0 0.0
    %5583 = vmatpush1.msra.mxu0 0.0
    %5584 = vmatprep.subr.mxu0 0.0
    %5585 = vmatpush1.msra.mxu0 0.0
    %5586 = vmatprep.subr.mxu0 0.0
    %5587 = vmatpush1.msra.mxu0 0.0
    %5588 = vmatprep.subr.mxu0 0.0
    %5589 = vmatpush1.msra.mxu0 0.0
    %5590 = vmatprep.subr.mxu0 0.0
    %5591 = vmatpush1.msra.mxu0 0.0
    %5592 = vmatprep.subr.mxu0 0.0
    %5593 = vmatpush1.msra.mxu0 0.0
    %5594 = vmatprep.subr.mxu0 0.0
    %5595 = vmatpush1.msra.mxu0 0.0
    %5596 = vmatprep.subr.mxu0 0.0
    %5597 = vmatpush1.msra.mxu0 0.0
    %5598 = vmatprep.subr.mxu0 0.0
    %5599 = vmatpush1.msra.mxu0 0.0
    %5600 = vmatprep.subr.mxu0 0.0
    %5601 = vmatpush1.msra.mxu0 %v5212
    %5602 = vmatprep.subr.mxu0 0.0
    %5603 = vmatpush1.msra.mxu0 %v5211
    %5604 = vmatprep.subr.mxu0 0.0
    %5605 = vmatpush1.msra.mxu0 %v5210
    %5606 = vmatprep.subr.mxu0 0.0
    %5607 = vmatpush1.msra.mxu0 %v5209
    %5608 = vmatprep.subr.mxu0 0.0
    %5609 = vmatpush2.msra.mxu0 0.0
    %5610 = vmatprep.subr.mxu0 0.0
    %5611 = vmatpush2.msra.mxu0 0.0
    %5612 = vmatprep.subr.mxu0 0.0
    %5613 = vmatpush2.msra.mxu0 0.0
    %5614 = vmatprep.subr.mxu0 0.0
    %5615 = vmatpush2.msra.mxu0 0.0
    %5616 = vmatprep.subr.mxu0 0.0
    %5617 = vmatpush2.msra.mxu0 0.0
    %5618 = vmatprep.subr.mxu0 0.0
    %5619 = vmatpush2.msra.mxu0 0.0
    %5620 = vmatprep.subr.mxu0 0.0
    %5621 = vmatpush2.msra.mxu0 0.0
    %5622 = vmatprep.subr.mxu0 0.0
    %5623 = vmatpush2.msra.mxu0 0.0
    %5624 = vmatprep.subr.mxu0 0.0
    %5625 = vmatpush2.msra.mxu0 0.0
    %5626 = vmatprep.subr.mxu0 0.0
    %5627 = vmatpush2.msra.mxu0 0.0
    %5628 = vmatprep.subr.mxu0 0.0
    %5629 = vmatpush2.msra.mxu0 0.0
    %5630 = vmatprep.subr.mxu0 0.0
    %5631 = vmatpush2.msra.mxu0 0.0
    %5632 = vmatprep.subr.mxu0 0.0
    %5633 = vmatpush2.msra.mxu0 0.0
    %5634 = vmatprep.subr.mxu0 0.0
    %5635 = vmatpush2.msra.mxu0 0.0
    %5636 = vmatprep.subr.mxu0 0.0
    %5637 = vmatpush2.msra.mxu0 0.0
    %5638 = vmatprep.subr.mxu0 0.0
    %5639 = vmatpush2.msra.mxu0 0.0
    %5640 = vmatprep.mubr.f32.mxu0 0.0
    %5641 = vmatmul.mubr.f32.gmra.mxu0 %v5574
    %v5642 = vpop.f32.mrf.mxu0
    %v5643 = vadd.f32 %v5218, %v5642
    %v5644 = vpop.f32.mrf.mxu0
    %5645 = vdwg.mxu0
    %v5646 = vsel %vm1927, %v5643, -inf
    %5647 = vmax.xlane.f32.xlu0 %v5646
    %v5648 = vpop.xlane.xlu0 %5647
    %v5649 = vsub.f32 %v5643, %v5648
    %v5650 = vmul.f32 %v5649, 1.442695
    %v5651 = vpow.pop %v5650
    %v5652 = vsel %vm1927, %v5651, 0.0
    %5653 = vadd.xlane.f32.xlu0 %v5652
    %v5654 = vpop.xlane.xlu0 %5653
    %v5655 = vlog2.pop %v5654
    %v5656 = vmul.f32 %v5655, 0.6931472
    %v5657 = vadd.f32 %v5648, %v5656
    %v5658 = vsub.f32 %v5643, %v5657
    %s5659 = scalar_lea.vmem %s9, 8
    %v5660 = vld [vmem:[%s5659] sm:$0xf]
    %v5661 = vmul.f32 %v5658, %v5660
    %v5662 = vsel %vm1927, %v5661, 0.0
    %5663 = vadd.xlane.f32.xlu0 %v5662
    %v5664 = vpop.xlane.xlu0 %5663
    %v5665 = vrot.slane %v5664, 4
    %v5666 = vadd.f32 %v5664, %v5665
    %v5667 = vrot.slane %v5666, 2
    %v5668 = vadd.f32 %v5666, %v5667
    %v5669 = vrot.slane %v5668, 1
    %v5670 = vadd.f32 %v5668, %v5669
    %s5671 = vtos %v5670
    %v5672 = vstv %s5671
    %v5673 = vsub.f32 %v5496, %v5672
    %s5674 = scalar_lea.vmem [#allocation9], 12
    %v5675 = vld [vmem:[%s5674] sm:$0xf]
    %v5677 = vsel %vm1853, %v5675, 0
    %5679 = vmatprep.subr.mxu0 0.0
    %5680 = vmatpush1.msra.mxu0 0.0
    %5681 = vmatprep.subr.mxu0 0.0
    %5682 = vmatpush1.msra.mxu0 0.0
    %5683 = vmatprep.subr.mxu0 0.0
    %5684 = vmatpush1.msra.mxu0 0.0
    %5685 = vmatprep.subr.mxu0 0.0
    %5686 = vmatpush1.msra.mxu0 0.0
    %5687 = vmatprep.subr.mxu0 0.0
    %5688 = vmatpush1.msra.mxu0 0.0
    %5689 = vmatprep.subr.mxu0 0.0
    %5690 = vmatpush1.msra.mxu0 0.0
    %5691 = vmatprep.subr.mxu0 0.0
    %5692 = vmatpush1.msra.mxu0 0.0
    %5693 = vmatprep.subr.mxu0 0.0
    %5694 = vmatpush1.msra.mxu0 0.0
    %5695 = vmatprep.subr.mxu0 0.0
    %5696 = vmatpush1.msra.mxu0 %v5127
    %5697 = vmatprep.subr.mxu0 0.0
    %5698 = vmatpush1.msra.mxu0 %v5126
    %5699 = vmatprep.subr.mxu0 0.0
    %5700 = vmatpush1.msra.mxu0 %v5125
    %5701 = vmatprep.subr.mxu0 0.0
    %5702 = vmatpush1.msra.mxu0 %v5124
    %5703 = vmatprep.subr.mxu0 0.0
    %5704 = vmatpush1.msra.mxu0 %v5123
    %5705 = vmatprep.subr.mxu0 0.0
    %5706 = vmatpush1.msra.mxu0 %v5122
    %5707 = vmatprep.subr.mxu0 0.0
    %5708 = vmatpush1.msra.mxu0 %v5121
    %5709 = vmatprep.subr.mxu0 0.0
    %5710 = vmatpush1.msra.mxu0 %v5120
    %5711 = vmatprep.subr.mxu0 0.0
    %5712 = vmatpush2.msra.mxu0 0.0
    %5713 = vmatprep.subr.mxu0 0.0
    %5714 = vmatpush2.msra.mxu0 0.0
    %5715 = vmatprep.subr.mxu0 0.0
    %5716 = vmatpush2.msra.mxu0 0.0
    %5717 = vmatprep.subr.mxu0 0.0
    %5718 = vmatpush2.msra.mxu0 0.0
    %5719 = vmatprep.subr.mxu0 0.0
    %5720 = vmatpush2.msra.mxu0 0.0
    %5721 = vmatprep.subr.mxu0 0.0
    %5722 = vmatpush2.msra.mxu0 0.0
    %5723 = vmatprep.subr.mxu0 0.0
    %5724 = vmatpush2.msra.mxu0 0.0
    %5725 = vmatprep.subr.mxu0 0.0
    %5726 = vmatpush2.msra.mxu0 0.0
    %5727 = vmatprep.subr.mxu0 0.0
    %5728 = vmatpush2.msra.mxu0 0.0
    %5729 = vmatprep.subr.mxu0 0.0
    %5730 = vmatpush2.msra.mxu0 0.0
    %5731 = vmatprep.subr.mxu0 0.0
    %5732 = vmatpush2.msra.mxu0 0.0
    %5733 = vmatprep.subr.mxu0 0.0
    %5734 = vmatpush2.msra.mxu0 0.0
    %5735 = vmatprep.subr.mxu0 0.0
    %5736 = vmatpush2.msra.mxu0 0.0
    %5737 = vmatprep.subr.mxu0 0.0
    %5738 = vmatpush2.msra.mxu0 0.0
    %5739 = vmatprep.subr.mxu0 0.0
    %5740 = vmatpush2.msra.mxu0 0.0
    %5741 = vmatprep.subr.mxu0 0.0
    %5742 = vmatpush2.msra.mxu0 0.0
    %5743 = vmatprep.mubr.f32.mxu0 0.0
    %5744 = vmatmul.mubr.f32.gmra.mxu0 %v5677
    %v5745 = vpop.f32.mrf.mxu0
    %v5746 = vadd.f32 %v5133, %v5745
    %v5747 = vpop.f32.mrf.mxu0
    %5748 = vdwg.mxu0
    %v5749 = vtanh.pop %v5746
    %v5751 = vsel %vm159, %v5749, 0
    %5753 = vmatprep.subr.mxu0 0.0
    %5754 = vmatpush1.msra.mxu0 0.0
    %5755 = vmatprep.subr.mxu0 0.0
    %5756 = vmatpush1.msra.mxu0 0.0
    %5757 = vmatprep.subr.mxu0 0.0
    %5758 = vmatpush1.msra.mxu0 0.0
    %5759 = vmatprep.subr.mxu0 0.0
    %5760 = vmatpush1.msra.mxu0 0.0
    %5761 = vmatprep.subr.mxu0 0.0
    %5762 = vmatpush1.msra.mxu0 0.0
    %5763 = vmatprep.subr.mxu0 0.0
    %5764 = vmatpush1.msra.mxu0 0.0
    %5765 = vmatprep.subr.mxu0 0.0
    %5766 = vmatpush1.msra.mxu0 0.0
    %5767 = vmatprep.subr.mxu0 0.0
    %5768 = vmatpush1.msra.mxu0 0.0
    %5769 = vmatprep.subr.mxu0 0.0
    %5770 = vmatpush1.msra.mxu0 0.0
    %5771 = vmatprep.subr.mxu0 0.0
    %5772 = vmatpush1.msra.mxu0 0.0
    %5773 = vmatprep.subr.mxu0 0.0
    %5774 = vmatpush1.msra.mxu0 0.0
    %5775 = vmatprep.subr.mxu0 0.0
    %5776 = vmatpush1.msra.mxu0 0.0
    %5777 = vmatprep.subr.mxu0 0.0
    %5778 = vmatpush1.msra.mxu0 %v5212
    %5779 = vmatprep.subr.mxu0 0.0
    %5780 = vmatpush1.msra.mxu0 %v5211
    %5781 = vmatprep.subr.mxu0 0.0
    %5782 = vmatpush1.msra.mxu0 %v5210
    %5783 = vmatprep.subr.mxu0 0.0
    %5784 = vmatpush1.msra.mxu0 %v5209
    %5785 = vmatprep.subr.mxu0 0.0
    %5786 = vmatpush2.msra.mxu0 0.0
    %5787 = vmatprep.subr.mxu0 0.0
    %5788 = vmatpush2.msra.mxu0 0.0
    %5789 = vmatprep.subr.mxu0 0.0
    %5790 = vmatpush2.msra.mxu0 0.0
    %5791 = vmatprep.subr.mxu0 0.0
    %5792 = vmatpush2.msra.mxu0 0.0
    %5793 = vmatprep.subr.mxu0 0.0
    %5794 = vmatpush2.msra.mxu0 0.0
    %5795 = vmatprep.subr.mxu0 0.0
    %5796 = vmatpush2.msra.mxu0 0.0
    %5797 = vmatprep.subr.mxu0 0.0
    %5798 = vmatpush2.msra.mxu0 0.0
    %5799 = vmatprep.subr.mxu0 0.0
    %5800 = vmatpush2.msra.mxu0 0.0
    %5801 = vmatprep.subr.mxu0 0.0
    %5802 = vmatpush2.msra.mxu0 0.0
    %5803 = vmatprep.subr.mxu0 0.0
    %5804 = vmatpush2.msra.mxu0 0.0
    %5805 = vmatprep.subr.mxu0 0.0
    %5806 = vmatpush2.msra.mxu0 0.0
    %5807 = vmatprep.subr.mxu0 0.0
    %5808 = vmatpush2.msra.mxu0 0.0
    %5809 = vmatprep.subr.mxu0 0.0
    %5810 = vmatpush2.msra.mxu0 0.0
    %5811 = vmatprep.subr.mxu0 0.0
    %5812 = vmatpush2.msra.mxu0 0.0
    %5813 = vmatprep.subr.mxu0 0.0
    %5814 = vmatpush2.msra.mxu0 0.0
    %5815 = vmatprep.subr.mxu0 0.0
    %5816 = vmatpush2.msra.mxu0 0.0
    %5817 = vmatprep.mubr.f32.mxu0 0.0
    %5818 = vmatmul.mubr.f32.gmra.mxu0 %v5751
    %v5819 = vpop.f32.mrf.mxu0
    %v5820 = vadd.f32 %v5218, %v5819
    %v5821 = vpop.f32.mrf.mxu0
    %5822 = vdwg.mxu0
    %v5823 = vsel %vm1927, %v5820, -inf
    %5824 = vmax.xlane.f32.xlu0 %v5823
    %v5825 = vpop.xlane.xlu0 %5824
    %v5826 = vsub.f32 %v5820, %v5825
    %v5827 = vmul.f32 %v5826, 1.442695
    %v5828 = vpow.pop %v5827
    %v5829 = vsel %vm1927, %v5828, 0.0
    %5830 = vadd.xlane.f32.xlu0 %v5829
    %v5831 = vpop.xlane.xlu0 %5830
    %v5832 = vlog2.pop %v5831
    %v5833 = vmul.f32 %v5832, 0.6931472
    %v5834 = vadd.f32 %v5825, %v5833
    %v5835 = vsub.f32 %v5820, %v5834
    %s5836 = scalar_lea.vmem %s9, 12
    %v5837 = vld [vmem:[%s5836] sm:$0xf]
    %v5838 = vmul.f32 %v5835, %v5837
    %v5839 = vsel %vm1927, %v5838, 0.0
    %5840 = vadd.xlane.f32.xlu0 %v5839
    %v5841 = vpop.xlane.xlu0 %5840
    %v5842 = vrot.slane %v5841, 4
    %v5843 = vadd.f32 %v5841, %v5842
    %v5844 = vrot.slane %v5843, 2
    %v5845 = vadd.f32 %v5843, %v5844
    %v5846 = vrot.slane %v5845, 1
    %v5847 = vadd.f32 %v5845, %v5846
    %s5848 = vtos %v5847
    %v5849 = vstv %s5848
    %v5850 = vsub.f32 %v5673, %v5849
    %s5851 = scalar_lea.vmem [#allocation9], 16
    %v5852 = vld [vmem:[%s5851] sm:$0xf]
    %v5854 = vsel %vm1853, %v5852, 0
    %5856 = vmatprep.subr.mxu0 0.0
    %5857 = vmatpush1.msra.mxu0 0.0
    %5858 = vmatprep.subr.mxu0 0.0
    %5859 = vmatpush1.msra.mxu0 0.0
    %5860 = vmatprep.subr.mxu0 0.0
    %5861 = vmatpush1.msra.mxu0 0.0
    %5862 = vmatprep.subr.mxu0 0.0
    %5863 = vmatpush1.msra.mxu0 0.0
    %5864 = vmatprep.subr.mxu0 0.0
    %5865 = vmatpush1.msra.mxu0 0.0
    %5866 = vmatprep.subr.mxu0 0.0
    %5867 = vmatpush1.msra.mxu0 0.0
    %5868 = vmatprep.subr.mxu0 0.0
    %5869 = vmatpush1.msra.mxu0 0.0
    %5870 = vmatprep.subr.mxu0 0.0
    %5871 = vmatpush1.msra.mxu0 0.0
    %5872 = vmatprep.subr.mxu0 0.0
    %5873 = vmatpush1.msra.mxu0 %v5127
    %5874 = vmatprep.subr.mxu0 0.0
    %5875 = vmatpush1.msra.mxu0 %v5126
    %5876 = vmatprep.subr.mxu0 0.0
    %5877 = vmatpush1.msra.mxu0 %v5125
    %5878 = vmatprep.subr.mxu0 0.0
    %5879 = vmatpush1.msra.mxu0 %v5124
    %5880 = vmatprep.subr.mxu0 0.0
    %5881 = vmatpush1.msra.mxu0 %v5123
    %5882 = vmatprep.subr.mxu0 0.0
    %5883 = vmatpush1.msra.mxu0 %v5122
    %5884 = vmatprep.subr.mxu0 0.0
    %5885 = vmatpush1.msra.mxu0 %v5121
    %5886 = vmatprep.subr.mxu0 0.0
    %5887 = vmatpush1.msra.mxu0 %v5120
    %5888 = vmatprep.subr.mxu0 0.0
    %5889 = vmatpush2.msra.mxu0 0.0
    %5890 = vmatprep.subr.mxu0 0.0
    %5891 = vmatpush2.msra.mxu0 0.0
    %5892 = vmatprep.subr.mxu0 0.0
    %5893 = vmatpush2.msra.mxu0 0.0
    %5894 = vmatprep.subr.mxu0 0.0
    %5895 = vmatpush2.msra.mxu0 0.0
    %5896 = vmatprep.subr.mxu0 0.0
    %5897 = vmatpush2.msra.mxu0 0.0
    %5898 = vmatprep.subr.mxu0 0.0
    %5899 = vmatpush2.msra.mxu0 0.0
    %5900 = vmatprep.subr.mxu0 0.0
    %5901 = vmatpush2.msra.mxu0 0.0
    %5902 = vmatprep.subr.mxu0 0.0
    %5903 = vmatpush2.msra.mxu0 0.0
    %5904 = vmatprep.subr.mxu0 0.0
    %5905 = vmatpush2.msra.mxu0 0.0
    %5906 = vmatprep.subr.mxu0 0.0
    %5907 = vmatpush2.msra.mxu0 0.0
    %5908 = vmatprep.subr.mxu0 0.0
    %5909 = vmatpush2.msra.mxu0 0.0
    %5910 = vmatprep.subr.mxu0 0.0
    %5911 = vmatpush2.msra.mxu0 0.0
    %5912 = vmatprep.subr.mxu0 0.0
    %5913 = vmatpush2.msra.mxu0 0.0
    %5914 = vmatprep.subr.mxu0 0.0
    %5915 = vmatpush2.msra.mxu0 0.0
    %5916 = vmatprep.subr.mxu0 0.0
    %5917 = vmatpush2.msra.mxu0 0.0
    %5918 = vmatprep.subr.mxu0 0.0
    %5919 = vmatpush2.msra.mxu0 0.0
    %5920 = vmatprep.mubr.f32.mxu0 0.0
    %5921 = vmatmul.mubr.f32.gmra.mxu0 %v5854
    %v5922 = vpop.f32.mrf.mxu0
    %v5923 = vadd.f32 %v5133, %v5922
    %v5924 = vpop.f32.mrf.mxu0
    %5925 = vdwg.mxu0
    %v5926 = vtanh.pop %v5923
    %v5928 = vsel %vm159, %v5926, 0
    %5930 = vmatprep.subr.mxu0 0.0
    %5931 = vmatpush1.msra.mxu0 0.0
    %5932 = vmatprep.subr.mxu0 0.0
    %5933 = vmatpush1.msra.mxu0 0.0
    %5934 = vmatprep.subr.mxu0 0.0
    %5935 = vmatpush1.msra.mxu0 0.0
    %5936 = vmatprep.subr.mxu0 0.0
    %5937 = vmatpush1.msra.mxu0 0.0
    %5938 = vmatprep.subr.mxu0 0.0
    %5939 = vmatpush1.msra.mxu0 0.0
    %5940 = vmatprep.subr.mxu0 0.0
    %5941 = vmatpush1.msra.mxu0 0.0
    %5942 = vmatprep.subr.mxu0 0.0
    %5943 = vmatpush1.msra.mxu0 0.0
    %5944 = vmatprep.subr.mxu0 0.0
    %5945 = vmatpush1.msra.mxu0 0.0
    %5946 = vmatprep.subr.mxu0 0.0
    %5947 = vmatpush1.msra.mxu0 0.0
    %5948 = vmatprep.subr.mxu0 0.0
    %5949 = vmatpush1.msra.mxu0 0.0
    %5950 = vmatprep.subr.mxu0 0.0
    %5951 = vmatpush1.msra.mxu0 0.0
    %5952 = vmatprep.subr.mxu0 0.0
    %5953 = vmatpush1.msra.mxu0 0.0
    %5954 = vmatprep.subr.mxu0 0.0
    %5955 = vmatpush1.msra.mxu0 %v5212
    %5956 = vmatprep.subr.mxu0 0.0
    %5957 = vmatpush1.msra.mxu0 %v5211
    %5958 = vmatprep.subr.mxu0 0.0
    %5959 = vmatpush1.msra.mxu0 %v5210
    %5960 = vmatprep.subr.mxu0 0.0
    %5961 = vmatpush1.msra.mxu0 %v5209
    %5962 = vmatprep.subr.mxu0 0.0
    %5963 = vmatpush2.msra.mxu0 0.0
    %5964 = vmatprep.subr.mxu0 0.0
    %5965 = vmatpush2.msra.mxu0 0.0
    %5966 = vmatprep.subr.mxu0 0.0
    %5967 = vmatpush2.msra.mxu0 0.0
    %5968 = vmatprep.subr.mxu0 0.0
    %5969 = vmatpush2.msra.mxu0 0.0
    %5970 = vmatprep.subr.mxu0 0.0
    %5971 = vmatpush2.msra.mxu0 0.0
    %5972 = vmatprep.subr.mxu0 0.0
    %5973 = vmatpush2.msra.mxu0 0.0
    %5974 = vmatprep.subr.mxu0 0.0
    %5975 = vmatpush2.msra.mxu0 0.0
    %5976 = vmatprep.subr.mxu0 0.0
    %5977 = vmatpush2.msra.mxu0 0.0
    %5978 = vmatprep.subr.mxu0 0.0
    %5979 = vmatpush2.msra.mxu0 0.0
    %5980 = vmatprep.subr.mxu0 0.0
    %5981 = vmatpush2.msra.mxu0 0.0
    %5982 = vmatprep.subr.mxu0 0.0
    %5983 = vmatpush2.msra.mxu0 0.0
    %5984 = vmatprep.subr.mxu0 0.0
    %5985 = vmatpush2.msra.mxu0 0.0
    %5986 = vmatprep.subr.mxu0 0.0
    %5987 = vmatpush2.msra.mxu0 0.0
    %5988 = vmatprep.subr.mxu0 0.0
    %5989 = vmatpush2.msra.mxu0 0.0
    %5990 = vmatprep.subr.mxu0 0.0
    %5991 = vmatpush2.msra.mxu0 0.0
    %5992 = vmatprep.subr.mxu0 0.0
    %5993 = vmatpush2.msra.mxu0 0.0
    %5994 = vmatprep.mubr.f32.mxu0 0.0
    %5995 = vmatmul.mubr.f32.gmra.mxu0 %v5928
    %v5996 = vpop.f32.mrf.mxu0
    %v5997 = vadd.f32 %v5218, %v5996
    %v5998 = vpop.f32.mrf.mxu0
    %5999 = vdwg.mxu0
    %v6000 = vsel %vm1927, %v5997, -inf
    %6001 = vmax.xlane.f32.xlu0 %v6000
    %v6002 = vpop.xlane.xlu0 %6001
    %v6003 = vsub.f32 %v5997, %v6002
    %v6004 = vmul.f32 %v6003, 1.442695
    %v6005 = vpow.pop %v6004
    %v6006 = vsel %vm1927, %v6005, 0.0
    %6007 = vadd.xlane.f32.xlu0 %v6006
    %v6008 = vpop.xlane.xlu0 %6007
    %v6009 = vlog2.pop %v6008
    %v6010 = vmul.f32 %v6009, 0.6931472
    %v6011 = vadd.f32 %v6002, %v6010
    %v6012 = vsub.f32 %v5997, %v6011
    %s6013 = scalar_lea.vmem %s9, 16
    %v6014 = vld [vmem:[%s6013] sm:$0xf]
    %v6015 = vmul.f32 %v6012, %v6014
    %v6016 = vsel %vm1927, %v6015, 0.0
    %6017 = vadd.xlane.f32.xlu0 %v6016
    %v6018 = vpop.xlane.xlu0 %6017
    %v6019 = vrot.slane %v6018, 4
    %v6020 = vadd.f32 %v6018, %v6019
    %v6021 = vrot.slane %v6020, 2
    %v6022 = vadd.f32 %v6020, %v6021
    %v6023 = vrot.slane %v6022, 1
    %v6024 = vadd.f32 %v6022, %v6023
    %s6025 = vtos %v6024
    %v6026 = vstv %s6025
    %v6027 = vsub.f32 %v5850, %v6026
    %s6028 = scalar_lea.vmem [#allocation9], 20
    %v6029 = vld [vmem:[%s6028] sm:$0xf]
    %v6031 = vsel %vm1853, %v6029, 0
    %6033 = vmatprep.subr.mxu0 0.0
    %6034 = vmatpush1.msra.mxu0 0.0
    %6035 = vmatprep.subr.mxu0 0.0
    %6036 = vmatpush1.msra.mxu0 0.0
    %6037 = vmatprep.subr.mxu0 0.0
    %6038 = vmatpush1.msra.mxu0 0.0
    %6039 = vmatprep.subr.mxu0 0.0
    %6040 = vmatpush1.msra.mxu0 0.0
    %6041 = vmatprep.subr.mxu0 0.0
    %6042 = vmatpush1.msra.mxu0 0.0
    %6043 = vmatprep.subr.mxu0 0.0
    %6044 = vmatpush1.msra.mxu0 0.0
    %6045 = vmatprep.subr.mxu0 0.0
    %6046 = vmatpush1.msra.mxu0 0.0
    %6047 = vmatprep.subr.mxu0 0.0
    %6048 = vmatpush1.msra.mxu0 0.0
    %6049 = vmatprep.subr.mxu0 0.0
    %6050 = vmatpush1.msra.mxu0 %v5127
    %6051 = vmatprep.subr.mxu0 0.0
    %6052 = vmatpush1.msra.mxu0 %v5126
    %6053 = vmatprep.subr.mxu0 0.0
    %6054 = vmatpush1.msra.mxu0 %v5125
    %6055 = vmatprep.subr.mxu0 0.0
    %6056 = vmatpush1.msra.mxu0 %v5124
    %6057 = vmatprep.subr.mxu0 0.0
    %6058 = vmatpush1.msra.mxu0 %v5123
    %6059 = vmatprep.subr.mxu0 0.0
    %6060 = vmatpush1.msra.mxu0 %v5122
    %6061 = vmatprep.subr.mxu0 0.0
    %6062 = vmatpush1.msra.mxu0 %v5121
    %6063 = vmatprep.subr.mxu0 0.0
    %6064 = vmatpush1.msra.mxu0 %v5120
    %6065 = vmatprep.subr.mxu0 0.0
    %6066 = vmatpush2.msra.mxu0 0.0
    %6067 = vmatprep.subr.mxu0 0.0
    %6068 = vmatpush2.msra.mxu0 0.0
    %6069 = vmatprep.subr.mxu0 0.0
    %6070 = vmatpush2.msra.mxu0 0.0
    %6071 = vmatprep.subr.mxu0 0.0
    %6072 = vmatpush2.msra.mxu0 0.0
    %6073 = vmatprep.subr.mxu0 0.0
    %6074 = vmatpush2.msra.mxu0 0.0
    %6075 = vmatprep.subr.mxu0 0.0
    %6076 = vmatpush2.msra.mxu0 0.0
    %6077 = vmatprep.subr.mxu0 0.0
    %6078 = vmatpush2.msra.mxu0 0.0
    %6079 = vmatprep.subr.mxu0 0.0
    %6080 = vmatpush2.msra.mxu0 0.0
    %6081 = vmatprep.subr.mxu0 0.0
    %6082 = vmatpush2.msra.mxu0 0.0
    %6083 = vmatprep.subr.mxu0 0.0
    %6084 = vmatpush2.msra.mxu0 0.0
    %6085 = vmatprep.subr.mxu0 0.0
    %6086 = vmatpush2.msra.mxu0 0.0
    %6087 = vmatprep.subr.mxu0 0.0
    %6088 = vmatpush2.msra.mxu0 0.0
    %6089 = vmatprep.subr.mxu0 0.0
    %6090 = vmatpush2.msra.mxu0 0.0
    %6091 = vmatprep.subr.mxu0 0.0
    %6092 = vmatpush2.msra.mxu0 0.0
    %6093 = vmatprep.subr.mxu0 0.0
    %6094 = vmatpush2.msra.mxu0 0.0
    %6095 = vmatprep.subr.mxu0 0.0
    %6096 = vmatpush2.msra.mxu0 0.0
    %6097 = vmatprep.mubr.f32.mxu0 0.0
    %6098 = vmatmul.mubr.f32.gmra.mxu0 %v6031
    %v6099 = vpop.f32.mrf.mxu0
    %v6100 = vadd.f32 %v5133, %v6099
    %v6101 = vpop.f32.mrf.mxu0
    %6102 = vdwg.mxu0
    %v6103 = vtanh.pop %v6100
    %v6105 = vsel %vm159, %v6103, 0
    %6107 = vmatprep.subr.mxu0 0.0
    %6108 = vmatpush1.msra.mxu0 0.0
    %6109 = vmatprep.subr.mxu0 0.0
    %6110 = vmatpush1.msra.mxu0 0.0
    %6111 = vmatprep.subr.mxu0 0.0
    %6112 = vmatpush1.msra.mxu0 0.0
    %6113 = vmatprep.subr.mxu0 0.0
    %6114 = vmatpush1.msra.mxu0 0.0
    %6115 = vmatprep.subr.mxu0 0.0
    %6116 = vmatpush1.msra.mxu0 0.0
    %6117 = vmatprep.subr.mxu0 0.0
    %6118 = vmatpush1.msra.mxu0 0.0
    %6119 = vmatprep.subr.mxu0 0.0
    %6120 = vmatpush1.msra.mxu0 0.0
    %6121 = vmatprep.subr.mxu0 0.0
    %6122 = vmatpush1.msra.mxu0 0.0
    %6123 = vmatprep.subr.mxu0 0.0
    %6124 = vmatpush1.msra.mxu0 0.0
    %6125 = vmatprep.subr.mxu0 0.0
    %6126 = vmatpush1.msra.mxu0 0.0
    %6127 = vmatprep.subr.mxu0 0.0
    %6128 = vmatpush1.msra.mxu0 0.0
    %6129 = vmatprep.subr.mxu0 0.0
    %6130 = vmatpush1.msra.mxu0 0.0
    %6131 = vmatprep.subr.mxu0 0.0
    %6132 = vmatpush1.msra.mxu0 %v5212
    %6133 = vmatprep.subr.mxu0 0.0
    %6134 = vmatpush1.msra.mxu0 %v5211
    %6135 = vmatprep.subr.mxu0 0.0
    %6136 = vmatpush1.msra.mxu0 %v5210
    %6137 = vmatprep.subr.mxu0 0.0
    %6138 = vmatpush1.msra.mxu0 %v5209
    %6139 = vmatprep.subr.mxu0 0.0
    %6140 = vmatpush2.msra.mxu0 0.0
    %6141 = vmatprep.subr.mxu0 0.0
    %6142 = vmatpush2.msra.mxu0 0.0
    %6143 = vmatprep.subr.mxu0 0.0
    %6144 = vmatpush2.msra.mxu0 0.0
    %6145 = vmatprep.subr.mxu0 0.0
    %6146 = vmatpush2.msra.mxu0 0.0
    %6147 = vmatprep.subr.mxu0 0.0
    %6148 = vmatpush2.msra.mxu0 0.0
    %6149 = vmatprep.subr.mxu0 0.0
    %6150 = vmatpush2.msra.mxu0 0.0
    %6151 = vmatprep.subr.mxu0 0.0
    %6152 = vmatpush2.msra.mxu0 0.0
    %6153 = vmatprep.subr.mxu0 0.0
    %6154 = vmatpush2.msra.mxu0 0.0
    %6155 = vmatprep.subr.mxu0 0.0
    %6156 = vmatpush2.msra.mxu0 0.0
    %6157 = vmatprep.subr.mxu0 0.0
    %6158 = vmatpush2.msra.mxu0 0.0
    %6159 = vmatprep.subr.mxu0 0.0
    %6160 = vmatpush2.msra.mxu0 0.0
    %6161 = vmatprep.subr.mxu0 0.0
    %6162 = vmatpush2.msra.mxu0 0.0
    %6163 = vmatprep.subr.mxu0 0.0
    %6164 = vmatpush2.msra.mxu0 0.0
    %6165 = vmatprep.subr.mxu0 0.0
    %6166 = vmatpush2.msra.mxu0 0.0
    %6167 = vmatprep.subr.mxu0 0.0
    %6168 = vmatpush2.msra.mxu0 0.0
    %6169 = vmatprep.subr.mxu0 0.0
    %6170 = vmatpush2.msra.mxu0 0.0
    %6171 = vmatprep.mubr.f32.mxu0 0.0
    %6172 = vmatmul.mubr.f32.gmra.mxu0 %v6105
    %v6173 = vpop.f32.mrf.mxu0
    %v6174 = vadd.f32 %v5218, %v6173
    %v6175 = vpop.f32.mrf.mxu0
    %6176 = vdwg.mxu0
    %v6177 = vsel %vm1927, %v6174, -inf
    %6178 = vmax.xlane.f32.xlu0 %v6177
    %v6179 = vpop.xlane.xlu0 %6178
    %v6180 = vsub.f32 %v6174, %v6179
    %v6181 = vmul.f32 %v6180, 1.442695
    %v6182 = vpow.pop %v6181
    %v6183 = vsel %vm1927, %v6182, 0.0
    %6184 = vadd.xlane.f32.xlu0 %v6183
    %v6185 = vpop.xlane.xlu0 %6184
    %v6186 = vlog2.pop %v6185
    %v6187 = vmul.f32 %v6186, 0.6931472
    %v6188 = vadd.f32 %v6179, %v6187
    %v6189 = vsub.f32 %v6174, %v6188
    %s6190 = scalar_lea.vmem %s9, 20
    %v6191 = vld [vmem:[%s6190] sm:$0xf]
    %v6192 = vmul.f32 %v6189, %v6191
    %v6193 = vsel %vm1927, %v6192, 0.0
    %6194 = vadd.xlane.f32.xlu0 %v6193
    %v6195 = vpop.xlane.xlu0 %6194
    %v6196 = vrot.slane %v6195, 4
    %v6197 = vadd.f32 %v6195, %v6196
    %v6198 = vrot.slane %v6197, 2
    %v6199 = vadd.f32 %v6197, %v6198
    %v6200 = vrot.slane %v6199, 1
    %v6201 = vadd.f32 %v6199, %v6200
    %s6202 = vtos %v6201
    %v6203 = vstv %s6202
    %v6204 = vsub.f32 %v6027, %v6203
    %s6205 = scalar_lea.vmem [#allocation9], 24
    %v6206 = vld [vmem:[%s6205] sm:$0xf]
    %v6208 = vsel %vm1853, %v6206, 0
    %6210 = vmatprep.subr.mxu0 0.0
    %6211 = vmatpush1.msra.mxu0 0.0
    %6212 = vmatprep.subr.mxu0 0.0
    %6213 = vmatpush1.msra.mxu0 0.0
    %6214 = vmatprep.subr.mxu0 0.0
    %6215 = vmatpush1.msra.mxu0 0.0
    %6216 = vmatprep.subr.mxu0 0.0
    %6217 = vmatpush1.msra.mxu0 0.0
    %6218 = vmatprep.subr.mxu0 0.0
    %6219 = vmatpush1.msra.mxu0 0.0
    %6220 = vmatprep.subr.mxu0 0.0
    %6221 = vmatpush1.msra.mxu0 0.0
    %6222 = vmatprep.subr.mxu0 0.0
    %6223 = vmatpush1.msra.mxu0 0.0
    %6224 = vmatprep.subr.mxu0 0.0
    %6225 = vmatpush1.msra.mxu0 0.0
    %6226 = vmatprep.subr.mxu0 0.0
    %6227 = vmatpush1.msra.mxu0 %v5127
    %6228 = vmatprep.subr.mxu0 0.0
    %6229 = vmatpush1.msra.mxu0 %v5126
    %6230 = vmatprep.subr.mxu0 0.0
    %6231 = vmatpush1.msra.mxu0 %v5125
    %6232 = vmatprep.subr.mxu0 0.0
    %6233 = vmatpush1.msra.mxu0 %v5124
    %6234 = vmatprep.subr.mxu0 0.0
    %6235 = vmatpush1.msra.mxu0 %v5123
    %6236 = vmatprep.subr.mxu0 0.0
    %6237 = vmatpush1.msra.mxu0 %v5122
    %6238 = vmatprep.subr.mxu0 0.0
    %6239 = vmatpush1.msra.mxu0 %v5121
    %6240 = vmatprep.subr.mxu0 0.0
    %6241 = vmatpush1.msra.mxu0 %v5120
    %6242 = vmatprep.subr.mxu0 0.0
    %6243 = vmatpush2.msra.mxu0 0.0
    %6244 = vmatprep.subr.mxu0 0.0
    %6245 = vmatpush2.msra.mxu0 0.0
    %6246 = vmatprep.subr.mxu0 0.0
    %6247 = vmatpush2.msra.mxu0 0.0
    %6248 = vmatprep.subr.mxu0 0.0
    %6249 = vmatpush2.msra.mxu0 0.0
    %6250 = vmatprep.subr.mxu0 0.0
    %6251 = vmatpush2.msra.mxu0 0.0
    %6252 = vmatprep.subr.mxu0 0.0
    %6253 = vmatpush2.msra.mxu0 0.0
    %6254 = vmatprep.subr.mxu0 0.0
    %6255 = vmatpush2.msra.mxu0 0.0
    %6256 = vmatprep.subr.mxu0 0.0
    %6257 = vmatpush2.msra.mxu0 0.0
    %6258 = vmatprep.subr.mxu0 0.0
    %6259 = vmatpush2.msra.mxu0 0.0
    %6260 = vmatprep.subr.mxu0 0.0
    %6261 = vmatpush2.msra.mxu0 0.0
    %6262 = vmatprep.subr.mxu0 0.0
    %6263 = vmatpush2.msra.mxu0 0.0
    %6264 = vmatprep.subr.mxu0 0.0
    %6265 = vmatpush2.msra.mxu0 0.0
    %6266 = vmatprep.subr.mxu0 0.0
    %6267 = vmatpush2.msra.mxu0 0.0
    %6268 = vmatprep.subr.mxu0 0.0
    %6269 = vmatpush2.msra.mxu0 0.0
    %6270 = vmatprep.subr.mxu0 0.0
    %6271 = vmatpush2.msra.mxu0 0.0
    %6272 = vmatprep.subr.mxu0 0.0
    %6273 = vmatpush2.msra.mxu0 0.0
    %6274 = vmatprep.mubr.f32.mxu0 0.0
    %6275 = vmatmul.mubr.f32.gmra.mxu0 %v6208
    %v6276 = vpop.f32.mrf.mxu0
    %v6277 = vadd.f32 %v5133, %v6276
    %v6278 = vpop.f32.mrf.mxu0
    %6279 = vdwg.mxu0
    %v6280 = vtanh.pop %v6277
    %v6282 = vsel %vm159, %v6280, 0
    %6284 = vmatprep.subr.mxu0 0.0
    %6285 = vmatpush1.msra.mxu0 0.0
    %6286 = vmatprep.subr.mxu0 0.0
    %6287 = vmatpush1.msra.mxu0 0.0
    %6288 = vmatprep.subr.mxu0 0.0
    %6289 = vmatpush1.msra.mxu0 0.0
    %6290 = vmatprep.subr.mxu0 0.0
    %6291 = vmatpush1.msra.mxu0 0.0
    %6292 = vmatprep.subr.mxu0 0.0
    %6293 = vmatpush1.msra.mxu0 0.0
    %6294 = vmatprep.subr.mxu0 0.0
    %6295 = vmatpush1.msra.mxu0 0.0
    %6296 = vmatprep.subr.mxu0 0.0
    %6297 = vmatpush1.msra.mxu0 0.0
    %6298 = vmatprep.subr.mxu0 0.0
    %6299 = vmatpush1.msra.mxu0 0.0
    %6300 = vmatprep.subr.mxu0 0.0
    %6301 = vmatpush1.msra.mxu0 0.0
    %6302 = vmatprep.subr.mxu0 0.0
    %6303 = vmatpush1.msra.mxu0 0.0
    %6304 = vmatprep.subr.mxu0 0.0
    %6305 = vmatpush1.msra.mxu0 0.0
    %6306 = vmatprep.subr.mxu0 0.0
    %6307 = vmatpush1.msra.mxu0 0.0
    %6308 = vmatprep.subr.mxu0 0.0
    %6309 = vmatpush1.msra.mxu0 %v5212
    %6310 = vmatprep.subr.mxu0 0.0
    %6311 = vmatpush1.msra.mxu0 %v5211
    %6312 = vmatprep.subr.mxu0 0.0
    %6313 = vmatpush1.msra.mxu0 %v5210
    %6314 = vmatprep.subr.mxu0 0.0
    %6315 = vmatpush1.msra.mxu0 %v5209
    %6316 = vmatprep.subr.mxu0 0.0
    %6317 = vmatpush2.msra.mxu0 0.0
    %6318 = vmatprep.subr.mxu0 0.0
    %6319 = vmatpush2.msra.mxu0 0.0
    %6320 = vmatprep.subr.mxu0 0.0
    %6321 = vmatpush2.msra.mxu0 0.0
    %6322 = vmatprep.subr.mxu0 0.0
    %6323 = vmatpush2.msra.mxu0 0.0
    %6324 = vmatprep.subr.mxu0 0.0
    %6325 = vmatpush2.msra.mxu0 0.0
    %6326 = vmatprep.subr.mxu0 0.0
    %6327 = vmatpush2.msra.mxu0 0.0
    %6328 = vmatprep.subr.mxu0 0.0
    %6329 = vmatpush2.msra.mxu0 0.0
    %6330 = vmatprep.subr.mxu0 0.0
    %6331 = vmatpush2.msra.mxu0 0.0
    %6332 = vmatprep.subr.mxu0 0.0
    %6333 = vmatpush2.msra.mxu0 0.0
    %6334 = vmatprep.subr.mxu0 0.0
    %6335 = vmatpush2.msra.mxu0 0.0
    %6336 = vmatprep.subr.mxu0 0.0
    %6337 = vmatpush2.msra.mxu0 0.0
    %6338 = vmatprep.subr.mxu0 0.0
    %6339 = vmatpush2.msra.mxu0 0.0
    %6340 = vmatprep.subr.mxu0 0.0
    %6341 = vmatpush2.msra.mxu0 0.0
    %6342 = vmatprep.subr.mxu0 0.0
    %6343 = vmatpush2.msra.mxu0 0.0
    %6344 = vmatprep.subr.mxu0 0.0
    %6345 = vmatpush2.msra.mxu0 0.0
    %6346 = vmatprep.subr.mxu0 0.0
    %6347 = vmatpush2.msra.mxu0 0.0
    %6348 = vmatprep.mubr.f32.mxu0 0.0
    %6349 = vmatmul.mubr.f32.gmra.mxu0 %v6282
    %v6350 = vpop.f32.mrf.mxu0
    %v6351 = vadd.f32 %v5218, %v6350
    %v6352 = vpop.f32.mrf.mxu0
    %6353 = vdwg.mxu0
    %v6354 = vsel %vm1927, %v6351, -inf
    %6355 = vmax.xlane.f32.xlu0 %v6354
    %v6356 = vpop.xlane.xlu0 %6355
    %v6357 = vsub.f32 %v6351, %v6356
    %v6358 = vmul.f32 %v6357, 1.442695
    %v6359 = vpow.pop %v6358
    %v6360 = vsel %vm1927, %v6359, 0.0
    %6361 = vadd.xlane.f32.xlu0 %v6360
    %v6362 = vpop.xlane.xlu0 %6361
    %v6363 = vlog2.pop %v6362
    %v6364 = vmul.f32 %v6363, 0.6931472
    %v6365 = vadd.f32 %v6356, %v6364
    %v6366 = vsub.f32 %v6351, %v6365
    %s6367 = scalar_lea.vmem %s9, 24
    %v6368 = vld [vmem:[%s6367] sm:$0xf]
    %v6369 = vmul.f32 %v6366, %v6368
    %v6370 = vsel %vm1927, %v6369, 0.0
    %6371 = vadd.xlane.f32.xlu0 %v6370
    %v6372 = vpop.xlane.xlu0 %6371
    %v6373 = vrot.slane %v6372, 4
    %v6374 = vadd.f32 %v6372, %v6373
    %v6375 = vrot.slane %v6374, 2
    %v6376 = vadd.f32 %v6374, %v6375
    %v6377 = vrot.slane %v6376, 1
    %v6378 = vadd.f32 %v6376, %v6377
    %s6379 = vtos %v6378
    %v6380 = vstv %s6379
    %v6381 = vsub.f32 %v6204, %v6380
    %vm6382 = vcmask 0
    %6383 = vst.msk [vmem:[#allocation10] sm:$0x1] %vm6382, %v6381
    // Predicated region
    $region163: #{amnmt_forward.1} parent=1 // pred_check
      _
    $region164: #{amnmt_forward.1} parent=1 // pred_check_branch
      %6385 = sbr.rel (0) target = $region166
    $region165: #{amnmt_forward.1} parent=1 // pred_region
      %s6387 = ssub.s32 16, 16
      %6388 = vsyncadd [#allocation11], %s6387
      %s6390 = sshll.u32 [#allocation10], 4
      %s6391 = int_to_ptr.vmem [resolvable:$true] %s6390
      %6393 = dma.vmem_to_hbm [thread:$0]  %s6391, 16, %s71, [#allocation11]
    $region166: #{amnmt_forward.1} parent=1 // pred_fallthru
      _
    // Predicated region
    $region167: #{amnmt_forward.1} parent=1 // pred_check
      _
    $region168: #{amnmt_forward.1} parent=1 // pred_check_branch
      %6395 = sbr.rel (0) target = $region170
    $region169: #{amnmt_forward.1} parent=1 // pred_region
      %6396 = dma.done [#allocation11], 16
    $region170: #{amnmt_forward.1} parent=1 // pred_fallthru
      _
    %6397 = vsyncpa [#allocation11], 1

</llo_original>
